<compile_context>
chip_gen: v7x
topology: tpu7x:2x2x1
jax: 0.10.0
libtpu: 0.0.40
codegen_flags: <defaults>
</compile_context>

<pallas_src>
import jax
import jax.numpy as jnp
from jax import lax
from jax.experimental import pallas as pl
from jax.experimental.pallas import tpu as pltpu

C, H, W = 320, 32, 32
POOL = 4
PH, PW = H // POOL, W // POOL          # 8, 8
FEAT = C * PH * PW                     # 320 * 64 = 20480
HID = 128
NCLS = 10
LN_EPS = 1e-5

ROW_TILE = 160                         # rows of (B*C/2, 2*H*W) per pooling step (grid=2)
TK = 10240                             # FEAT tile per head step (bf16 W1 tile = 2.5 MiB)


# --------------------------------------------------------------------------
# Kernel 1: AvgPool2d(4,4) + Flatten as a single matmul against the
# block-diagonal Kronecker pooling matrix Kpool2 (2*H*W, 2*PH*PW) = (2048,128)
# so the output is 128-lane dense (unmasked vector stores, full MXU width).
# --------------------------------------------------------------------------
def _pool_kernel(x_ref, k_ref, o_ref):
    o_ref[...] = jnp.dot(x_ref[...], k_ref[...],
                         preferred_element_type=jnp.float32).astype(o_ref.dtype)


def avgpool_flatten(x2, kpool2):
    rows = x2.shape[0]                                   # B * C / 2
    assert rows % ROW_TILE == 0, rows
    return pl.pallas_call(
        _pool_kernel,
        out_shape=jax.ShapeDtypeStruct((rows, 2 * PH * PW), jnp.float32),
        grid=(rows // ROW_TILE,),
        in_specs=[
            pl.BlockSpec((ROW_TILE, 2 * H * W), lambda r: (r, 0)),   # streamed x rows
            pl.BlockSpec((2 * H * W, 2 * PH * PW), lambda r: (0, 0)),  # resident Kpool2
        ],
        out_specs=pl.BlockSpec((ROW_TILE, 2 * PH * PW), lambda r: (r, 0)),
        compiler_params=pltpu.CompilerParams(
            dimension_semantics=("parallel",)),
    )(x2, kpool2)


# --------------------------------------------------------------------------
# Kernel 2: LayerNorm(20480) -> Linear(20480,128) -> ReLU -> Linear(128,10),
# K-tiled over FEAT so the bf16 (gamma-folded) W1 streams double-buffered.
# --------------------------------------------------------------------------
def _head_kernel(f_ref, w1g_ref, gw_ref, bw1_ref, w2_ref, b2_ref,
                 o_ref, acc_ref, s1_ref, s2_ref):
    k = pl.program_id(0)

    @pl.when(k == 0)
    def _():
        acc_ref[...] = jnp.zeros_like(acc_ref)
        s1_ref[...] = jnp.zeros_like(s1_ref)
        s2_ref[...] = jnp.zeros_like(s2_ref)

    f = f_ref[...]                                           # (B, TK) f32
    s1_ref[...] += jnp.sum(f, axis=-1, keepdims=True)        # running sum (f32)
    s2_ref[...] += jnp.sum(f * f, axis=-1, keepdims=True)    # running sum of squares
    # f @ (gamma * W1.T) tile: bf16 operands into the MXU, f32 accumulation.
    acc_ref[...] += jnp.dot(f.astype(jnp.bfloat16), w1g_ref[...],
                            preferred_element_type=jnp.float32)

    @pl.when(k == pl.num_programs(0) - 1)
    def _():
        inv_n = 1.0 / FEAT
        mean = s1_ref[...] * inv_n                           # (B, 1)
        var = s2_ref[...] * inv_n - mean * mean
        rstd = lax.rsqrt(var + LN_EPS)
        # xln @ W1.T + b1 == rstd*acc - rstd*mean*(gamma@W1.T) + (beta@W1.T + b1)
        hidden = rstd * acc_ref[...] - (rstd * mean) * gw_ref[...] + bw1_ref[...]
        hidden = jnp.maximum(hidden, 0.0)                    # ReLU (f32)
        out = jnp.dot(hidden, w2_ref[...],
                      preferred_element_type=jnp.float32) + b2_ref[...]
        o_ref[...] = out.astype(o_ref.dtype)


def ln_mlp_head(f, w1g, gw, bw1, w2t, b2r):
    B = f.shape[0]
    assert FEAT % TK == 0
    kt = FEAT // TK
    return pl.pallas_call(
        _head_kernel,
        out_shape=jax.ShapeDtypeStruct((B, NCLS), jnp.float32),
        grid=(kt,),
        in_specs=[
            pl.BlockSpec((B, TK), lambda k: (0, k)),         # f tile (lane-dense, f32)
            pl.BlockSpec((TK, HID), lambda k: (k, 0)),       # gamma*W1.T tile (bf16, streamed)
            pl.BlockSpec((1, HID), lambda k: (0, 0)),        # gamma @ W1.T     (resident)
            pl.BlockSpec((1, HID), lambda k: (0, 0)),        # beta @ W1.T + b1 (resident)
            pl.BlockSpec((HID, NCLS), lambda k: (0, 0)),     # W2.T             (resident)
            pl.BlockSpec((1, NCLS), lambda k: (0, 0)),       # b2               (resident)
        ],
        out_specs=pl.BlockSpec((B, NCLS), lambda k: (0, 0)),
        scratch_shapes=[pltpu.VMEM((B, HID), jnp.float32),   # matmul accumulator
                        pltpu.VMEM((B, 1), jnp.float32),     # sum(f)
                        pltpu.VMEM((B, 1), jnp.float32)],    # sum(f^2)
        compiler_params=pltpu.CompilerParams(
            dimension_semantics=("arbitrary",),
            vmem_limit_bytes=16 * 1024 * 1024),              # actual need ~5.3 MiB
    )(f, w1g, gw, bw1, w2t, b2r)


# --------------------------------------------------------------------------
# Full forward
# --------------------------------------------------------------------------
def encode_ln_classify(x, kp):
    B = x.shape[0]
    # TODO(synk): target_encoder treated as identity.
    x2 = x.reshape(B * C // 2, 2 * H * W)            # channel-pair row-major flatten
    f_rows = avgpool_flatten(x2, kp["kpool2"])        # (B*C/2, 128), PyTorch flatten order
    f = f_rows.reshape(B, FEAT)                       # (B, 20480) lane-dense features
    return ln_mlp_head(f, kp["w1g"], kp["gw"], kp["bw1"], kp["w2t"], kp["b2r"])


# --------------------------------------------------------------------------
# Parameters
# --------------------------------------------------------------------------
def init_params(key):
    k = jax.random.split(key, 6)
    w1 = jax.random.uniform(k[0], (HID, FEAT), jnp.float32, -1.0, 1.0) / jnp.sqrt(FEAT)
    b1 = jax.random.uniform(k[1], (HID,), jnp.float32, -1.0, 1.0) / jnp.sqrt(FEAT)
    w2 = jax.random.uniform(k[2], (NCLS, HID), jnp.float32, -1.0, 1.0) / jnp.sqrt(HID)
    b2 = jax.random.uniform(k[3], (NCLS,), jnp.float32, -1.0, 1.0) / jnp.sqrt(HID)
    gamma = 1.0 + 0.1 * jax.random.normal(k[4], (FEAT,), jnp.float32)
    beta = 0.1 * jax.random.normal(k[5], (FEAT,), jnp.float32)
    return dict(w1=w1, b1=b1, w2=w2, b2=b2, ln_gamma=gamma, ln_beta=beta)


def prepare_params(p):
    """One-time derived constants (amortized across all forward calls)."""
    rows = lax.broadcasted_iota(jnp.int32, (PH, H), 0)
    cols = lax.broadcasted_iota(jnp.int32, (PH, H), 1)
    pm = jnp.where(cols // POOL == rows, 1.0 / POOL, 0.0).astype(jnp.float32)  # (8, 32)
    kpool = jnp.kron(pm, pm).T                        # (1024, 64), entries 1/16
    kpool2 = jnp.kron(jnp.eye(2, dtype=jnp.float32), kpool)   # (2048, 128) block-diag
    w1t = jnp.asarray(p["w1"].T)                      # (FEAT, HID), transposed once
    gw = (p["ln_gamma"] @ w1t).reshape(1, HID)        # gamma @ W1.T           (f32)
    bw1 = (p["ln_beta"] @ w1t + p["b1"]).reshape(1, HID)   # beta @ W1.T + b1  (f32)
    w1g = (p["ln_gamma"][:, None] * w1t).astype(jnp.bfloat16)  # gamma folded, bf16
    return dict(kpool2=kpool2, w1g=w1g, gw=gw, bw1=bw1,
                w2t=jnp.asarray(p["w2"].T),
                b2r=p["b2"].reshape(1, NCLS))


# --------------------------------------------------------------------------
# Pure-JAX reference (uses raw, untransformed params)
# --------------------------------------------------------------------------
def reference(x, p):
    B = x.shape[0]
    pooled = x.reshape(B, C, PH, POOL, PW, POOL).mean(axis=(3, 5))
    f = pooled.reshape(B, FEAT)
    mean = f.mean(-1, keepdims=True)
    var = ((f - mean) ** 2).mean(-1, keepdims=True)
    xln = (f - mean) / jnp.sqrt(var + LN_EPS) * p["ln_gamma"] + p["ln_beta"]
    h = jnp.maximum(xln @ p["w1"].T + p["b1"], 0.0)
    return h @ p["w2"].T + p["b2"]


if __name__ == "__main__":
    key = jax.random.PRNGKey(0)
    kx, kp = jax.random.split(key)
    x = jax.random.normal(kx, (2, C, H, W), jnp.float32)    # batch=2, NCHW
    raw = init_params(kp)
    kparams = jax.device_put(prepare_params(raw))

    fwd = jax.jit(encode_ln_classify)
    out = jax.block_until_ready(fwd(x, kparams))

    ref = reference(x, raw)
    assert out.shape == (2, NCLS), out.shape
    if not bool(jnp.allclose(out, ref, rtol=2e-2, atol=2e-2)):
        raise AssertionError(
            f"mismatch: max abs err = {float(jnp.max(jnp.abs(out - ref)))}")
    print("KERNEL_OK")
</pallas_src>

<mosaic_0001>
module attributes {stable_mosaic.version = 11 : i64} {
  func.func @_pool_kernel(%arg0: i32, %arg1: memref<160x2048xf32, #tpu.memory_space<vmem>>, %arg2: memref<2048x128xf32, #tpu.memory_space<vmem>>, %arg3: memref<160x128xf32, #tpu.memory_space<vmem>>) attributes {dimension_semantics = [#tpu.dimension_semantics<parallel>], iteration_bounds = array<i64: 2>, scalar_prefetch = 0 : i64, scratch_operands = 0 : i64, tpu.core_type = #tpu.core_type<tc>, window_params = [{transform_indices = @transform_0, window_bounds = array<i64: 160, 2048>}, {pipeline_mode = #tpu.pipeline_mode<synchronous>, transform_indices = @transform_1, window_bounds = array<i64: 2048, 128>}, {transform_indices = @transform_2, window_bounds = array<i64: 160, 128>}]} {
    %c0 = arith.constant 0 : index
    %c0_0 = arith.constant 0 : index
    %0 = vector.load %arg1[%c0, %c0_0] : memref<160x2048xf32, #tpu.memory_space<vmem>>, vector<160x2048xf32>
    %c0_1 = arith.constant 0 : index
    %c0_2 = arith.constant 0 : index
    %1 = vector.load %arg2[%c0_1, %c0_2] : memref<2048x128xf32, #tpu.memory_space<vmem>>, vector<2048x128xf32>
    %cst = arith.constant dense<0.000000e+00> : vector<160x128xf32>
    %2 = tpu.matmul %0, %1, %cst {dimension_numbers = #tpu.dot_dimension_numbers<[1], [0], [0], [1], [0, 0, 1, 1], [], []>} : vector<160x2048xf32>, vector<2048x128xf32>, vector<160x128xf32> -> vector<160x128xf32>
    %c0_3 = arith.constant 0 : index
    %c0_4 = arith.constant 0 : index
    %3 = vector.load %arg3[%c0_3, %c0_4] : memref<160x128xf32, #tpu.memory_space<vmem>>, vector<160x128xf32>
    tpu.vector_store %arg3[%c0_3, %c0_4], %2 {strides = array<i32>} : memref<160x128xf32, #tpu.memory_space<vmem>>, vector<160x128xf32>,
    return
  }
  func.func @transform_0(%arg0: i32) -> (i32, i32) {
    %c0_i32 = arith.constant 0 : i32
    %c0_i32_0 = arith.constant 0 : i32
    return %arg0, %c0_i32 : i32, i32
  }
  func.func @transform_1(%arg0: i32) -> (i32, i32) {
    %c0_i32 = arith.constant 0 : i32
    %c0_i32_0 = arith.constant 0 : i32
    %c0_i32_1 = arith.constant 0 : i32
    return %c0_i32, %c0_i32_0 : i32, i32
  }
  func.func @transform_2(%arg0: i32) -> (i32, i32) {
    %c0_i32 = arith.constant 0 : i32
    %c0_i32_0 = arith.constant 0 : i32
    return %arg0, %c0_i32 : i32, i32
  }
}

module attributes {stable_mosaic.version = 11 : i64} {
  func.func @_head_kernel(%arg0: i32, %arg1: memref<2x10240xf32, #tpu.memory_space<vmem>>, %arg2: memref<10240x128xbf16, #tpu.memory_space<vmem>>, %arg3: memref<1x128xf32, #tpu.memory_space<vmem>>, %arg4: memref<1x128xf32, #tpu.memory_space<vmem>>, %arg5: memref<128x10xf32, #tpu.memory_space<vmem>>, %arg6: memref<1x10xf32, #tpu.memory_space<vmem>>, %arg7: memref<2x10xf32, #tpu.memory_space<vmem>>, %arg8: memref<2x128xf32, #tpu.memory_space<vmem>>, %arg9: memref<2x1xf32, #tpu.memory_space<vmem>>, %arg10: memref<2x1xf32, #tpu.memory_space<vmem>>) attributes {dimension_semantics = [#tpu.dimension_semantics<arbitrary>], iteration_bounds = array<i64: 2>, scalar_prefetch = 0 : i64, scratch_operands = 3 : i64, tpu.core_type = #tpu.core_type<tc>, window_params = [{transform_indices = @transform_0, window_bounds = array<i64: 2, 10240>}, {transform_indices = @transform_1, window_bounds = array<i64: 10240, 128>}, {pipeline_mode = #tpu.pipeline_mode<synchronous>, transform_indices = @transform_2, window_bounds = array<i64: 1, 128>}, {pipeline_mode = #tpu.pipeline_mode<synchronous>, transform_indices = @transform_3, window_bounds = array<i64: 1, 128>}, {pipeline_mode = #tpu.pipeline_mode<synchronous>, transform_indices = @transform_4, window_bounds = array<i64: 128, 10>}, {pipeline_mode = #tpu.pipeline_mode<synchronous>, transform_indices = @transform_5, window_bounds = array<i64: 1, 10>}, {pipeline_mode = #tpu.pipeline_mode<synchronous>, transform_indices = @transform_6, window_bounds = array<i64: 2, 10>}]} {
    %c0_i32 = arith.constant 0 : i32
    %0 = arith.cmpi eq, %arg0, %c0_i32 : i32
    %1 = arith.extui %0 : i1 to i32
    %c0_i32_0 = arith.constant 0 : i32
    %2 = arith.cmpi ne, %1, %c0_i32_0 : i32
    scf.if %2 {
      %cst_19 = arith.constant 0.000000e+00 : f32
      %24 = vector.broadcast %cst_19 : f32 to vector<2x128xf32>
      %c0_20 = arith.constant 0 : index
      %c0_21 = arith.constant 0 : index
      %25 = vector.load %arg8[%c0_20, %c0_21] : memref<2x128xf32, #tpu.memory_space<vmem>>, vector<2x128xf32>
      tpu.vector_store %arg8[%c0_20, %c0_21], %24 {strides = array<i32>} : memref<2x128xf32, #tpu.memory_space<vmem>>, vector<2x128xf32>,
      %cst_22 = arith.constant 0.000000e+00 : f32
      %26 = vector.broadcast %cst_22 : f32 to vector<2x1xf32>
      %c0_23 = arith.constant 0 : index
      %c0_24 = arith.constant 0 : index
      %27 = vector.load %arg9[%c0_23, %c0_24] : memref<2x1xf32, #tpu.memory_space<vmem>>, vector<2x1xf32>
      tpu.vector_store %arg9[%c0_23, %c0_24], %26 {strides = array<i32>} : memref<2x1xf32, #tpu.memory_space<vmem>>, vector<2x1xf32>,
      %cst_25 = arith.constant 0.000000e+00 : f32
      %28 = vector.broadcast %cst_25 : f32 to vector<2x1xf32>
      %c0_26 = arith.constant 0 : index
      %c0_27 = arith.constant 0 : index
      %29 = vector.load %arg10[%c0_26, %c0_27] : memref<2x1xf32, #tpu.memory_space<vmem>>, vector<2x1xf32>
      tpu.vector_store %arg10[%c0_26, %c0_27], %28 {strides = array<i32>} : memref<2x1xf32, #tpu.memory_space<vmem>>, vector<2x1xf32>,
    } else {
    }
    %c0 = arith.constant 0 : index
    %c0_1 = arith.constant 0 : index
    %3 = vector.load %arg1[%c0, %c0_1] : memref<2x10240xf32, #tpu.memory_space<vmem>>, vector<2x10240xf32>
    %c0_2 = arith.constant 0 : index
    %c0_3 = arith.constant 0 : index
    %4 = vector.load %arg9[%c0_2, %c0_3] : memref<2x1xf32, #tpu.memory_space<vmem>>, vector<2x1xf32>
    %cst = arith.constant dense<0.000000e+00> : vector<2xf32>
    %5 = vector.multi_reduction <add>, %3, %cst [1] : vector<2x10240xf32> to vector<2xf32>
    %6 = vector.shape_cast %5 : vector<2xf32> to vector<2x1xf32>
    %7 = arith.addf %4, %6 : vector<2x1xf32>
    %c0_4 = arith.constant 0 : index
    %c0_5 = arith.constant 0 : index
    %8 = vector.load %arg9[%c0_4, %c0_5] : memref<2x1xf32, #tpu.memory_space<vmem>>, vector<2x1xf32>
    tpu.vector_store %arg9[%c0_4, %c0_5], %7 {strides = array<i32>} : memref<2x1xf32, #tpu.memory_space<vmem>>, vector<2x1xf32>,
    %c0_6 = arith.constant 0 : index
    %c0_7 = arith.constant 0 : index
    %9 = vector.load %arg10[%c0_6, %c0_7] : memref<2x1xf32, #tpu.memory_space<vmem>>, vector<2x1xf32>
    %10 = arith.mulf %3, %3 : vector<2x10240xf32>
    %cst_8 = arith.constant dense<0.000000e+00> : vector<2xf32>
    %11 = vector.multi_reduction <add>, %10, %cst_8 [1] : vector<2x10240xf32> to vector<2xf32>
    %12 = vector.shape_cast %11 : vector<2xf32> to vector<2x1xf32>
    %13 = arith.addf %9, %12 : vector<2x1xf32>
    %c0_9 = arith.constant 0 : index
    %c0_10 = arith.constant 0 : index
    %14 = vector.load %arg10[%c0_9, %c0_10] : memref<2x1xf32, #tpu.memory_space<vmem>>, vector<2x1xf32>
    tpu.vector_store %arg10[%c0_9, %c0_10], %13 {strides = array<i32>} : memref<2x1xf32, #tpu.memory_space<vmem>>, vector<2x1xf32>,
    %c0_11 = arith.constant 0 : index
    %c0_12 = arith.constant 0 : index
    %15 = vector.load %arg8[%c0_11, %c0_12] : memref<2x128xf32, #tpu.memory_space<vmem>>, vector<2x128xf32>
    %16 = arith.truncf %3 : vector<2x10240xf32> to vector<2x10240xbf16>
    %c0_13 = arith.constant 0 : index
    %c0_14 = arith.constant 0 : index
    %17 = vector.load %arg2[%c0_13, %c0_14] : memref<10240x128xbf16, #tpu.memory_space<vmem>>, vector<10240x128xbf16>
    %cst_15 = arith.constant dense<0.000000e+00> : vector<2x128xf32>
    %18 = tpu.matmul %16, %17, %cst_15 {dimension_numbers = #tpu.dot_dimension_numbers<[1], [0], [0], [1], [0, 0, 1, 1], [], []>} : vector<2x10240xbf16>, vector<10240x128xbf16>, vector<2x128xf32> -> vector<2x128xf32>
    %19 = arith.addf %15, %18 : vector<2x128xf32>
    %c0_16 = arith.constant 0 : index
    %c0_17 = arith.constant 0 : index
    %20 = vector.load %arg8[%c0_16, %c0_17] : memref<2x128xf32, #tpu.memory_space<vmem>>, vector<2x128xf32>
    tpu.vector_store %arg8[%c0_16, %c0_17], %19 {strides = array<i32>} : memref<2x128xf32, #tpu.memory_space<vmem>>, vector<2x128xf32>,
    %c1_i32 = arith.constant 1 : i32
    %21 = arith.cmpi eq, %arg0, %c1_i32 : i32
    %22 = arith.extui %21 : i1 to i32
    %c0_i32_18 = arith.constant 0 : i32
    %23 = arith.cmpi ne, %22, %c0_i32_18 : i32
    scf.if %23 {
      %c0_19 = arith.constant 0 : index
      %c0_20 = arith.constant 0 : index
      %24 = vector.load %arg9[%c0_19, %c0_20] : memref<2x1xf32, #tpu.memory_space<vmem>>, vector<2x1xf32>
      %cst_21 = arith.constant 4.88281257E-5 : f32
      %25 = vector.broadcast %cst_21 : f32 to vector<2x1xf32>
      %26 = arith.mulf %24, %25 : vector<2x1xf32>
      %c0_22 = arith.constant 0 : index
      %c0_23 = arith.constant 0 : index
      %27 = vector.load %arg10[%c0_22, %c0_23] : memref<2x1xf32, #tpu.memory_space<vmem>>, vector<2x1xf32>
      %cst_24 = arith.constant 4.88281257E-5 : f32
      %28 = vector.broadcast %cst_24 : f32 to vector<2x1xf32>
      %29 = arith.mulf %27, %28 : vector<2x1xf32>
      %30 = arith.mulf %26, %26 : vector<2x1xf32>
      %31 = arith.subf %29, %30 : vector<2x1xf32>
      %cst_25 = arith.constant 9.99999974E-6 : f32
      %32 = vector.broadcast %cst_25 : f32 to vector<2x1xf32>
      %33 = arith.addf %31, %32 : vector<2x1xf32>
      %34 = math.rsqrt %33 : vector<2x1xf32>
      %c0_26 = arith.constant 0 : index
      %c0_27 = arith.constant 0 : index
      %35 = vector.load %arg8[%c0_26, %c0_27] : memref<2x128xf32, #tpu.memory_space<vmem>>, vector<2x128xf32>
      %36 = vector.broadcast %34 : vector<2x1xf32> to vector<2x128xf32>
      %37 = arith.mulf %36, %35 : vector<2x128xf32>
      %38 = arith.mulf %34, %26 : vector<2x1xf32>
      %c0_28 = arith.constant 0 : index
      %c0_29 = arith.constant 0 : index
      %39 = vector.load %arg3[%c0_28, %c0_29] : memref<1x128xf32, #tpu.memory_space<vmem>>, vector<1x128xf32>
      %40 = vector.broadcast %38 : vector<2x1xf32> to vector<2x128xf32>
      %41 = vector.broadcast %39 : vector<1x128xf32> to vector<2x128xf32>
      %42 = arith.mulf %40, %41 : vector<2x128xf32>
      %43 = arith.subf %37, %42 : vector<2x128xf32>
      %c0_30 = arith.constant 0 : index
      %c0_31 = arith.constant 0 : index
      %44 = vector.load %arg4[%c0_30, %c0_31] : memref<1x128xf32, #tpu.memory_space<vmem>>, vector<1x128xf32>
      %45 = vector.broadcast %44 : vector<1x128xf32> to vector<2x128xf32>
      %46 = arith.addf %43, %45 : vector<2x128xf32>
      %cst_32 = arith.constant 0.000000e+00 : f32
      %47 = vector.broadcast %cst_32 : f32 to vector<2x128xf32>
      %48 = arith.maximumf %46, %47 : vector<2x128xf32>
      %c0_33 = arith.constant 0 : index
      %c0_34 = arith.constant 0 : index
      %49 = vector.load %arg5[%c0_33, %c0_34] : memref<128x10xf32, #tpu.memory_space<vmem>>, vector<128x10xf32>
      %cst_35 = arith.constant dense<0.000000e+00> : vector<2x10xf32>
      %50 = tpu.matmul %48, %49, %cst_35 {dimension_numbers = #tpu.dot_dimension_numbers<[1], [0], [0], [1], [0, 0, 1, 1], [], []>} : vector<2x128xf32>, vector<128x10xf32>, vector<2x10xf32> -> vector<2x10xf32>
      %c0_36 = arith.constant 0 : index
      %c0_37 = arith.constant 0 : index
      %51 = vector.load %arg6[%c0_36, %c0_37] : memref<1x10xf32, #tpu.memory_space<vmem>>, vector<1x10xf32>
      %52 = vector.broadcast %51 : vector<1x10xf32> to vector<2x10xf32>
      %53 = arith.addf %50, %52 : vector<2x10xf32>
      %c0_38 = arith.constant 0 : index
      %c0_39 = arith.constant 0 : index
      %54 = vector.load %arg7[%c0_38, %c0_39] : memref<2x10xf32, #tpu.memory_space<vmem>>, vector<2x10xf32>
      tpu.vector_store %arg7[%c0_38, %c0_39], %53 {strides = array<i32>} : memref<2x10xf32, #tpu.memory_space<vmem>>, vector<2x10xf32>,
    } else {
    }
    return
  }
  func.func @transform_0(%arg0: i32) -> (i32, i32) {
    %c0_i32 = arith.constant 0 : i32
    %c0_i32_0 = arith.constant 0 : i32
    return %c0_i32, %arg0 : i32, i32
  }
  func.func @transform_1(%arg0: i32) -> (i32, i32) {
    %c0_i32 = arith.constant 0 : i32
    %c0_i32_0 = arith.constant 0 : i32
    return %arg0, %c0_i32 : i32, i32
  }
  func.func @transform_2(%arg0: i32) -> (i32, i32) {
    %c0_i32 = arith.constant 0 : i32
    %c0_i32_0 = arith.constant 0 : i32
    %c0_i32_1 = arith.constant 0 : i32
    return %c0_i32, %c0_i32_0 : i32, i32
  }
  func.func @transform_3(%arg0: i32) -> (i32, i32) {
    %c0_i32 = arith.constant 0 : i32
    %c0_i32_0 = arith.constant 0 : i32
    %c0_i32_1 = arith.constant 0 : i32
    return %c0_i32, %c0_i32_0 : i32, i32
  }
  func.func @transform_4(%arg0: i32) -> (i32, i32) {
    %c0_i32 = arith.constant 0 : i32
    %c0_i32_0 = arith.constant 0 : i32
    %c0_i32_1 = arith.constant 0 : i32
    return %c0_i32, %c0_i32_0 : i32, i32
  }
  func.func @transform_5(%arg0: i32) -> (i32, i32) {
    %c0_i32 = arith.constant 0 : i32
    %c0_i32_0 = arith.constant 0 : i32
    %c0_i32_1 = arith.constant 0 : i32
    return %c0_i32, %c0_i32_0 : i32, i32
  }
  func.func @transform_6(%arg0: i32) -> (i32, i32) {
    %c0_i32 = arith.constant 0 : i32
    %c0_i32_0 = arith.constant 0 : i32
    %c0_i32_1 = arith.constant 0 : i32
    return %c0_i32, %c0_i32_0 : i32, i32
  }
}

</mosaic_0001>

<llo_original>
// kernel: encode_ln_classify.2
$region0: #{encode_ln_classify.2}
  #allocation0 [shape = 'u32[]', space=smem, size = 0x4, offset = 0x4, fixed_abs, tag = 'smem constant byte address 0x4 - core index']
  #allocation1 [shape = 'u32[144,128]{1,0:T(1,128)}', space=vmem, size = 0x12000, scoped, tag = 'internal scratch']
  %s0 = inlined_call_operand.vmem [shape: f32[320,2048], index: 0, kind: input, shape index: {}]
  %s1 = inlined_call_operand.vmem [shape: f32[2048,128], index: 1, kind: input, shape index: {}]
  %s2 = inlined_call_operand.vmem [shape: f32[320,128], index: 2, kind: output, shape index: {}]
  %s3 = sld [smem:[#allocation0]]
  $region41: #{encode_ln_classify.2} parent=0
    _
  %s5 = ssub.s32 1, %s3
  %s6 = scalar_select 0, %s5, %s3
  loop: start=0, step=1, limit=4
  $region2: #{encode_ln_classify.2} parent=0 // loop_pre_header
    _
  $region3: #{encode_ln_classify.2} parent=0 // loop_header
    %s8 = sphi 0, %s12
    %p9 = scmp.ge.s32.totalorder %s8, 4
    %s18 = sphi 0, %s20
    %s21 = sphi 0, %s18
    %s22 = sphi 0, %s21
    %s38 = sphi 0, %s22
    %s42 = sphi 0, %s42
    %s44 = sphi 0, %s42
    %s45 = sphi 0, %s44
    %s59 = sphi 0, %s45
    %s65 = sphi 0, %s67
    %s68 = sphi 0, %s65
    %s69 = sphi 0, %s68
    %s85 = sphi 0, %s69
  $region4: #{encode_ln_classify.2} parent=0 // loop_header_branch
    %11 = sbr.rel (%p9) target = $region8
  $region5: #{encode_ln_classify.2} parent=0 // loop_body
    %s13 = ssub.s32 %s8, 1
    %s14 = ssub.s32 %s8, 2
    %s15 = sadd.s32 %s8, 1
    %s16 = ssub.s32 %s8, %s15
    %p17 = scmp.eq.s32.totalorder %s16, 0
    %s19 = sadd.s32 %s18, 1
    %s20 = scalar_select %p17, %s18, %s19
    %p23 = pneg %p17
    %p24 = scmp.eq.s32.totalorder %s8, 1
    %p25 = por %p23, %p24
    %p26 = scmp.ne.s32.totalorder %s18, %s21
    %p27 = scmp.eq.s32.totalorder %s8, 0
    %p28 = por %p26, %p27
    %p29 = scmp.ne.s32.totalorder %s18, %s21
    %p30 = scmp.eq.s32.totalorder %s13, 1
    %p31 = por %p29, %p30
    %p32 = scmp.ne.s32.totalorder %s21, %s22
    %p33 = scmp.eq.s32.totalorder %s13, 0
    %p34 = por %p32, %p33
    %p35 = scmp.ne.s32.totalorder %s21, %s22
    %p36 = scmp.eq.s32.totalorder %s14, 1
    %p37 = por %p35, %p36
    %p39 = scmp.ne.s32.totalorder %s22, %s38
    %p40 = scmp.eq.s32.totalorder %s14, 0
    %p41 = por %p39, %p40
    %s43 = sadd.s32 %s42, 1
    %p46 = scmp.eq.s32.totalorder %s8, 1
    %p47 = scmp.ne.s32.totalorder %s42, %s44
    %p48 = scmp.eq.s32.totalorder %s8, 0
    %p49 = por %p47, %p48
    %p50 = scmp.ne.s32.totalorder %s42, %s44
    %p51 = scmp.eq.s32.totalorder %s13, 1
    %p52 = por %p50, %p51
    %p53 = scmp.ne.s32.totalorder %s44, %s45
    %p54 = scmp.eq.s32.totalorder %s13, 0
    %p55 = por %p53, %p54
    %p56 = scmp.ne.s32.totalorder %s44, %s45
    %p57 = scmp.eq.s32.totalorder %s14, 1
    %p58 = por %p56, %p57
    %p60 = scmp.ne.s32.totalorder %s45, %s59
    %p61 = scmp.eq.s32.totalorder %s14, 0
    %p62 = por %p60, %p61
    %s63 = ssub.s32 %s8, %s15
    %p64 = scmp.eq.s32.totalorder %s63, 0
    %s66 = sadd.s32 %s65, 1
    %s67 = scalar_select %p64, %s65, %s66
    %p70 = pneg %p64
    %p71 = scmp.eq.s32.totalorder %s8, 1
    %p72 = por %p70, %p71
    %p73 = scmp.ne.s32.totalorder %s65, %s68
    %p74 = scmp.eq.s32.totalorder %s8, 0
    %p75 = por %p73, %p74
    %p76 = scmp.ne.s32.totalorder %s65, %s68
    %p77 = scmp.eq.s32.totalorder %s13, 1
    %p78 = por %p76, %p77
    %p79 = scmp.ne.s32.totalorder %s68, %s69
    %p80 = scmp.eq.s32.totalorder %s13, 0
    %p81 = por %p79, %p80
    %p82 = scmp.ne.s32.totalorder %s68, %s69
    %p83 = scmp.eq.s32.totalorder %s14, 1
    %p84 = por %p82, %p83
    %p86 = scmp.ne.s32.totalorder %s69, %s85
    %p87 = scmp.eq.s32.totalorder %s14, 0
    %p88 = por %p86, %p87
    %p89 = scmp.le.s32.totalorder 1, %s8
    %p90 = scmp.lt.s32.totalorder %s8, 3
    %p91 = pnand %p89, %p90
    %p92 = pneg %p91
    // Predicated region
    $region9: #{encode_ln_classify.2} parent=5 // pred_check
      _
    $region10: #{encode_ln_classify.2} parent=5 // pred_check_branch
      %94 = sbr.rel (%p91) target = $region12
    $region11: #{encode_ln_classify.2} parent=5 // pred_region
      %s95 = ssub.s32 %s8, 1
      // Predicated region
      $region13: #{encode_ln_classify.2} parent=11 // pred_check
        %p96 = pneg %p55
      $region14: #{encode_ln_classify.2} parent=11 // pred_check_branch
        %98 = sbr.rel (%p96) target = $region16
      $region15: #{encode_ln_classify.2} parent=11 // pred_region
        _
      $region16: #{encode_ln_classify.2} parent=11 // pred_fallthru
        _
    $region12: #{encode_ln_classify.2} parent=5 // pred_fallthru
      _
    %p99 = scmp.lt.s32.totalorder %s8, 2
    // Predicated region
    $region17: #{encode_ln_classify.2} parent=5 // pred_check
      %p100 = pneg %p99
    $region18: #{encode_ln_classify.2} parent=5 // pred_check_branch
      %102 = sbr.rel (%p100) target = $region20
    $region19: #{encode_ln_classify.2} parent=5 // pred_region
      // Predicated region
      $region21: #{encode_ln_classify.2} parent=19 // pred_check
        %p103 = pneg %p28
      $region22: #{encode_ln_classify.2} parent=19 // pred_check_branch
        %105 = sbr.rel (%p103) target = $region24
      $region23: #{encode_ln_classify.2} parent=19 // pred_region
        %s106 = smul.u32 20, %s8
        %p107 = scmp.lt.s32.totalorder %s106, 39
        %s108 = scalar_select %p107, %s106, 39
        %s109 = smul.addr %s108, 16
        %s110 = smul.addr %s109, 8
        %s111 = scalar_lea.vmem %s0, %s110
        %s112 = smul.u32 20, %s8
      $region24: #{encode_ln_classify.2} parent=19 // pred_fallthru
        _
    $region20: #{encode_ln_classify.2} parent=5 // pred_fallthru
      _
    %p113 = scmp.le.s32.totalorder 1, %s8
    %p114 = scmp.lt.s32.totalorder %s8, 3
    %p115 = pnand %p113, %p114
    %p116 = pneg %p115
    // Predicated region
    $region25: #{encode_ln_classify.2} parent=5 // pred_check
      _
    $region26: #{encode_ln_classify.2} parent=5 // pred_check_branch
      %118 = sbr.rel (%p115) target = $region28
    $region27: #{encode_ln_classify.2} parent=5 // pred_region
      %s119 = ssub.s32 %s8, 1
      %s120 = smul.u32 20, %s13
      %p121 = scmp.lt.s32.totalorder %s120, 39
      %s122 = scalar_select %p121, %s120, 39
      %s123 = smul.addr %s122, 16
      %s124 = smul.addr %s123, 8
      %s125 = scalar_lea.vmem %s0, %s124
      %p126 = pneg %p34
      %p127 = pneg %p31
      %p128 = pneg %p55
      %p129 = pneg %p52
      %p130 = pneg %p81
      %p131 = pneg %p78
      %s132 = smul.u32 20, %s13
      %p133 = scmp.lt.s32.totalorder %s132, 39
      %s134 = scalar_select %p133, %s132, 39
      %s135 = smul.addr %s134, 8
      %s136 = scalar_lea.vmem %s2, %s135
      %s137 = smul.u32 20, %s13
      %p138 = scmp.lt.s32.totalorder %s137, 39
      %s139 = scalar_select %p138, %s137, 39
      %s140 = smul.addr %s139, 16
      %s141 = smul.addr %s140, 8
      %s142 = scalar_lea.vmem %s0, %s141
      %s143 = smul.u32 20, %s13
      %s144 = smul.u32 20, %s13
      %p145 = scmp.lt.s32.totalorder %s144, 39
      %s146 = scalar_select %p145, %s144, 39
      %s147 = smul.addr %s146, 8
      %s148 = scalar_lea.vmem %s2, %s147
      %s149 = smul.u32 20, %s13
      %v150 = vld [vmem:[%s142] sm:$0xff]
      %v151 = vld [vmem:[%s142 + $0x8] sm:$0xff]
      %v152 = vld [vmem:[%s142 + $0x10] sm:$0xff]
      %v153 = vld [vmem:[%s142 + $0x18] sm:$0xff]
      %v154 = vld [vmem:[%s142 + $0x20] sm:$0xff]
      %v155 = vld [vmem:[%s142 + $0x28] sm:$0xff]
      %v156 = vld [vmem:[%s142 + $0x30] sm:$0xff]
      %v157 = vld [vmem:[%s142 + $0x38] sm:$0xff]
      %v158 = vld [vmem:[%s142 + $0x40] sm:$0xff]
      %v159 = vld [vmem:[%s142 + $0x48] sm:$0xff]
      %v160 = vld [vmem:[%s142 + $0x50] sm:$0xff]
      %v161 = vld [vmem:[%s142 + $0x58] sm:$0xff]
      %v162 = vld [vmem:[%s142 + $0x60] sm:$0xff]
      %v163 = vld [vmem:[%s142 + $0x68] sm:$0xff]
      %v164 = vld [vmem:[%s142 + $0x70] sm:$0xff]
      %v165 = vld [vmem:[%s142 + $0x78] sm:$0xff]
      %v166 = vld [vmem:[%s142 + $0x80] sm:$0xff]
      %v167 = vld [vmem:[%s142 + $0x88] sm:$0xff]
      %v168 = vld [vmem:[%s142 + $0x90] sm:$0xff]
      %v169 = vld [vmem:[%s142 + $0x98] sm:$0xff]
      %v170 = vld [vmem:[%s142 + $0xa0] sm:$0xff]
      %v171 = vld [vmem:[%s142 + $0xa8] sm:$0xff]
      %v172 = vld [vmem:[%s142 + $0xb0] sm:$0xff]
      %v173 = vld [vmem:[%s142 + $0xb8] sm:$0xff]
      %v174 = vld [vmem:[%s142 + $0xc0] sm:$0xff]
      %v175 = vld [vmem:[%s142 + $0xc8] sm:$0xff]
      %v176 = vld [vmem:[%s142 + $0xd0] sm:$0xff]
      %v177 = vld [vmem:[%s142 + $0xd8] sm:$0xff]
      %v178 = vld [vmem:[%s142 + $0xe0] sm:$0xff]
      %v179 = vld [vmem:[%s142 + $0xe8] sm:$0xff]
      %v180 = vld [vmem:[%s142 + $0xf0] sm:$0xff]
      %v181 = vld [vmem:[%s142 + $0xf8] sm:$0xff]
      %v182 = vld [vmem:[%s142 + $0x100] sm:$0xff]
      %v183 = vld [vmem:[%s142 + $0x108] sm:$0xff]
      %v184 = vld [vmem:[%s142 + $0x110] sm:$0xff]
      %v185 = vld [vmem:[%s142 + $0x118] sm:$0xff]
      %v186 = vld [vmem:[%s142 + $0x120] sm:$0xff]
      %v187 = vld [vmem:[%s142 + $0x128] sm:$0xff]
      %v188 = vld [vmem:[%s142 + $0x130] sm:$0xff]
      %v189 = vld [vmem:[%s142 + $0x138] sm:$0xff]
      %v190 = vld [vmem:[%s142 + $0x140] sm:$0xff]
      %v191 = vld [vmem:[%s142 + $0x148] sm:$0xff]
      %v192 = vld [vmem:[%s142 + $0x150] sm:$0xff]
      %v193 = vld [vmem:[%s142 + $0x158] sm:$0xff]
      %v194 = vld [vmem:[%s142 + $0x160] sm:$0xff]
      %v195 = vld [vmem:[%s142 + $0x168] sm:$0xff]
      %v196 = vld [vmem:[%s142 + $0x170] sm:$0xff]
      %v197 = vld [vmem:[%s142 + $0x178] sm:$0xff]
      %v198 = vld [vmem:[%s142 + $0x180] sm:$0xff]
      %v199 = vld [vmem:[%s142 + $0x188] sm:$0xff]
      %v200 = vld [vmem:[%s142 + $0x190] sm:$0xff]
      %v201 = vld [vmem:[%s142 + $0x198] sm:$0xff]
      %v202 = vld [vmem:[%s142 + $0x1a0] sm:$0xff]
      %v203 = vld [vmem:[%s142 + $0x1a8] sm:$0xff]
      %v204 = vld [vmem:[%s142 + $0x1b0] sm:$0xff]
      %v205 = vld [vmem:[%s142 + $0x1b8] sm:$0xff]
      %v206 = vld [vmem:[%s142 + $0x1c0] sm:$0xff]
      %v207 = vld [vmem:[%s142 + $0x1c8] sm:$0xff]
      %v208 = vld [vmem:[%s142 + $0x1d0] sm:$0xff]
      %v209 = vld [vmem:[%s142 + $0x1d8] sm:$0xff]
      %v210 = vld [vmem:[%s142 + $0x1e0] sm:$0xff]
      %v211 = vld [vmem:[%s142 + $0x1e8] sm:$0xff]
      %v212 = vld [vmem:[%s142 + $0x1f0] sm:$0xff]
      %v213 = vld [vmem:[%s142 + $0x1f8] sm:$0xff]
      %v214 = vld [vmem:[%s142 + $0x200] sm:$0xff]
      %v215 = vld [vmem:[%s142 + $0x208] sm:$0xff]
      %v216 = vld [vmem:[%s142 + $0x210] sm:$0xff]
      %v217 = vld [vmem:[%s142 + $0x218] sm:$0xff]
      %v218 = vld [vmem:[%s142 + $0x220] sm:$0xff]
      %v219 = vld [vmem:[%s142 + $0x228] sm:$0xff]
      %v220 = vld [vmem:[%s142 + $0x230] sm:$0xff]
      %v221 = vld [vmem:[%s142 + $0x238] sm:$0xff]
      %v222 = vld [vmem:[%s142 + $0x240] sm:$0xff]
      %v223 = vld [vmem:[%s142 + $0x248] sm:$0xff]
      %v224 = vld [vmem:[%s142 + $0x250] sm:$0xff]
      %v225 = vld [vmem:[%s142 + $0x258] sm:$0xff]
      %v226 = vld [vmem:[%s142 + $0x260] sm:$0xff]
      %v227 = vld [vmem:[%s142 + $0x268] sm:$0xff]
      %v228 = vld [vmem:[%s142 + $0x270] sm:$0xff]
      %v229 = vld [vmem:[%s142 + $0x278] sm:$0xff]
      %v230 = vld [vmem:[%s142 + $0x280] sm:$0xff]
      %v231 = vld [vmem:[%s142 + $0x288] sm:$0xff]
      %v232 = vld [vmem:[%s142 + $0x290] sm:$0xff]
      %v233 = vld [vmem:[%s142 + $0x298] sm:$0xff]
      %v234 = vld [vmem:[%s142 + $0x2a0] sm:$0xff]
      %v235 = vld [vmem:[%s142 + $0x2a8] sm:$0xff]
      %v236 = vld [vmem:[%s142 + $0x2b0] sm:$0xff]
      %v237 = vld [vmem:[%s142 + $0x2b8] sm:$0xff]
      %v238 = vld [vmem:[%s142 + $0x2c0] sm:$0xff]
      %v239 = vld [vmem:[%s142 + $0x2c8] sm:$0xff]
      %v240 = vld [vmem:[%s142 + $0x2d0] sm:$0xff]
      %v241 = vld [vmem:[%s142 + $0x2d8] sm:$0xff]
      %v242 = vld [vmem:[%s142 + $0x2e0] sm:$0xff]
      %v243 = vld [vmem:[%s142 + $0x2e8] sm:$0xff]
      %v244 = vld [vmem:[%s142 + $0x2f0] sm:$0xff]
      %v245 = vld [vmem:[%s142 + $0x2f8] sm:$0xff]
      %v246 = vld [vmem:[%s142 + $0x300] sm:$0xff]
      %v247 = vld [vmem:[%s142 + $0x308] sm:$0xff]
      %v248 = vld [vmem:[%s142 + $0x310] sm:$0xff]
      %v249 = vld [vmem:[%s142 + $0x318] sm:$0xff]
      %v250 = vld [vmem:[%s142 + $0x320] sm:$0xff]
      %v251 = vld [vmem:[%s142 + $0x328] sm:$0xff]
      %v252 = vld [vmem:[%s142 + $0x330] sm:$0xff]
      %v253 = vld [vmem:[%s142 + $0x338] sm:$0xff]
      %v254 = vld [vmem:[%s142 + $0x340] sm:$0xff]
      %v255 = vld [vmem:[%s142 + $0x348] sm:$0xff]
      %v256 = vld [vmem:[%s142 + $0x350] sm:$0xff]
      %v257 = vld [vmem:[%s142 + $0x358] sm:$0xff]
      %v258 = vld [vmem:[%s142 + $0x360] sm:$0xff]
      %v259 = vld [vmem:[%s142 + $0x368] sm:$0xff]
      %v260 = vld [vmem:[%s142 + $0x370] sm:$0xff]
      %v261 = vld [vmem:[%s142 + $0x378] sm:$0xff]
      %v262 = vld [vmem:[%s142 + $0x380] sm:$0xff]
      %v263 = vld [vmem:[%s142 + $0x388] sm:$0xff]
      %v264 = vld [vmem:[%s142 + $0x390] sm:$0xff]
      %v265 = vld [vmem:[%s142 + $0x398] sm:$0xff]
      %v266 = vld [vmem:[%s142 + $0x3a0] sm:$0xff]
      %v267 = vld [vmem:[%s142 + $0x3a8] sm:$0xff]
      %v268 = vld [vmem:[%s142 + $0x3b0] sm:$0xff]
      %v269 = vld [vmem:[%s142 + $0x3b8] sm:$0xff]
      %v270 = vld [vmem:[%s142 + $0x3c0] sm:$0xff]
      %v271 = vld [vmem:[%s142 + $0x3c8] sm:$0xff]
      %v272 = vld [vmem:[%s142 + $0x3d0] sm:$0xff]
      %v273 = vld [vmem:[%s142 + $0x3d8] sm:$0xff]
      %v274 = vld [vmem:[%s142 + $0x3e0] sm:$0xff]
      %v275 = vld [vmem:[%s142 + $0x3e8] sm:$0xff]
      %v276 = vld [vmem:[%s142 + $0x3f0] sm:$0xff]
      %v277 = vld [vmem:[%s142 + $0x3f8] sm:$0xff]
      %v278 = vld [vmem:[%s142 + $0x400] sm:$0xff]
      %v279 = vld [vmem:[%s142 + $0x408] sm:$0xff]
      %v280 = vld [vmem:[%s142 + $0x410] sm:$0xff]
      %v281 = vld [vmem:[%s142 + $0x418] sm:$0xff]
      %v282 = vld [vmem:[%s142 + $0x420] sm:$0xff]
      %v283 = vld [vmem:[%s142 + $0x428] sm:$0xff]
      %v284 = vld [vmem:[%s142 + $0x430] sm:$0xff]
      %v285 = vld [vmem:[%s142 + $0x438] sm:$0xff]
      %v286 = vld [vmem:[%s142 + $0x440] sm:$0xff]
      %v287 = vld [vmem:[%s142 + $0x448] sm:$0xff]
      %v288 = vld [vmem:[%s142 + $0x450] sm:$0xff]
      %v289 = vld [vmem:[%s142 + $0x458] sm:$0xff]
      %v290 = vld [vmem:[%s142 + $0x460] sm:$0xff]
      %v291 = vld [vmem:[%s142 + $0x468] sm:$0xff]
      %v292 = vld [vmem:[%s142 + $0x470] sm:$0xff]
      %v293 = vld [vmem:[%s142 + $0x478] sm:$0xff]
      %v294 = vld [vmem:[%s142 + $0x480] sm:$0xff]
      %v295 = vld [vmem:[%s142 + $0x488] sm:$0xff]
      %v296 = vld [vmem:[%s142 + $0x490] sm:$0xff]
      %v297 = vld [vmem:[%s142 + $0x498] sm:$0xff]
      %v298 = vld [vmem:[%s142 + $0x4a0] sm:$0xff]
      %v299 = vld [vmem:[%s142 + $0x4a8] sm:$0xff]
      %v300 = vld [vmem:[%s142 + $0x4b0] sm:$0xff]
      %v301 = vld [vmem:[%s142 + $0x4b8] sm:$0xff]
      %v302 = vld [vmem:[%s142 + $0x4c0] sm:$0xff]
      %v303 = vld [vmem:[%s142 + $0x4c8] sm:$0xff]
      %v304 = vld [vmem:[%s142 + $0x4d0] sm:$0xff]
      %v305 = vld [vmem:[%s142 + $0x4d8] sm:$0xff]
      %v306 = vld [vmem:[%s142 + $0x4e0] sm:$0xff]
      %v307 = vld [vmem:[%s142 + $0x4e8] sm:$0xff]
      %v308 = vld [vmem:[%s142 + $0x4f0] sm:$0xff]
      %v309 = vld [vmem:[%s142 + $0x4f8] sm:$0xff]
      %v310 = vld [vmem:[%s142 + $0x500] sm:$0xff]
      %v311 = vld [vmem:[%s142 + $0x508] sm:$0xff]
      %v312 = vld [vmem:[%s142 + $0x510] sm:$0xff]
      %v313 = vld [vmem:[%s142 + $0x518] sm:$0xff]
      %v314 = vld [vmem:[%s142 + $0x520] sm:$0xff]
      %v315 = vld [vmem:[%s142 + $0x528] sm:$0xff]
      %v316 = vld [vmem:[%s142 + $0x530] sm:$0xff]
      %v317 = vld [vmem:[%s142 + $0x538] sm:$0xff]
      %v318 = vld [vmem:[%s142 + $0x540] sm:$0xff]
      %v319 = vld [vmem:[%s142 + $0x548] sm:$0xff]
      %v320 = vld [vmem:[%s142 + $0x550] sm:$0xff]
      %v321 = vld [vmem:[%s142 + $0x558] sm:$0xff]
      %v322 = vld [vmem:[%s142 + $0x560] sm:$0xff]
      %v323 = vld [vmem:[%s142 + $0x568] sm:$0xff]
      %v324 = vld [vmem:[%s142 + $0x570] sm:$0xff]
      %v325 = vld [vmem:[%s142 + $0x578] sm:$0xff]
      %v326 = vld [vmem:[%s142 + $0x580] sm:$0xff]
      %v327 = vld [vmem:[%s142 + $0x588] sm:$0xff]
      %v328 = vld [vmem:[%s142 + $0x590] sm:$0xff]
      %v329 = vld [vmem:[%s142 + $0x598] sm:$0xff]
      %v330 = vld [vmem:[%s142 + $0x5a0] sm:$0xff]
      %v331 = vld [vmem:[%s142 + $0x5a8] sm:$0xff]
      %v332 = vld [vmem:[%s142 + $0x5b0] sm:$0xff]
      %v333 = vld [vmem:[%s142 + $0x5b8] sm:$0xff]
      %v334 = vld [vmem:[%s142 + $0x5c0] sm:$0xff]
      %v335 = vld [vmem:[%s142 + $0x5c8] sm:$0xff]
      %v336 = vld [vmem:[%s142 + $0x5d0] sm:$0xff]
      %v337 = vld [vmem:[%s142 + $0x5d8] sm:$0xff]
      %v338 = vld [vmem:[%s142 + $0x5e0] sm:$0xff]
      %v339 = vld [vmem:[%s142 + $0x5e8] sm:$0xff]
      %v340 = vld [vmem:[%s142 + $0x5f0] sm:$0xff]
      %v341 = vld [vmem:[%s142 + $0x5f8] sm:$0xff]
      %v342 = vld [vmem:[%s142 + $0x600] sm:$0xff]
      %v343 = vld [vmem:[%s142 + $0x608] sm:$0xff]
      %v344 = vld [vmem:[%s142 + $0x610] sm:$0xff]
      %v345 = vld [vmem:[%s142 + $0x618] sm:$0xff]
      %v346 = vld [vmem:[%s142 + $0x620] sm:$0xff]
      %v347 = vld [vmem:[%s142 + $0x628] sm:$0xff]
      %v348 = vld [vmem:[%s142 + $0x630] sm:$0xff]
      %v349 = vld [vmem:[%s142 + $0x638] sm:$0xff]
      %v350 = vld [vmem:[%s142 + $0x640] sm:$0xff]
      %v351 = vld [vmem:[%s142 + $0x648] sm:$0xff]
      %v352 = vld [vmem:[%s142 + $0x650] sm:$0xff]
      %v353 = vld [vmem:[%s142 + $0x658] sm:$0xff]
      %v354 = vld [vmem:[%s142 + $0x660] sm:$0xff]
      %v355 = vld [vmem:[%s142 + $0x668] sm:$0xff]
      %v356 = vld [vmem:[%s142 + $0x670] sm:$0xff]
      %v357 = vld [vmem:[%s142 + $0x678] sm:$0xff]
      %v358 = vld [vmem:[%s142 + $0x680] sm:$0xff]
      %v359 = vld [vmem:[%s142 + $0x688] sm:$0xff]
      %v360 = vld [vmem:[%s142 + $0x690] sm:$0xff]
      %v361 = vld [vmem:[%s142 + $0x698] sm:$0xff]
      %v362 = vld [vmem:[%s142 + $0x6a0] sm:$0xff]
      %v363 = vld [vmem:[%s142 + $0x6a8] sm:$0xff]
      %v364 = vld [vmem:[%s142 + $0x6b0] sm:$0xff]
      %v365 = vld [vmem:[%s142 + $0x6b8] sm:$0xff]
      %v366 = vld [vmem:[%s142 + $0x6c0] sm:$0xff]
      %v367 = vld [vmem:[%s142 + $0x6c8] sm:$0xff]
      %v368 = vld [vmem:[%s142 + $0x6d0] sm:$0xff]
      %v369 = vld [vmem:[%s142 + $0x6d8] sm:$0xff]
      %v370 = vld [vmem:[%s142 + $0x6e0] sm:$0xff]
      %v371 = vld [vmem:[%s142 + $0x6e8] sm:$0xff]
      %v372 = vld [vmem:[%s142 + $0x6f0] sm:$0xff]
      %v373 = vld [vmem:[%s142 + $0x6f8] sm:$0xff]
      %v374 = vld [vmem:[%s142 + $0x700] sm:$0xff]
      %v375 = vld [vmem:[%s142 + $0x708] sm:$0xff]
      %v376 = vld [vmem:[%s142 + $0x710] sm:$0xff]
      %v377 = vld [vmem:[%s142 + $0x718] sm:$0xff]
      %v378 = vld [vmem:[%s142 + $0x720] sm:$0xff]
      %v379 = vld [vmem:[%s142 + $0x728] sm:$0xff]
      %v380 = vld [vmem:[%s142 + $0x730] sm:$0xff]
      %v381 = vld [vmem:[%s142 + $0x738] sm:$0xff]
      %v382 = vld [vmem:[%s142 + $0x740] sm:$0xff]
      %v383 = vld [vmem:[%s142 + $0x748] sm:$0xff]
      %v384 = vld [vmem:[%s142 + $0x750] sm:$0xff]
      %v385 = vld [vmem:[%s142 + $0x758] sm:$0xff]
      %v386 = vld [vmem:[%s142 + $0x760] sm:$0xff]
      %v387 = vld [vmem:[%s142 + $0x768] sm:$0xff]
      %v388 = vld [vmem:[%s142 + $0x770] sm:$0xff]
      %v389 = vld [vmem:[%s142 + $0x778] sm:$0xff]
      %v390 = vld [vmem:[%s142 + $0x780] sm:$0xff]
      %v391 = vld [vmem:[%s142 + $0x788] sm:$0xff]
      %v392 = vld [vmem:[%s142 + $0x790] sm:$0xff]
      %v393 = vld [vmem:[%s142 + $0x798] sm:$0xff]
      %v394 = vld [vmem:[%s142 + $0x7a0] sm:$0xff]
      %v395 = vld [vmem:[%s142 + $0x7a8] sm:$0xff]
      %v396 = vld [vmem:[%s142 + $0x7b0] sm:$0xff]
      %v397 = vld [vmem:[%s142 + $0x7b8] sm:$0xff]
      %v398 = vld [vmem:[%s142 + $0x7c0] sm:$0xff]
      %v399 = vld [vmem:[%s142 + $0x7c8] sm:$0xff]
      %v400 = vld [vmem:[%s142 + $0x7d0] sm:$0xff]
      %v401 = vld [vmem:[%s142 + $0x7d8] sm:$0xff]
      %v402 = vld [vmem:[%s142 + $0x7e0] sm:$0xff]
      %v403 = vld [vmem:[%s142 + $0x7e8] sm:$0xff]
      %v404 = vld [vmem:[%s142 + $0x7f0] sm:$0xff]
      %v405 = vld [vmem:[%s142 + $0x7f8] sm:$0xff]
      %v406 = vld [vmem:[%s142 + $0x800] sm:$0xff]
      %v407 = vld [vmem:[%s142 + $0x808] sm:$0xff]
      %v408 = vld [vmem:[%s142 + $0x810] sm:$0xff]
      %v409 = vld [vmem:[%s142 + $0x818] sm:$0xff]
      %v410 = vld [vmem:[%s142 + $0x820] sm:$0xff]
      %v411 = vld [vmem:[%s142 + $0x828] sm:$0xff]
      %v412 = vld [vmem:[%s142 + $0x830] sm:$0xff]
      %v413 = vld [vmem:[%s142 + $0x838] sm:$0xff]
      %v414 = vld [vmem:[%s142 + $0x840] sm:$0xff]
      %v415 = vld [vmem:[%s142 + $0x848] sm:$0xff]
      %v416 = vld [vmem:[%s142 + $0x850] sm:$0xff]
      %v417 = vld [vmem:[%s142 + $0x858] sm:$0xff]
      %v418 = vld [vmem:[%s142 + $0x860] sm:$0xff]
      %v419 = vld [vmem:[%s142 + $0x868] sm:$0xff]
      %v420 = vld [vmem:[%s142 + $0x870] sm:$0xff]
      %v421 = vld [vmem:[%s142 + $0x878] sm:$0xff]
      %v422 = vld [vmem:[%s142 + $0x880] sm:$0xff]
      %v423 = vld [vmem:[%s142 + $0x888] sm:$0xff]
      %v424 = vld [vmem:[%s142 + $0x890] sm:$0xff]
      %v425 = vld [vmem:[%s142 + $0x898] sm:$0xff]
      %v426 = vld [vmem:[%s142 + $0x8a0] sm:$0xff]
      %v427 = vld [vmem:[%s142 + $0x8a8] sm:$0xff]
      %v428 = vld [vmem:[%s142 + $0x8b0] sm:$0xff]
      %v429 = vld [vmem:[%s142 + $0x8b8] sm:$0xff]
      %v430 = vld [vmem:[%s142 + $0x8c0] sm:$0xff]
      %v431 = vld [vmem:[%s142 + $0x8c8] sm:$0xff]
      %v432 = vld [vmem:[%s142 + $0x8d0] sm:$0xff]
      %v433 = vld [vmem:[%s142 + $0x8d8] sm:$0xff]
      %v434 = vld [vmem:[%s142 + $0x8e0] sm:$0xff]
      %v435 = vld [vmem:[%s142 + $0x8e8] sm:$0xff]
      %v436 = vld [vmem:[%s142 + $0x8f0] sm:$0xff]
      %v437 = vld [vmem:[%s142 + $0x8f8] sm:$0xff]
      %v438 = vld [vmem:[%s142 + $0x900] sm:$0xff]
      %v439 = vld [vmem:[%s142 + $0x908] sm:$0xff]
      %v440 = vld [vmem:[%s142 + $0x910] sm:$0xff]
      %v441 = vld [vmem:[%s142 + $0x918] sm:$0xff]
      %v442 = vld [vmem:[%s142 + $0x920] sm:$0xff]
      %v443 = vld [vmem:[%s142 + $0x928] sm:$0xff]
      %v444 = vld [vmem:[%s142 + $0x930] sm:$0xff]
      %v445 = vld [vmem:[%s142 + $0x938] sm:$0xff]
      %v446 = vld [vmem:[%s142 + $0x940] sm:$0xff]
      %v447 = vld [vmem:[%s142 + $0x948] sm:$0xff]
      %v448 = vld [vmem:[%s142 + $0x950] sm:$0xff]
      %v449 = vld [vmem:[%s142 + $0x958] sm:$0xff]
      %v450 = vld [vmem:[%s142 + $0x960] sm:$0xff]
      %v451 = vld [vmem:[%s142 + $0x968] sm:$0xff]
      %v452 = vld [vmem:[%s142 + $0x970] sm:$0xff]
      %v453 = vld [vmem:[%s142 + $0x978] sm:$0xff]
      %v454 = vld [vmem:[%s142 + $0x980] sm:$0xff]
      %v455 = vld [vmem:[%s142 + $0x988] sm:$0xff]
      %v456 = vld [vmem:[%s142 + $0x990] sm:$0xff]
      %v457 = vld [vmem:[%s142 + $0x998] sm:$0xff]
      %v458 = vld [vmem:[%s142 + $0x9a0] sm:$0xff]
      %v459 = vld [vmem:[%s142 + $0x9a8] sm:$0xff]
      %v460 = vld [vmem:[%s142 + $0x9b0] sm:$0xff]
      %v461 = vld [vmem:[%s142 + $0x9b8] sm:$0xff]
      %v462 = vld [vmem:[%s142 + $0x9c0] sm:$0xff]
      %v463 = vld [vmem:[%s142 + $0x9c8] sm:$0xff]
      %v464 = vld [vmem:[%s142 + $0x9d0] sm:$0xff]
      %v465 = vld [vmem:[%s142 + $0x9d8] sm:$0xff]
      %v466 = vld [vmem:[%s142 + $0x9e0] sm:$0xff]
      %v467 = vld [vmem:[%s142 + $0x9e8] sm:$0xff]
      %v468 = vld [vmem:[%s142 + $0x9f0] sm:$0xff]
      %v469 = vld [vmem:[%s142 + $0x9f8] sm:$0xff]
      %v470 = vld [vmem:[%s1] sm:$0xff]
      %v471 = vld [vmem:[%s1 + $0x8] sm:$0xff]
      %v472 = vld [vmem:[%s1 + $0x10] sm:$0xff]
      %v473 = vld [vmem:[%s1 + $0x18] sm:$0xff]
      %v474 = vld [vmem:[%s1 + $0x20] sm:$0xff]
      %v475 = vld [vmem:[%s1 + $0x28] sm:$0xff]
      %v476 = vld [vmem:[%s1 + $0x30] sm:$0xff]
      %v477 = vld [vmem:[%s1 + $0x38] sm:$0xff]
      %v478 = vld [vmem:[%s1 + $0x40] sm:$0xff]
      %v479 = vld [vmem:[%s1 + $0x48] sm:$0xff]
      %v480 = vld [vmem:[%s1 + $0x50] sm:$0xff]
      %v481 = vld [vmem:[%s1 + $0x58] sm:$0xff]
      %v482 = vld [vmem:[%s1 + $0x60] sm:$0xff]
      %v483 = vld [vmem:[%s1 + $0x68] sm:$0xff]
      %v484 = vld [vmem:[%s1 + $0x70] sm:$0xff]
      %v485 = vld [vmem:[%s1 + $0x78] sm:$0xff]
      %v486 = vld [vmem:[%s1 + $0x80] sm:$0xff]
      %v487 = vld [vmem:[%s1 + $0x88] sm:$0xff]
      %v488 = vld [vmem:[%s1 + $0x90] sm:$0xff]
      %v489 = vld [vmem:[%s1 + $0x98] sm:$0xff]
      %v490 = vld [vmem:[%s1 + $0xa0] sm:$0xff]
      %v491 = vld [vmem:[%s1 + $0xa8] sm:$0xff]
      %v492 = vld [vmem:[%s1 + $0xb0] sm:$0xff]
      %v493 = vld [vmem:[%s1 + $0xb8] sm:$0xff]
      %v494 = vld [vmem:[%s1 + $0xc0] sm:$0xff]
      %v495 = vld [vmem:[%s1 + $0xc8] sm:$0xff]
      %v496 = vld [vmem:[%s1 + $0xd0] sm:$0xff]
      %v497 = vld [vmem:[%s1 + $0xd8] sm:$0xff]
      %v498 = vld [vmem:[%s1 + $0xe0] sm:$0xff]
      %v499 = vld [vmem:[%s1 + $0xe8] sm:$0xff]
      %v500 = vld [vmem:[%s1 + $0xf0] sm:$0xff]
      %v501 = vld [vmem:[%s1 + $0xf8] sm:$0xff]
      %v502 = vld [vmem:[%s1 + $0x100] sm:$0xff]
      %v503 = vld [vmem:[%s1 + $0x108] sm:$0xff]
      %v504 = vld [vmem:[%s1 + $0x110] sm:$0xff]
      %v505 = vld [vmem:[%s1 + $0x118] sm:$0xff]
      %v506 = vld [vmem:[%s1 + $0x120] sm:$0xff]
      %v507 = vld [vmem:[%s1 + $0x128] sm:$0xff]
      %v508 = vld [vmem:[%s1 + $0x130] sm:$0xff]
      %v509 = vld [vmem:[%s1 + $0x138] sm:$0xff]
      %v510 = vld [vmem:[%s1 + $0x140] sm:$0xff]
      %v511 = vld [vmem:[%s1 + $0x148] sm:$0xff]
      %v512 = vld [vmem:[%s1 + $0x150] sm:$0xff]
      %v513 = vld [vmem:[%s1 + $0x158] sm:$0xff]
      %v514 = vld [vmem:[%s1 + $0x160] sm:$0xff]
      %v515 = vld [vmem:[%s1 + $0x168] sm:$0xff]
      %v516 = vld [vmem:[%s1 + $0x170] sm:$0xff]
      %v517 = vld [vmem:[%s1 + $0x178] sm:$0xff]
      %v518 = vld [vmem:[%s1 + $0x180] sm:$0xff]
      %v519 = vld [vmem:[%s1 + $0x188] sm:$0xff]
      %v520 = vld [vmem:[%s1 + $0x190] sm:$0xff]
      %v521 = vld [vmem:[%s1 + $0x198] sm:$0xff]
      %v522 = vld [vmem:[%s1 + $0x1a0] sm:$0xff]
      %v523 = vld [vmem:[%s1 + $0x1a8] sm:$0xff]
      %v524 = vld [vmem:[%s1 + $0x1b0] sm:$0xff]
      %v525 = vld [vmem:[%s1 + $0x1b8] sm:$0xff]
      %v526 = vld [vmem:[%s1 + $0x1c0] sm:$0xff]
      %v527 = vld [vmem:[%s1 + $0x1c8] sm:$0xff]
      %v528 = vld [vmem:[%s1 + $0x1d0] sm:$0xff]
      %v529 = vld [vmem:[%s1 + $0x1d8] sm:$0xff]
      %v530 = vld [vmem:[%s1 + $0x1e0] sm:$0xff]
      %v531 = vld [vmem:[%s1 + $0x1e8] sm:$0xff]
      %v532 = vld [vmem:[%s1 + $0x1f0] sm:$0xff]
      %v533 = vld [vmem:[%s1 + $0x1f8] sm:$0xff]
      %v534 = vld [vmem:[%s1 + $0x200] sm:$0xff]
      %v535 = vld [vmem:[%s1 + $0x208] sm:$0xff]
      %v536 = vld [vmem:[%s1 + $0x210] sm:$0xff]
      %v537 = vld [vmem:[%s1 + $0x218] sm:$0xff]
      %v538 = vld [vmem:[%s1 + $0x220] sm:$0xff]
      %v539 = vld [vmem:[%s1 + $0x228] sm:$0xff]
      %v540 = vld [vmem:[%s1 + $0x230] sm:$0xff]
      %v541 = vld [vmem:[%s1 + $0x238] sm:$0xff]
      %v542 = vld [vmem:[%s1 + $0x240] sm:$0xff]
      %v543 = vld [vmem:[%s1 + $0x248] sm:$0xff]
      %v544 = vld [vmem:[%s1 + $0x250] sm:$0xff]
      %v545 = vld [vmem:[%s1 + $0x258] sm:$0xff]
      %v546 = vld [vmem:[%s1 + $0x260] sm:$0xff]
      %v547 = vld [vmem:[%s1 + $0x268] sm:$0xff]
      %v548 = vld [vmem:[%s1 + $0x270] sm:$0xff]
      %v549 = vld [vmem:[%s1 + $0x278] sm:$0xff]
      %v550 = vld [vmem:[%s1 + $0x280] sm:$0xff]
      %v551 = vld [vmem:[%s1 + $0x288] sm:$0xff]
      %v552 = vld [vmem:[%s1 + $0x290] sm:$0xff]
      %v553 = vld [vmem:[%s1 + $0x298] sm:$0xff]
      %v554 = vld [vmem:[%s1 + $0x2a0] sm:$0xff]
      %v555 = vld [vmem:[%s1 + $0x2a8] sm:$0xff]
      %v556 = vld [vmem:[%s1 + $0x2b0] sm:$0xff]
      %v557 = vld [vmem:[%s1 + $0x2b8] sm:$0xff]
      %v558 = vld [vmem:[%s1 + $0x2c0] sm:$0xff]
      %v559 = vld [vmem:[%s1 + $0x2c8] sm:$0xff]
      %v560 = vld [vmem:[%s1 + $0x2d0] sm:$0xff]
      %v561 = vld [vmem:[%s1 + $0x2d8] sm:$0xff]
      %v562 = vld [vmem:[%s1 + $0x2e0] sm:$0xff]
      %v563 = vld [vmem:[%s1 + $0x2e8] sm:$0xff]
      %v564 = vld [vmem:[%s1 + $0x2f0] sm:$0xff]
      %v565 = vld [vmem:[%s1 + $0x2f8] sm:$0xff]
      %v566 = vld [vmem:[%s1 + $0x300] sm:$0xff]
      %v567 = vld [vmem:[%s1 + $0x308] sm:$0xff]
      %v568 = vld [vmem:[%s1 + $0x310] sm:$0xff]
      %v569 = vld [vmem:[%s1 + $0x318] sm:$0xff]
      %v570 = vld [vmem:[%s1 + $0x320] sm:$0xff]
      %v571 = vld [vmem:[%s1 + $0x328] sm:$0xff]
      %v572 = vld [vmem:[%s1 + $0x330] sm:$0xff]
      %v573 = vld [vmem:[%s1 + $0x338] sm:$0xff]
      %v574 = vld [vmem:[%s1 + $0x340] sm:$0xff]
      %v575 = vld [vmem:[%s1 + $0x348] sm:$0xff]
      %v576 = vld [vmem:[%s1 + $0x350] sm:$0xff]
      %v577 = vld [vmem:[%s1 + $0x358] sm:$0xff]
      %v578 = vld [vmem:[%s1 + $0x360] sm:$0xff]
      %v579 = vld [vmem:[%s1 + $0x368] sm:$0xff]
      %v580 = vld [vmem:[%s1 + $0x370] sm:$0xff]
      %v581 = vld [vmem:[%s1 + $0x378] sm:$0xff]
      %v582 = vld [vmem:[%s1 + $0x380] sm:$0xff]
      %v583 = vld [vmem:[%s1 + $0x388] sm:$0xff]
      %v584 = vld [vmem:[%s1 + $0x390] sm:$0xff]
      %v585 = vld [vmem:[%s1 + $0x398] sm:$0xff]
      %v586 = vld [vmem:[%s1 + $0x3a0] sm:$0xff]
      %v587 = vld [vmem:[%s1 + $0x3a8] sm:$0xff]
      %v588 = vld [vmem:[%s1 + $0x3b0] sm:$0xff]
      %v589 = vld [vmem:[%s1 + $0x3b8] sm:$0xff]
      %v590 = vld [vmem:[%s1 + $0x3c0] sm:$0xff]
      %v591 = vld [vmem:[%s1 + $0x3c8] sm:$0xff]
      %v592 = vld [vmem:[%s1 + $0x3d0] sm:$0xff]
      %v593 = vld [vmem:[%s1 + $0x3d8] sm:$0xff]
      %v594 = vld [vmem:[%s1 + $0x3e0] sm:$0xff]
      %v595 = vld [vmem:[%s1 + $0x3e8] sm:$0xff]
      %v596 = vld [vmem:[%s1 + $0x3f0] sm:$0xff]
      %v597 = vld [vmem:[%s1 + $0x3f8] sm:$0xff]
      %v598 = vld [vmem:[%s1 + $0x400] sm:$0xff]
      %v599 = vld [vmem:[%s1 + $0x408] sm:$0xff]
      %v600 = vld [vmem:[%s1 + $0x410] sm:$0xff]
      %v601 = vld [vmem:[%s1 + $0x418] sm:$0xff]
      %v602 = vld [vmem:[%s1 + $0x420] sm:$0xff]
      %v603 = vld [vmem:[%s1 + $0x428] sm:$0xff]
      %v604 = vld [vmem:[%s1 + $0x430] sm:$0xff]
      %v605 = vld [vmem:[%s1 + $0x438] sm:$0xff]
      %v606 = vld [vmem:[%s1 + $0x440] sm:$0xff]
      %v607 = vld [vmem:[%s1 + $0x448] sm:$0xff]
      %v608 = vld [vmem:[%s1 + $0x450] sm:$0xff]
      %v609 = vld [vmem:[%s1 + $0x458] sm:$0xff]
      %v610 = vld [vmem:[%s1 + $0x460] sm:$0xff]
      %v611 = vld [vmem:[%s1 + $0x468] sm:$0xff]
      %v612 = vld [vmem:[%s1 + $0x470] sm:$0xff]
      %v613 = vld [vmem:[%s1 + $0x478] sm:$0xff]
      %v614 = vld [vmem:[%s1 + $0x480] sm:$0xff]
      %v615 = vld [vmem:[%s1 + $0x488] sm:$0xff]
      %v616 = vld [vmem:[%s1 + $0x490] sm:$0xff]
      %v617 = vld [vmem:[%s1 + $0x498] sm:$0xff]
      %v618 = vld [vmem:[%s1 + $0x4a0] sm:$0xff]
      %v619 = vld [vmem:[%s1 + $0x4a8] sm:$0xff]
      %v620 = vld [vmem:[%s1 + $0x4b0] sm:$0xff]
      %v621 = vld [vmem:[%s1 + $0x4b8] sm:$0xff]
      %v622 = vld [vmem:[%s1 + $0x4c0] sm:$0xff]
      %v623 = vld [vmem:[%s1 + $0x4c8] sm:$0xff]
      %v624 = vld [vmem:[%s1 + $0x4d0] sm:$0xff]
      %v625 = vld [vmem:[%s1 + $0x4d8] sm:$0xff]
      %v626 = vld [vmem:[%s1 + $0x4e0] sm:$0xff]
      %v627 = vld [vmem:[%s1 + $0x4e8] sm:$0xff]
      %v628 = vld [vmem:[%s1 + $0x4f0] sm:$0xff]
      %v629 = vld [vmem:[%s1 + $0x4f8] sm:$0xff]
      %v630 = vld [vmem:[%s1 + $0x500] sm:$0xff]
      %v631 = vld [vmem:[%s1 + $0x508] sm:$0xff]
      %v632 = vld [vmem:[%s1 + $0x510] sm:$0xff]
      %v633 = vld [vmem:[%s1 + $0x518] sm:$0xff]
      %v634 = vld [vmem:[%s1 + $0x520] sm:$0xff]
      %v635 = vld [vmem:[%s1 + $0x528] sm:$0xff]
      %v636 = vld [vmem:[%s1 + $0x530] sm:$0xff]
      %v637 = vld [vmem:[%s1 + $0x538] sm:$0xff]
      %v638 = vld [vmem:[%s1 + $0x540] sm:$0xff]
      %v639 = vld [vmem:[%s1 + $0x548] sm:$0xff]
      %v640 = vld [vmem:[%s1 + $0x550] sm:$0xff]
      %v641 = vld [vmem:[%s1 + $0x558] sm:$0xff]
      %v642 = vld [vmem:[%s1 + $0x560] sm:$0xff]
      %v643 = vld [vmem:[%s1 + $0x568] sm:$0xff]
      %v644 = vld [vmem:[%s1 + $0x570] sm:$0xff]
      %v645 = vld [vmem:[%s1 + $0x578] sm:$0xff]
      %v646 = vld [vmem:[%s1 + $0x580] sm:$0xff]
      %v647 = vld [vmem:[%s1 + $0x588] sm:$0xff]
      %v648 = vld [vmem:[%s1 + $0x590] sm:$0xff]
      %v649 = vld [vmem:[%s1 + $0x598] sm:$0xff]
      %v650 = vld [vmem:[%s1 + $0x5a0] sm:$0xff]
      %v651 = vld [vmem:[%s1 + $0x5a8] sm:$0xff]
      %v652 = vld [vmem:[%s1 + $0x5b0] sm:$0xff]
      %v653 = vld [vmem:[%s1 + $0x5b8] sm:$0xff]
      %v654 = vld [vmem:[%s1 + $0x5c0] sm:$0xff]
      %v655 = vld [vmem:[%s1 + $0x5c8] sm:$0xff]
      %v656 = vld [vmem:[%s1 + $0x5d0] sm:$0xff]
      %v657 = vld [vmem:[%s1 + $0x5d8] sm:$0xff]
      %v658 = vld [vmem:[%s1 + $0x5e0] sm:$0xff]
      %v659 = vld [vmem:[%s1 + $0x5e8] sm:$0xff]
      %v660 = vld [vmem:[%s1 + $0x5f0] sm:$0xff]
      %v661 = vld [vmem:[%s1 + $0x5f8] sm:$0xff]
      %v662 = vld [vmem:[%s1 + $0x600] sm:$0xff]
      %v663 = vld [vmem:[%s1 + $0x608] sm:$0xff]
      %v664 = vld [vmem:[%s1 + $0x610] sm:$0xff]
      %v665 = vld [vmem:[%s1 + $0x618] sm:$0xff]
      %v666 = vld [vmem:[%s1 + $0x620] sm:$0xff]
      %v667 = vld [vmem:[%s1 + $0x628] sm:$0xff]
      %v668 = vld [vmem:[%s1 + $0x630] sm:$0xff]
      %v669 = vld [vmem:[%s1 + $0x638] sm:$0xff]
      %v670 = vld [vmem:[%s1 + $0x640] sm:$0xff]
      %v671 = vld [vmem:[%s1 + $0x648] sm:$0xff]
      %v672 = vld [vmem:[%s1 + $0x650] sm:$0xff]
      %v673 = vld [vmem:[%s1 + $0x658] sm:$0xff]
      %v674 = vld [vmem:[%s1 + $0x660] sm:$0xff]
      %v675 = vld [vmem:[%s1 + $0x668] sm:$0xff]
      %v676 = vld [vmem:[%s1 + $0x670] sm:$0xff]
      %v677 = vld [vmem:[%s1 + $0x678] sm:$0xff]
      %v678 = vld [vmem:[%s1 + $0x680] sm:$0xff]
      %v679 = vld [vmem:[%s1 + $0x688] sm:$0xff]
      %v680 = vld [vmem:[%s1 + $0x690] sm:$0xff]
      %v681 = vld [vmem:[%s1 + $0x698] sm:$0xff]
      %v682 = vld [vmem:[%s1 + $0x6a0] sm:$0xff]
      %v683 = vld [vmem:[%s1 + $0x6a8] sm:$0xff]
      %v684 = vld [vmem:[%s1 + $0x6b0] sm:$0xff]
      %v685 = vld [vmem:[%s1 + $0x6b8] sm:$0xff]
      %v686 = vld [vmem:[%s1 + $0x6c0] sm:$0xff]
      %v687 = vld [vmem:[%s1 + $0x6c8] sm:$0xff]
      %v688 = vld [vmem:[%s1 + $0x6d0] sm:$0xff]
      %v689 = vld [vmem:[%s1 + $0x6d8] sm:$0xff]
      %v690 = vld [vmem:[%s1 + $0x6e0] sm:$0xff]
      %v691 = vld [vmem:[%s1 + $0x6e8] sm:$0xff]
      %v692 = vld [vmem:[%s1 + $0x6f0] sm:$0xff]
      %v693 = vld [vmem:[%s1 + $0x6f8] sm:$0xff]
      %v694 = vld [vmem:[%s1 + $0x700] sm:$0xff]
      %v695 = vld [vmem:[%s1 + $0x708] sm:$0xff]
      %v696 = vld [vmem:[%s1 + $0x710] sm:$0xff]
      %v697 = vld [vmem:[%s1 + $0x718] sm:$0xff]
      %v698 = vld [vmem:[%s1 + $0x720] sm:$0xff]
      %v699 = vld [vmem:[%s1 + $0x728] sm:$0xff]
      %v700 = vld [vmem:[%s1 + $0x730] sm:$0xff]
      %v701 = vld [vmem:[%s1 + $0x738] sm:$0xff]
      %v702 = vld [vmem:[%s1 + $0x740] sm:$0xff]
      %v703 = vld [vmem:[%s1 + $0x748] sm:$0xff]
      %v704 = vld [vmem:[%s1 + $0x750] sm:$0xff]
      %v705 = vld [vmem:[%s1 + $0x758] sm:$0xff]
      %v706 = vld [vmem:[%s1 + $0x760] sm:$0xff]
      %v707 = vld [vmem:[%s1 + $0x768] sm:$0xff]
      %v708 = vld [vmem:[%s1 + $0x770] sm:$0xff]
      %v709 = vld [vmem:[%s1 + $0x778] sm:$0xff]
      %v710 = vld [vmem:[%s1 + $0x780] sm:$0xff]
      %v711 = vld [vmem:[%s1 + $0x788] sm:$0xff]
      %v712 = vld [vmem:[%s1 + $0x790] sm:$0xff]
      %v713 = vld [vmem:[%s1 + $0x798] sm:$0xff]
      %v714 = vld [vmem:[%s1 + $0x7a0] sm:$0xff]
      %v715 = vld [vmem:[%s1 + $0x7a8] sm:$0xff]
      %v716 = vld [vmem:[%s1 + $0x7b0] sm:$0xff]
      %v717 = vld [vmem:[%s1 + $0x7b8] sm:$0xff]
      %v718 = vld [vmem:[%s1 + $0x7c0] sm:$0xff]
      %v719 = vld [vmem:[%s1 + $0x7c8] sm:$0xff]
      %v720 = vld [vmem:[%s1 + $0x7d0] sm:$0xff]
      %v721 = vld [vmem:[%s1 + $0x7d8] sm:$0xff]
      %v722 = vld [vmem:[%s1 + $0x7e0] sm:$0xff]
      %v723 = vld [vmem:[%s1 + $0x7e8] sm:$0xff]
      %v724 = vld [vmem:[%s1 + $0x7f0] sm:$0xff]
      %v725 = vld [vmem:[%s1 + $0x7f8] sm:$0xff]
      %726 = vmatprep.subr.mxu0 0.0
      %727 = vmatpush1.msra.mxu0 %v470
      %728 = vmatprep.subr.mxu0 0.0
      %729 = vmatpush1.msra.mxu0 %v471
      %730 = vmatprep.subr.mxu0 0.0
      %731 = vmatpush1.msra.mxu0 %v472
      %732 = vmatprep.subr.mxu0 0.0
      %733 = vmatpush1.msra.mxu0 %v473
      %734 = vmatprep.subr.mxu0 0.0
      %735 = vmatpush1.msra.mxu0 %v474
      %736 = vmatprep.subr.mxu0 0.0
      %737 = vmatpush1.msra.mxu0 %v475
      %738 = vmatprep.subr.mxu0 0.0
      %739 = vmatpush1.msra.mxu0 %v476
      %740 = vmatprep.subr.mxu0 0.0
      %741 = vmatpush1.msra.mxu0 %v477
      %742 = vmatprep.subr.mxu0 0.0
      %743 = vmatpush1.msra.mxu0 %v478
      %744 = vmatprep.subr.mxu0 0.0
      %745 = vmatpush1.msra.mxu0 %v479
      %746 = vmatprep.subr.mxu0 0.0
      %747 = vmatpush1.msra.mxu0 %v480
      %748 = vmatprep.subr.mxu0 0.0
      %749 = vmatpush1.msra.mxu0 %v481
      %750 = vmatprep.subr.mxu0 0.0
      %751 = vmatpush1.msra.mxu0 %v482
      %752 = vmatprep.subr.mxu0 0.0
      %753 = vmatpush1.msra.mxu0 %v483
      %754 = vmatprep.subr.mxu0 0.0
      %755 = vmatpush1.msra.mxu0 %v484
      %756 = vmatprep.subr.mxu0 0.0
      %757 = vmatpush1.msra.mxu0 %v485
      %758 = vmatprep.subr.mxu0 0.0
      %759 = vmatpush1.msra.mxu0 %v486
      %760 = vmatprep.subr.mxu0 0.0
      %761 = vmatpush1.msra.mxu0 %v487
      %762 = vmatprep.subr.mxu0 0.0
      %763 = vmatpush1.msra.mxu0 %v488
      %764 = vmatprep.subr.mxu0 0.0
      %765 = vmatpush1.msra.mxu0 %v489
      %766 = vmatprep.subr.mxu0 0.0
      %767 = vmatpush1.msra.mxu0 %v490
      %768 = vmatprep.subr.mxu0 0.0
      %769 = vmatpush1.msra.mxu0 %v491
      %770 = vmatprep.subr.mxu0 0.0
      %771 = vmatpush1.msra.mxu0 %v492
      %772 = vmatprep.subr.mxu0 0.0
      %773 = vmatpush1.msra.mxu0 %v493
      %774 = vmatprep.subr.mxu0 0.0
      %775 = vmatpush1.msra.mxu0 %v494
      %776 = vmatprep.subr.mxu0 0.0
      %777 = vmatpush1.msra.mxu0 %v495
      %778 = vmatprep.subr.mxu0 0.0
      %779 = vmatpush1.msra.mxu0 %v496
      %780 = vmatprep.subr.mxu0 0.0
      %781 = vmatpush1.msra.mxu0 %v497
      %782 = vmatprep.subr.mxu0 0.0
      %783 = vmatpush1.msra.mxu0 %v498
      %784 = vmatprep.subr.mxu0 0.0
      %785 = vmatpush1.msra.mxu0 %v499
      %786 = vmatprep.subr.mxu0 0.0
      %787 = vmatpush1.msra.mxu0 %v500
      %788 = vmatprep.subr.mxu0 0.0
      %789 = vmatpush1.msra.mxu0 %v501
      %790 = vmatprep.mubr.f32.mxu0 %v151
      %791 = vmatmul.mubr.f32.gmra.mrb[0].mxu0 %v150
      %v792 = vpop.f32.mrb[0].mxu0
      %v793 = vadd.f32 0.0, %v792
      %v794 = vpop.f32.mrb[0].mxu0
      %795 = vmatprep.mubr.f32.mxu0 %v167
      %796 = vmatmul.mubr.f32.gmra.mrb[0].mxu0 %v166
      %v797 = vpop.f32.mrb[0].mxu0
      %v798 = vadd.f32 0.0, %v797
      %v799 = vpop.f32.mrb[0].mxu0
      %800 = vmatprep.mubr.f32.mxu0 %v183
      %801 = vmatmul.mubr.f32.gmra.mrb[0].mxu0 %v182
      %v802 = vpop.f32.mrb[0].mxu0
      %v803 = vadd.f32 0.0, %v802
      %v804 = vpop.f32.mrb[0].mxu0
      %805 = vmatprep.mubr.f32.mxu0 %v199
      %806 = vmatmul.mubr.f32.gmra.mrb[0].mxu0 %v198
      %v807 = vpop.f32.mrb[0].mxu0
      %v808 = vadd.f32 0.0, %v807
      %v809 = vpop.f32.mrb[0].mxu0
      %810 = vmatprep.mubr.f32.mxu0 %v215
      %811 = vmatmul.mubr.f32.gmra.mrb[0].mxu0 %v214
      %v812 = vpop.f32.mrb[0].mxu0
      %v813 = vadd.f32 0.0, %v812
      %v814 = vpop.f32.mrb[0].mxu0
      %815 = vmatprep.mubr.f32.mxu0 %v231
      %816 = vmatmul.mubr.f32.gmra.mrb[0].mxu0 %v230
      %v817 = vpop.f32.mrb[0].mxu0
      %v818 = vadd.f32 0.0, %v817
      %v819 = vpop.f32.mrb[0].mxu0
      %820 = vmatprep.mubr.f32.mxu0 %v247
      %821 = vmatmul.mubr.f32.gmra.mrb[0].mxu0 %v246
      %v822 = vpop.f32.mrb[0].mxu0
      %v823 = vadd.f32 0.0, %v822
      %v824 = vpop.f32.mrb[0].mxu0
      %825 = vmatprep.mubr.f32.mxu0 %v263
      %826 = vmatmul.mubr.f32.gmra.mrb[0].mxu0 %v262
      %v827 = vpop.f32.mrb[0].mxu0
      %v828 = vadd.f32 0.0, %v827
      %v829 = vpop.f32.mrb[0].mxu0
      %830 = vmatprep.mubr.f32.mxu0 %v279
      %831 = vmatmul.mubr.f32.gmra.mrb[0].mxu0 %v278
      %v832 = vpop.f32.mrb[0].mxu0
      %v833 = vadd.f32 0.0, %v832
      %v834 = vpop.f32.mrb[0].mxu0
      %835 = vmatprep.mubr.f32.mxu0 %v295
      %836 = vmatmul.mubr.f32.gmra.mrb[0].mxu0 %v294
      %v837 = vpop.f32.mrb[0].mxu0
      %v838 = vadd.f32 0.0, %v837
      %v839 = vpop.f32.mrb[0].mxu0
      %840 = vmatprep.mubr.f32.mxu0 %v311
      %841 = vmatmul.mubr.f32.gmra.mrb[0].mxu0 %v310
      %v842 = vpop.f32.mrb[0].mxu0
      %v843 = vadd.f32 0.0, %v842
      %v844 = vpop.f32.mrb[0].mxu0
      %845 = vmatprep.mubr.f32.mxu0 %v327
      %846 = vmatmul.mubr.f32.gmra.mrb[0].mxu0 %v326
      %v847 = vpop.f32.mrb[0].mxu0
      %v848 = vadd.f32 0.0, %v847
      %v849 = vpop.f32.mrb[0].mxu0
      %850 = vmatprep.mubr.f32.mxu0 %v343
      %851 = vmatmul.mubr.f32.gmra.mrb[0].mxu0 %v342
      %v852 = vpop.f32.mrb[0].mxu0
      %v853 = vadd.f32 0.0, %v852
      %v854 = vpop.f32.mrb[0].mxu0
      %855 = vmatprep.mubr.f32.mxu0 %v359
      %856 = vmatmul.mubr.f32.gmra.mrb[0].mxu0 %v358
      %v857 = vpop.f32.mrb[0].mxu0
      %v858 = vadd.f32 0.0, %v857
      %v859 = vpop.f32.mrb[0].mxu0
      %860 = vmatprep.mubr.f32.mxu0 %v375
      %861 = vmatmul.mubr.f32.gmra.mrb[0].mxu0 %v374
      %v862 = vpop.f32.mrb[0].mxu0
      %v863 = vadd.f32 0.0, %v862
      %v864 = vpop.f32.mrb[0].mxu0
      %865 = vmatprep.mubr.f32.mxu0 %v391
      %866 = vmatmul.mubr.f32.gmra.mrb[0].mxu0 %v390
      %v867 = vpop.f32.mrb[0].mxu0
      %v868 = vadd.f32 0.0, %v867
      %v869 = vpop.f32.mrb[0].mxu0
      %870 = vmatprep.mubr.f32.mxu0 %v407
      %871 = vmatmul.mubr.f32.gmra.mrb[0].mxu0 %v406
      %v872 = vpop.f32.mrb[0].mxu0
      %v873 = vadd.f32 0.0, %v872
      %v874 = vpop.f32.mrb[0].mxu0
      %875 = vmatprep.mubr.f32.mxu0 %v423
      %876 = vmatmul.mubr.f32.gmra.mrb[0].mxu0 %v422
      %v877 = vpop.f32.mrb[0].mxu0
      %v878 = vadd.f32 0.0, %v877
      %v879 = vpop.f32.mrb[0].mxu0
      %880 = vmatprep.mubr.f32.mxu0 %v439
      %881 = vmatmul.mubr.f32.gmra.mrb[0].mxu0 %v438
      %v882 = vpop.f32.mrb[0].mxu0
      %v883 = vadd.f32 0.0, %v882
      %v884 = vpop.f32.mrb[0].mxu0
      %885 = vmatprep.mubr.f32.mxu0 %v455
      %886 = vmatmul.mubr.f32.gmra.mrb[0].mxu0 %v454
      %v887 = vpop.f32.mrb[0].mxu0
      %v888 = vadd.f32 0.0, %v887
      %v889 = vpop.f32.mrb[0].mxu0
      %890 = vdwg.mxu0
      %891 = vmatprep.subr.mxu0 0.0
      %892 = vmatpush1.msra.mxu0 %v502
      %893 = vmatprep.subr.mxu0 0.0
      %894 = vmatpush1.msra.mxu0 %v503
      %895 = vmatprep.subr.mxu0 0.0
      %896 = vmatpush1.msra.mxu0 %v504
      %897 = vmatprep.subr.mxu0 0.0
      %898 = vmatpush1.msra.mxu0 %v505
      %899 = vmatprep.subr.mxu0 0.0
      %900 = vmatpush1.msra.mxu0 %v506
      %901 = vmatprep.subr.mxu0 0.0
      %902 = vmatpush1.msra.mxu0 %v507
      %903 = vmatprep.subr.mxu0 0.0
      %904 = vmatpush1.msra.mxu0 %v508
      %905 = vmatprep.subr.mxu0 0.0
      %906 = vmatpush1.msra.mxu0 %v509
      %907 = vmatprep.subr.mxu0 0.0
      %908 = vmatpush1.msra.mxu0 %v510
      %909 = vmatprep.subr.mxu0 0.0
      %910 = vmatpush1.msra.mxu0 %v511
      %911 = vmatprep.subr.mxu0 0.0
      %912 = vmatpush1.msra.mxu0 %v512
      %913 = vmatprep.subr.mxu0 0.0
      %914 = vmatpush1.msra.mxu0 %v513
      %915 = vmatprep.subr.mxu0 0.0
      %916 = vmatpush1.msra.mxu0 %v514
      %917 = vmatprep.subr.mxu0 0.0
      %918 = vmatpush1.msra.mxu0 %v515
      %919 = vmatprep.subr.mxu0 0.0
      %920 = vmatpush1.msra.mxu0 %v516
      %921 = vmatprep.subr.mxu0 0.0
      %922 = vmatpush1.msra.mxu0 %v517
      %923 = vmatprep.subr.mxu0 0.0
      %924 = vmatpush1.msra.mxu0 %v518
      %925 = vmatprep.subr.mxu0 0.0
      %926 = vmatpush1.msra.mxu0 %v519
      %927 = vmatprep.subr.mxu0 0.0
      %928 = vmatpush1.msra.mxu0 %v520
      %929 = vmatprep.subr.mxu0 0.0
      %930 = vmatpush1.msra.mxu0 %v521
      %931 = vmatprep.subr.mxu0 0.0
      %932 = vmatpush1.msra.mxu0 %v522
      %933 = vmatprep.subr.mxu0 0.0
      %934 = vmatpush1.msra.mxu0 %v523
      %935 = vmatprep.subr.mxu0 0.0
      %936 = vmatpush1.msra.mxu0 %v524
      %937 = vmatprep.subr.mxu0 0.0
      %938 = vmatpush1.msra.mxu0 %v525
      %939 = vmatprep.subr.mxu0 0.0
      %940 = vmatpush1.msra.mxu0 %v526
      %941 = vmatprep.subr.mxu0 0.0
      %942 = vmatpush1.msra.mxu0 %v527
      %943 = vmatprep.subr.mxu0 0.0
      %944 = vmatpush1.msra.mxu0 %v528
      %945 = vmatprep.subr.mxu0 0.0
      %946 = vmatpush1.msra.mxu0 %v529
      %947 = vmatprep.subr.mxu0 0.0
      %948 = vmatpush1.msra.mxu0 %v530
      %949 = vmatprep.subr.mxu0 0.0
      %950 = vmatpush1.msra.mxu0 %v531
      %951 = vmatprep.subr.mxu0 0.0
      %952 = vmatpush1.msra.mxu0 %v532
      %953 = vmatprep.subr.mxu0 0.0
      %954 = vmatpush1.msra.mxu0 %v533
      %955 = vmatprep.mubr.f32.mxu0 %v153
      %956 = vmatmul.mubr.f32.gmra.mrb[0].mxu0 %v152
      %v957 = vpop.f32.mrb[0].mxu0
      %v958 = vadd.f32 %v793, %v957
      %v959 = vpop.f32.mrb[0].mxu0
      %960 = vmatprep.mubr.f32.mxu0 %v169
      %961 = vmatmul.mubr.f32.gmra.mrb[0].mxu0 %v168
      %v962 = vpop.f32.mrb[0].mxu0
      %v963 = vadd.f32 %v798, %v962
      %v964 = vpop.f32.mrb[0].mxu0
      %965 = vmatprep.mubr.f32.mxu0 %v185
      %966 = vmatmul.mubr.f32.gmra.mrb[0].mxu0 %v184
      %v967 = vpop.f32.mrb[0].mxu0
      %v968 = vadd.f32 %v803, %v967
      %v969 = vpop.f32.mrb[0].mxu0
      %970 = vmatprep.mubr.f32.mxu0 %v201
      %971 = vmatmul.mubr.f32.gmra.mrb[0].mxu0 %v200
      %v972 = vpop.f32.mrb[0].mxu0
      %v973 = vadd.f32 %v808, %v972
      %v974 = vpop.f32.mrb[0].mxu0
      %975 = vmatprep.mubr.f32.mxu0 %v217
      %976 = vmatmul.mubr.f32.gmra.mrb[0].mxu0 %v216
      %v977 = vpop.f32.mrb[0].mxu0
      %v978 = vadd.f32 %v813, %v977
      %v979 = vpop.f32.mrb[0].mxu0
      %980 = vmatprep.mubr.f32.mxu0 %v233
      %981 = vmatmul.mubr.f32.gmra.mrb[0].mxu0 %v232
      %v982 = vpop.f32.mrb[0].mxu0
      %v983 = vadd.f32 %v818, %v982
      %v984 = vpop.f32.mrb[0].mxu0
      %985 = vmatprep.mubr.f32.mxu0 %v249
      %986 = vmatmul.mubr.f32.gmra.mrb[0].mxu0 %v248
      %v987 = vpop.f32.mrb[0].mxu0
      %v988 = vadd.f32 %v823, %v987
      %v989 = vpop.f32.mrb[0].mxu0
      %990 = vmatprep.mubr.f32.mxu0 %v265
      %991 = vmatmul.mubr.f32.gmra.mrb[0].mxu0 %v264
      %v992 = vpop.f32.mrb[0].mxu0
      %v993 = vadd.f32 %v828, %v992
      %v994 = vpop.f32.mrb[0].mxu0
      %995 = vmatprep.mubr.f32.mxu0 %v281
      %996 = vmatmul.mubr.f32.gmra.mrb[0].mxu0 %v280
      %v997 = vpop.f32.mrb[0].mxu0
      %v998 = vadd.f32 %v833, %v997
      %v999 = vpop.f32.mrb[0].mxu0
      %1000 = vmatprep.mubr.f32.mxu0 %v297
      %1001 = vmatmul.mubr.f32.gmra.mrb[0].mxu0 %v296
      %v1002 = vpop.f32.mrb[0].mxu0
      %v1003 = vadd.f32 %v838, %v1002
      %v1004 = vpop.f32.mrb[0].mxu0
      %1005 = vmatprep.mubr.f32.mxu0 %v313
      %1006 = vmatmul.mubr.f32.gmra.mrb[0].mxu0 %v312
      %v1007 = vpop.f32.mrb[0].mxu0
      %v1008 = vadd.f32 %v843, %v1007
      %v1009 = vpop.f32.mrb[0].mxu0
      %1010 = vmatprep.mubr.f32.mxu0 %v329
      %1011 = vmatmul.mubr.f32.gmra.mrb[0].mxu0 %v328
      %v1012 = vpop.f32.mrb[0].mxu0
      %v1013 = vadd.f32 %v848, %v1012
      %v1014 = vpop.f32.mrb[0].mxu0
      %1015 = vmatprep.mubr.f32.mxu0 %v345
      %1016 = vmatmul.mubr.f32.gmra.mrb[0].mxu0 %v344
      %v1017 = vpop.f32.mrb[0].mxu0
      %v1018 = vadd.f32 %v853, %v1017
      %v1019 = vpop.f32.mrb[0].mxu0
      %1020 = vmatprep.mubr.f32.mxu0 %v361
      %1021 = vmatmul.mubr.f32.gmra.mrb[0].mxu0 %v360
      %v1022 = vpop.f32.mrb[0].mxu0
      %v1023 = vadd.f32 %v858, %v1022
      %v1024 = vpop.f32.mrb[0].mxu0
      %1025 = vmatprep.mubr.f32.mxu0 %v377
      %1026 = vmatmul.mubr.f32.gmra.mrb[0].mxu0 %v376
      %v1027 = vpop.f32.mrb[0].mxu0
      %v1028 = vadd.f32 %v863, %v1027
      %v1029 = vpop.f32.mrb[0].mxu0
      %1030 = vmatprep.mubr.f32.mxu0 %v393
      %1031 = vmatmul.mubr.f32.gmra.mrb[0].mxu0 %v392
      %v1032 = vpop.f32.mrb[0].mxu0
      %v1033 = vadd.f32 %v868, %v1032
      %v1034 = vpop.f32.mrb[0].mxu0
      %1035 = vmatprep.mubr.f32.mxu0 %v409
      %1036 = vmatmul.mubr.f32.gmra.mrb[0].mxu0 %v408
      %v1037 = vpop.f32.mrb[0].mxu0
      %v1038 = vadd.f32 %v873, %v1037
      %v1039 = vpop.f32.mrb[0].mxu0
      %1040 = vmatprep.mubr.f32.mxu0 %v425
      %1041 = vmatmul.mubr.f32.gmra.mrb[0].mxu0 %v424
      %v1042 = vpop.f32.mrb[0].mxu0
      %v1043 = vadd.f32 %v878, %v1042
      %v1044 = vpop.f32.mrb[0].mxu0
      %1045 = vmatprep.mubr.f32.mxu0 %v441
      %1046 = vmatmul.mubr.f32.gmra.mrb[0].mxu0 %v440
      %v1047 = vpop.f32.mrb[0].mxu0
      %v1048 = vadd.f32 %v883, %v1047
      %v1049 = vpop.f32.mrb[0].mxu0
      %1050 = vmatprep.mubr.f32.mxu0 %v457
      %1051 = vmatmul.mubr.f32.gmra.mrb[0].mxu0 %v456
      %v1052 = vpop.f32.mrb[0].mxu0
      %v1053 = vadd.f32 %v888, %v1052
      %v1054 = vpop.f32.mrb[0].mxu0
      %1055 = vdwg.mxu0
      %1056 = vmatprep.subr.mxu0 0.0
      %1057 = vmatpush1.msra.mxu0 %v534
      %1058 = vmatprep.subr.mxu0 0.0
      %1059 = vmatpush1.msra.mxu0 %v535
      %1060 = vmatprep.subr.mxu0 0.0
      %1061 = vmatpush1.msra.mxu0 %v536
      %1062 = vmatprep.subr.mxu0 0.0
      %1063 = vmatpush1.msra.mxu0 %v537
      %1064 = vmatprep.subr.mxu0 0.0
      %1065 = vmatpush1.msra.mxu0 %v538
      %1066 = vmatprep.subr.mxu0 0.0
      %1067 = vmatpush1.msra.mxu0 %v539
      %1068 = vmatprep.subr.mxu0 0.0
      %1069 = vmatpush1.msra.mxu0 %v540
      %1070 = vmatprep.subr.mxu0 0.0
      %1071 = vmatpush1.msra.mxu0 %v541
      %1072 = vmatprep.subr.mxu0 0.0
      %1073 = vmatpush1.msra.mxu0 %v542
      %1074 = vmatprep.subr.mxu0 0.0
      %1075 = vmatpush1.msra.mxu0 %v543
      %1076 = vmatprep.subr.mxu0 0.0
      %1077 = vmatpush1.msra.mxu0 %v544
      %1078 = vmatprep.subr.mxu0 0.0
      %1079 = vmatpush1.msra.mxu0 %v545
      %1080 = vmatprep.subr.mxu0 0.0
      %1081 = vmatpush1.msra.mxu0 %v546
      %1082 = vmatprep.subr.mxu0 0.0
      %1083 = vmatpush1.msra.mxu0 %v547
      %1084 = vmatprep.subr.mxu0 0.0
      %1085 = vmatpush1.msra.mxu0 %v548
      %1086 = vmatprep.subr.mxu0 0.0
      %1087 = vmatpush1.msra.mxu0 %v549
      %1088 = vmatprep.subr.mxu0 0.0
      %1089 = vmatpush1.msra.mxu0 %v550
      %1090 = vmatprep.subr.mxu0 0.0
      %1091 = vmatpush1.msra.mxu0 %v551
      %1092 = vmatprep.subr.mxu0 0.0
      %1093 = vmatpush1.msra.mxu0 %v552
      %1094 = vmatprep.subr.mxu0 0.0
      %1095 = vmatpush1.msra.mxu0 %v553
      %1096 = vmatprep.subr.mxu0 0.0
      %1097 = vmatpush1.msra.mxu0 %v554
      %1098 = vmatprep.subr.mxu0 0.0
      %1099 = vmatpush1.msra.mxu0 %v555
      %1100 = vmatprep.subr.mxu0 0.0
      %1101 = vmatpush1.msra.mxu0 %v556
      %1102 = vmatprep.subr.mxu0 0.0
      %1103 = vmatpush1.msra.mxu0 %v557
      %1104 = vmatprep.subr.mxu0 0.0
      %1105 = vmatpush1.msra.mxu0 %v558
      %1106 = vmatprep.subr.mxu0 0.0
      %1107 = vmatpush1.msra.mxu0 %v559
      %1108 = vmatprep.subr.mxu0 0.0
      %1109 = vmatpush1.msra.mxu0 %v560
      %1110 = vmatprep.subr.mxu0 0.0
      %1111 = vmatpush1.msra.mxu0 %v561
      %1112 = vmatprep.subr.mxu0 0.0
      %1113 = vmatpush1.msra.mxu0 %v562
      %1114 = vmatprep.subr.mxu0 0.0
      %1115 = vmatpush1.msra.mxu0 %v563
      %1116 = vmatprep.subr.mxu0 0.0
      %1117 = vmatpush1.msra.mxu0 %v564
      %1118 = vmatprep.subr.mxu0 0.0
      %1119 = vmatpush1.msra.mxu0 %v565
      %1120 = vmatprep.mubr.f32.mxu0 %v155
      %1121 = vmatmul.mubr.f32.gmra.mrb[0].mxu0 %v154
      %v1122 = vpop.f32.mrb[0].mxu0
      %v1123 = vadd.f32 %v958, %v1122
      %v1124 = vpop.f32.mrb[0].mxu0
      %1125 = vmatprep.mubr.f32.mxu0 %v171
      %1126 = vmatmul.mubr.f32.gmra.mrb[0].mxu0 %v170
      %v1127 = vpop.f32.mrb[0].mxu0
      %v1128 = vadd.f32 %v963, %v1127
      %v1129 = vpop.f32.mrb[0].mxu0
      %1130 = vmatprep.mubr.f32.mxu0 %v187
      %1131 = vmatmul.mubr.f32.gmra.mrb[0].mxu0 %v186
      %v1132 = vpop.f32.mrb[0].mxu0
      %v1133 = vadd.f32 %v968, %v1132
      %v1134 = vpop.f32.mrb[0].mxu0
      %1135 = vmatprep.mubr.f32.mxu0 %v203
      %1136 = vmatmul.mubr.f32.gmra.mrb[0].mxu0 %v202
      %v1137 = vpop.f32.mrb[0].mxu0
      %v1138 = vadd.f32 %v973, %v1137
      %v1139 = vpop.f32.mrb[0].mxu0
      %1140 = vmatprep.mubr.f32.mxu0 %v219
      %1141 = vmatmul.mubr.f32.gmra.mrb[0].mxu0 %v218
      %v1142 = vpop.f32.mrb[0].mxu0
      %v1143 = vadd.f32 %v978, %v1142
      %v1144 = vpop.f32.mrb[0].mxu0
      %1145 = vmatprep.mubr.f32.mxu0 %v235
      %1146 = vmatmul.mubr.f32.gmra.mrb[0].mxu0 %v234
      %v1147 = vpop.f32.mrb[0].mxu0
      %v1148 = vadd.f32 %v983, %v1147
      %v1149 = vpop.f32.mrb[0].mxu0
      %1150 = vmatprep.mubr.f32.mxu0 %v251
      %1151 = vmatmul.mubr.f32.gmra.mrb[0].mxu0 %v250
      %v1152 = vpop.f32.mrb[0].mxu0
      %v1153 = vadd.f32 %v988, %v1152
      %v1154 = vpop.f32.mrb[0].mxu0
      %1155 = vmatprep.mubr.f32.mxu0 %v267
      %1156 = vmatmul.mubr.f32.gmra.mrb[0].mxu0 %v266
      %v1157 = vpop.f32.mrb[0].mxu0
      %v1158 = vadd.f32 %v993, %v1157
      %v1159 = vpop.f32.mrb[0].mxu0
      %1160 = vmatprep.mubr.f32.mxu0 %v283
      %1161 = vmatmul.mubr.f32.gmra.mrb[0].mxu0 %v282
      %v1162 = vpop.f32.mrb[0].mxu0
      %v1163 = vadd.f32 %v998, %v1162
      %v1164 = vpop.f32.mrb[0].mxu0
      %1165 = vmatprep.mubr.f32.mxu0 %v299
      %1166 = vmatmul.mubr.f32.gmra.mrb[0].mxu0 %v298
      %v1167 = vpop.f32.mrb[0].mxu0
      %v1168 = vadd.f32 %v1003, %v1167
      %v1169 = vpop.f32.mrb[0].mxu0
      %1170 = vmatprep.mubr.f32.mxu0 %v315
      %1171 = vmatmul.mubr.f32.gmra.mrb[0].mxu0 %v314
      %v1172 = vpop.f32.mrb[0].mxu0
      %v1173 = vadd.f32 %v1008, %v1172
      %v1174 = vpop.f32.mrb[0].mxu0
      %1175 = vmatprep.mubr.f32.mxu0 %v331
      %1176 = vmatmul.mubr.f32.gmra.mrb[0].mxu0 %v330
      %v1177 = vpop.f32.mrb[0].mxu0
      %v1178 = vadd.f32 %v1013, %v1177
      %v1179 = vpop.f32.mrb[0].mxu0
      %1180 = vmatprep.mubr.f32.mxu0 %v347
      %1181 = vmatmul.mubr.f32.gmra.mrb[0].mxu0 %v346
      %v1182 = vpop.f32.mrb[0].mxu0
      %v1183 = vadd.f32 %v1018, %v1182
      %v1184 = vpop.f32.mrb[0].mxu0
      %1185 = vmatprep.mubr.f32.mxu0 %v363
      %1186 = vmatmul.mubr.f32.gmra.mrb[0].mxu0 %v362
      %v1187 = vpop.f32.mrb[0].mxu0
      %v1188 = vadd.f32 %v1023, %v1187
      %v1189 = vpop.f32.mrb[0].mxu0
      %1190 = vmatprep.mubr.f32.mxu0 %v379
      %1191 = vmatmul.mubr.f32.gmra.mrb[0].mxu0 %v378
      %v1192 = vpop.f32.mrb[0].mxu0
      %v1193 = vadd.f32 %v1028, %v1192
      %v1194 = vpop.f32.mrb[0].mxu0
      %1195 = vmatprep.mubr.f32.mxu0 %v395
      %1196 = vmatmul.mubr.f32.gmra.mrb[0].mxu0 %v394
      %v1197 = vpop.f32.mrb[0].mxu0
      %v1198 = vadd.f32 %v1033, %v1197
      %v1199 = vpop.f32.mrb[0].mxu0
      %1200 = vmatprep.mubr.f32.mxu0 %v411
      %1201 = vmatmul.mubr.f32.gmra.mrb[0].mxu0 %v410
      %v1202 = vpop.f32.mrb[0].mxu0
      %v1203 = vadd.f32 %v1038, %v1202
      %v1204 = vpop.f32.mrb[0].mxu0
      %1205 = vmatprep.mubr.f32.mxu0 %v427
      %1206 = vmatmul.mubr.f32.gmra.mrb[0].mxu0 %v426
      %v1207 = vpop.f32.mrb[0].mxu0
      %v1208 = vadd.f32 %v1043, %v1207
      %v1209 = vpop.f32.mrb[0].mxu0
      %1210 = vmatprep.mubr.f32.mxu0 %v443
      %1211 = vmatmul.mubr.f32.gmra.mrb[0].mxu0 %v442
      %v1212 = vpop.f32.mrb[0].mxu0
      %v1213 = vadd.f32 %v1048, %v1212
      %v1214 = vpop.f32.mrb[0].mxu0
      %1215 = vmatprep.mubr.f32.mxu0 %v459
      %1216 = vmatmul.mubr.f32.gmra.mrb[0].mxu0 %v458
      %v1217 = vpop.f32.mrb[0].mxu0
      %v1218 = vadd.f32 %v1053, %v1217
      %v1219 = vpop.f32.mrb[0].mxu0
      %1220 = vdwg.mxu0
      %1221 = vmatprep.subr.mxu0 0.0
      %1222 = vmatpush1.msra.mxu0 %v566
      %1223 = vmatprep.subr.mxu0 0.0
      %1224 = vmatpush1.msra.mxu0 %v567
      %1225 = vmatprep.subr.mxu0 0.0
      %1226 = vmatpush1.msra.mxu0 %v568
      %1227 = vmatprep.subr.mxu0 0.0
      %1228 = vmatpush1.msra.mxu0 %v569
      %1229 = vmatprep.subr.mxu0 0.0
      %1230 = vmatpush1.msra.mxu0 %v570
      %1231 = vmatprep.subr.mxu0 0.0
      %1232 = vmatpush1.msra.mxu0 %v571
      %1233 = vmatprep.subr.mxu0 0.0
      %1234 = vmatpush1.msra.mxu0 %v572
      %1235 = vmatprep.subr.mxu0 0.0
      %1236 = vmatpush1.msra.mxu0 %v573
      %1237 = vmatprep.subr.mxu0 0.0
      %1238 = vmatpush1.msra.mxu0 %v574
      %1239 = vmatprep.subr.mxu0 0.0
      %1240 = vmatpush1.msra.mxu0 %v575
      %1241 = vmatprep.subr.mxu0 0.0
      %1242 = vmatpush1.msra.mxu0 %v576
      %1243 = vmatprep.subr.mxu0 0.0
      %1244 = vmatpush1.msra.mxu0 %v577
      %1245 = vmatprep.subr.mxu0 0.0
      %1246 = vmatpush1.msra.mxu0 %v578
      %1247 = vmatprep.subr.mxu0 0.0
      %1248 = vmatpush1.msra.mxu0 %v579
      %1249 = vmatprep.subr.mxu0 0.0
      %1250 = vmatpush1.msra.mxu0 %v580
      %1251 = vmatprep.subr.mxu0 0.0
      %1252 = vmatpush1.msra.mxu0 %v581
      %1253 = vmatprep.subr.mxu0 0.0
      %1254 = vmatpush1.msra.mxu0 %v582
      %1255 = vmatprep.subr.mxu0 0.0
      %1256 = vmatpush1.msra.mxu0 %v583
      %1257 = vmatprep.subr.mxu0 0.0
      %1258 = vmatpush1.msra.mxu0 %v584
      %1259 = vmatprep.subr.mxu0 0.0
      %1260 = vmatpush1.msra.mxu0 %v585
      %1261 = vmatprep.subr.mxu0 0.0
      %1262 = vmatpush1.msra.mxu0 %v586
      %1263 = vmatprep.subr.mxu0 0.0
      %1264 = vmatpush1.msra.mxu0 %v587
      %1265 = vmatprep.subr.mxu0 0.0
      %1266 = vmatpush1.msra.mxu0 %v588
      %1267 = vmatprep.subr.mxu0 0.0
      %1268 = vmatpush1.msra.mxu0 %v589
      %1269 = vmatprep.subr.mxu0 0.0
      %1270 = vmatpush1.msra.mxu0 %v590
      %1271 = vmatprep.subr.mxu0 0.0
      %1272 = vmatpush1.msra.mxu0 %v591
      %1273 = vmatprep.subr.mxu0 0.0
      %1274 = vmatpush1.msra.mxu0 %v592
      %1275 = vmatprep.subr.mxu0 0.0
      %1276 = vmatpush1.msra.mxu0 %v593
      %1277 = vmatprep.subr.mxu0 0.0
      %1278 = vmatpush1.msra.mxu0 %v594
      %1279 = vmatprep.subr.mxu0 0.0
      %1280 = vmatpush1.msra.mxu0 %v595
      %1281 = vmatprep.subr.mxu0 0.0
      %1282 = vmatpush1.msra.mxu0 %v596
      %1283 = vmatprep.subr.mxu0 0.0
      %1284 = vmatpush1.msra.mxu0 %v597
      %1285 = vmatprep.mubr.f32.mxu0 %v157
      %1286 = vmatmul.mubr.f32.gmra.mrb[0].mxu0 %v156
      %v1287 = vpop.f32.mrb[0].mxu0
      %v1288 = vadd.f32 %v1123, %v1287
      %v1289 = vpop.f32.mrb[0].mxu0
      %1290 = vmatprep.mubr.f32.mxu0 %v173
      %1291 = vmatmul.mubr.f32.gmra.mrb[0].mxu0 %v172
      %v1292 = vpop.f32.mrb[0].mxu0
      %v1293 = vadd.f32 %v1128, %v1292
      %v1294 = vpop.f32.mrb[0].mxu0
      %1295 = vmatprep.mubr.f32.mxu0 %v189
      %1296 = vmatmul.mubr.f32.gmra.mrb[0].mxu0 %v188
      %v1297 = vpop.f32.mrb[0].mxu0
      %v1298 = vadd.f32 %v1133, %v1297
      %v1299 = vpop.f32.mrb[0].mxu0
      %1300 = vmatprep.mubr.f32.mxu0 %v205
      %1301 = vmatmul.mubr.f32.gmra.mrb[0].mxu0 %v204
      %v1302 = vpop.f32.mrb[0].mxu0
      %v1303 = vadd.f32 %v1138, %v1302
      %v1304 = vpop.f32.mrb[0].mxu0
      %1305 = vmatprep.mubr.f32.mxu0 %v221
      %1306 = vmatmul.mubr.f32.gmra.mrb[0].mxu0 %v220
      %v1307 = vpop.f32.mrb[0].mxu0
      %v1308 = vadd.f32 %v1143, %v1307
      %v1309 = vpop.f32.mrb[0].mxu0
      %1310 = vmatprep.mubr.f32.mxu0 %v237
      %1311 = vmatmul.mubr.f32.gmra.mrb[0].mxu0 %v236
      %v1312 = vpop.f32.mrb[0].mxu0
      %v1313 = vadd.f32 %v1148, %v1312
      %v1314 = vpop.f32.mrb[0].mxu0
      %1315 = vmatprep.mubr.f32.mxu0 %v253
      %1316 = vmatmul.mubr.f32.gmra.mrb[0].mxu0 %v252
      %v1317 = vpop.f32.mrb[0].mxu0
      %v1318 = vadd.f32 %v1153, %v1317
      %v1319 = vpop.f32.mrb[0].mxu0
      %1320 = vmatprep.mubr.f32.mxu0 %v269
      %1321 = vmatmul.mubr.f32.gmra.mrb[0].mxu0 %v268
      %v1322 = vpop.f32.mrb[0].mxu0
      %v1323 = vadd.f32 %v1158, %v1322
      %v1324 = vpop.f32.mrb[0].mxu0
      %1325 = vmatprep.mubr.f32.mxu0 %v285
      %1326 = vmatmul.mubr.f32.gmra.mrb[0].mxu0 %v284
      %v1327 = vpop.f32.mrb[0].mxu0
      %v1328 = vadd.f32 %v1163, %v1327
      %v1329 = vpop.f32.mrb[0].mxu0
      %1330 = vmatprep.mubr.f32.mxu0 %v301
      %1331 = vmatmul.mubr.f32.gmra.mrb[0].mxu0 %v300
      %v1332 = vpop.f32.mrb[0].mxu0
      %v1333 = vadd.f32 %v1168, %v1332
      %v1334 = vpop.f32.mrb[0].mxu0
      %1335 = vmatprep.mubr.f32.mxu0 %v317
      %1336 = vmatmul.mubr.f32.gmra.mrb[0].mxu0 %v316
      %v1337 = vpop.f32.mrb[0].mxu0
      %v1338 = vadd.f32 %v1173, %v1337
      %v1339 = vpop.f32.mrb[0].mxu0
      %1340 = vmatprep.mubr.f32.mxu0 %v333
      %1341 = vmatmul.mubr.f32.gmra.mrb[0].mxu0 %v332
      %v1342 = vpop.f32.mrb[0].mxu0
      %v1343 = vadd.f32 %v1178, %v1342
      %v1344 = vpop.f32.mrb[0].mxu0
      %1345 = vmatprep.mubr.f32.mxu0 %v349
      %1346 = vmatmul.mubr.f32.gmra.mrb[0].mxu0 %v348
      %v1347 = vpop.f32.mrb[0].mxu0
      %v1348 = vadd.f32 %v1183, %v1347
      %v1349 = vpop.f32.mrb[0].mxu0
      %1350 = vmatprep.mubr.f32.mxu0 %v365
      %1351 = vmatmul.mubr.f32.gmra.mrb[0].mxu0 %v364
      %v1352 = vpop.f32.mrb[0].mxu0
      %v1353 = vadd.f32 %v1188, %v1352
      %v1354 = vpop.f32.mrb[0].mxu0
      %1355 = vmatprep.mubr.f32.mxu0 %v381
      %1356 = vmatmul.mubr.f32.gmra.mrb[0].mxu0 %v380
      %v1357 = vpop.f32.mrb[0].mxu0
      %v1358 = vadd.f32 %v1193, %v1357
      %v1359 = vpop.f32.mrb[0].mxu0
      %1360 = vmatprep.mubr.f32.mxu0 %v397
      %1361 = vmatmul.mubr.f32.gmra.mrb[0].mxu0 %v396
      %v1362 = vpop.f32.mrb[0].mxu0
      %v1363 = vadd.f32 %v1198, %v1362
      %v1364 = vpop.f32.mrb[0].mxu0
      %1365 = vmatprep.mubr.f32.mxu0 %v413
      %1366 = vmatmul.mubr.f32.gmra.mrb[0].mxu0 %v412
      %v1367 = vpop.f32.mrb[0].mxu0
      %v1368 = vadd.f32 %v1203, %v1367
      %v1369 = vpop.f32.mrb[0].mxu0
      %1370 = vmatprep.mubr.f32.mxu0 %v429
      %1371 = vmatmul.mubr.f32.gmra.mrb[0].mxu0 %v428
      %v1372 = vpop.f32.mrb[0].mxu0
      %v1373 = vadd.f32 %v1208, %v1372
      %v1374 = vpop.f32.mrb[0].mxu0
      %1375 = vmatprep.mubr.f32.mxu0 %v445
      %1376 = vmatmul.mubr.f32.gmra.mrb[0].mxu0 %v444
      %v1377 = vpop.f32.mrb[0].mxu0
      %v1378 = vadd.f32 %v1213, %v1377
      %v1379 = vpop.f32.mrb[0].mxu0
      %1380 = vmatprep.mubr.f32.mxu0 %v461
      %1381 = vmatmul.mubr.f32.gmra.mrb[0].mxu0 %v460
      %v1382 = vpop.f32.mrb[0].mxu0
      %v1383 = vadd.f32 %v1218, %v1382
      %v1384 = vpop.f32.mrb[0].mxu0
      %1385 = vdwg.mxu0
      %1386 = vmatprep.subr.mxu0 0.0
      %1387 = vmatpush1.msra.mxu0 %v598
      %1388 = vmatprep.subr.mxu0 0.0
      %1389 = vmatpush1.msra.mxu0 %v599
      %1390 = vmatprep.subr.mxu0 0.0
      %1391 = vmatpush1.msra.mxu0 %v600
      %1392 = vmatprep.subr.mxu0 0.0
      %1393 = vmatpush1.msra.mxu0 %v601
      %1394 = vmatprep.subr.mxu0 0.0
      %1395 = vmatpush1.msra.mxu0 %v602
      %1396 = vmatprep.subr.mxu0 0.0
      %1397 = vmatpush1.msra.mxu0 %v603
      %1398 = vmatprep.subr.mxu0 0.0
      %1399 = vmatpush1.msra.mxu0 %v604
      %1400 = vmatprep.subr.mxu0 0.0
      %1401 = vmatpush1.msra.mxu0 %v605
      %1402 = vmatprep.subr.mxu0 0.0
      %1403 = vmatpush1.msra.mxu0 %v606
      %1404 = vmatprep.subr.mxu0 0.0
      %1405 = vmatpush1.msra.mxu0 %v607
      %1406 = vmatprep.subr.mxu0 0.0
      %1407 = vmatpush1.msra.mxu0 %v608
      %1408 = vmatprep.subr.mxu0 0.0
      %1409 = vmatpush1.msra.mxu0 %v609
      %1410 = vmatprep.subr.mxu0 0.0
      %1411 = vmatpush1.msra.mxu0 %v610
      %1412 = vmatprep.subr.mxu0 0.0
      %1413 = vmatpush1.msra.mxu0 %v611
      %1414 = vmatprep.subr.mxu0 0.0
      %1415 = vmatpush1.msra.mxu0 %v612
      %1416 = vmatprep.subr.mxu0 0.0
      %1417 = vmatpush1.msra.mxu0 %v613
      %1418 = vmatprep.subr.mxu0 0.0
      %1419 = vmatpush1.msra.mxu0 %v614
      %1420 = vmatprep.subr.mxu0 0.0
      %1421 = vmatpush1.msra.mxu0 %v615
      %1422 = vmatprep.subr.mxu0 0.0
      %1423 = vmatpush1.msra.mxu0 %v616
      %1424 = vmatprep.subr.mxu0 0.0
      %1425 = vmatpush1.msra.mxu0 %v617
      %1426 = vmatprep.subr.mxu0 0.0
      %1427 = vmatpush1.msra.mxu0 %v618
      %1428 = vmatprep.subr.mxu0 0.0
      %1429 = vmatpush1.msra.mxu0 %v619
      %1430 = vmatprep.subr.mxu0 0.0
      %1431 = vmatpush1.msra.mxu0 %v620
      %1432 = vmatprep.subr.mxu0 0.0
      %1433 = vmatpush1.msra.mxu0 %v621
      %1434 = vmatprep.subr.mxu0 0.0
      %1435 = vmatpush1.msra.mxu0 %v622
      %1436 = vmatprep.subr.mxu0 0.0
      %1437 = vmatpush1.msra.mxu0 %v623
      %1438 = vmatprep.subr.mxu0 0.0
      %1439 = vmatpush1.msra.mxu0 %v624
      %1440 = vmatprep.subr.mxu0 0.0
      %1441 = vmatpush1.msra.mxu0 %v625
      %1442 = vmatprep.subr.mxu0 0.0
      %1443 = vmatpush1.msra.mxu0 %v626
      %1444 = vmatprep.subr.mxu0 0.0
      %1445 = vmatpush1.msra.mxu0 %v627
      %1446 = vmatprep.subr.mxu0 0.0
      %1447 = vmatpush1.msra.mxu0 %v628
      %1448 = vmatprep.subr.mxu0 0.0
      %1449 = vmatpush1.msra.mxu0 %v629
      %1450 = vmatprep.mubr.f32.mxu0 %v159
      %1451 = vmatmul.mubr.f32.gmra.mrb[0].mxu0 %v158
      %v1452 = vpop.f32.mrb[0].mxu0
      %v1453 = vadd.f32 %v1288, %v1452
      %v1454 = vpop.f32.mrb[0].mxu0
      %1455 = vmatprep.mubr.f32.mxu0 %v175
      %1456 = vmatmul.mubr.f32.gmra.mrb[0].mxu0 %v174
      %v1457 = vpop.f32.mrb[0].mxu0
      %v1458 = vadd.f32 %v1293, %v1457
      %v1459 = vpop.f32.mrb[0].mxu0
      %1460 = vmatprep.mubr.f32.mxu0 %v191
      %1461 = vmatmul.mubr.f32.gmra.mrb[0].mxu0 %v190
      %v1462 = vpop.f32.mrb[0].mxu0
      %v1463 = vadd.f32 %v1298, %v1462
      %v1464 = vpop.f32.mrb[0].mxu0
      %1465 = vmatprep.mubr.f32.mxu0 %v207
      %1466 = vmatmul.mubr.f32.gmra.mrb[0].mxu0 %v206
      %v1467 = vpop.f32.mrb[0].mxu0
      %v1468 = vadd.f32 %v1303, %v1467
      %v1469 = vpop.f32.mrb[0].mxu0
      %1470 = vmatprep.mubr.f32.mxu0 %v223
      %1471 = vmatmul.mubr.f32.gmra.mrb[0].mxu0 %v222
      %v1472 = vpop.f32.mrb[0].mxu0
      %v1473 = vadd.f32 %v1308, %v1472
      %v1474 = vpop.f32.mrb[0].mxu0
      %1475 = vmatprep.mubr.f32.mxu0 %v239
      %1476 = vmatmul.mubr.f32.gmra.mrb[0].mxu0 %v238
      %v1477 = vpop.f32.mrb[0].mxu0
      %v1478 = vadd.f32 %v1313, %v1477
      %v1479 = vpop.f32.mrb[0].mxu0
      %1480 = vmatprep.mubr.f32.mxu0 %v255
      %1481 = vmatmul.mubr.f32.gmra.mrb[0].mxu0 %v254
      %v1482 = vpop.f32.mrb[0].mxu0
      %v1483 = vadd.f32 %v1318, %v1482
      %v1484 = vpop.f32.mrb[0].mxu0
      %1485 = vmatprep.mubr.f32.mxu0 %v271
      %1486 = vmatmul.mubr.f32.gmra.mrb[0].mxu0 %v270
      %v1487 = vpop.f32.mrb[0].mxu0
      %v1488 = vadd.f32 %v1323, %v1487
      %v1489 = vpop.f32.mrb[0].mxu0
      %1490 = vmatprep.mubr.f32.mxu0 %v287
      %1491 = vmatmul.mubr.f32.gmra.mrb[0].mxu0 %v286
      %v1492 = vpop.f32.mrb[0].mxu0
      %v1493 = vadd.f32 %v1328, %v1492
      %v1494 = vpop.f32.mrb[0].mxu0
      %1495 = vmatprep.mubr.f32.mxu0 %v303
      %1496 = vmatmul.mubr.f32.gmra.mrb[0].mxu0 %v302
      %v1497 = vpop.f32.mrb[0].mxu0
      %v1498 = vadd.f32 %v1333, %v1497
      %v1499 = vpop.f32.mrb[0].mxu0
      %1500 = vmatprep.mubr.f32.mxu0 %v319
      %1501 = vmatmul.mubr.f32.gmra.mrb[0].mxu0 %v318
      %v1502 = vpop.f32.mrb[0].mxu0
      %v1503 = vadd.f32 %v1338, %v1502
      %v1504 = vpop.f32.mrb[0].mxu0
      %1505 = vmatprep.mubr.f32.mxu0 %v335
      %1506 = vmatmul.mubr.f32.gmra.mrb[0].mxu0 %v334
      %v1507 = vpop.f32.mrb[0].mxu0
      %v1508 = vadd.f32 %v1343, %v1507
      %v1509 = vpop.f32.mrb[0].mxu0
      %1510 = vmatprep.mubr.f32.mxu0 %v351
      %1511 = vmatmul.mubr.f32.gmra.mrb[0].mxu0 %v350
      %v1512 = vpop.f32.mrb[0].mxu0
      %v1513 = vadd.f32 %v1348, %v1512
      %v1514 = vpop.f32.mrb[0].mxu0
      %1515 = vmatprep.mubr.f32.mxu0 %v367
      %1516 = vmatmul.mubr.f32.gmra.mrb[0].mxu0 %v366
      %v1517 = vpop.f32.mrb[0].mxu0
      %v1518 = vadd.f32 %v1353, %v1517
      %v1519 = vpop.f32.mrb[0].mxu0
      %1520 = vmatprep.mubr.f32.mxu0 %v383
      %1521 = vmatmul.mubr.f32.gmra.mrb[0].mxu0 %v382
      %v1522 = vpop.f32.mrb[0].mxu0
      %v1523 = vadd.f32 %v1358, %v1522
      %v1524 = vpop.f32.mrb[0].mxu0
      %1525 = vmatprep.mubr.f32.mxu0 %v399
      %1526 = vmatmul.mubr.f32.gmra.mrb[0].mxu0 %v398
      %v1527 = vpop.f32.mrb[0].mxu0
      %v1528 = vadd.f32 %v1363, %v1527
      %v1529 = vpop.f32.mrb[0].mxu0
      %1530 = vmatprep.mubr.f32.mxu0 %v415
      %1531 = vmatmul.mubr.f32.gmra.mrb[0].mxu0 %v414
      %v1532 = vpop.f32.mrb[0].mxu0
      %v1533 = vadd.f32 %v1368, %v1532
      %v1534 = vpop.f32.mrb[0].mxu0
      %1535 = vmatprep.mubr.f32.mxu0 %v431
      %1536 = vmatmul.mubr.f32.gmra.mrb[0].mxu0 %v430
      %v1537 = vpop.f32.mrb[0].mxu0
      %v1538 = vadd.f32 %v1373, %v1537
      %v1539 = vpop.f32.mrb[0].mxu0
      %1540 = vmatprep.mubr.f32.mxu0 %v447
      %1541 = vmatmul.mubr.f32.gmra.mrb[0].mxu0 %v446
      %v1542 = vpop.f32.mrb[0].mxu0
      %v1543 = vadd.f32 %v1378, %v1542
      %v1544 = vpop.f32.mrb[0].mxu0
      %1545 = vmatprep.mubr.f32.mxu0 %v463
      %1546 = vmatmul.mubr.f32.gmra.mrb[0].mxu0 %v462
      %v1547 = vpop.f32.mrb[0].mxu0
      %v1548 = vadd.f32 %v1383, %v1547
      %v1549 = vpop.f32.mrb[0].mxu0
      %1550 = vdwg.mxu0
      %1551 = vmatprep.subr.mxu0 0.0
      %1552 = vmatpush1.msra.mxu0 %v630
      %1553 = vmatprep.subr.mxu0 0.0
      %1554 = vmatpush1.msra.mxu0 %v631
      %1555 = vmatprep.subr.mxu0 0.0
      %1556 = vmatpush1.msra.mxu0 %v632
      %1557 = vmatprep.subr.mxu0 0.0
      %1558 = vmatpush1.msra.mxu0 %v633
      %1559 = vmatprep.subr.mxu0 0.0
      %1560 = vmatpush1.msra.mxu0 %v634
      %1561 = vmatprep.subr.mxu0 0.0
      %1562 = vmatpush1.msra.mxu0 %v635
      %1563 = vmatprep.subr.mxu0 0.0
      %1564 = vmatpush1.msra.mxu0 %v636
      %1565 = vmatprep.subr.mxu0 0.0
      %1566 = vmatpush1.msra.mxu0 %v637
      %1567 = vmatprep.subr.mxu0 0.0
      %1568 = vmatpush1.msra.mxu0 %v638
      %1569 = vmatprep.subr.mxu0 0.0
      %1570 = vmatpush1.msra.mxu0 %v639
      %1571 = vmatprep.subr.mxu0 0.0
      %1572 = vmatpush1.msra.mxu0 %v640
      %1573 = vmatprep.subr.mxu0 0.0
      %1574 = vmatpush1.msra.mxu0 %v641
      %1575 = vmatprep.subr.mxu0 0.0
      %1576 = vmatpush1.msra.mxu0 %v642
      %1577 = vmatprep.subr.mxu0 0.0
      %1578 = vmatpush1.msra.mxu0 %v643
      %1579 = vmatprep.subr.mxu0 0.0
      %1580 = vmatpush1.msra.mxu0 %v644
      %1581 = vmatprep.subr.mxu0 0.0
      %1582 = vmatpush1.msra.mxu0 %v645
      %1583 = vmatprep.subr.mxu0 0.0
      %1584 = vmatpush1.msra.mxu0 %v646
      %1585 = vmatprep.subr.mxu0 0.0
      %1586 = vmatpush1.msra.mxu0 %v647
      %1587 = vmatprep.subr.mxu0 0.0
      %1588 = vmatpush1.msra.mxu0 %v648
      %1589 = vmatprep.subr.mxu0 0.0
      %1590 = vmatpush1.msra.mxu0 %v649
      %1591 = vmatprep.subr.mxu0 0.0
      %1592 = vmatpush1.msra.mxu0 %v650
      %1593 = vmatprep.subr.mxu0 0.0
      %1594 = vmatpush1.msra.mxu0 %v651
      %1595 = vmatprep.subr.mxu0 0.0
      %1596 = vmatpush1.msra.mxu0 %v652
      %1597 = vmatprep.subr.mxu0 0.0
      %1598 = vmatpush1.msra.mxu0 %v653
      %1599 = vmatprep.subr.mxu0 0.0
      %1600 = vmatpush1.msra.mxu0 %v654
      %1601 = vmatprep.subr.mxu0 0.0
      %1602 = vmatpush1.msra.mxu0 %v655
      %1603 = vmatprep.subr.mxu0 0.0
      %1604 = vmatpush1.msra.mxu0 %v656
      %1605 = vmatprep.subr.mxu0 0.0
      %1606 = vmatpush1.msra.mxu0 %v657
      %1607 = vmatprep.subr.mxu0 0.0
      %1608 = vmatpush1.msra.mxu0 %v658
      %1609 = vmatprep.subr.mxu0 0.0
      %1610 = vmatpush1.msra.mxu0 %v659
      %1611 = vmatprep.subr.mxu0 0.0
      %1612 = vmatpush1.msra.mxu0 %v660
      %1613 = vmatprep.subr.mxu0 0.0
      %1614 = vmatpush1.msra.mxu0 %v661
      %1615 = vmatprep.mubr.f32.mxu0 %v161
      %1616 = vmatmul.mubr.f32.gmra.mrb[0].mxu0 %v160
      %v1617 = vpop.f32.mrb[0].mxu0
      %v1618 = vadd.f32 %v1453, %v1617
      %v1619 = vpop.f32.mrb[0].mxu0
      %1620 = vmatprep.mubr.f32.mxu0 %v177
      %1621 = vmatmul.mubr.f32.gmra.mrb[0].mxu0 %v176
      %v1622 = vpop.f32.mrb[0].mxu0
      %v1623 = vadd.f32 %v1458, %v1622
      %v1624 = vpop.f32.mrb[0].mxu0
      %1625 = vmatprep.mubr.f32.mxu0 %v193
      %1626 = vmatmul.mubr.f32.gmra.mrb[0].mxu0 %v192
      %v1627 = vpop.f32.mrb[0].mxu0
      %v1628 = vadd.f32 %v1463, %v1627
      %v1629 = vpop.f32.mrb[0].mxu0
      %1630 = vmatprep.mubr.f32.mxu0 %v209
      %1631 = vmatmul.mubr.f32.gmra.mrb[0].mxu0 %v208
      %v1632 = vpop.f32.mrb[0].mxu0
      %v1633 = vadd.f32 %v1468, %v1632
      %v1634 = vpop.f32.mrb[0].mxu0
      %1635 = vmatprep.mubr.f32.mxu0 %v225
      %1636 = vmatmul.mubr.f32.gmra.mrb[0].mxu0 %v224
      %v1637 = vpop.f32.mrb[0].mxu0
      %v1638 = vadd.f32 %v1473, %v1637
      %v1639 = vpop.f32.mrb[0].mxu0
      %1640 = vmatprep.mubr.f32.mxu0 %v241
      %1641 = vmatmul.mubr.f32.gmra.mrb[0].mxu0 %v240
      %v1642 = vpop.f32.mrb[0].mxu0
      %v1643 = vadd.f32 %v1478, %v1642
      %v1644 = vpop.f32.mrb[0].mxu0
      %1645 = vmatprep.mubr.f32.mxu0 %v257
      %1646 = vmatmul.mubr.f32.gmra.mrb[0].mxu0 %v256
      %v1647 = vpop.f32.mrb[0].mxu0
      %v1648 = vadd.f32 %v1483, %v1647
      %v1649 = vpop.f32.mrb[0].mxu0
      %1650 = vmatprep.mubr.f32.mxu0 %v273
      %1651 = vmatmul.mubr.f32.gmra.mrb[0].mxu0 %v272
      %v1652 = vpop.f32.mrb[0].mxu0
      %v1653 = vadd.f32 %v1488, %v1652
      %v1654 = vpop.f32.mrb[0].mxu0
      %1655 = vmatprep.mubr.f32.mxu0 %v289
      %1656 = vmatmul.mubr.f32.gmra.mrb[0].mxu0 %v288
      %v1657 = vpop.f32.mrb[0].mxu0
      %v1658 = vadd.f32 %v1493, %v1657
      %v1659 = vpop.f32.mrb[0].mxu0
      %1660 = vmatprep.mubr.f32.mxu0 %v305
      %1661 = vmatmul.mubr.f32.gmra.mrb[0].mxu0 %v304
      %v1662 = vpop.f32.mrb[0].mxu0
      %v1663 = vadd.f32 %v1498, %v1662
      %v1664 = vpop.f32.mrb[0].mxu0
      %1665 = vmatprep.mubr.f32.mxu0 %v321
      %1666 = vmatmul.mubr.f32.gmra.mrb[0].mxu0 %v320
      %v1667 = vpop.f32.mrb[0].mxu0
      %v1668 = vadd.f32 %v1503, %v1667
      %v1669 = vpop.f32.mrb[0].mxu0
      %1670 = vmatprep.mubr.f32.mxu0 %v337
      %1671 = vmatmul.mubr.f32.gmra.mrb[0].mxu0 %v336
      %v1672 = vpop.f32.mrb[0].mxu0
      %v1673 = vadd.f32 %v1508, %v1672
      %v1674 = vpop.f32.mrb[0].mxu0
      %1675 = vmatprep.mubr.f32.mxu0 %v353
      %1676 = vmatmul.mubr.f32.gmra.mrb[0].mxu0 %v352
      %v1677 = vpop.f32.mrb[0].mxu0
      %v1678 = vadd.f32 %v1513, %v1677
      %v1679 = vpop.f32.mrb[0].mxu0
      %1680 = vmatprep.mubr.f32.mxu0 %v369
      %1681 = vmatmul.mubr.f32.gmra.mrb[0].mxu0 %v368
      %v1682 = vpop.f32.mrb[0].mxu0
      %v1683 = vadd.f32 %v1518, %v1682
      %v1684 = vpop.f32.mrb[0].mxu0
      %1685 = vmatprep.mubr.f32.mxu0 %v385
      %1686 = vmatmul.mubr.f32.gmra.mrb[0].mxu0 %v384
      %v1687 = vpop.f32.mrb[0].mxu0
      %v1688 = vadd.f32 %v1523, %v1687
      %v1689 = vpop.f32.mrb[0].mxu0
      %1690 = vmatprep.mubr.f32.mxu0 %v401
      %1691 = vmatmul.mubr.f32.gmra.mrb[0].mxu0 %v400
      %v1692 = vpop.f32.mrb[0].mxu0
      %v1693 = vadd.f32 %v1528, %v1692
      %v1694 = vpop.f32.mrb[0].mxu0
      %1695 = vmatprep.mubr.f32.mxu0 %v417
      %1696 = vmatmul.mubr.f32.gmra.mrb[0].mxu0 %v416
      %v1697 = vpop.f32.mrb[0].mxu0
      %v1698 = vadd.f32 %v1533, %v1697
      %v1699 = vpop.f32.mrb[0].mxu0
      %1700 = vmatprep.mubr.f32.mxu0 %v433
      %1701 = vmatmul.mubr.f32.gmra.mrb[0].mxu0 %v432
      %v1702 = vpop.f32.mrb[0].mxu0
      %v1703 = vadd.f32 %v1538, %v1702
      %v1704 = vpop.f32.mrb[0].mxu0
      %1705 = vmatprep.mubr.f32.mxu0 %v449
      %1706 = vmatmul.mubr.f32.gmra.mrb[0].mxu0 %v448
      %v1707 = vpop.f32.mrb[0].mxu0
      %v1708 = vadd.f32 %v1543, %v1707
      %v1709 = vpop.f32.mrb[0].mxu0
      %1710 = vmatprep.mubr.f32.mxu0 %v465
      %1711 = vmatmul.mubr.f32.gmra.mrb[0].mxu0 %v464
      %v1712 = vpop.f32.mrb[0].mxu0
      %v1713 = vadd.f32 %v1548, %v1712
      %v1714 = vpop.f32.mrb[0].mxu0
      %1715 = vdwg.mxu0
      %1716 = vmatprep.subr.mxu0 0.0
      %1717 = vmatpush1.msra.mxu0 %v662
      %1718 = vmatprep.subr.mxu0 0.0
      %1719 = vmatpush1.msra.mxu0 %v663
      %1720 = vmatprep.subr.mxu0 0.0
      %1721 = vmatpush1.msra.mxu0 %v664
      %1722 = vmatprep.subr.mxu0 0.0
      %1723 = vmatpush1.msra.mxu0 %v665
      %1724 = vmatprep.subr.mxu0 0.0
      %1725 = vmatpush1.msra.mxu0 %v666
      %1726 = vmatprep.subr.mxu0 0.0
      %1727 = vmatpush1.msra.mxu0 %v667
      %1728 = vmatprep.subr.mxu0 0.0
      %1729 = vmatpush1.msra.mxu0 %v668
      %1730 = vmatprep.subr.mxu0 0.0
      %1731 = vmatpush1.msra.mxu0 %v669
      %1732 = vmatprep.subr.mxu0 0.0
      %1733 = vmatpush1.msra.mxu0 %v670
      %1734 = vmatprep.subr.mxu0 0.0
      %1735 = vmatpush1.msra.mxu0 %v671
      %1736 = vmatprep.subr.mxu0 0.0
      %1737 = vmatpush1.msra.mxu0 %v672
      %1738 = vmatprep.subr.mxu0 0.0
      %1739 = vmatpush1.msra.mxu0 %v673
      %1740 = vmatprep.subr.mxu0 0.0
      %1741 = vmatpush1.msra.mxu0 %v674
      %1742 = vmatprep.subr.mxu0 0.0
      %1743 = vmatpush1.msra.mxu0 %v675
      %1744 = vmatprep.subr.mxu0 0.0
      %1745 = vmatpush1.msra.mxu0 %v676
      %1746 = vmatprep.subr.mxu0 0.0
      %1747 = vmatpush1.msra.mxu0 %v677
      %1748 = vmatprep.subr.mxu0 0.0
      %1749 = vmatpush1.msra.mxu0 %v678
      %1750 = vmatprep.subr.mxu0 0.0
      %1751 = vmatpush1.msra.mxu0 %v679
      %1752 = vmatprep.subr.mxu0 0.0
      %1753 = vmatpush1.msra.mxu0 %v680
      %1754 = vmatprep.subr.mxu0 0.0
      %1755 = vmatpush1.msra.mxu0 %v681
      %1756 = vmatprep.subr.mxu0 0.0
      %1757 = vmatpush1.msra.mxu0 %v682
      %1758 = vmatprep.subr.mxu0 0.0
      %1759 = vmatpush1.msra.mxu0 %v683
      %1760 = vmatprep.subr.mxu0 0.0
      %1761 = vmatpush1.msra.mxu0 %v684
      %1762 = vmatprep.subr.mxu0 0.0
      %1763 = vmatpush1.msra.mxu0 %v685
      %1764 = vmatprep.subr.mxu0 0.0
      %1765 = vmatpush1.msra.mxu0 %v686
      %1766 = vmatprep.subr.mxu0 0.0
      %1767 = vmatpush1.msra.mxu0 %v687
      %1768 = vmatprep.subr.mxu0 0.0
      %1769 = vmatpush1.msra.mxu0 %v688
      %1770 = vmatprep.subr.mxu0 0.0
      %1771 = vmatpush1.msra.mxu0 %v689
      %1772 = vmatprep.subr.mxu0 0.0
      %1773 = vmatpush1.msra.mxu0 %v690
      %1774 = vmatprep.subr.mxu0 0.0
      %1775 = vmatpush1.msra.mxu0 %v691
      %1776 = vmatprep.subr.mxu0 0.0
      %1777 = vmatpush1.msra.mxu0 %v692
      %1778 = vmatprep.subr.mxu0 0.0
      %1779 = vmatpush1.msra.mxu0 %v693
      %1780 = vmatprep.mubr.f32.mxu0 %v163
      %1781 = vmatmul.mubr.f32.gmra.mrb[0].mxu0 %v162
      %v1782 = vpop.f32.mrb[0].mxu0
      %v1783 = vadd.f32 %v1618, %v1782
      %v1784 = vpop.f32.mrb[0].mxu0
      %1785 = vmatprep.mubr.f32.mxu0 %v179
      %1786 = vmatmul.mubr.f32.gmra.mrb[0].mxu0 %v178
      %v1787 = vpop.f32.mrb[0].mxu0
      %v1788 = vadd.f32 %v1623, %v1787
      %v1789 = vpop.f32.mrb[0].mxu0
      %1790 = vmatprep.mubr.f32.mxu0 %v195
      %1791 = vmatmul.mubr.f32.gmra.mrb[0].mxu0 %v194
      %v1792 = vpop.f32.mrb[0].mxu0
      %v1793 = vadd.f32 %v1628, %v1792
      %v1794 = vpop.f32.mrb[0].mxu0
      %1795 = vmatprep.mubr.f32.mxu0 %v211
      %1796 = vmatmul.mubr.f32.gmra.mrb[0].mxu0 %v210
      %v1797 = vpop.f32.mrb[0].mxu0
      %v1798 = vadd.f32 %v1633, %v1797
      %v1799 = vpop.f32.mrb[0].mxu0
      %1800 = vmatprep.mubr.f32.mxu0 %v227
      %1801 = vmatmul.mubr.f32.gmra.mrb[0].mxu0 %v226
      %v1802 = vpop.f32.mrb[0].mxu0
      %v1803 = vadd.f32 %v1638, %v1802
      %v1804 = vpop.f32.mrb[0].mxu0
      %1805 = vmatprep.mubr.f32.mxu0 %v243
      %1806 = vmatmul.mubr.f32.gmra.mrb[0].mxu0 %v242
      %v1807 = vpop.f32.mrb[0].mxu0
      %v1808 = vadd.f32 %v1643, %v1807
      %v1809 = vpop.f32.mrb[0].mxu0
      %1810 = vmatprep.mubr.f32.mxu0 %v259
      %1811 = vmatmul.mubr.f32.gmra.mrb[0].mxu0 %v258
      %v1812 = vpop.f32.mrb[0].mxu0
      %v1813 = vadd.f32 %v1648, %v1812
      %v1814 = vpop.f32.mrb[0].mxu0
      %1815 = vmatprep.mubr.f32.mxu0 %v275
      %1816 = vmatmul.mubr.f32.gmra.mrb[0].mxu0 %v274
      %v1817 = vpop.f32.mrb[0].mxu0
      %v1818 = vadd.f32 %v1653, %v1817
      %v1819 = vpop.f32.mrb[0].mxu0
      %1820 = vmatprep.mubr.f32.mxu0 %v291
      %1821 = vmatmul.mubr.f32.gmra.mrb[0].mxu0 %v290
      %v1822 = vpop.f32.mrb[0].mxu0
      %v1823 = vadd.f32 %v1658, %v1822
      %v1824 = vpop.f32.mrb[0].mxu0
      %1825 = vmatprep.mubr.f32.mxu0 %v307
      %1826 = vmatmul.mubr.f32.gmra.mrb[0].mxu0 %v306
      %v1827 = vpop.f32.mrb[0].mxu0
      %v1828 = vadd.f32 %v1663, %v1827
      %v1829 = vpop.f32.mrb[0].mxu0
      %1830 = vmatprep.mubr.f32.mxu0 %v323
      %1831 = vmatmul.mubr.f32.gmra.mrb[0].mxu0 %v322
      %v1832 = vpop.f32.mrb[0].mxu0
      %v1833 = vadd.f32 %v1668, %v1832
      %v1834 = vpop.f32.mrb[0].mxu0
      %1835 = vmatprep.mubr.f32.mxu0 %v339
      %1836 = vmatmul.mubr.f32.gmra.mrb[0].mxu0 %v338
      %v1837 = vpop.f32.mrb[0].mxu0
      %v1838 = vadd.f32 %v1673, %v1837
      %v1839 = vpop.f32.mrb[0].mxu0
      %1840 = vmatprep.mubr.f32.mxu0 %v355
      %1841 = vmatmul.mubr.f32.gmra.mrb[0].mxu0 %v354
      %v1842 = vpop.f32.mrb[0].mxu0
      %v1843 = vadd.f32 %v1678, %v1842
      %v1844 = vpop.f32.mrb[0].mxu0
      %1845 = vmatprep.mubr.f32.mxu0 %v371
      %1846 = vmatmul.mubr.f32.gmra.mrb[0].mxu0 %v370
      %v1847 = vpop.f32.mrb[0].mxu0
      %v1848 = vadd.f32 %v1683, %v1847
      %v1849 = vpop.f32.mrb[0].mxu0
      %1850 = vmatprep.mubr.f32.mxu0 %v387
      %1851 = vmatmul.mubr.f32.gmra.mrb[0].mxu0 %v386
      %v1852 = vpop.f32.mrb[0].mxu0
      %v1853 = vadd.f32 %v1688, %v1852
      %v1854 = vpop.f32.mrb[0].mxu0
      %1855 = vmatprep.mubr.f32.mxu0 %v403
      %1856 = vmatmul.mubr.f32.gmra.mrb[0].mxu0 %v402
      %v1857 = vpop.f32.mrb[0].mxu0
      %v1858 = vadd.f32 %v1693, %v1857
      %v1859 = vpop.f32.mrb[0].mxu0
      %1860 = vmatprep.mubr.f32.mxu0 %v419
      %1861 = vmatmul.mubr.f32.gmra.mrb[0].mxu0 %v418
      %v1862 = vpop.f32.mrb[0].mxu0
      %v1863 = vadd.f32 %v1698, %v1862
      %v1864 = vpop.f32.mrb[0].mxu0
      %1865 = vmatprep.mubr.f32.mxu0 %v435
      %1866 = vmatmul.mubr.f32.gmra.mrb[0].mxu0 %v434
      %v1867 = vpop.f32.mrb[0].mxu0
      %v1868 = vadd.f32 %v1703, %v1867
      %v1869 = vpop.f32.mrb[0].mxu0
      %1870 = vmatprep.mubr.f32.mxu0 %v451
      %1871 = vmatmul.mubr.f32.gmra.mrb[0].mxu0 %v450
      %v1872 = vpop.f32.mrb[0].mxu0
      %v1873 = vadd.f32 %v1708, %v1872
      %v1874 = vpop.f32.mrb[0].mxu0
      %1875 = vmatprep.mubr.f32.mxu0 %v467
      %1876 = vmatmul.mubr.f32.gmra.mrb[0].mxu0 %v466
      %v1877 = vpop.f32.mrb[0].mxu0
      %v1878 = vadd.f32 %v1713, %v1877
      %v1879 = vpop.f32.mrb[0].mxu0
      %1880 = vdwg.mxu0
      %1881 = vmatprep.subr.mxu0 0.0
      %1882 = vmatpush1.msra.mxu0 %v694
      %1883 = vmatprep.subr.mxu0 0.0
      %1884 = vmatpush1.msra.mxu0 %v695
      %1885 = vmatprep.subr.mxu0 0.0
      %1886 = vmatpush1.msra.mxu0 %v696
      %1887 = vmatprep.subr.mxu0 0.0
      %1888 = vmatpush1.msra.mxu0 %v697
      %1889 = vmatprep.subr.mxu0 0.0
      %1890 = vmatpush1.msra.mxu0 %v698
      %1891 = vmatprep.subr.mxu0 0.0
      %1892 = vmatpush1.msra.mxu0 %v699
      %1893 = vmatprep.subr.mxu0 0.0
      %1894 = vmatpush1.msra.mxu0 %v700
      %1895 = vmatprep.subr.mxu0 0.0
      %1896 = vmatpush1.msra.mxu0 %v701
      %1897 = vmatprep.subr.mxu0 0.0
      %1898 = vmatpush1.msra.mxu0 %v702
      %1899 = vmatprep.subr.mxu0 0.0
      %1900 = vmatpush1.msra.mxu0 %v703
      %1901 = vmatprep.subr.mxu0 0.0
      %1902 = vmatpush1.msra.mxu0 %v704
      %1903 = vmatprep.subr.mxu0 0.0
      %1904 = vmatpush1.msra.mxu0 %v705
      %1905 = vmatprep.subr.mxu0 0.0
      %1906 = vmatpush1.msra.mxu0 %v706
      %1907 = vmatprep.subr.mxu0 0.0
      %1908 = vmatpush1.msra.mxu0 %v707
      %1909 = vmatprep.subr.mxu0 0.0
      %1910 = vmatpush1.msra.mxu0 %v708
      %1911 = vmatprep.subr.mxu0 0.0
      %1912 = vmatpush1.msra.mxu0 %v709
      %1913 = vmatprep.subr.mxu0 0.0
      %1914 = vmatpush1.msra.mxu0 %v710
      %1915 = vmatprep.subr.mxu0 0.0
      %1916 = vmatpush1.msra.mxu0 %v711
      %1917 = vmatprep.subr.mxu0 0.0
      %1918 = vmatpush1.msra.mxu0 %v712
      %1919 = vmatprep.subr.mxu0 0.0
      %1920 = vmatpush1.msra.mxu0 %v713
      %1921 = vmatprep.subr.mxu0 0.0
      %1922 = vmatpush1.msra.mxu0 %v714
      %1923 = vmatprep.subr.mxu0 0.0
      %1924 = vmatpush1.msra.mxu0 %v715
      %1925 = vmatprep.subr.mxu0 0.0
      %1926 = vmatpush1.msra.mxu0 %v716
      %1927 = vmatprep.subr.mxu0 0.0
      %1928 = vmatpush1.msra.mxu0 %v717
      %1929 = vmatprep.subr.mxu0 0.0
      %1930 = vmatpush1.msra.mxu0 %v718
      %1931 = vmatprep.subr.mxu0 0.0
      %1932 = vmatpush1.msra.mxu0 %v719
      %1933 = vmatprep.subr.mxu0 0.0
      %1934 = vmatpush1.msra.mxu0 %v720
      %1935 = vmatprep.subr.mxu0 0.0
      %1936 = vmatpush1.msra.mxu0 %v721
      %1937 = vmatprep.subr.mxu0 0.0
      %1938 = vmatpush1.msra.mxu0 %v722
      %1939 = vmatprep.subr.mxu0 0.0
      %1940 = vmatpush1.msra.mxu0 %v723
      %1941 = vmatprep.subr.mxu0 0.0
      %1942 = vmatpush1.msra.mxu0 %v724
      %1943 = vmatprep.subr.mxu0 0.0
      %1944 = vmatpush1.msra.mxu0 %v725
      %1945 = vmatprep.mubr.f32.mxu0 %v165
      %1946 = vmatmul.mubr.f32.gmra.mrb[0].mxu0 %v164
      %v1947 = vpop.f32.mrb[0].mxu0
      %v1948 = vadd.f32 %v1783, %v1947
      %v1949 = vpop.f32.mrb[0].mxu0
      %1950 = vmatprep.mubr.f32.mxu0 %v181
      %1951 = vmatmul.mubr.f32.gmra.mrb[0].mxu0 %v180
      %v1952 = vpop.f32.mrb[0].mxu0
      %v1953 = vadd.f32 %v1788, %v1952
      %v1954 = vpop.f32.mrb[0].mxu0
      %1955 = vmatprep.mubr.f32.mxu0 %v197
      %1956 = vmatmul.mubr.f32.gmra.mrb[0].mxu0 %v196
      %v1957 = vpop.f32.mrb[0].mxu0
      %v1958 = vadd.f32 %v1793, %v1957
      %v1959 = vpop.f32.mrb[0].mxu0
      %1960 = vmatprep.mubr.f32.mxu0 %v213
      %1961 = vmatmul.mubr.f32.gmra.mrb[0].mxu0 %v212
      %v1962 = vpop.f32.mrb[0].mxu0
      %v1963 = vadd.f32 %v1798, %v1962
      %v1964 = vpop.f32.mrb[0].mxu0
      %1965 = vmatprep.mubr.f32.mxu0 %v229
      %1966 = vmatmul.mubr.f32.gmra.mrb[0].mxu0 %v228
      %v1967 = vpop.f32.mrb[0].mxu0
      %v1968 = vadd.f32 %v1803, %v1967
      %v1969 = vpop.f32.mrb[0].mxu0
      %1970 = vmatprep.mubr.f32.mxu0 %v245
      %1971 = vmatmul.mubr.f32.gmra.mrb[0].mxu0 %v244
      %v1972 = vpop.f32.mrb[0].mxu0
      %v1973 = vadd.f32 %v1808, %v1972
      %v1974 = vpop.f32.mrb[0].mxu0
      %1975 = vmatprep.mubr.f32.mxu0 %v261
      %1976 = vmatmul.mubr.f32.gmra.mrb[0].mxu0 %v260
      %v1977 = vpop.f32.mrb[0].mxu0
      %v1978 = vadd.f32 %v1813, %v1977
      %v1979 = vpop.f32.mrb[0].mxu0
      %1980 = vmatprep.mubr.f32.mxu0 %v277
      %1981 = vmatmul.mubr.f32.gmra.mrb[0].mxu0 %v276
      %v1982 = vpop.f32.mrb[0].mxu0
      %v1983 = vadd.f32 %v1818, %v1982
      %v1984 = vpop.f32.mrb[0].mxu0
      %1985 = vmatprep.mubr.f32.mxu0 %v293
      %1986 = vmatmul.mubr.f32.gmra.mrb[0].mxu0 %v292
      %v1987 = vpop.f32.mrb[0].mxu0
      %v1988 = vadd.f32 %v1823, %v1987
      %v1989 = vpop.f32.mrb[0].mxu0
      %1990 = vmatprep.mubr.f32.mxu0 %v309
      %1991 = vmatmul.mubr.f32.gmra.mrb[0].mxu0 %v308
      %v1992 = vpop.f32.mrb[0].mxu0
      %v1993 = vadd.f32 %v1828, %v1992
      %v1994 = vpop.f32.mrb[0].mxu0
      %1995 = vmatprep.mubr.f32.mxu0 %v325
      %1996 = vmatmul.mubr.f32.gmra.mrb[0].mxu0 %v324
      %v1997 = vpop.f32.mrb[0].mxu0
      %v1998 = vadd.f32 %v1833, %v1997
      %v1999 = vpop.f32.mrb[0].mxu0
      %2000 = vmatprep.mubr.f32.mxu0 %v341
      %2001 = vmatmul.mubr.f32.gmra.mrb[0].mxu0 %v340
      %v2002 = vpop.f32.mrb[0].mxu0
      %v2003 = vadd.f32 %v1838, %v2002
      %v2004 = vpop.f32.mrb[0].mxu0
      %2005 = vmatprep.mubr.f32.mxu0 %v357
      %2006 = vmatmul.mubr.f32.gmra.mrb[0].mxu0 %v356
      %v2007 = vpop.f32.mrb[0].mxu0
      %v2008 = vadd.f32 %v1843, %v2007
      %v2009 = vpop.f32.mrb[0].mxu0
      %2010 = vmatprep.mubr.f32.mxu0 %v373
      %2011 = vmatmul.mubr.f32.gmra.mrb[0].mxu0 %v372
      %v2012 = vpop.f32.mrb[0].mxu0
      %v2013 = vadd.f32 %v1848, %v2012
      %v2014 = vpop.f32.mrb[0].mxu0
      %2015 = vmatprep.mubr.f32.mxu0 %v389
      %2016 = vmatmul.mubr.f32.gmra.mrb[0].mxu0 %v388
      %v2017 = vpop.f32.mrb[0].mxu0
      %v2018 = vadd.f32 %v1853, %v2017
      %v2019 = vpop.f32.mrb[0].mxu0
      %2020 = vmatprep.mubr.f32.mxu0 %v405
      %2021 = vmatmul.mubr.f32.gmra.mrb[0].mxu0 %v404
      %v2022 = vpop.f32.mrb[0].mxu0
      %v2023 = vadd.f32 %v1858, %v2022
      %v2024 = vpop.f32.mrb[0].mxu0
      %2025 = vmatprep.mubr.f32.mxu0 %v421
      %2026 = vmatmul.mubr.f32.gmra.mrb[0].mxu0 %v420
      %v2027 = vpop.f32.mrb[0].mxu0
      %v2028 = vadd.f32 %v1863, %v2027
      %v2029 = vpop.f32.mrb[0].mxu0
      %2030 = vmatprep.mubr.f32.mxu0 %v437
      %2031 = vmatmul.mubr.f32.gmra.mrb[0].mxu0 %v436
      %v2032 = vpop.f32.mrb[0].mxu0
      %v2033 = vadd.f32 %v1868, %v2032
      %v2034 = vpop.f32.mrb[0].mxu0
      %2035 = vmatprep.mubr.f32.mxu0 %v453
      %2036 = vmatmul.mubr.f32.gmra.mrb[0].mxu0 %v452
      %v2037 = vpop.f32.mrb[0].mxu0
      %v2038 = vadd.f32 %v1873, %v2037
      %v2039 = vpop.f32.mrb[0].mxu0
      %2040 = vmatprep.mubr.f32.mxu0 %v469
      %2041 = vmatmul.mubr.f32.gmra.mrb[0].mxu0 %v468
      %v2042 = vpop.f32.mrb[0].mxu0
      %v2043 = vadd.f32 %v1878, %v2042
      %v2044 = vpop.f32.mrb[0].mxu0
      %2045 = vdwg.mxu0
      %2046 = vst [vmem:[%s148] sm:$0xff] %v1948
      %2047 = vst [vmem:[%s148 + $0x8] sm:$0xff] %v1953
      %2048 = vst [vmem:[%s148 + $0x10] sm:$0xff] %v1958
      %2049 = vst [vmem:[%s148 + $0x18] sm:$0xff] %v1963
      %2050 = vst [vmem:[%s148 + $0x20] sm:$0xff] %v1968
      %2051 = vst [vmem:[%s148 + $0x28] sm:$0xff] %v1973
      %2052 = vst [vmem:[%s148 + $0x30] sm:$0xff] %v1978
      %2053 = vst [vmem:[%s148 + $0x38] sm:$0xff] %v1983
      %2054 = vst [vmem:[%s148 + $0x40] sm:$0xff] %v1988
      %2055 = vst [vmem:[%s148 + $0x48] sm:$0xff] %v1993
      %2056 = vst [vmem:[%s148 + $0x50] sm:$0xff] %v1998
      %2057 = vst [vmem:[%s148 + $0x58] sm:$0xff] %v2003
      %2058 = vst [vmem:[%s148 + $0x60] sm:$0xff] %v2008
      %2059 = vst [vmem:[%s148 + $0x68] sm:$0xff] %v2013
      %2060 = vst [vmem:[%s148 + $0x70] sm:$0xff] %v2018
      %2061 = vst [vmem:[%s148 + $0x78] sm:$0xff] %v2023
      %2062 = vst [vmem:[%s148 + $0x80] sm:$0xff] %v2028
      %2063 = vst [vmem:[%s148 + $0x88] sm:$0xff] %v2033
      %2064 = vst [vmem:[%s148 + $0x90] sm:$0xff] %v2038
      %2065 = vst [vmem:[%s148 + $0x98] sm:$0xff] %v2043
      %s2066 = smul.u32 20, %s13
      %p2067 = scmp.lt.s32.totalorder %s2066, 39
      %s2068 = scalar_select %p2067, %s2066, 39
      %s2069 = smul.addr %s2068, 8
      %s2070 = scalar_lea.vmem %s2, %s2069
      // Predicated region
      $region29: #{encode_ln_classify.2} parent=27 // pred_check
        %p2071 = pneg %p78
      $region30: #{encode_ln_classify.2} parent=27 // pred_check_branch
        %2073 = sbr.rel (%p2071) target = $region32
      $region31: #{encode_ln_classify.2} parent=27 // pred_region
        %s2074 = smul.u32 20, %s13
      $region32: #{encode_ln_classify.2} parent=27 // pred_fallthru
        _
    $region28: #{encode_ln_classify.2} parent=5 // pred_fallthru
      _
    %p2075 = scmp.le.s32.totalorder 2, %s8
    // Predicated region
    $region33: #{encode_ln_classify.2} parent=5 // pred_check
      %p2076 = pneg %p2075
    $region34: #{encode_ln_classify.2} parent=5 // pred_check_branch
      %2078 = sbr.rel (%p2076) target = $region36
    $region35: #{encode_ln_classify.2} parent=5 // pred_region
      %s2079 = ssub.s32 %s8, 2
      // Predicated region
      $region37: #{encode_ln_classify.2} parent=35 // pred_check
        %p2080 = pneg %p84
      $region38: #{encode_ln_classify.2} parent=35 // pred_check_branch
        %2082 = sbr.rel (%p2080) target = $region40
      $region39: #{encode_ln_classify.2} parent=35 // pred_region
        %s2083 = smul.u32 20, %s14
        %p2084 = scmp.lt.s32.totalorder %s2083, 39
        %s2085 = scalar_select %p2084, %s2083, 39
        %s2086 = smul.addr %s2085, 8
        %s2087 = scalar_lea.vmem %s2, %s2086
      $region40: #{encode_ln_classify.2} parent=35 // pred_fallthru
        _
    $region36: #{encode_ln_classify.2} parent=5 // pred_fallthru
      _
  $region6: #{encode_ln_classify.2} parent=0 // loop_footer
    %s12 = sadd.s32 1, %s8
  $region7: #{encode_ln_classify.2} parent=0 // loop_footer_branch
    %7 = sbr.rel target = $region3
  $region8: #{encode_ln_classify.2} parent=0 // loop_exit
    _

// kernel: encode_ln_classify.3
$region0: #{encode_ln_classify.3}
  #allocation0 [shape = 'u32[]', space=smem, size = 0x4, offset = 0x4, fixed_abs, tag = 'smem constant byte address 0x4 - core index']
  #allocation1 [shape = 'u32[144,128]{1,0:T(1,128)}', space=vmem, size = 0x12000, scoped, tag = 'internal scratch']
  #allocation2 [shape = 'f32[2,128]{1,0:T(2,128)}', space=vmem, size = 0x400, scoped, tag = 'scratch operand']
  #allocation3 [shape = 'f32[2,1]{1,0:T(2,128)}', space=vmem, size = 0x400, scoped, tag = 'scratch operand']
  #allocation4 [shape = 'f32[2,1]{1,0:T(2,128)}', space=vmem, size = 0x400, scoped, tag = 'scratch operand']
  %s0 = inlined_call_operand.vmem [shape: f32[2,20480], index: 0, kind: input, shape index: {}]
  %s1 = inlined_call_operand.vmem [shape: bf16[20480,128], index: 1, kind: input, shape index: {}]
  %s2 = inlined_call_operand.vmem [shape: f32[1,128], index: 2, kind: input, shape index: {}]
  %s3 = inlined_call_operand.vmem [shape: f32[1,128], index: 3, kind: input, shape index: {}]
  %s4 = inlined_call_operand.vmem [shape: f32[128,10], index: 4, kind: input, shape index: {}]
  %s5 = inlined_call_operand.vmem [shape: f32[1,10], index: 5, kind: input, shape index: {}]
  %s6 = inlined_call_operand.hbm [shape: f32[2,10], index: 6, kind: output, shape index: {}]
  %s7 = sld [smem:[#allocation0]]
  $region65: #{encode_ln_classify.3} parent=0
    _
  %s9 = ssub.s32 1, %s7
  %s10 = scalar_select 0, %s9, %s7
  $region1: #{encode_ln_classify.3} parent=0
    #allocation5 [shape = 'u8[1024]{0}', space=vmem, size = 0x400, scoped, tag = 'output window, operand 0, single buffered']
    #allocation6 [shape = 's32[2]{0}', space=sflag, size = 0x8, scoped, tag = 'scoped memory for encode_ln_classify.3']
    %11 = vsyncpa [#allocation6], 0
    loop: start=0, step=1, limit=4
    $region2: #{encode_ln_classify.3} parent=1 // loop_pre_header
      _
    $region3: #{encode_ln_classify.3} parent=1 // loop_header
      %s13 = sphi 0, %s17
      %p14 = scmp.ge.s32.totalorder %s13, 4
      %s23 = sphi 0, %s25
      %s26 = sphi 0, %s23
      %s27 = sphi 0, %s26
      %s43 = sphi 0, %s27
      %s49 = sphi 0, %s51
      %s52 = sphi 0, %s49
      %s53 = sphi 0, %s52
      %s69 = sphi 0, %s53
      %s73 = sphi 0, %s73
      %s75 = sphi 0, %s73
      %s76 = sphi 0, %s75
      %s90 = sphi 0, %s76
      %s94 = sphi 0, %s94
      %s96 = sphi 0, %s94
      %s97 = sphi 0, %s96
      %s111 = sphi 0, %s97
      %s115 = sphi 0, %s115
      %s117 = sphi 0, %s115
      %s118 = sphi 0, %s117
      %s132 = sphi 0, %s118
      %s136 = sphi 0, %s136
      %s138 = sphi 0, %s136
      %s139 = sphi 0, %s138
      %s153 = sphi 0, %s139
      %s157 = sphi 0, %s157
      %s159 = sphi 0, %s157
      %s160 = sphi 0, %s159
      %s174 = sphi 0, %s160
    $region4: #{encode_ln_classify.3} parent=1 // loop_header_branch
      %16 = sbr.rel (%p14) target = $region8
    $region5: #{encode_ln_classify.3} parent=1 // loop_body
      %s18 = ssub.s32 %s13, 1
      %s19 = ssub.s32 %s13, 2
      %s20 = sadd.s32 %s13, 1
      %s21 = ssub.s32 %s13, %s20
      %p22 = scmp.eq.s32.totalorder %s21, 0
      %s24 = sadd.s32 %s23, 1
      %s25 = scalar_select %p22, %s23, %s24
      %p28 = pneg %p22
      %p29 = scmp.eq.s32.totalorder %s13, 1
      %p30 = por %p28, %p29
      %p31 = scmp.ne.s32.totalorder %s23, %s26
      %p32 = scmp.eq.s32.totalorder %s13, 0
      %p33 = por %p31, %p32
      %p34 = scmp.ne.s32.totalorder %s23, %s26
      %p35 = scmp.eq.s32.totalorder %s18, 1
      %p36 = por %p34, %p35
      %p37 = scmp.ne.s32.totalorder %s26, %s27
      %p38 = scmp.eq.s32.totalorder %s18, 0
      %p39 = por %p37, %p38
      %p40 = scmp.ne.s32.totalorder %s26, %s27
      %p41 = scmp.eq.s32.totalorder %s19, 1
      %p42 = por %p40, %p41
      %p44 = scmp.ne.s32.totalorder %s27, %s43
      %p45 = scmp.eq.s32.totalorder %s19, 0
      %p46 = por %p44, %p45
      %s47 = ssub.s32 %s13, %s20
      %p48 = scmp.eq.s32.totalorder %s47, 0
      %s50 = sadd.s32 %s49, 1
      %s51 = scalar_select %p48, %s49, %s50
      %p54 = pneg %p48
      %p55 = scmp.eq.s32.totalorder %s13, 1
      %p56 = por %p54, %p55
      %p57 = scmp.ne.s32.totalorder %s49, %s52
      %p58 = scmp.eq.s32.totalorder %s13, 0
      %p59 = por %p57, %p58
      %p60 = scmp.ne.s32.totalorder %s49, %s52
      %p61 = scmp.eq.s32.totalorder %s18, 1
      %p62 = por %p60, %p61
      %p63 = scmp.ne.s32.totalorder %s52, %s53
      %p64 = scmp.eq.s32.totalorder %s18, 0
      %p65 = por %p63, %p64
      %p66 = scmp.ne.s32.totalorder %s52, %s53
      %p67 = scmp.eq.s32.totalorder %s19, 1
      %p68 = por %p66, %p67
      %p70 = scmp.ne.s32.totalorder %s53, %s69
      %p71 = scmp.eq.s32.totalorder %s19, 0
      %p72 = por %p70, %p71
      %s74 = sadd.s32 %s73, 1
      %p77 = scmp.eq.s32.totalorder %s13, 1
      %p78 = scmp.ne.s32.totalorder %s73, %s75
      %p79 = scmp.eq.s32.totalorder %s13, 0
      %p80 = por %p78, %p79
      %p81 = scmp.ne.s32.totalorder %s73, %s75
      %p82 = scmp.eq.s32.totalorder %s18, 1
      %p83 = por %p81, %p82
      %p84 = scmp.ne.s32.totalorder %s75, %s76
      %p85 = scmp.eq.s32.totalorder %s18, 0
      %p86 = por %p84, %p85
      %p87 = scmp.ne.s32.totalorder %s75, %s76
      %p88 = scmp.eq.s32.totalorder %s19, 1
      %p89 = por %p87, %p88
      %p91 = scmp.ne.s32.totalorder %s76, %s90
      %p92 = scmp.eq.s32.totalorder %s19, 0
      %p93 = por %p91, %p92
      %s95 = sadd.s32 %s94, 1
      %p98 = scmp.eq.s32.totalorder %s13, 1
      %p99 = scmp.ne.s32.totalorder %s94, %s96
      %p100 = scmp.eq.s32.totalorder %s13, 0
      %p101 = por %p99, %p100
      %p102 = scmp.ne.s32.totalorder %s94, %s96
      %p103 = scmp.eq.s32.totalorder %s18, 1
      %p104 = por %p102, %p103
      %p105 = scmp.ne.s32.totalorder %s96, %s97
      %p106 = scmp.eq.s32.totalorder %s18, 0
      %p107 = por %p105, %p106
      %p108 = scmp.ne.s32.totalorder %s96, %s97
      %p109 = scmp.eq.s32.totalorder %s19, 1
      %p110 = por %p108, %p109
      %p112 = scmp.ne.s32.totalorder %s97, %s111
      %p113 = scmp.eq.s32.totalorder %s19, 0
      %p114 = por %p112, %p113
      %s116 = sadd.s32 %s115, 1
      %p119 = scmp.eq.s32.totalorder %s13, 1
      %p120 = scmp.ne.s32.totalorder %s115, %s117
      %p121 = scmp.eq.s32.totalorder %s13, 0
      %p122 = por %p120, %p121
      %p123 = scmp.ne.s32.totalorder %s115, %s117
      %p124 = scmp.eq.s32.totalorder %s18, 1
      %p125 = por %p123, %p124
      %p126 = scmp.ne.s32.totalorder %s117, %s118
      %p127 = scmp.eq.s32.totalorder %s18, 0
      %p128 = por %p126, %p127
      %p129 = scmp.ne.s32.totalorder %s117, %s118
      %p130 = scmp.eq.s32.totalorder %s19, 1
      %p131 = por %p129, %p130
      %p133 = scmp.ne.s32.totalorder %s118, %s132
      %p134 = scmp.eq.s32.totalorder %s19, 0
      %p135 = por %p133, %p134
      %s137 = sadd.s32 %s136, 1
      %p140 = scmp.eq.s32.totalorder %s13, 1
      %p141 = scmp.ne.s32.totalorder %s136, %s138
      %p142 = scmp.eq.s32.totalorder %s13, 0
      %p143 = por %p141, %p142
      %p144 = scmp.ne.s32.totalorder %s136, %s138
      %p145 = scmp.eq.s32.totalorder %s18, 1
      %p146 = por %p144, %p145
      %p147 = scmp.ne.s32.totalorder %s138, %s139
      %p148 = scmp.eq.s32.totalorder %s18, 0
      %p149 = por %p147, %p148
      %p150 = scmp.ne.s32.totalorder %s138, %s139
      %p151 = scmp.eq.s32.totalorder %s19, 1
      %p152 = por %p150, %p151
      %p154 = scmp.ne.s32.totalorder %s139, %s153
      %p155 = scmp.eq.s32.totalorder %s19, 0
      %p156 = por %p154, %p155
      %s158 = sadd.s32 %s157, 1
      %p161 = scmp.eq.s32.totalorder %s13, 1
      %p162 = scmp.ne.s32.totalorder %s157, %s159
      %p163 = scmp.eq.s32.totalorder %s13, 0
      %p164 = por %p162, %p163
      %p165 = scmp.ne.s32.totalorder %s157, %s159
      %p166 = scmp.eq.s32.totalorder %s18, 1
      %p167 = por %p165, %p166
      %p168 = scmp.ne.s32.totalorder %s159, %s160
      %p169 = scmp.eq.s32.totalorder %s18, 0
      %p170 = por %p168, %p169
      %p171 = scmp.ne.s32.totalorder %s159, %s160
      %p172 = scmp.eq.s32.totalorder %s19, 1
      %p173 = por %p171, %p172
      %p175 = scmp.ne.s32.totalorder %s160, %s174
      %p176 = scmp.eq.s32.totalorder %s19, 0
      %p177 = por %p175, %p176
      %p178 = scmp.le.s32.totalorder 1, %s13
      %p179 = scmp.lt.s32.totalorder %s13, 3
      %p180 = pnand %p178, %p179
      %p181 = pneg %p180
      // Predicated region
      $region9: #{encode_ln_classify.3} parent=5 // pred_check
        _
      $region10: #{encode_ln_classify.3} parent=5 // pred_check_branch
        %183 = sbr.rel (%p180) target = $region12
      $region11: #{encode_ln_classify.3} parent=5 // pred_region
        %s184 = ssub.s32 %s13, 1
        // Predicated region
        $region13: #{encode_ln_classify.3} parent=11 // pred_check
          %p185 = pneg %p86
        $region14: #{encode_ln_classify.3} parent=11 // pred_check_branch
          %187 = sbr.rel (%p185) target = $region16
        $region15: #{encode_ln_classify.3} parent=11 // pred_region
          _
        $region16: #{encode_ln_classify.3} parent=11 // pred_fallthru
          _
        // Predicated region
        $region17: #{encode_ln_classify.3} parent=11 // pred_check
          %p188 = pneg %p107
        $region18: #{encode_ln_classify.3} parent=11 // pred_check_branch
          %190 = sbr.rel (%p188) target = $region20
        $region19: #{encode_ln_classify.3} parent=11 // pred_region
          _
        $region20: #{encode_ln_classify.3} parent=11 // pred_fallthru
          _
        // Predicated region
        $region21: #{encode_ln_classify.3} parent=11 // pred_check
          %p191 = pneg %p128
        $region22: #{encode_ln_classify.3} parent=11 // pred_check_branch
          %193 = sbr.rel (%p191) target = $region24
        $region23: #{encode_ln_classify.3} parent=11 // pred_region
          _
        $region24: #{encode_ln_classify.3} parent=11 // pred_fallthru
          _
        // Predicated region
        $region25: #{encode_ln_classify.3} parent=11 // pred_check
          %p194 = pneg %p149
        $region26: #{encode_ln_classify.3} parent=11 // pred_check_branch
          %196 = sbr.rel (%p194) target = $region28
        $region27: #{encode_ln_classify.3} parent=11 // pred_region
          _
        $region28: #{encode_ln_classify.3} parent=11 // pred_fallthru
          _
      $region12: #{encode_ln_classify.3} parent=5 // pred_fallthru
        _
      %p197 = scmp.lt.s32.totalorder %s13, 2
      // Predicated region
      $region29: #{encode_ln_classify.3} parent=5 // pred_check
        %p198 = pneg %p197
      $region30: #{encode_ln_classify.3} parent=5 // pred_check_branch
        %200 = sbr.rel (%p198) target = $region32
      $region31: #{encode_ln_classify.3} parent=5 // pred_region
        // Predicated region
        $region33: #{encode_ln_classify.3} parent=31 // pred_check
          %p201 = pneg %p33
        $region34: #{encode_ln_classify.3} parent=31 // pred_check_branch
          %203 = sbr.rel (%p201) target = $region36
        $region35: #{encode_ln_classify.3} parent=31 // pred_region
          %s204 = smul.u32 80, %s13
          %p205 = scmp.lt.s32.totalorder %s204, 159
          %s206 = scalar_select %p205, %s204, 159
          %s207 = smul.addr %s206, 2
          %s208 = scalar_lea.vmem %s0, %s207
          %s209 = smul.u32 80, %s13
        $region36: #{encode_ln_classify.3} parent=31 // pred_fallthru
          _
        // Predicated region
        $region37: #{encode_ln_classify.3} parent=31 // pred_check
          %p210 = pneg %p59
        $region38: #{encode_ln_classify.3} parent=31 // pred_check_branch
          %212 = sbr.rel (%p210) target = $region40
        $region39: #{encode_ln_classify.3} parent=31 // pred_region
          %s213 = smul.u32 1280, %s13
          %p214 = scmp.lt.s32.totalorder %s213, 2559
          %s215 = scalar_select %p214, %s213, 2559
          %s216 = smul.addr %s215, 4
          %s217 = scalar_lea.vmem %s1, %s216
          %s218 = smul.u32 1280, %s13
        $region40: #{encode_ln_classify.3} parent=31 // pred_fallthru
          _
      $region32: #{encode_ln_classify.3} parent=5 // pred_fallthru
        _
      %p219 = scmp.le.s32.totalorder 1, %s13
      %p220 = scmp.lt.s32.totalorder %s13, 3
      %p221 = pnand %p219, %p220
      %p222 = pneg %p221
      // Predicated region
      $region41: #{encode_ln_classify.3} parent=5 // pred_check
        _
      $region42: #{encode_ln_classify.3} parent=5 // pred_check_branch
        %224 = sbr.rel (%p221) target = $region44
      $region43: #{encode_ln_classify.3} parent=5 // pred_region
        %s225 = ssub.s32 %s13, 1
        %s226 = smul.u32 80, %s18
        %p227 = scmp.lt.s32.totalorder %s226, 159
        %s228 = scalar_select %p227, %s226, 159
        %s229 = smul.addr %s228, 2
        %s230 = scalar_lea.vmem %s0, %s229
        %p231 = pneg %p39
        %p232 = pneg %p36
        %s233 = smul.u32 1280, %s18
        %p234 = scmp.lt.s32.totalorder %s233, 2559
        %s235 = scalar_select %p234, %s233, 2559
        %s236 = smul.addr %s235, 4
        %s237 = scalar_lea.vmem %s1, %s236
        %p238 = pneg %p65
        %p239 = pneg %p62
        %p240 = pneg %p86
        %p241 = pneg %p83
        %p242 = pneg %p107
        %p243 = pneg %p104
        %p244 = pneg %p128
        %p245 = pneg %p125
        %p246 = pneg %p149
        %p247 = pneg %p146
        %p248 = pneg %p170
        %p249 = pneg %p167
        %s250 = smul.u32 80, %s18
        %p251 = scmp.lt.s32.totalorder %s250, 159
        %s252 = scalar_select %p251, %s250, 159
        %s253 = smul.addr %s252, 2
        %s254 = scalar_lea.vmem %s0, %s253
        %s255 = smul.u32 80, %s18
        %s256 = smul.u32 1280, %s18
        %p257 = scmp.lt.s32.totalorder %s256, 2559
        %s258 = scalar_select %p257, %s256, 2559
        %s259 = smul.addr %s258, 4
        %s260 = scalar_lea.vmem %s1, %s259
        %s261 = smul.u32 1280, %s18
        %p263 = scmp.eq.s32.totalorder %s18, 0
        // Predicated region
        $region45: #{encode_ln_classify.3} parent=43 // pred_check
          %p264 = pneg %p263
        $region46: #{encode_ln_classify.3} parent=43 // pred_check_branch
          %266 = sbr.rel (%p264) target = $region48
        $region47: #{encode_ln_classify.3} parent=43 // pred_region
          %267 = vst [vmem:[#allocation2] sm:$0x3] 0.0
          %vm268 = vcmask 1024
          %269 = vst.msk [vmem:[#allocation3] sm:$0x3] %vm268, 0.0
          %270 = vst.msk [vmem:[#allocation4] sm:$0x3] %vm268, 0.0
        $region48: #{encode_ln_classify.3} parent=43 // pred_fallthru
          _
        %v271 = vld [vmem:[%s254] sm:$0xff]
        %v272 = vld [vmem:[%s254 + $0x8] sm:$0xff]
        %v273 = vld [vmem:[%s254 + $0x10] sm:$0xff]
        %v274 = vld [vmem:[%s254 + $0x18] sm:$0xff]
        %v275 = vld [vmem:[%s254 + $0x20] sm:$0xff]
        %v276 = vld [vmem:[%s254 + $0x28] sm:$0xff]
        %v277 = vld [vmem:[%s254 + $0x30] sm:$0xff]
        %v278 = vld [vmem:[%s254 + $0x38] sm:$0xff]
        %v279 = vld [vmem:[%s254 + $0x40] sm:$0xff]
        %v280 = vld [vmem:[%s254 + $0x48] sm:$0xff]
        %v281 = vld [vmem:[%s254 + $0x50] sm:$0xff]
        %v282 = vld [vmem:[%s254 + $0x58] sm:$0xff]
        %v283 = vld [vmem:[%s254 + $0x60] sm:$0xff]
        %v284 = vld [vmem:[%s254 + $0x68] sm:$0xff]
        %v285 = vld [vmem:[%s254 + $0x70] sm:$0xff]
        %v286 = vld [vmem:[%s254 + $0x78] sm:$0xff]
        %v287 = vld [vmem:[%s254 + $0x80] sm:$0xff]
        %v288 = vld [vmem:[%s254 + $0x88] sm:$0xff]
        %v289 = vld [vmem:[%s254 + $0x90] sm:$0xff]
        %v290 = vld [vmem:[%s254 + $0x98] sm:$0xff]
        %v291 = vld [vmem:[#allocation3] sm:$0x3]
        %v312 = vcombine.high %v271, %v271
        %v314 = vunpack.c.l.s4 1983009808
        %v315 = vunpack.c.0.s8 %v314
        %v316 = vlaneseq
        %v317 = vshrl.u32 %v316, 7
        %v318 = vsub.s32 %v315, %v317
        %v319 = vrot.slane %v271, %v318
        %v321 = vunpack.c.l.s4 1983009808
        %v322 = vunpack.c.0.s8 %v321
        %v323 = vlaneseq
        %v324 = vshrl.u32 %v323, 7
        %v325 = vsub.s32 %v322, %v324
        %v326 = vrot.slane %v312, %v325
        %v327 = vcombine.high %v319, %v319
        %v328 = vcombine.high %v326, %v326
        %v329 = vcombine.high %v272, %v272
        %v331 = vunpack.c.l.s4 1983009808
        %v332 = vunpack.c.0.s8 %v331
        %v333 = vlaneseq
        %v334 = vshrl.u32 %v333, 7
        %v335 = vsub.s32 %v332, %v334
        %v336 = vrot.slane %v272, %v335
        %v338 = vunpack.c.l.s4 1983009808
        %v339 = vunpack.c.0.s8 %v338
        %v340 = vlaneseq
        %v341 = vshrl.u32 %v340, 7
        %v342 = vsub.s32 %v339, %v341
        %v343 = vrot.slane %v329, %v342
        %v344 = vcombine.high %v336, %v336
        %v345 = vcombine.high %v343, %v343
        %v346 = vcombine.high %v273, %v273
        %v348 = vunpack.c.l.s4 1983009808
        %v349 = vunpack.c.0.s8 %v348
        %v350 = vlaneseq
        %v351 = vshrl.u32 %v350, 7
        %v352 = vsub.s32 %v349, %v351
        %v353 = vrot.slane %v273, %v352
        %v355 = vunpack.c.l.s4 1983009808
        %v356 = vunpack.c.0.s8 %v355
        %v357 = vlaneseq
        %v358 = vshrl.u32 %v357, 7
        %v359 = vsub.s32 %v356, %v358
        %v360 = vrot.slane %v346, %v359
        %v361 = vcombine.high %v353, %v353
        %v362 = vcombine.high %v360, %v360
        %v363 = vcombine.high %v274, %v274
        %v365 = vunpack.c.l.s4 1983009808
        %v366 = vunpack.c.0.s8 %v365
        %v367 = vlaneseq
        %v368 = vshrl.u32 %v367, 7
        %v369 = vsub.s32 %v366, %v368
        %v370 = vrot.slane %v274, %v369
        %v372 = vunpack.c.l.s4 1983009808
        %v373 = vunpack.c.0.s8 %v372
        %v374 = vlaneseq
        %v375 = vshrl.u32 %v374, 7
        %v376 = vsub.s32 %v373, %v375
        %v377 = vrot.slane %v363, %v376
        %v378 = vcombine.high %v370, %v370
        %v379 = vcombine.high %v377, %v377
        %v380 = vcombine.high %v275, %v275
        %v382 = vunpack.c.l.s4 1983009808
        %v383 = vunpack.c.0.s8 %v382
        %v384 = vlaneseq
        %v385 = vshrl.u32 %v384, 7
        %v386 = vsub.s32 %v383, %v385
        %v387 = vrot.slane %v275, %v386
        %v389 = vunpack.c.l.s4 1983009808
        %v390 = vunpack.c.0.s8 %v389
        %v391 = vlaneseq
        %v392 = vshrl.u32 %v391, 7
        %v393 = vsub.s32 %v390, %v392
        %v394 = vrot.slane %v380, %v393
        %v395 = vcombine.high %v387, %v387
        %v396 = vcombine.high %v394, %v394
        %v397 = vcombine.high %v276, %v276
        %v399 = vunpack.c.l.s4 1983009808
        %v400 = vunpack.c.0.s8 %v399
        %v401 = vlaneseq
        %v402 = vshrl.u32 %v401, 7
        %v403 = vsub.s32 %v400, %v402
        %v404 = vrot.slane %v276, %v403
        %v406 = vunpack.c.l.s4 1983009808
        %v407 = vunpack.c.0.s8 %v406
        %v408 = vlaneseq
        %v409 = vshrl.u32 %v408, 7
        %v410 = vsub.s32 %v407, %v409
        %v411 = vrot.slane %v397, %v410
        %v412 = vcombine.high %v404, %v404
        %v413 = vcombine.high %v411, %v411
        %v414 = vcombine.high %v277, %v277
        %v416 = vunpack.c.l.s4 1983009808
        %v417 = vunpack.c.0.s8 %v416
        %v418 = vlaneseq
        %v419 = vshrl.u32 %v418, 7
        %v420 = vsub.s32 %v417, %v419
        %v421 = vrot.slane %v277, %v420
        %v423 = vunpack.c.l.s4 1983009808
        %v424 = vunpack.c.0.s8 %v423
        %v425 = vlaneseq
        %v426 = vshrl.u32 %v425, 7
        %v427 = vsub.s32 %v424, %v426
        %v428 = vrot.slane %v414, %v427
        %v429 = vcombine.high %v421, %v421
        %v430 = vcombine.high %v428, %v428
        %v431 = vcombine.high %v278, %v278
        %v433 = vunpack.c.l.s4 1983009808
        %v434 = vunpack.c.0.s8 %v433
        %v435 = vlaneseq
        %v436 = vshrl.u32 %v435, 7
        %v437 = vsub.s32 %v434, %v436
        %v438 = vrot.slane %v278, %v437
        %v440 = vunpack.c.l.s4 1983009808
        %v441 = vunpack.c.0.s8 %v440
        %v442 = vlaneseq
        %v443 = vshrl.u32 %v442, 7
        %v444 = vsub.s32 %v441, %v443
        %v445 = vrot.slane %v431, %v444
        %v446 = vcombine.high %v438, %v438
        %v447 = vcombine.high %v445, %v445
        %v448 = vcombine.high %v279, %v279
        %v450 = vunpack.c.l.s4 1983009808
        %v451 = vunpack.c.0.s8 %v450
        %v452 = vlaneseq
        %v453 = vshrl.u32 %v452, 7
        %v454 = vsub.s32 %v451, %v453
        %v455 = vrot.slane %v279, %v454
        %v457 = vunpack.c.l.s4 1983009808
        %v458 = vunpack.c.0.s8 %v457
        %v459 = vlaneseq
        %v460 = vshrl.u32 %v459, 7
        %v461 = vsub.s32 %v458, %v460
        %v462 = vrot.slane %v448, %v461
        %v463 = vcombine.high %v455, %v455
        %v464 = vcombine.high %v462, %v462
        %v465 = vcombine.high %v280, %v280
        %v467 = vunpack.c.l.s4 1983009808
        %v468 = vunpack.c.0.s8 %v467
        %v469 = vlaneseq
        %v470 = vshrl.u32 %v469, 7
        %v471 = vsub.s32 %v468, %v470
        %v472 = vrot.slane %v280, %v471
        %v474 = vunpack.c.l.s4 1983009808
        %v475 = vunpack.c.0.s8 %v474
        %v476 = vlaneseq
        %v477 = vshrl.u32 %v476, 7
        %v478 = vsub.s32 %v475, %v477
        %v479 = vrot.slane %v465, %v478
        %v480 = vcombine.high %v472, %v472
        %v481 = vcombine.high %v479, %v479
        %v482 = vcombine.high %v281, %v281
        %v484 = vunpack.c.l.s4 1983009808
        %v485 = vunpack.c.0.s8 %v484
        %v486 = vlaneseq
        %v487 = vshrl.u32 %v486, 7
        %v488 = vsub.s32 %v485, %v487
        %v489 = vrot.slane %v281, %v488
        %v491 = vunpack.c.l.s4 1983009808
        %v492 = vunpack.c.0.s8 %v491
        %v493 = vlaneseq
        %v494 = vshrl.u32 %v493, 7
        %v495 = vsub.s32 %v492, %v494
        %v496 = vrot.slane %v482, %v495
        %v497 = vcombine.high %v489, %v489
        %v498 = vcombine.high %v496, %v496
        %v499 = vcombine.high %v282, %v282
        %v501 = vunpack.c.l.s4 1983009808
        %v502 = vunpack.c.0.s8 %v501
        %v503 = vlaneseq
        %v504 = vshrl.u32 %v503, 7
        %v505 = vsub.s32 %v502, %v504
        %v506 = vrot.slane %v282, %v505
        %v508 = vunpack.c.l.s4 1983009808
        %v509 = vunpack.c.0.s8 %v508
        %v510 = vlaneseq
        %v511 = vshrl.u32 %v510, 7
        %v512 = vsub.s32 %v509, %v511
        %v513 = vrot.slane %v499, %v512
        %v514 = vcombine.high %v506, %v506
        %v515 = vcombine.high %v513, %v513
        %v516 = vcombine.high %v283, %v283
        %v518 = vunpack.c.l.s4 1983009808
        %v519 = vunpack.c.0.s8 %v518
        %v520 = vlaneseq
        %v521 = vshrl.u32 %v520, 7
        %v522 = vsub.s32 %v519, %v521
        %v523 = vrot.slane %v283, %v522
        %v525 = vunpack.c.l.s4 1983009808
        %v526 = vunpack.c.0.s8 %v525
        %v527 = vlaneseq
        %v528 = vshrl.u32 %v527, 7
        %v529 = vsub.s32 %v526, %v528
        %v530 = vrot.slane %v516, %v529
        %v531 = vcombine.high %v523, %v523
        %v532 = vcombine.high %v530, %v530
        %v533 = vcombine.high %v284, %v284
        %v535 = vunpack.c.l.s4 1983009808
        %v536 = vunpack.c.0.s8 %v535
        %v537 = vlaneseq
        %v538 = vshrl.u32 %v537, 7
        %v539 = vsub.s32 %v536, %v538
        %v540 = vrot.slane %v284, %v539
        %v542 = vunpack.c.l.s4 1983009808
        %v543 = vunpack.c.0.s8 %v542
        %v544 = vlaneseq
        %v545 = vshrl.u32 %v544, 7
        %v546 = vsub.s32 %v543, %v545
        %v547 = vrot.slane %v533, %v546
        %v548 = vcombine.high %v540, %v540
        %v549 = vcombine.high %v547, %v547
        %v550 = vcombine.high %v285, %v285
        %v552 = vunpack.c.l.s4 1983009808
        %v553 = vunpack.c.0.s8 %v552
        %v554 = vlaneseq
        %v555 = vshrl.u32 %v554, 7
        %v556 = vsub.s32 %v553, %v555
        %v557 = vrot.slane %v285, %v556
        %v559 = vunpack.c.l.s4 1983009808
        %v560 = vunpack.c.0.s8 %v559
        %v561 = vlaneseq
        %v562 = vshrl.u32 %v561, 7
        %v563 = vsub.s32 %v560, %v562
        %v564 = vrot.slane %v550, %v563
        %v565 = vcombine.high %v557, %v557
        %v566 = vcombine.high %v564, %v564
        %v567 = vcombine.high %v286, %v286
        %v569 = vunpack.c.l.s4 1983009808
        %v570 = vunpack.c.0.s8 %v569
        %v571 = vlaneseq
        %v572 = vshrl.u32 %v571, 7
        %v573 = vsub.s32 %v570, %v572
        %v574 = vrot.slane %v286, %v573
        %v576 = vunpack.c.l.s4 1983009808
        %v577 = vunpack.c.0.s8 %v576
        %v578 = vlaneseq
        %v579 = vshrl.u32 %v578, 7
        %v580 = vsub.s32 %v577, %v579
        %v581 = vrot.slane %v567, %v580
        %v582 = vcombine.high %v574, %v574
        %v583 = vcombine.high %v581, %v581
        %v584 = vcombine.high %v287, %v287
        %v586 = vunpack.c.l.s4 1983009808
        %v587 = vunpack.c.0.s8 %v586
        %v588 = vlaneseq
        %v589 = vshrl.u32 %v588, 7
        %v590 = vsub.s32 %v587, %v589
        %v591 = vrot.slane %v287, %v590
        %v593 = vunpack.c.l.s4 1983009808
        %v594 = vunpack.c.0.s8 %v593
        %v595 = vlaneseq
        %v596 = vshrl.u32 %v595, 7
        %v597 = vsub.s32 %v594, %v596
        %v598 = vrot.slane %v584, %v597
        %v599 = vcombine.high %v591, %v591
        %v600 = vcombine.high %v598, %v598
        %v601 = vcombine.high %v288, %v288
        %v603 = vunpack.c.l.s4 1983009808
        %v604 = vunpack.c.0.s8 %v603
        %v605 = vlaneseq
        %v606 = vshrl.u32 %v605, 7
        %v607 = vsub.s32 %v604, %v606
        %v608 = vrot.slane %v288, %v607
        %v610 = vunpack.c.l.s4 1983009808
        %v611 = vunpack.c.0.s8 %v610
        %v612 = vlaneseq
        %v613 = vshrl.u32 %v612, 7
        %v614 = vsub.s32 %v611, %v613
        %v615 = vrot.slane %v601, %v614
        %v616 = vcombine.high %v608, %v608
        %v617 = vcombine.high %v615, %v615
        %v618 = vcombine.high %v289, %v289
        %v620 = vunpack.c.l.s4 1983009808
        %v621 = vunpack.c.0.s8 %v620
        %v622 = vlaneseq
        %v623 = vshrl.u32 %v622, 7
        %v624 = vsub.s32 %v621, %v623
        %v625 = vrot.slane %v289, %v624
        %v627 = vunpack.c.l.s4 1983009808
        %v628 = vunpack.c.0.s8 %v627
        %v629 = vlaneseq
        %v630 = vshrl.u32 %v629, 7
        %v631 = vsub.s32 %v628, %v630
        %v632 = vrot.slane %v618, %v631
        %v633 = vcombine.high %v625, %v625
        %v634 = vcombine.high %v632, %v632
        %v635 = vcombine.high %v290, %v290
        %v637 = vunpack.c.l.s4 1983009808
        %v638 = vunpack.c.0.s8 %v637
        %v639 = vlaneseq
        %v640 = vshrl.u32 %v639, 7
        %v641 = vsub.s32 %v638, %v640
        %v642 = vrot.slane %v290, %v641
        %v644 = vunpack.c.l.s4 1983009808
        %v645 = vunpack.c.0.s8 %v644
        %v646 = vlaneseq
        %v647 = vshrl.u32 %v646, 7
        %v648 = vsub.s32 %v645, %v647
        %v649 = vrot.slane %v635, %v648
        %v650 = vcombine.high %v642, %v642
        %v651 = vcombine.high %v649, %v649
        %vm732 = vcmask 1041408
        %v733 = vsel %vm732, %v319, 0.0
        %v734 = vsel %vm732, %v327, 0.0
        %v735 = vadd.f32 %v733, %v734
        %v736 = vsel %vm732, %v326, 0.0
        %v737 = vadd.f32 %v735, %v736
        %v738 = vsel %vm732, %v328, 0.0
        %v739 = vadd.f32 %v737, %v738
        %v740 = vsel %vm732, %v336, 0.0
        %v741 = vadd.f32 %v739, %v740
        %v742 = vsel %vm732, %v344, 0.0
        %v743 = vadd.f32 %v741, %v742
        %v744 = vsel %vm732, %v343, 0.0
        %v745 = vadd.f32 %v743, %v744
        %v746 = vsel %vm732, %v345, 0.0
        %v747 = vadd.f32 %v745, %v746
        %v748 = vsel %vm732, %v353, 0.0
        %v749 = vadd.f32 %v747, %v748
        %v750 = vsel %vm732, %v361, 0.0
        %v751 = vadd.f32 %v749, %v750
        %v752 = vsel %vm732, %v360, 0.0
        %v753 = vadd.f32 %v751, %v752
        %v754 = vsel %vm732, %v362, 0.0
        %v755 = vadd.f32 %v753, %v754
        %v756 = vsel %vm732, %v370, 0.0
        %v757 = vadd.f32 %v755, %v756
        %v758 = vsel %vm732, %v378, 0.0
        %v759 = vadd.f32 %v757, %v758
        %v760 = vsel %vm732, %v377, 0.0
        %v761 = vadd.f32 %v759, %v760
        %v762 = vsel %vm732, %v379, 0.0
        %v763 = vadd.f32 %v761, %v762
        %v764 = vsel %vm732, %v387, 0.0
        %v765 = vadd.f32 %v763, %v764
        %v766 = vsel %vm732, %v395, 0.0
        %v767 = vadd.f32 %v765, %v766
        %v768 = vsel %vm732, %v394, 0.0
        %v769 = vadd.f32 %v767, %v768
        %v770 = vsel %vm732, %v396, 0.0
        %v771 = vadd.f32 %v769, %v770
        %v772 = vsel %vm732, %v404, 0.0
        %v773 = vadd.f32 %v771, %v772
        %v774 = vsel %vm732, %v412, 0.0
        %v775 = vadd.f32 %v773, %v774
        %v776 = vsel %vm732, %v411, 0.0
        %v777 = vadd.f32 %v775, %v776
        %v778 = vsel %vm732, %v413, 0.0
        %v779 = vadd.f32 %v777, %v778
        %v780 = vsel %vm732, %v421, 0.0
        %v781 = vadd.f32 %v779, %v780
        %v782 = vsel %vm732, %v429, 0.0
        %v783 = vadd.f32 %v781, %v782
        %v784 = vsel %vm732, %v428, 0.0
        %v785 = vadd.f32 %v783, %v784
        %v786 = vsel %vm732, %v430, 0.0
        %v787 = vadd.f32 %v785, %v786
        %v788 = vsel %vm732, %v438, 0.0
        %v789 = vadd.f32 %v787, %v788
        %v790 = vsel %vm732, %v446, 0.0
        %v791 = vadd.f32 %v789, %v790
        %v792 = vsel %vm732, %v445, 0.0
        %v793 = vadd.f32 %v791, %v792
        %v794 = vsel %vm732, %v447, 0.0
        %v795 = vadd.f32 %v793, %v794
        %v796 = vsel %vm732, %v455, 0.0
        %v797 = vadd.f32 %v795, %v796
        %v798 = vsel %vm732, %v463, 0.0
        %v799 = vadd.f32 %v797, %v798
        %v800 = vsel %vm732, %v462, 0.0
        %v801 = vadd.f32 %v799, %v800
        %v802 = vsel %vm732, %v464, 0.0
        %v803 = vadd.f32 %v801, %v802
        %v804 = vsel %vm732, %v472, 0.0
        %v805 = vadd.f32 %v803, %v804
        %v806 = vsel %vm732, %v480, 0.0
        %v807 = vadd.f32 %v805, %v806
        %v808 = vsel %vm732, %v479, 0.0
        %v809 = vadd.f32 %v807, %v808
        %v810 = vsel %vm732, %v481, 0.0
        %v811 = vadd.f32 %v809, %v810
        %v812 = vsel %vm732, %v489, 0.0
        %v813 = vadd.f32 %v811, %v812
        %v814 = vsel %vm732, %v497, 0.0
        %v815 = vadd.f32 %v813, %v814
        %v816 = vsel %vm732, %v496, 0.0
        %v817 = vadd.f32 %v815, %v816
        %v818 = vsel %vm732, %v498, 0.0
        %v819 = vadd.f32 %v817, %v818
        %v820 = vsel %vm732, %v506, 0.0
        %v821 = vadd.f32 %v819, %v820
        %v822 = vsel %vm732, %v514, 0.0
        %v823 = vadd.f32 %v821, %v822
        %v824 = vsel %vm732, %v513, 0.0
        %v825 = vadd.f32 %v823, %v824
        %v826 = vsel %vm732, %v515, 0.0
        %v827 = vadd.f32 %v825, %v826
        %v828 = vsel %vm732, %v523, 0.0
        %v829 = vadd.f32 %v827, %v828
        %v830 = vsel %vm732, %v531, 0.0
        %v831 = vadd.f32 %v829, %v830
        %v832 = vsel %vm732, %v530, 0.0
        %v833 = vadd.f32 %v831, %v832
        %v834 = vsel %vm732, %v532, 0.0
        %v835 = vadd.f32 %v833, %v834
        %v836 = vsel %vm732, %v540, 0.0
        %v837 = vadd.f32 %v835, %v836
        %v838 = vsel %vm732, %v548, 0.0
        %v839 = vadd.f32 %v837, %v838
        %v840 = vsel %vm732, %v547, 0.0
        %v841 = vadd.f32 %v839, %v840
        %v842 = vsel %vm732, %v549, 0.0
        %v843 = vadd.f32 %v841, %v842
        %v844 = vsel %vm732, %v557, 0.0
        %v845 = vadd.f32 %v843, %v844
        %v846 = vsel %vm732, %v565, 0.0
        %v847 = vadd.f32 %v845, %v846
        %v848 = vsel %vm732, %v564, 0.0
        %v849 = vadd.f32 %v847, %v848
        %v850 = vsel %vm732, %v566, 0.0
        %v851 = vadd.f32 %v849, %v850
        %v852 = vsel %vm732, %v574, 0.0
        %v853 = vadd.f32 %v851, %v852
        %v854 = vsel %vm732, %v582, 0.0
        %v855 = vadd.f32 %v853, %v854
        %v856 = vsel %vm732, %v581, 0.0
        %v857 = vadd.f32 %v855, %v856
        %v858 = vsel %vm732, %v583, 0.0
        %v859 = vadd.f32 %v857, %v858
        %v860 = vsel %vm732, %v591, 0.0
        %v861 = vadd.f32 %v859, %v860
        %v862 = vsel %vm732, %v599, 0.0
        %v863 = vadd.f32 %v861, %v862
        %v864 = vsel %vm732, %v598, 0.0
        %v865 = vadd.f32 %v863, %v864
        %v866 = vsel %vm732, %v600, 0.0
        %v867 = vadd.f32 %v865, %v866
        %v868 = vsel %vm732, %v608, 0.0
        %v869 = vadd.f32 %v867, %v868
        %v870 = vsel %vm732, %v616, 0.0
        %v871 = vadd.f32 %v869, %v870
        %v872 = vsel %vm732, %v615, 0.0
        %v873 = vadd.f32 %v871, %v872
        %v874 = vsel %vm732, %v617, 0.0
        %v875 = vadd.f32 %v873, %v874
        %v876 = vsel %vm732, %v625, 0.0
        %v877 = vadd.f32 %v875, %v876
        %v878 = vsel %vm732, %v633, 0.0
        %v879 = vadd.f32 %v877, %v878
        %v880 = vsel %vm732, %v632, 0.0
        %v881 = vadd.f32 %v879, %v880
        %v882 = vsel %vm732, %v634, 0.0
        %v883 = vadd.f32 %v881, %v882
        %v884 = vsel %vm732, %v642, 0.0
        %v885 = vadd.f32 %v883, %v884
        %v886 = vsel %vm732, %v650, 0.0
        %v887 = vadd.f32 %v885, %v886
        %v888 = vsel %vm732, %v649, 0.0
        %v889 = vadd.f32 %v887, %v888
        %v890 = vsel %vm732, %v651, 0.0
        %v891 = vadd.f32 %v889, %v890
        %892 = vadd.xlane.f32.xlu0 %v891
        %v893 = vpop.xlane.xlu0 %892
        %v894 = vadd.f32 %v291, %v893
        %vm895 = vcmask 1024
        %896 = vst.msk [vmem:[#allocation3] sm:$0x3] %vm895, %v894
        %v897 = vld [vmem:[#allocation4] sm:$0x3]
        %v898 = vmul.f32 %v271, %v271
        %v899 = vmul.f32 %v272, %v272
        %v900 = vmul.f32 %v273, %v273
        %v901 = vmul.f32 %v274, %v274
        %v902 = vmul.f32 %v275, %v275
        %v903 = vmul.f32 %v276, %v276
        %v904 = vmul.f32 %v277, %v277
        %v905 = vmul.f32 %v278, %v278
        %v906 = vmul.f32 %v279, %v279
        %v907 = vmul.f32 %v280, %v280
        %v908 = vmul.f32 %v281, %v281
        %v909 = vmul.f32 %v282, %v282
        %v910 = vmul.f32 %v283, %v283
        %v911 = vmul.f32 %v284, %v284
        %v912 = vmul.f32 %v285, %v285
        %v913 = vmul.f32 %v286, %v286
        %v914 = vmul.f32 %v287, %v287
        %v915 = vmul.f32 %v288, %v288
        %v916 = vmul.f32 %v289, %v289
        %v917 = vmul.f32 %v290, %v290
        %v938 = vcombine.high %v898, %v898
        %v940 = vunpack.c.l.s4 1983009808
        %v941 = vunpack.c.0.s8 %v940
        %v942 = vlaneseq
        %v943 = vshrl.u32 %v942, 7
        %v944 = vsub.s32 %v941, %v943
        %v945 = vrot.slane %v898, %v944
        %v947 = vunpack.c.l.s4 1983009808
        %v948 = vunpack.c.0.s8 %v947
        %v949 = vlaneseq
        %v950 = vshrl.u32 %v949, 7
        %v951 = vsub.s32 %v948, %v950
        %v952 = vrot.slane %v938, %v951
        %v953 = vcombine.high %v945, %v945
        %v954 = vcombine.high %v952, %v952
        %v955 = vcombine.high %v899, %v899
        %v957 = vunpack.c.l.s4 1983009808
        %v958 = vunpack.c.0.s8 %v957
        %v959 = vlaneseq
        %v960 = vshrl.u32 %v959, 7
        %v961 = vsub.s32 %v958, %v960
        %v962 = vrot.slane %v899, %v961
        %v964 = vunpack.c.l.s4 1983009808
        %v965 = vunpack.c.0.s8 %v964
        %v966 = vlaneseq
        %v967 = vshrl.u32 %v966, 7
        %v968 = vsub.s32 %v965, %v967
        %v969 = vrot.slane %v955, %v968
        %v970 = vcombine.high %v962, %v962
        %v971 = vcombine.high %v969, %v969
        %v972 = vcombine.high %v900, %v900
        %v974 = vunpack.c.l.s4 1983009808
        %v975 = vunpack.c.0.s8 %v974
        %v976 = vlaneseq
        %v977 = vshrl.u32 %v976, 7
        %v978 = vsub.s32 %v975, %v977
        %v979 = vrot.slane %v900, %v978
        %v981 = vunpack.c.l.s4 1983009808
        %v982 = vunpack.c.0.s8 %v981
        %v983 = vlaneseq
        %v984 = vshrl.u32 %v983, 7
        %v985 = vsub.s32 %v982, %v984
        %v986 = vrot.slane %v972, %v985
        %v987 = vcombine.high %v979, %v979
        %v988 = vcombine.high %v986, %v986
        %v989 = vcombine.high %v901, %v901
        %v991 = vunpack.c.l.s4 1983009808
        %v992 = vunpack.c.0.s8 %v991
        %v993 = vlaneseq
        %v994 = vshrl.u32 %v993, 7
        %v995 = vsub.s32 %v992, %v994
        %v996 = vrot.slane %v901, %v995
        %v998 = vunpack.c.l.s4 1983009808
        %v999 = vunpack.c.0.s8 %v998
        %v1000 = vlaneseq
        %v1001 = vshrl.u32 %v1000, 7
        %v1002 = vsub.s32 %v999, %v1001
        %v1003 = vrot.slane %v989, %v1002
        %v1004 = vcombine.high %v996, %v996
        %v1005 = vcombine.high %v1003, %v1003
        %v1006 = vcombine.high %v902, %v902
        %v1008 = vunpack.c.l.s4 1983009808
        %v1009 = vunpack.c.0.s8 %v1008
        %v1010 = vlaneseq
        %v1011 = vshrl.u32 %v1010, 7
        %v1012 = vsub.s32 %v1009, %v1011
        %v1013 = vrot.slane %v902, %v1012
        %v1015 = vunpack.c.l.s4 1983009808
        %v1016 = vunpack.c.0.s8 %v1015
        %v1017 = vlaneseq
        %v1018 = vshrl.u32 %v1017, 7
        %v1019 = vsub.s32 %v1016, %v1018
        %v1020 = vrot.slane %v1006, %v1019
        %v1021 = vcombine.high %v1013, %v1013
        %v1022 = vcombine.high %v1020, %v1020
        %v1023 = vcombine.high %v903, %v903
        %v1025 = vunpack.c.l.s4 1983009808
        %v1026 = vunpack.c.0.s8 %v1025
        %v1027 = vlaneseq
        %v1028 = vshrl.u32 %v1027, 7
        %v1029 = vsub.s32 %v1026, %v1028
        %v1030 = vrot.slane %v903, %v1029
        %v1032 = vunpack.c.l.s4 1983009808
        %v1033 = vunpack.c.0.s8 %v1032
        %v1034 = vlaneseq
        %v1035 = vshrl.u32 %v1034, 7
        %v1036 = vsub.s32 %v1033, %v1035
        %v1037 = vrot.slane %v1023, %v1036
        %v1038 = vcombine.high %v1030, %v1030
        %v1039 = vcombine.high %v1037, %v1037
        %v1040 = vcombine.high %v904, %v904
        %v1042 = vunpack.c.l.s4 1983009808
        %v1043 = vunpack.c.0.s8 %v1042
        %v1044 = vlaneseq
        %v1045 = vshrl.u32 %v1044, 7
        %v1046 = vsub.s32 %v1043, %v1045
        %v1047 = vrot.slane %v904, %v1046
        %v1049 = vunpack.c.l.s4 1983009808
        %v1050 = vunpack.c.0.s8 %v1049
        %v1051 = vlaneseq
        %v1052 = vshrl.u32 %v1051, 7
        %v1053 = vsub.s32 %v1050, %v1052
        %v1054 = vrot.slane %v1040, %v1053
        %v1055 = vcombine.high %v1047, %v1047
        %v1056 = vcombine.high %v1054, %v1054
        %v1057 = vcombine.high %v905, %v905
        %v1059 = vunpack.c.l.s4 1983009808
        %v1060 = vunpack.c.0.s8 %v1059
        %v1061 = vlaneseq
        %v1062 = vshrl.u32 %v1061, 7
        %v1063 = vsub.s32 %v1060, %v1062
        %v1064 = vrot.slane %v905, %v1063
        %v1066 = vunpack.c.l.s4 1983009808
        %v1067 = vunpack.c.0.s8 %v1066
        %v1068 = vlaneseq
        %v1069 = vshrl.u32 %v1068, 7
        %v1070 = vsub.s32 %v1067, %v1069
        %v1071 = vrot.slane %v1057, %v1070
        %v1072 = vcombine.high %v1064, %v1064
        %v1073 = vcombine.high %v1071, %v1071
        %v1074 = vcombine.high %v906, %v906
        %v1076 = vunpack.c.l.s4 1983009808
        %v1077 = vunpack.c.0.s8 %v1076
        %v1078 = vlaneseq
        %v1079 = vshrl.u32 %v1078, 7
        %v1080 = vsub.s32 %v1077, %v1079
        %v1081 = vrot.slane %v906, %v1080
        %v1083 = vunpack.c.l.s4 1983009808
        %v1084 = vunpack.c.0.s8 %v1083
        %v1085 = vlaneseq
        %v1086 = vshrl.u32 %v1085, 7
        %v1087 = vsub.s32 %v1084, %v1086
        %v1088 = vrot.slane %v1074, %v1087
        %v1089 = vcombine.high %v1081, %v1081
        %v1090 = vcombine.high %v1088, %v1088
        %v1091 = vcombine.high %v907, %v907
        %v1093 = vunpack.c.l.s4 1983009808
        %v1094 = vunpack.c.0.s8 %v1093
        %v1095 = vlaneseq
        %v1096 = vshrl.u32 %v1095, 7
        %v1097 = vsub.s32 %v1094, %v1096
        %v1098 = vrot.slane %v907, %v1097
        %v1100 = vunpack.c.l.s4 1983009808
        %v1101 = vunpack.c.0.s8 %v1100
        %v1102 = vlaneseq
        %v1103 = vshrl.u32 %v1102, 7
        %v1104 = vsub.s32 %v1101, %v1103
        %v1105 = vrot.slane %v1091, %v1104
        %v1106 = vcombine.high %v1098, %v1098
        %v1107 = vcombine.high %v1105, %v1105
        %v1108 = vcombine.high %v908, %v908
        %v1110 = vunpack.c.l.s4 1983009808
        %v1111 = vunpack.c.0.s8 %v1110
        %v1112 = vlaneseq
        %v1113 = vshrl.u32 %v1112, 7
        %v1114 = vsub.s32 %v1111, %v1113
        %v1115 = vrot.slane %v908, %v1114
        %v1117 = vunpack.c.l.s4 1983009808
        %v1118 = vunpack.c.0.s8 %v1117
        %v1119 = vlaneseq
        %v1120 = vshrl.u32 %v1119, 7
        %v1121 = vsub.s32 %v1118, %v1120
        %v1122 = vrot.slane %v1108, %v1121
        %v1123 = vcombine.high %v1115, %v1115
        %v1124 = vcombine.high %v1122, %v1122
        %v1125 = vcombine.high %v909, %v909
        %v1127 = vunpack.c.l.s4 1983009808
        %v1128 = vunpack.c.0.s8 %v1127
        %v1129 = vlaneseq
        %v1130 = vshrl.u32 %v1129, 7
        %v1131 = vsub.s32 %v1128, %v1130
        %v1132 = vrot.slane %v909, %v1131
        %v1134 = vunpack.c.l.s4 1983009808
        %v1135 = vunpack.c.0.s8 %v1134
        %v1136 = vlaneseq
        %v1137 = vshrl.u32 %v1136, 7
        %v1138 = vsub.s32 %v1135, %v1137
        %v1139 = vrot.slane %v1125, %v1138
        %v1140 = vcombine.high %v1132, %v1132
        %v1141 = vcombine.high %v1139, %v1139
        %v1142 = vcombine.high %v910, %v910
        %v1144 = vunpack.c.l.s4 1983009808
        %v1145 = vunpack.c.0.s8 %v1144
        %v1146 = vlaneseq
        %v1147 = vshrl.u32 %v1146, 7
        %v1148 = vsub.s32 %v1145, %v1147
        %v1149 = vrot.slane %v910, %v1148
        %v1151 = vunpack.c.l.s4 1983009808
        %v1152 = vunpack.c.0.s8 %v1151
        %v1153 = vlaneseq
        %v1154 = vshrl.u32 %v1153, 7
        %v1155 = vsub.s32 %v1152, %v1154
        %v1156 = vrot.slane %v1142, %v1155
        %v1157 = vcombine.high %v1149, %v1149
        %v1158 = vcombine.high %v1156, %v1156
        %v1159 = vcombine.high %v911, %v911
        %v1161 = vunpack.c.l.s4 1983009808
        %v1162 = vunpack.c.0.s8 %v1161
        %v1163 = vlaneseq
        %v1164 = vshrl.u32 %v1163, 7
        %v1165 = vsub.s32 %v1162, %v1164
        %v1166 = vrot.slane %v911, %v1165
        %v1168 = vunpack.c.l.s4 1983009808
        %v1169 = vunpack.c.0.s8 %v1168
        %v1170 = vlaneseq
        %v1171 = vshrl.u32 %v1170, 7
        %v1172 = vsub.s32 %v1169, %v1171
        %v1173 = vrot.slane %v1159, %v1172
        %v1174 = vcombine.high %v1166, %v1166
        %v1175 = vcombine.high %v1173, %v1173
        %v1176 = vcombine.high %v912, %v912
        %v1178 = vunpack.c.l.s4 1983009808
        %v1179 = vunpack.c.0.s8 %v1178
        %v1180 = vlaneseq
        %v1181 = vshrl.u32 %v1180, 7
        %v1182 = vsub.s32 %v1179, %v1181
        %v1183 = vrot.slane %v912, %v1182
        %v1185 = vunpack.c.l.s4 1983009808
        %v1186 = vunpack.c.0.s8 %v1185
        %v1187 = vlaneseq
        %v1188 = vshrl.u32 %v1187, 7
        %v1189 = vsub.s32 %v1186, %v1188
        %v1190 = vrot.slane %v1176, %v1189
        %v1191 = vcombine.high %v1183, %v1183
        %v1192 = vcombine.high %v1190, %v1190
        %v1193 = vcombine.high %v913, %v913
        %v1195 = vunpack.c.l.s4 1983009808
        %v1196 = vunpack.c.0.s8 %v1195
        %v1197 = vlaneseq
        %v1198 = vshrl.u32 %v1197, 7
        %v1199 = vsub.s32 %v1196, %v1198
        %v1200 = vrot.slane %v913, %v1199
        %v1202 = vunpack.c.l.s4 1983009808
        %v1203 = vunpack.c.0.s8 %v1202
        %v1204 = vlaneseq
        %v1205 = vshrl.u32 %v1204, 7
        %v1206 = vsub.s32 %v1203, %v1205
        %v1207 = vrot.slane %v1193, %v1206
        %v1208 = vcombine.high %v1200, %v1200
        %v1209 = vcombine.high %v1207, %v1207
        %v1210 = vcombine.high %v914, %v914
        %v1212 = vunpack.c.l.s4 1983009808
        %v1213 = vunpack.c.0.s8 %v1212
        %v1214 = vlaneseq
        %v1215 = vshrl.u32 %v1214, 7
        %v1216 = vsub.s32 %v1213, %v1215
        %v1217 = vrot.slane %v914, %v1216
        %v1219 = vunpack.c.l.s4 1983009808
        %v1220 = vunpack.c.0.s8 %v1219
        %v1221 = vlaneseq
        %v1222 = vshrl.u32 %v1221, 7
        %v1223 = vsub.s32 %v1220, %v1222
        %v1224 = vrot.slane %v1210, %v1223
        %v1225 = vcombine.high %v1217, %v1217
        %v1226 = vcombine.high %v1224, %v1224
        %v1227 = vcombine.high %v915, %v915
        %v1229 = vunpack.c.l.s4 1983009808
        %v1230 = vunpack.c.0.s8 %v1229
        %v1231 = vlaneseq
        %v1232 = vshrl.u32 %v1231, 7
        %v1233 = vsub.s32 %v1230, %v1232
        %v1234 = vrot.slane %v915, %v1233
        %v1236 = vunpack.c.l.s4 1983009808
        %v1237 = vunpack.c.0.s8 %v1236
        %v1238 = vlaneseq
        %v1239 = vshrl.u32 %v1238, 7
        %v1240 = vsub.s32 %v1237, %v1239
        %v1241 = vrot.slane %v1227, %v1240
        %v1242 = vcombine.high %v1234, %v1234
        %v1243 = vcombine.high %v1241, %v1241
        %v1244 = vcombine.high %v916, %v916
        %v1246 = vunpack.c.l.s4 1983009808
        %v1247 = vunpack.c.0.s8 %v1246
        %v1248 = vlaneseq
        %v1249 = vshrl.u32 %v1248, 7
        %v1250 = vsub.s32 %v1247, %v1249
        %v1251 = vrot.slane %v916, %v1250
        %v1253 = vunpack.c.l.s4 1983009808
        %v1254 = vunpack.c.0.s8 %v1253
        %v1255 = vlaneseq
        %v1256 = vshrl.u32 %v1255, 7
        %v1257 = vsub.s32 %v1254, %v1256
        %v1258 = vrot.slane %v1244, %v1257
        %v1259 = vcombine.high %v1251, %v1251
        %v1260 = vcombine.high %v1258, %v1258
        %v1261 = vcombine.high %v917, %v917
        %v1263 = vunpack.c.l.s4 1983009808
        %v1264 = vunpack.c.0.s8 %v1263
        %v1265 = vlaneseq
        %v1266 = vshrl.u32 %v1265, 7
        %v1267 = vsub.s32 %v1264, %v1266
        %v1268 = vrot.slane %v917, %v1267
        %v1270 = vunpack.c.l.s4 1983009808
        %v1271 = vunpack.c.0.s8 %v1270
        %v1272 = vlaneseq
        %v1273 = vshrl.u32 %v1272, 7
        %v1274 = vsub.s32 %v1271, %v1273
        %v1275 = vrot.slane %v1261, %v1274
        %v1276 = vcombine.high %v1268, %v1268
        %v1277 = vcombine.high %v1275, %v1275
        %v1358 = vsel %vm732, %v945, 0.0
        %v1359 = vsel %vm732, %v953, 0.0
        %v1360 = vadd.f32 %v1358, %v1359
        %v1361 = vsel %vm732, %v952, 0.0
        %v1362 = vadd.f32 %v1360, %v1361
        %v1363 = vsel %vm732, %v954, 0.0
        %v1364 = vadd.f32 %v1362, %v1363
        %v1365 = vsel %vm732, %v962, 0.0
        %v1366 = vadd.f32 %v1364, %v1365
        %v1367 = vsel %vm732, %v970, 0.0
        %v1368 = vadd.f32 %v1366, %v1367
        %v1369 = vsel %vm732, %v969, 0.0
        %v1370 = vadd.f32 %v1368, %v1369
        %v1371 = vsel %vm732, %v971, 0.0
        %v1372 = vadd.f32 %v1370, %v1371
        %v1373 = vsel %vm732, %v979, 0.0
        %v1374 = vadd.f32 %v1372, %v1373
        %v1375 = vsel %vm732, %v987, 0.0
        %v1376 = vadd.f32 %v1374, %v1375
        %v1377 = vsel %vm732, %v986, 0.0
        %v1378 = vadd.f32 %v1376, %v1377
        %v1379 = vsel %vm732, %v988, 0.0
        %v1380 = vadd.f32 %v1378, %v1379
        %v1381 = vsel %vm732, %v996, 0.0
        %v1382 = vadd.f32 %v1380, %v1381
        %v1383 = vsel %vm732, %v1004, 0.0
        %v1384 = vadd.f32 %v1382, %v1383
        %v1385 = vsel %vm732, %v1003, 0.0
        %v1386 = vadd.f32 %v1384, %v1385
        %v1387 = vsel %vm732, %v1005, 0.0
        %v1388 = vadd.f32 %v1386, %v1387
        %v1389 = vsel %vm732, %v1013, 0.0
        %v1390 = vadd.f32 %v1388, %v1389
        %v1391 = vsel %vm732, %v1021, 0.0
        %v1392 = vadd.f32 %v1390, %v1391
        %v1393 = vsel %vm732, %v1020, 0.0
        %v1394 = vadd.f32 %v1392, %v1393
        %v1395 = vsel %vm732, %v1022, 0.0
        %v1396 = vadd.f32 %v1394, %v1395
        %v1397 = vsel %vm732, %v1030, 0.0
        %v1398 = vadd.f32 %v1396, %v1397
        %v1399 = vsel %vm732, %v1038, 0.0
        %v1400 = vadd.f32 %v1398, %v1399
        %v1401 = vsel %vm732, %v1037, 0.0
        %v1402 = vadd.f32 %v1400, %v1401
        %v1403 = vsel %vm732, %v1039, 0.0
        %v1404 = vadd.f32 %v1402, %v1403
        %v1405 = vsel %vm732, %v1047, 0.0
        %v1406 = vadd.f32 %v1404, %v1405
        %v1407 = vsel %vm732, %v1055, 0.0
        %v1408 = vadd.f32 %v1406, %v1407
        %v1409 = vsel %vm732, %v1054, 0.0
        %v1410 = vadd.f32 %v1408, %v1409
        %v1411 = vsel %vm732, %v1056, 0.0
        %v1412 = vadd.f32 %v1410, %v1411
        %v1413 = vsel %vm732, %v1064, 0.0
        %v1414 = vadd.f32 %v1412, %v1413
        %v1415 = vsel %vm732, %v1072, 0.0
        %v1416 = vadd.f32 %v1414, %v1415
        %v1417 = vsel %vm732, %v1071, 0.0
        %v1418 = vadd.f32 %v1416, %v1417
        %v1419 = vsel %vm732, %v1073, 0.0
        %v1420 = vadd.f32 %v1418, %v1419
        %v1421 = vsel %vm732, %v1081, 0.0
        %v1422 = vadd.f32 %v1420, %v1421
        %v1423 = vsel %vm732, %v1089, 0.0
        %v1424 = vadd.f32 %v1422, %v1423
        %v1425 = vsel %vm732, %v1088, 0.0
        %v1426 = vadd.f32 %v1424, %v1425
        %v1427 = vsel %vm732, %v1090, 0.0
        %v1428 = vadd.f32 %v1426, %v1427
        %v1429 = vsel %vm732, %v1098, 0.0
        %v1430 = vadd.f32 %v1428, %v1429
        %v1431 = vsel %vm732, %v1106, 0.0
        %v1432 = vadd.f32 %v1430, %v1431
        %v1433 = vsel %vm732, %v1105, 0.0
        %v1434 = vadd.f32 %v1432, %v1433
        %v1435 = vsel %vm732, %v1107, 0.0
        %v1436 = vadd.f32 %v1434, %v1435
        %v1437 = vsel %vm732, %v1115, 0.0
        %v1438 = vadd.f32 %v1436, %v1437
        %v1439 = vsel %vm732, %v1123, 0.0
        %v1440 = vadd.f32 %v1438, %v1439
        %v1441 = vsel %vm732, %v1122, 0.0
        %v1442 = vadd.f32 %v1440, %v1441
        %v1443 = vsel %vm732, %v1124, 0.0
        %v1444 = vadd.f32 %v1442, %v1443
        %v1445 = vsel %vm732, %v1132, 0.0
        %v1446 = vadd.f32 %v1444, %v1445
        %v1447 = vsel %vm732, %v1140, 0.0
        %v1448 = vadd.f32 %v1446, %v1447
        %v1449 = vsel %vm732, %v1139, 0.0
        %v1450 = vadd.f32 %v1448, %v1449
        %v1451 = vsel %vm732, %v1141, 0.0
        %v1452 = vadd.f32 %v1450, %v1451
        %v1453 = vsel %vm732, %v1149, 0.0
        %v1454 = vadd.f32 %v1452, %v1453
        %v1455 = vsel %vm732, %v1157, 0.0
        %v1456 = vadd.f32 %v1454, %v1455
        %v1457 = vsel %vm732, %v1156, 0.0
        %v1458 = vadd.f32 %v1456, %v1457
        %v1459 = vsel %vm732, %v1158, 0.0
        %v1460 = vadd.f32 %v1458, %v1459
        %v1461 = vsel %vm732, %v1166, 0.0
        %v1462 = vadd.f32 %v1460, %v1461
        %v1463 = vsel %vm732, %v1174, 0.0
        %v1464 = vadd.f32 %v1462, %v1463
        %v1465 = vsel %vm732, %v1173, 0.0
        %v1466 = vadd.f32 %v1464, %v1465
        %v1467 = vsel %vm732, %v1175, 0.0
        %v1468 = vadd.f32 %v1466, %v1467
        %v1469 = vsel %vm732, %v1183, 0.0
        %v1470 = vadd.f32 %v1468, %v1469
        %v1471 = vsel %vm732, %v1191, 0.0
        %v1472 = vadd.f32 %v1470, %v1471
        %v1473 = vsel %vm732, %v1190, 0.0
        %v1474 = vadd.f32 %v1472, %v1473
        %v1475 = vsel %vm732, %v1192, 0.0
        %v1476 = vadd.f32 %v1474, %v1475
        %v1477 = vsel %vm732, %v1200, 0.0
        %v1478 = vadd.f32 %v1476, %v1477
        %v1479 = vsel %vm732, %v1208, 0.0
        %v1480 = vadd.f32 %v1478, %v1479
        %v1481 = vsel %vm732, %v1207, 0.0
        %v1482 = vadd.f32 %v1480, %v1481
        %v1483 = vsel %vm732, %v1209, 0.0
        %v1484 = vadd.f32 %v1482, %v1483
        %v1485 = vsel %vm732, %v1217, 0.0
        %v1486 = vadd.f32 %v1484, %v1485
        %v1487 = vsel %vm732, %v1225, 0.0
        %v1488 = vadd.f32 %v1486, %v1487
        %v1489 = vsel %vm732, %v1224, 0.0
        %v1490 = vadd.f32 %v1488, %v1489
        %v1491 = vsel %vm732, %v1226, 0.0
        %v1492 = vadd.f32 %v1490, %v1491
        %v1493 = vsel %vm732, %v1234, 0.0
        %v1494 = vadd.f32 %v1492, %v1493
        %v1495 = vsel %vm732, %v1242, 0.0
        %v1496 = vadd.f32 %v1494, %v1495
        %v1497 = vsel %vm732, %v1241, 0.0
        %v1498 = vadd.f32 %v1496, %v1497
        %v1499 = vsel %vm732, %v1243, 0.0
        %v1500 = vadd.f32 %v1498, %v1499
        %v1501 = vsel %vm732, %v1251, 0.0
        %v1502 = vadd.f32 %v1500, %v1501
        %v1503 = vsel %vm732, %v1259, 0.0
        %v1504 = vadd.f32 %v1502, %v1503
        %v1505 = vsel %vm732, %v1258, 0.0
        %v1506 = vadd.f32 %v1504, %v1505
        %v1507 = vsel %vm732, %v1260, 0.0
        %v1508 = vadd.f32 %v1506, %v1507
        %v1509 = vsel %vm732, %v1268, 0.0
        %v1510 = vadd.f32 %v1508, %v1509
        %v1511 = vsel %vm732, %v1276, 0.0
        %v1512 = vadd.f32 %v1510, %v1511
        %v1513 = vsel %vm732, %v1275, 0.0
        %v1514 = vadd.f32 %v1512, %v1513
        %v1515 = vsel %vm732, %v1277, 0.0
        %v1516 = vadd.f32 %v1514, %v1515
        %1517 = vadd.xlane.f32.xlu0 %v1516
        %v1518 = vpop.xlane.xlu0 %1517
        %v1519 = vadd.f32 %v897, %v1518
        %1520 = vst.msk [vmem:[#allocation4] sm:$0x3] %vm895, %v1519
        %v1521 = vld [vmem:[#allocation2] sm:$0x3]
        %v1522 = vpack.c.bf16 %v319, %v319
        %v1523 = vpack.c.bf16 %v327, %v327
        %v1524 = vpack.c.bf16 %v326, %v326
        %v1525 = vpack.c.bf16 %v328, %v328
        %v1526 = vpack.c.bf16 %v336, %v336
        %v1527 = vpack.c.bf16 %v344, %v344
        %v1528 = vpack.c.bf16 %v343, %v343
        %v1529 = vpack.c.bf16 %v345, %v345
        %v1530 = vpack.c.bf16 %v353, %v353
        %v1531 = vpack.c.bf16 %v361, %v361
        %v1532 = vpack.c.bf16 %v360, %v360
        %v1533 = vpack.c.bf16 %v362, %v362
        %v1534 = vpack.c.bf16 %v370, %v370
        %v1535 = vpack.c.bf16 %v378, %v378
        %v1536 = vpack.c.bf16 %v377, %v377
        %v1537 = vpack.c.bf16 %v379, %v379
        %v1538 = vpack.c.bf16 %v387, %v387
        %v1539 = vpack.c.bf16 %v395, %v395
        %v1540 = vpack.c.bf16 %v394, %v394
        %v1541 = vpack.c.bf16 %v396, %v396
        %v1542 = vpack.c.bf16 %v404, %v404
        %v1543 = vpack.c.bf16 %v412, %v412
        %v1544 = vpack.c.bf16 %v411, %v411
        %v1545 = vpack.c.bf16 %v413, %v413
        %v1546 = vpack.c.bf16 %v421, %v421
        %v1547 = vpack.c.bf16 %v429, %v429
        %v1548 = vpack.c.bf16 %v428, %v428
        %v1549 = vpack.c.bf16 %v430, %v430
        %v1550 = vpack.c.bf16 %v438, %v438
        %v1551 = vpack.c.bf16 %v446, %v446
        %v1552 = vpack.c.bf16 %v445, %v445
        %v1553 = vpack.c.bf16 %v447, %v447
        %v1554 = vpack.c.bf16 %v455, %v455
        %v1555 = vpack.c.bf16 %v463, %v463
        %v1556 = vpack.c.bf16 %v462, %v462
        %v1557 = vpack.c.bf16 %v464, %v464
        %v1558 = vpack.c.bf16 %v472, %v472
        %v1559 = vpack.c.bf16 %v480, %v480
        %v1560 = vpack.c.bf16 %v479, %v479
        %v1561 = vpack.c.bf16 %v481, %v481
        %v1562 = vpack.c.bf16 %v489, %v489
        %v1563 = vpack.c.bf16 %v497, %v497
        %v1564 = vpack.c.bf16 %v496, %v496
        %v1565 = vpack.c.bf16 %v498, %v498
        %v1566 = vpack.c.bf16 %v506, %v506
        %v1567 = vpack.c.bf16 %v514, %v514
        %v1568 = vpack.c.bf16 %v513, %v513
        %v1569 = vpack.c.bf16 %v515, %v515
        %v1570 = vpack.c.bf16 %v523, %v523
        %v1571 = vpack.c.bf16 %v531, %v531
        %v1572 = vpack.c.bf16 %v530, %v530
        %v1573 = vpack.c.bf16 %v532, %v532
        %v1574 = vpack.c.bf16 %v540, %v540
        %v1575 = vpack.c.bf16 %v548, %v548
        %v1576 = vpack.c.bf16 %v547, %v547
        %v1577 = vpack.c.bf16 %v549, %v549
        %v1578 = vpack.c.bf16 %v557, %v557
        %v1579 = vpack.c.bf16 %v565, %v565
        %v1580 = vpack.c.bf16 %v564, %v564
        %v1581 = vpack.c.bf16 %v566, %v566
        %v1582 = vpack.c.bf16 %v574, %v574
        %v1583 = vpack.c.bf16 %v582, %v582
        %v1584 = vpack.c.bf16 %v581, %v581
        %v1585 = vpack.c.bf16 %v583, %v583
        %v1586 = vpack.c.bf16 %v591, %v591
        %v1587 = vpack.c.bf16 %v599, %v599
        %v1588 = vpack.c.bf16 %v598, %v598
        %v1589 = vpack.c.bf16 %v600, %v600
        %v1590 = vpack.c.bf16 %v608, %v608
        %v1591 = vpack.c.bf16 %v616, %v616
        %v1592 = vpack.c.bf16 %v615, %v615
        %v1593 = vpack.c.bf16 %v617, %v617
        %v1594 = vpack.c.bf16 %v625, %v625
        %v1595 = vpack.c.bf16 %v633, %v633
        %v1596 = vpack.c.bf16 %v632, %v632
        %v1597 = vpack.c.bf16 %v634, %v634
        %v1598 = vpack.c.bf16 %v642, %v642
        %v1599 = vpack.c.bf16 %v650, %v650
        %v1600 = vpack.c.bf16 %v649, %v649
        %v1601 = vpack.c.bf16 %v651, %v651
        %v1602 = vld [vmem:[%s260] sm:$0xf]
        %v1603 = vld [vmem:[%s260 + $0x4] sm:$0xf]
        %v1604 = vld [vmem:[%s260 + $0x8] sm:$0xf]
        %v1605 = vld [vmem:[%s260 + $0xc] sm:$0xf]
        %v1606 = vld [vmem:[%s260 + $0x10] sm:$0xf]
        %v1607 = vld [vmem:[%s260 + $0x14] sm:$0xf]
        %v1608 = vld [vmem:[%s260 + $0x18] sm:$0xf]
        %v1609 = vld [vmem:[%s260 + $0x1c] sm:$0xf]
        %v1610 = vld [vmem:[%s260 + $0x20] sm:$0xf]
        %v1611 = vld [vmem:[%s260 + $0x24] sm:$0xf]
        %v1612 = vld [vmem:[%s260 + $0x28] sm:$0xf]
        %v1613 = vld [vmem:[%s260 + $0x2c] sm:$0xf]
        %v1614 = vld [vmem:[%s260 + $0x30] sm:$0xf]
        %v1615 = vld [vmem:[%s260 + $0x34] sm:$0xf]
        %v1616 = vld [vmem:[%s260 + $0x38] sm:$0xf]
        %v1617 = vld [vmem:[%s260 + $0x3c] sm:$0xf]
        %v1618 = vld [vmem:[%s260 + $0x40] sm:$0xf]
        %v1619 = vld [vmem:[%s260 + $0x44] sm:$0xf]
        %v1620 = vld [vmem:[%s260 + $0x48] sm:$0xf]
        %v1621 = vld [vmem:[%s260 + $0x4c] sm:$0xf]
        %v1622 = vld [vmem:[%s260 + $0x50] sm:$0xf]
        %v1623 = vld [vmem:[%s260 + $0x54] sm:$0xf]
        %v1624 = vld [vmem:[%s260 + $0x58] sm:$0xf]
        %v1625 = vld [vmem:[%s260 + $0x5c] sm:$0xf]
        %v1626 = vld [vmem:[%s260 + $0x60] sm:$0xf]
        %v1627 = vld [vmem:[%s260 + $0x64] sm:$0xf]
        %v1628 = vld [vmem:[%s260 + $0x68] sm:$0xf]
        %v1629 = vld [vmem:[%s260 + $0x6c] sm:$0xf]
        %v1630 = vld [vmem:[%s260 + $0x70] sm:$0xf]
        %v1631 = vld [vmem:[%s260 + $0x74] sm:$0xf]
        %v1632 = vld [vmem:[%s260 + $0x78] sm:$0xf]
        %v1633 = vld [vmem:[%s260 + $0x7c] sm:$0xf]
        %v1634 = vld [vmem:[%s260 + $0x80] sm:$0xf]
        %v1635 = vld [vmem:[%s260 + $0x84] sm:$0xf]
        %v1636 = vld [vmem:[%s260 + $0x88] sm:$0xf]
        %v1637 = vld [vmem:[%s260 + $0x8c] sm:$0xf]
        %v1638 = vld [vmem:[%s260 + $0x90] sm:$0xf]
        %v1639 = vld [vmem:[%s260 + $0x94] sm:$0xf]
        %v1640 = vld [vmem:[%s260 + $0x98] sm:$0xf]
        %v1641 = vld [vmem:[%s260 + $0x9c] sm:$0xf]
        %v1642 = vld [vmem:[%s260 + $0xa0] sm:$0xf]
        %v1643 = vld [vmem:[%s260 + $0xa4] sm:$0xf]
        %v1644 = vld [vmem:[%s260 + $0xa8] sm:$0xf]
        %v1645 = vld [vmem:[%s260 + $0xac] sm:$0xf]
        %v1646 = vld [vmem:[%s260 + $0xb0] sm:$0xf]
        %v1647 = vld [vmem:[%s260 + $0xb4] sm:$0xf]
        %v1648 = vld [vmem:[%s260 + $0xb8] sm:$0xf]
        %v1649 = vld [vmem:[%s260 + $0xbc] sm:$0xf]
        %v1650 = vld [vmem:[%s260 + $0xc0] sm:$0xf]
        %v1651 = vld [vmem:[%s260 + $0xc4] sm:$0xf]
        %v1652 = vld [vmem:[%s260 + $0xc8] sm:$0xf]
        %v1653 = vld [vmem:[%s260 + $0xcc] sm:$0xf]
        %v1654 = vld [vmem:[%s260 + $0xd0] sm:$0xf]
        %v1655 = vld [vmem:[%s260 + $0xd4] sm:$0xf]
        %v1656 = vld [vmem:[%s260 + $0xd8] sm:$0xf]
        %v1657 = vld [vmem:[%s260 + $0xdc] sm:$0xf]
        %v1658 = vld [vmem:[%s260 + $0xe0] sm:$0xf]
        %v1659 = vld [vmem:[%s260 + $0xe4] sm:$0xf]
        %v1660 = vld [vmem:[%s260 + $0xe8] sm:$0xf]
        %v1661 = vld [vmem:[%s260 + $0xec] sm:$0xf]
        %v1662 = vld [vmem:[%s260 + $0xf0] sm:$0xf]
        %v1663 = vld [vmem:[%s260 + $0xf4] sm:$0xf]
        %v1664 = vld [vmem:[%s260 + $0xf8] sm:$0xf]
        %v1665 = vld [vmem:[%s260 + $0xfc] sm:$0xf]
        %v1666 = vld [vmem:[%s260 + $0x100] sm:$0xf]
        %v1667 = vld [vmem:[%s260 + $0x104] sm:$0xf]
        %v1668 = vld [vmem:[%s260 + $0x108] sm:$0xf]
        %v1669 = vld [vmem:[%s260 + $0x10c] sm:$0xf]
        %v1670 = vld [vmem:[%s260 + $0x110] sm:$0xf]
        %v1671 = vld [vmem:[%s260 + $0x114] sm:$0xf]
        %v1672 = vld [vmem:[%s260 + $0x118] sm:$0xf]
        %v1673 = vld [vmem:[%s260 + $0x11c] sm:$0xf]
        %v1674 = vld [vmem:[%s260 + $0x120] sm:$0xf]
        %v1675 = vld [vmem:[%s260 + $0x124] sm:$0xf]
        %v1676 = vld [vmem:[%s260 + $0x128] sm:$0xf]
        %v1677 = vld [vmem:[%s260 + $0x12c] sm:$0xf]
        %v1678 = vld [vmem:[%s260 + $0x130] sm:$0xf]
        %v1679 = vld [vmem:[%s260 + $0x134] sm:$0xf]
        %v1680 = vld [vmem:[%s260 + $0x138] sm:$0xf]
        %v1681 = vld [vmem:[%s260 + $0x13c] sm:$0xf]
        %v1682 = vld [vmem:[%s260 + $0x140] sm:$0xf]
        %v1683 = vld [vmem:[%s260 + $0x144] sm:$0xf]
        %v1684 = vld [vmem:[%s260 + $0x148] sm:$0xf]
        %v1685 = vld [vmem:[%s260 + $0x14c] sm:$0xf]
        %v1686 = vld [vmem:[%s260 + $0x150] sm:$0xf]
        %v1687 = vld [vmem:[%s260 + $0x154] sm:$0xf]
        %v1688 = vld [vmem:[%s260 + $0x158] sm:$0xf]
        %v1689 = vld [vmem:[%s260 + $0x15c] sm:$0xf]
        %v1690 = vld [vmem:[%s260 + $0x160] sm:$0xf]
        %v1691 = vld [vmem:[%s260 + $0x164] sm:$0xf]
        %v1692 = vld [vmem:[%s260 + $0x168] sm:$0xf]
        %v1693 = vld [vmem:[%s260 + $0x16c] sm:$0xf]
        %v1694 = vld [vmem:[%s260 + $0x170] sm:$0xf]
        %v1695 = vld [vmem:[%s260 + $0x174] sm:$0xf]
        %v1696 = vld [vmem:[%s260 + $0x178] sm:$0xf]
        %v1697 = vld [vmem:[%s260 + $0x17c] sm:$0xf]
        %v1698 = vld [vmem:[%s260 + $0x180] sm:$0xf]
        %v1699 = vld [vmem:[%s260 + $0x184] sm:$0xf]
        %v1700 = vld [vmem:[%s260 + $0x188] sm:$0xf]
        %v1701 = vld [vmem:[%s260 + $0x18c] sm:$0xf]
        %v1702 = vld [vmem:[%s260 + $0x190] sm:$0xf]
        %v1703 = vld [vmem:[%s260 + $0x194] sm:$0xf]
        %v1704 = vld [vmem:[%s260 + $0x198] sm:$0xf]
        %v1705 = vld [vmem:[%s260 + $0x19c] sm:$0xf]
        %v1706 = vld [vmem:[%s260 + $0x1a0] sm:$0xf]
        %v1707 = vld [vmem:[%s260 + $0x1a4] sm:$0xf]
        %v1708 = vld [vmem:[%s260 + $0x1a8] sm:$0xf]
        %v1709 = vld [vmem:[%s260 + $0x1ac] sm:$0xf]
        %v1710 = vld [vmem:[%s260 + $0x1b0] sm:$0xf]
        %v1711 = vld [vmem:[%s260 + $0x1b4] sm:$0xf]
        %v1712 = vld [vmem:[%s260 + $0x1b8] sm:$0xf]
        %v1713 = vld [vmem:[%s260 + $0x1bc] sm:$0xf]
        %v1714 = vld [vmem:[%s260 + $0x1c0] sm:$0xf]
        %v1715 = vld [vmem:[%s260 + $0x1c4] sm:$0xf]
        %v1716 = vld [vmem:[%s260 + $0x1c8] sm:$0xf]
        %v1717 = vld [vmem:[%s260 + $0x1cc] sm:$0xf]
        %v1718 = vld [vmem:[%s260 + $0x1d0] sm:$0xf]
        %v1719 = vld [vmem:[%s260 + $0x1d4] sm:$0xf]
        %v1720 = vld [vmem:[%s260 + $0x1d8] sm:$0xf]
        %v1721 = vld [vmem:[%s260 + $0x1dc] sm:$0xf]
        %v1722 = vld [vmem:[%s260 + $0x1e0] sm:$0xf]
        %v1723 = vld [vmem:[%s260 + $0x1e4] sm:$0xf]
        %v1724 = vld [vmem:[%s260 + $0x1e8] sm:$0xf]
        %v1725 = vld [vmem:[%s260 + $0x1ec] sm:$0xf]
        %v1726 = vld [vmem:[%s260 + $0x1f0] sm:$0xf]
        %v1727 = vld [vmem:[%s260 + $0x1f4] sm:$0xf]
        %v1728 = vld [vmem:[%s260 + $0x1f8] sm:$0xf]
        %v1729 = vld [vmem:[%s260 + $0x1fc] sm:$0xf]
        %v1730 = vld [vmem:[%s260 + $0x200] sm:$0xf]
        %v1731 = vld [vmem:[%s260 + $0x204] sm:$0xf]
        %v1732 = vld [vmem:[%s260 + $0x208] sm:$0xf]
        %v1733 = vld [vmem:[%s260 + $0x20c] sm:$0xf]
        %v1734 = vld [vmem:[%s260 + $0x210] sm:$0xf]
        %v1735 = vld [vmem:[%s260 + $0x214] sm:$0xf]
        %v1736 = vld [vmem:[%s260 + $0x218] sm:$0xf]
        %v1737 = vld [vmem:[%s260 + $0x21c] sm:$0xf]
        %v1738 = vld [vmem:[%s260 + $0x220] sm:$0xf]
        %v1739 = vld [vmem:[%s260 + $0x224] sm:$0xf]
        %v1740 = vld [vmem:[%s260 + $0x228] sm:$0xf]
        %v1741 = vld [vmem:[%s260 + $0x22c] sm:$0xf]
        %v1742 = vld [vmem:[%s260 + $0x230] sm:$0xf]
        %v1743 = vld [vmem:[%s260 + $0x234] sm:$0xf]
        %v1744 = vld [vmem:[%s260 + $0x238] sm:$0xf]
        %v1745 = vld [vmem:[%s260 + $0x23c] sm:$0xf]
        %v1746 = vld [vmem:[%s260 + $0x240] sm:$0xf]
        %v1747 = vld [vmem:[%s260 + $0x244] sm:$0xf]
        %v1748 = vld [vmem:[%s260 + $0x248] sm:$0xf]
        %v1749 = vld [vmem:[%s260 + $0x24c] sm:$0xf]
        %v1750 = vld [vmem:[%s260 + $0x250] sm:$0xf]
        %v1751 = vld [vmem:[%s260 + $0x254] sm:$0xf]
        %v1752 = vld [vmem:[%s260 + $0x258] sm:$0xf]
        %v1753 = vld [vmem:[%s260 + $0x25c] sm:$0xf]
        %v1754 = vld [vmem:[%s260 + $0x260] sm:$0xf]
        %v1755 = vld [vmem:[%s260 + $0x264] sm:$0xf]
        %v1756 = vld [vmem:[%s260 + $0x268] sm:$0xf]
        %v1757 = vld [vmem:[%s260 + $0x26c] sm:$0xf]
        %v1758 = vld [vmem:[%s260 + $0x270] sm:$0xf]
        %v1759 = vld [vmem:[%s260 + $0x274] sm:$0xf]
        %v1760 = vld [vmem:[%s260 + $0x278] sm:$0xf]
        %v1761 = vld [vmem:[%s260 + $0x27c] sm:$0xf]
        %v1762 = vld [vmem:[%s260 + $0x280] sm:$0xf]
        %v1763 = vld [vmem:[%s260 + $0x284] sm:$0xf]
        %v1764 = vld [vmem:[%s260 + $0x288] sm:$0xf]
        %v1765 = vld [vmem:[%s260 + $0x28c] sm:$0xf]
        %v1766 = vld [vmem:[%s260 + $0x290] sm:$0xf]
        %v1767 = vld [vmem:[%s260 + $0x294] sm:$0xf]
        %v1768 = vld [vmem:[%s260 + $0x298] sm:$0xf]
        %v1769 = vld [vmem:[%s260 + $0x29c] sm:$0xf]
        %v1770 = vld [vmem:[%s260 + $0x2a0] sm:$0xf]
        %v1771 = vld [vmem:[%s260 + $0x2a4] sm:$0xf]
        %v1772 = vld [vmem:[%s260 + $0x2a8] sm:$0xf]
        %v1773 = vld [vmem:[%s260 + $0x2ac] sm:$0xf]
        %v1774 = vld [vmem:[%s260 + $0x2b0] sm:$0xf]
        %v1775 = vld [vmem:[%s260 + $0x2b4] sm:$0xf]
        %v1776 = vld [vmem:[%s260 + $0x2b8] sm:$0xf]
        %v1777 = vld [vmem:[%s260 + $0x2bc] sm:$0xf]
        %v1778 = vld [vmem:[%s260 + $0x2c0] sm:$0xf]
        %v1779 = vld [vmem:[%s260 + $0x2c4] sm:$0xf]
        %v1780 = vld [vmem:[%s260 + $0x2c8] sm:$0xf]
        %v1781 = vld [vmem:[%s260 + $0x2cc] sm:$0xf]
        %v1782 = vld [vmem:[%s260 + $0x2d0] sm:$0xf]
        %v1783 = vld [vmem:[%s260 + $0x2d4] sm:$0xf]
        %v1784 = vld [vmem:[%s260 + $0x2d8] sm:$0xf]
        %v1785 = vld [vmem:[%s260 + $0x2dc] sm:$0xf]
        %v1786 = vld [vmem:[%s260 + $0x2e0] sm:$0xf]
        %v1787 = vld [vmem:[%s260 + $0x2e4] sm:$0xf]
        %v1788 = vld [vmem:[%s260 + $0x2e8] sm:$0xf]
        %v1789 = vld [vmem:[%s260 + $0x2ec] sm:$0xf]
        %v1790 = vld [vmem:[%s260 + $0x2f0] sm:$0xf]
        %v1791 = vld [vmem:[%s260 + $0x2f4] sm:$0xf]
        %v1792 = vld [vmem:[%s260 + $0x2f8] sm:$0xf]
        %v1793 = vld [vmem:[%s260 + $0x2fc] sm:$0xf]
        %v1794 = vld [vmem:[%s260 + $0x300] sm:$0xf]
        %v1795 = vld [vmem:[%s260 + $0x304] sm:$0xf]
        %v1796 = vld [vmem:[%s260 + $0x308] sm:$0xf]
        %v1797 = vld [vmem:[%s260 + $0x30c] sm:$0xf]
        %v1798 = vld [vmem:[%s260 + $0x310] sm:$0xf]
        %v1799 = vld [vmem:[%s260 + $0x314] sm:$0xf]
        %v1800 = vld [vmem:[%s260 + $0x318] sm:$0xf]
        %v1801 = vld [vmem:[%s260 + $0x31c] sm:$0xf]
        %v1802 = vld [vmem:[%s260 + $0x320] sm:$0xf]
        %v1803 = vld [vmem:[%s260 + $0x324] sm:$0xf]
        %v1804 = vld [vmem:[%s260 + $0x328] sm:$0xf]
        %v1805 = vld [vmem:[%s260 + $0x32c] sm:$0xf]
        %v1806 = vld [vmem:[%s260 + $0x330] sm:$0xf]
        %v1807 = vld [vmem:[%s260 + $0x334] sm:$0xf]
        %v1808 = vld [vmem:[%s260 + $0x338] sm:$0xf]
        %v1809 = vld [vmem:[%s260 + $0x33c] sm:$0xf]
        %v1810 = vld [vmem:[%s260 + $0x340] sm:$0xf]
        %v1811 = vld [vmem:[%s260 + $0x344] sm:$0xf]
        %v1812 = vld [vmem:[%s260 + $0x348] sm:$0xf]
        %v1813 = vld [vmem:[%s260 + $0x34c] sm:$0xf]
        %v1814 = vld [vmem:[%s260 + $0x350] sm:$0xf]
        %v1815 = vld [vmem:[%s260 + $0x354] sm:$0xf]
        %v1816 = vld [vmem:[%s260 + $0x358] sm:$0xf]
        %v1817 = vld [vmem:[%s260 + $0x35c] sm:$0xf]
        %v1818 = vld [vmem:[%s260 + $0x360] sm:$0xf]
        %v1819 = vld [vmem:[%s260 + $0x364] sm:$0xf]
        %v1820 = vld [vmem:[%s260 + $0x368] sm:$0xf]
        %v1821 = vld [vmem:[%s260 + $0x36c] sm:$0xf]
        %v1822 = vld [vmem:[%s260 + $0x370] sm:$0xf]
        %v1823 = vld [vmem:[%s260 + $0x374] sm:$0xf]
        %v1824 = vld [vmem:[%s260 + $0x378] sm:$0xf]
        %v1825 = vld [vmem:[%s260 + $0x37c] sm:$0xf]
        %v1826 = vld [vmem:[%s260 + $0x380] sm:$0xf]
        %v1827 = vld [vmem:[%s260 + $0x384] sm:$0xf]
        %v1828 = vld [vmem:[%s260 + $0x388] sm:$0xf]
        %v1829 = vld [vmem:[%s260 + $0x38c] sm:$0xf]
        %v1830 = vld [vmem:[%s260 + $0x390] sm:$0xf]
        %v1831 = vld [vmem:[%s260 + $0x394] sm:$0xf]
        %v1832 = vld [vmem:[%s260 + $0x398] sm:$0xf]
        %v1833 = vld [vmem:[%s260 + $0x39c] sm:$0xf]
        %v1834 = vld [vmem:[%s260 + $0x3a0] sm:$0xf]
        %v1835 = vld [vmem:[%s260 + $0x3a4] sm:$0xf]
        %v1836 = vld [vmem:[%s260 + $0x3a8] sm:$0xf]
        %v1837 = vld [vmem:[%s260 + $0x3ac] sm:$0xf]
        %v1838 = vld [vmem:[%s260 + $0x3b0] sm:$0xf]
        %v1839 = vld [vmem:[%s260 + $0x3b4] sm:$0xf]
        %v1840 = vld [vmem:[%s260 + $0x3b8] sm:$0xf]
        %v1841 = vld [vmem:[%s260 + $0x3bc] sm:$0xf]
        %v1842 = vld [vmem:[%s260 + $0x3c0] sm:$0xf]
        %v1843 = vld [vmem:[%s260 + $0x3c4] sm:$0xf]
        %v1844 = vld [vmem:[%s260 + $0x3c8] sm:$0xf]
        %v1845 = vld [vmem:[%s260 + $0x3cc] sm:$0xf]
        %v1846 = vld [vmem:[%s260 + $0x3d0] sm:$0xf]
        %v1847 = vld [vmem:[%s260 + $0x3d4] sm:$0xf]
        %v1848 = vld [vmem:[%s260 + $0x3d8] sm:$0xf]
        %v1849 = vld [vmem:[%s260 + $0x3dc] sm:$0xf]
        %v1850 = vld [vmem:[%s260 + $0x3e0] sm:$0xf]
        %v1851 = vld [vmem:[%s260 + $0x3e4] sm:$0xf]
        %v1852 = vld [vmem:[%s260 + $0x3e8] sm:$0xf]
        %v1853 = vld [vmem:[%s260 + $0x3ec] sm:$0xf]
        %v1854 = vld [vmem:[%s260 + $0x3f0] sm:$0xf]
        %v1855 = vld [vmem:[%s260 + $0x3f4] sm:$0xf]
        %v1856 = vld [vmem:[%s260 + $0x3f8] sm:$0xf]
        %v1857 = vld [vmem:[%s260 + $0x3fc] sm:$0xf]
        %v1858 = vld [vmem:[%s260 + $0x400] sm:$0xf]
        %v1859 = vld [vmem:[%s260 + $0x404] sm:$0xf]
        %v1860 = vld [vmem:[%s260 + $0x408] sm:$0xf]
        %v1861 = vld [vmem:[%s260 + $0x40c] sm:$0xf]
        %v1862 = vld [vmem:[%s260 + $0x410] sm:$0xf]
        %v1863 = vld [vmem:[%s260 + $0x414] sm:$0xf]
        %v1864 = vld [vmem:[%s260 + $0x418] sm:$0xf]
        %v1865 = vld [vmem:[%s260 + $0x41c] sm:$0xf]
        %v1866 = vld [vmem:[%s260 + $0x420] sm:$0xf]
        %v1867 = vld [vmem:[%s260 + $0x424] sm:$0xf]
        %v1868 = vld [vmem:[%s260 + $0x428] sm:$0xf]
        %v1869 = vld [vmem:[%s260 + $0x42c] sm:$0xf]
        %v1870 = vld [vmem:[%s260 + $0x430] sm:$0xf]
        %v1871 = vld [vmem:[%s260 + $0x434] sm:$0xf]
        %v1872 = vld [vmem:[%s260 + $0x438] sm:$0xf]
        %v1873 = vld [vmem:[%s260 + $0x43c] sm:$0xf]
        %v1874 = vld [vmem:[%s260 + $0x440] sm:$0xf]
        %v1875 = vld [vmem:[%s260 + $0x444] sm:$0xf]
        %v1876 = vld [vmem:[%s260 + $0x448] sm:$0xf]
        %v1877 = vld [vmem:[%s260 + $0x44c] sm:$0xf]
        %v1878 = vld [vmem:[%s260 + $0x450] sm:$0xf]
        %v1879 = vld [vmem:[%s260 + $0x454] sm:$0xf]
        %v1880 = vld [vmem:[%s260 + $0x458] sm:$0xf]
        %v1881 = vld [vmem:[%s260 + $0x45c] sm:$0xf]
        %v1882 = vld [vmem:[%s260 + $0x460] sm:$0xf]
        %v1883 = vld [vmem:[%s260 + $0x464] sm:$0xf]
        %v1884 = vld [vmem:[%s260 + $0x468] sm:$0xf]
        %v1885 = vld [vmem:[%s260 + $0x46c] sm:$0xf]
        %v1886 = vld [vmem:[%s260 + $0x470] sm:$0xf]
        %v1887 = vld [vmem:[%s260 + $0x474] sm:$0xf]
        %v1888 = vld [vmem:[%s260 + $0x478] sm:$0xf]
        %v1889 = vld [vmem:[%s260 + $0x47c] sm:$0xf]
        %v1890 = vld [vmem:[%s260 + $0x480] sm:$0xf]
        %v1891 = vld [vmem:[%s260 + $0x484] sm:$0xf]
        %v1892 = vld [vmem:[%s260 + $0x488] sm:$0xf]
        %v1893 = vld [vmem:[%s260 + $0x48c] sm:$0xf]
        %v1894 = vld [vmem:[%s260 + $0x490] sm:$0xf]
        %v1895 = vld [vmem:[%s260 + $0x494] sm:$0xf]
        %v1896 = vld [vmem:[%s260 + $0x498] sm:$0xf]
        %v1897 = vld [vmem:[%s260 + $0x49c] sm:$0xf]
        %v1898 = vld [vmem:[%s260 + $0x4a0] sm:$0xf]
        %v1899 = vld [vmem:[%s260 + $0x4a4] sm:$0xf]
        %v1900 = vld [vmem:[%s260 + $0x4a8] sm:$0xf]
        %v1901 = vld [vmem:[%s260 + $0x4ac] sm:$0xf]
        %v1902 = vld [vmem:[%s260 + $0x4b0] sm:$0xf]
        %v1903 = vld [vmem:[%s260 + $0x4b4] sm:$0xf]
        %v1904 = vld [vmem:[%s260 + $0x4b8] sm:$0xf]
        %v1905 = vld [vmem:[%s260 + $0x4bc] sm:$0xf]
        %v1906 = vld [vmem:[%s260 + $0x4c0] sm:$0xf]
        %v1907 = vld [vmem:[%s260 + $0x4c4] sm:$0xf]
        %v1908 = vld [vmem:[%s260 + $0x4c8] sm:$0xf]
        %v1909 = vld [vmem:[%s260 + $0x4cc] sm:$0xf]
        %v1910 = vld [vmem:[%s260 + $0x4d0] sm:$0xf]
        %v1911 = vld [vmem:[%s260 + $0x4d4] sm:$0xf]
        %v1912 = vld [vmem:[%s260 + $0x4d8] sm:$0xf]
        %v1913 = vld [vmem:[%s260 + $0x4dc] sm:$0xf]
        %v1914 = vld [vmem:[%s260 + $0x4e0] sm:$0xf]
        %v1915 = vld [vmem:[%s260 + $0x4e4] sm:$0xf]
        %v1916 = vld [vmem:[%s260 + $0x4e8] sm:$0xf]
        %v1917 = vld [vmem:[%s260 + $0x4ec] sm:$0xf]
        %v1918 = vld [vmem:[%s260 + $0x4f0] sm:$0xf]
        %v1919 = vld [vmem:[%s260 + $0x4f4] sm:$0xf]
        %v1920 = vld [vmem:[%s260 + $0x4f8] sm:$0xf]
        %v1921 = vld [vmem:[%s260 + $0x4fc] sm:$0xf]
        %v1922 = vld [vmem:[%s260 + $0x500] sm:$0xf]
        %v1923 = vld [vmem:[%s260 + $0x504] sm:$0xf]
        %v1924 = vld [vmem:[%s260 + $0x508] sm:$0xf]
        %v1925 = vld [vmem:[%s260 + $0x50c] sm:$0xf]
        %v1926 = vld [vmem:[%s260 + $0x510] sm:$0xf]
        %v1927 = vld [vmem:[%s260 + $0x514] sm:$0xf]
        %v1928 = vld [vmem:[%s260 + $0x518] sm:$0xf]
        %v1929 = vld [vmem:[%s260 + $0x51c] sm:$0xf]
        %v1930 = vld [vmem:[%s260 + $0x520] sm:$0xf]
        %v1931 = vld [vmem:[%s260 + $0x524] sm:$0xf]
        %v1932 = vld [vmem:[%s260 + $0x528] sm:$0xf]
        %v1933 = vld [vmem:[%s260 + $0x52c] sm:$0xf]
        %v1934 = vld [vmem:[%s260 + $0x530] sm:$0xf]
        %v1935 = vld [vmem:[%s260 + $0x534] sm:$0xf]
        %v1936 = vld [vmem:[%s260 + $0x538] sm:$0xf]
        %v1937 = vld [vmem:[%s260 + $0x53c] sm:$0xf]
        %v1938 = vld [vmem:[%s260 + $0x540] sm:$0xf]
        %v1939 = vld [vmem:[%s260 + $0x544] sm:$0xf]
        %v1940 = vld [vmem:[%s260 + $0x548] sm:$0xf]
        %v1941 = vld [vmem:[%s260 + $0x54c] sm:$0xf]
        %v1942 = vld [vmem:[%s260 + $0x550] sm:$0xf]
        %v1943 = vld [vmem:[%s260 + $0x554] sm:$0xf]
        %v1944 = vld [vmem:[%s260 + $0x558] sm:$0xf]
        %v1945 = vld [vmem:[%s260 + $0x55c] sm:$0xf]
        %v1946 = vld [vmem:[%s260 + $0x560] sm:$0xf]
        %v1947 = vld [vmem:[%s260 + $0x564] sm:$0xf]
        %v1948 = vld [vmem:[%s260 + $0x568] sm:$0xf]
        %v1949 = vld [vmem:[%s260 + $0x56c] sm:$0xf]
        %v1950 = vld [vmem:[%s260 + $0x570] sm:$0xf]
        %v1951 = vld [vmem:[%s260 + $0x574] sm:$0xf]
        %v1952 = vld [vmem:[%s260 + $0x578] sm:$0xf]
        %v1953 = vld [vmem:[%s260 + $0x57c] sm:$0xf]
        %v1954 = vld [vmem:[%s260 + $0x580] sm:$0xf]
        %v1955 = vld [vmem:[%s260 + $0x584] sm:$0xf]
        %v1956 = vld [vmem:[%s260 + $0x588] sm:$0xf]
        %v1957 = vld [vmem:[%s260 + $0x58c] sm:$0xf]
        %v1958 = vld [vmem:[%s260 + $0x590] sm:$0xf]
        %v1959 = vld [vmem:[%s260 + $0x594] sm:$0xf]
        %v1960 = vld [vmem:[%s260 + $0x598] sm:$0xf]
        %v1961 = vld [vmem:[%s260 + $0x59c] sm:$0xf]
        %v1962 = vld [vmem:[%s260 + $0x5a0] sm:$0xf]
        %v1963 = vld [vmem:[%s260 + $0x5a4] sm:$0xf]
        %v1964 = vld [vmem:[%s260 + $0x5a8] sm:$0xf]
        %v1965 = vld [vmem:[%s260 + $0x5ac] sm:$0xf]
        %v1966 = vld [vmem:[%s260 + $0x5b0] sm:$0xf]
        %v1967 = vld [vmem:[%s260 + $0x5b4] sm:$0xf]
        %v1968 = vld [vmem:[%s260 + $0x5b8] sm:$0xf]
        %v1969 = vld [vmem:[%s260 + $0x5bc] sm:$0xf]
        %v1970 = vld [vmem:[%s260 + $0x5c0] sm:$0xf]
        %v1971 = vld [vmem:[%s260 + $0x5c4] sm:$0xf]
        %v1972 = vld [vmem:[%s260 + $0x5c8] sm:$0xf]
        %v1973 = vld [vmem:[%s260 + $0x5cc] sm:$0xf]
        %v1974 = vld [vmem:[%s260 + $0x5d0] sm:$0xf]
        %v1975 = vld [vmem:[%s260 + $0x5d4] sm:$0xf]
        %v1976 = vld [vmem:[%s260 + $0x5d8] sm:$0xf]
        %v1977 = vld [vmem:[%s260 + $0x5dc] sm:$0xf]
        %v1978 = vld [vmem:[%s260 + $0x5e0] sm:$0xf]
        %v1979 = vld [vmem:[%s260 + $0x5e4] sm:$0xf]
        %v1980 = vld [vmem:[%s260 + $0x5e8] sm:$0xf]
        %v1981 = vld [vmem:[%s260 + $0x5ec] sm:$0xf]
        %v1982 = vld [vmem:[%s260 + $0x5f0] sm:$0xf]
        %v1983 = vld [vmem:[%s260 + $0x5f4] sm:$0xf]
        %v1984 = vld [vmem:[%s260 + $0x5f8] sm:$0xf]
        %v1985 = vld [vmem:[%s260 + $0x5fc] sm:$0xf]
        %v1986 = vld [vmem:[%s260 + $0x600] sm:$0xf]
        %v1987 = vld [vmem:[%s260 + $0x604] sm:$0xf]
        %v1988 = vld [vmem:[%s260 + $0x608] sm:$0xf]
        %v1989 = vld [vmem:[%s260 + $0x60c] sm:$0xf]
        %v1990 = vld [vmem:[%s260 + $0x610] sm:$0xf]
        %v1991 = vld [vmem:[%s260 + $0x614] sm:$0xf]
        %v1992 = vld [vmem:[%s260 + $0x618] sm:$0xf]
        %v1993 = vld [vmem:[%s260 + $0x61c] sm:$0xf]
        %v1994 = vld [vmem:[%s260 + $0x620] sm:$0xf]
        %v1995 = vld [vmem:[%s260 + $0x624] sm:$0xf]
        %v1996 = vld [vmem:[%s260 + $0x628] sm:$0xf]
        %v1997 = vld [vmem:[%s260 + $0x62c] sm:$0xf]
        %v1998 = vld [vmem:[%s260 + $0x630] sm:$0xf]
        %v1999 = vld [vmem:[%s260 + $0x634] sm:$0xf]
        %v2000 = vld [vmem:[%s260 + $0x638] sm:$0xf]
        %v2001 = vld [vmem:[%s260 + $0x63c] sm:$0xf]
        %v2002 = vld [vmem:[%s260 + $0x640] sm:$0xf]
        %v2003 = vld [vmem:[%s260 + $0x644] sm:$0xf]
        %v2004 = vld [vmem:[%s260 + $0x648] sm:$0xf]
        %v2005 = vld [vmem:[%s260 + $0x64c] sm:$0xf]
        %v2006 = vld [vmem:[%s260 + $0x650] sm:$0xf]
        %v2007 = vld [vmem:[%s260 + $0x654] sm:$0xf]
        %v2008 = vld [vmem:[%s260 + $0x658] sm:$0xf]
        %v2009 = vld [vmem:[%s260 + $0x65c] sm:$0xf]
        %v2010 = vld [vmem:[%s260 + $0x660] sm:$0xf]
        %v2011 = vld [vmem:[%s260 + $0x664] sm:$0xf]
        %v2012 = vld [vmem:[%s260 + $0x668] sm:$0xf]
        %v2013 = vld [vmem:[%s260 + $0x66c] sm:$0xf]
        %v2014 = vld [vmem:[%s260 + $0x670] sm:$0xf]
        %v2015 = vld [vmem:[%s260 + $0x674] sm:$0xf]
        %v2016 = vld [vmem:[%s260 + $0x678] sm:$0xf]
        %v2017 = vld [vmem:[%s260 + $0x67c] sm:$0xf]
        %v2018 = vld [vmem:[%s260 + $0x680] sm:$0xf]
        %v2019 = vld [vmem:[%s260 + $0x684] sm:$0xf]
        %v2020 = vld [vmem:[%s260 + $0x688] sm:$0xf]
        %v2021 = vld [vmem:[%s260 + $0x68c] sm:$0xf]
        %v2022 = vld [vmem:[%s260 + $0x690] sm:$0xf]
        %v2023 = vld [vmem:[%s260 + $0x694] sm:$0xf]
        %v2024 = vld [vmem:[%s260 + $0x698] sm:$0xf]
        %v2025 = vld [vmem:[%s260 + $0x69c] sm:$0xf]
        %v2026 = vld [vmem:[%s260 + $0x6a0] sm:$0xf]
        %v2027 = vld [vmem:[%s260 + $0x6a4] sm:$0xf]
        %v2028 = vld [vmem:[%s260 + $0x6a8] sm:$0xf]
        %v2029 = vld [vmem:[%s260 + $0x6ac] sm:$0xf]
        %v2030 = vld [vmem:[%s260 + $0x6b0] sm:$0xf]
        %v2031 = vld [vmem:[%s260 + $0x6b4] sm:$0xf]
        %v2032 = vld [vmem:[%s260 + $0x6b8] sm:$0xf]
        %v2033 = vld [vmem:[%s260 + $0x6bc] sm:$0xf]
        %v2034 = vld [vmem:[%s260 + $0x6c0] sm:$0xf]
        %v2035 = vld [vmem:[%s260 + $0x6c4] sm:$0xf]
        %v2036 = vld [vmem:[%s260 + $0x6c8] sm:$0xf]
        %v2037 = vld [vmem:[%s260 + $0x6cc] sm:$0xf]
        %v2038 = vld [vmem:[%s260 + $0x6d0] sm:$0xf]
        %v2039 = vld [vmem:[%s260 + $0x6d4] sm:$0xf]
        %v2040 = vld [vmem:[%s260 + $0x6d8] sm:$0xf]
        %v2041 = vld [vmem:[%s260 + $0x6dc] sm:$0xf]
        %v2042 = vld [vmem:[%s260 + $0x6e0] sm:$0xf]
        %v2043 = vld [vmem:[%s260 + $0x6e4] sm:$0xf]
        %v2044 = vld [vmem:[%s260 + $0x6e8] sm:$0xf]
        %v2045 = vld [vmem:[%s260 + $0x6ec] sm:$0xf]
        %v2046 = vld [vmem:[%s260 + $0x6f0] sm:$0xf]
        %v2047 = vld [vmem:[%s260 + $0x6f4] sm:$0xf]
        %v2048 = vld [vmem:[%s260 + $0x6f8] sm:$0xf]
        %v2049 = vld [vmem:[%s260 + $0x6fc] sm:$0xf]
        %v2050 = vld [vmem:[%s260 + $0x700] sm:$0xf]
        %v2051 = vld [vmem:[%s260 + $0x704] sm:$0xf]
        %v2052 = vld [vmem:[%s260 + $0x708] sm:$0xf]
        %v2053 = vld [vmem:[%s260 + $0x70c] sm:$0xf]
        %v2054 = vld [vmem:[%s260 + $0x710] sm:$0xf]
        %v2055 = vld [vmem:[%s260 + $0x714] sm:$0xf]
        %v2056 = vld [vmem:[%s260 + $0x718] sm:$0xf]
        %v2057 = vld [vmem:[%s260 + $0x71c] sm:$0xf]
        %v2058 = vld [vmem:[%s260 + $0x720] sm:$0xf]
        %v2059 = vld [vmem:[%s260 + $0x724] sm:$0xf]
        %v2060 = vld [vmem:[%s260 + $0x728] sm:$0xf]
        %v2061 = vld [vmem:[%s260 + $0x72c] sm:$0xf]
        %v2062 = vld [vmem:[%s260 + $0x730] sm:$0xf]
        %v2063 = vld [vmem:[%s260 + $0x734] sm:$0xf]
        %v2064 = vld [vmem:[%s260 + $0x738] sm:$0xf]
        %v2065 = vld [vmem:[%s260 + $0x73c] sm:$0xf]
        %v2066 = vld [vmem:[%s260 + $0x740] sm:$0xf]
        %v2067 = vld [vmem:[%s260 + $0x744] sm:$0xf]
        %v2068 = vld [vmem:[%s260 + $0x748] sm:$0xf]
        %v2069 = vld [vmem:[%s260 + $0x74c] sm:$0xf]
        %v2070 = vld [vmem:[%s260 + $0x750] sm:$0xf]
        %v2071 = vld [vmem:[%s260 + $0x754] sm:$0xf]
        %v2072 = vld [vmem:[%s260 + $0x758] sm:$0xf]
        %v2073 = vld [vmem:[%s260 + $0x75c] sm:$0xf]
        %v2074 = vld [vmem:[%s260 + $0x760] sm:$0xf]
        %v2075 = vld [vmem:[%s260 + $0x764] sm:$0xf]
        %v2076 = vld [vmem:[%s260 + $0x768] sm:$0xf]
        %v2077 = vld [vmem:[%s260 + $0x76c] sm:$0xf]
        %v2078 = vld [vmem:[%s260 + $0x770] sm:$0xf]
        %v2079 = vld [vmem:[%s260 + $0x774] sm:$0xf]
        %v2080 = vld [vmem:[%s260 + $0x778] sm:$0xf]
        %v2081 = vld [vmem:[%s260 + $0x77c] sm:$0xf]
        %v2082 = vld [vmem:[%s260 + $0x780] sm:$0xf]
        %v2083 = vld [vmem:[%s260 + $0x784] sm:$0xf]
        %v2084 = vld [vmem:[%s260 + $0x788] sm:$0xf]
        %v2085 = vld [vmem:[%s260 + $0x78c] sm:$0xf]
        %v2086 = vld [vmem:[%s260 + $0x790] sm:$0xf]
        %v2087 = vld [vmem:[%s260 + $0x794] sm:$0xf]
        %v2088 = vld [vmem:[%s260 + $0x798] sm:$0xf]
        %v2089 = vld [vmem:[%s260 + $0x79c] sm:$0xf]
        %v2090 = vld [vmem:[%s260 + $0x7a0] sm:$0xf]
        %v2091 = vld [vmem:[%s260 + $0x7a4] sm:$0xf]
        %v2092 = vld [vmem:[%s260 + $0x7a8] sm:$0xf]
        %v2093 = vld [vmem:[%s260 + $0x7ac] sm:$0xf]
        %v2094 = vld [vmem:[%s260 + $0x7b0] sm:$0xf]
        %v2095 = vld [vmem:[%s260 + $0x7b4] sm:$0xf]
        %v2096 = vld [vmem:[%s260 + $0x7b8] sm:$0xf]
        %v2097 = vld [vmem:[%s260 + $0x7bc] sm:$0xf]
        %v2098 = vld [vmem:[%s260 + $0x7c0] sm:$0xf]
        %v2099 = vld [vmem:[%s260 + $0x7c4] sm:$0xf]
        %v2100 = vld [vmem:[%s260 + $0x7c8] sm:$0xf]
        %v2101 = vld [vmem:[%s260 + $0x7cc] sm:$0xf]
        %v2102 = vld [vmem:[%s260 + $0x7d0] sm:$0xf]
        %v2103 = vld [vmem:[%s260 + $0x7d4] sm:$0xf]
        %v2104 = vld [vmem:[%s260 + $0x7d8] sm:$0xf]
        %v2105 = vld [vmem:[%s260 + $0x7dc] sm:$0xf]
        %v2106 = vld [vmem:[%s260 + $0x7e0] sm:$0xf]
        %v2107 = vld [vmem:[%s260 + $0x7e4] sm:$0xf]
        %v2108 = vld [vmem:[%s260 + $0x7e8] sm:$0xf]
        %v2109 = vld [vmem:[%s260 + $0x7ec] sm:$0xf]
        %v2110 = vld [vmem:[%s260 + $0x7f0] sm:$0xf]
        %v2111 = vld [vmem:[%s260 + $0x7f4] sm:$0xf]
        %v2112 = vld [vmem:[%s260 + $0x7f8] sm:$0xf]
        %v2113 = vld [vmem:[%s260 + $0x7fc] sm:$0xf]
        %v2114 = vld [vmem:[%s260 + $0x800] sm:$0xf]
        %v2115 = vld [vmem:[%s260 + $0x804] sm:$0xf]
        %v2116 = vld [vmem:[%s260 + $0x808] sm:$0xf]
        %v2117 = vld [vmem:[%s260 + $0x80c] sm:$0xf]
        %v2118 = vld [vmem:[%s260 + $0x810] sm:$0xf]
        %v2119 = vld [vmem:[%s260 + $0x814] sm:$0xf]
        %v2120 = vld [vmem:[%s260 + $0x818] sm:$0xf]
        %v2121 = vld [vmem:[%s260 + $0x81c] sm:$0xf]
        %v2122 = vld [vmem:[%s260 + $0x820] sm:$0xf]
        %v2123 = vld [vmem:[%s260 + $0x824] sm:$0xf]
        %v2124 = vld [vmem:[%s260 + $0x828] sm:$0xf]
        %v2125 = vld [vmem:[%s260 + $0x82c] sm:$0xf]
        %v2126 = vld [vmem:[%s260 + $0x830] sm:$0xf]
        %v2127 = vld [vmem:[%s260 + $0x834] sm:$0xf]
        %v2128 = vld [vmem:[%s260 + $0x838] sm:$0xf]
        %v2129 = vld [vmem:[%s260 + $0x83c] sm:$0xf]
        %v2130 = vld [vmem:[%s260 + $0x840] sm:$0xf]
        %v2131 = vld [vmem:[%s260 + $0x844] sm:$0xf]
        %v2132 = vld [vmem:[%s260 + $0x848] sm:$0xf]
        %v2133 = vld [vmem:[%s260 + $0x84c] sm:$0xf]
        %v2134 = vld [vmem:[%s260 + $0x850] sm:$0xf]
        %v2135 = vld [vmem:[%s260 + $0x854] sm:$0xf]
        %v2136 = vld [vmem:[%s260 + $0x858] sm:$0xf]
        %v2137 = vld [vmem:[%s260 + $0x85c] sm:$0xf]
        %v2138 = vld [vmem:[%s260 + $0x860] sm:$0xf]
        %v2139 = vld [vmem:[%s260 + $0x864] sm:$0xf]
        %v2140 = vld [vmem:[%s260 + $0x868] sm:$0xf]
        %v2141 = vld [vmem:[%s260 + $0x86c] sm:$0xf]
        %v2142 = vld [vmem:[%s260 + $0x870] sm:$0xf]
        %v2143 = vld [vmem:[%s260 + $0x874] sm:$0xf]
        %v2144 = vld [vmem:[%s260 + $0x878] sm:$0xf]
        %v2145 = vld [vmem:[%s260 + $0x87c] sm:$0xf]
        %v2146 = vld [vmem:[%s260 + $0x880] sm:$0xf]
        %v2147 = vld [vmem:[%s260 + $0x884] sm:$0xf]
        %v2148 = vld [vmem:[%s260 + $0x888] sm:$0xf]
        %v2149 = vld [vmem:[%s260 + $0x88c] sm:$0xf]
        %v2150 = vld [vmem:[%s260 + $0x890] sm:$0xf]
        %v2151 = vld [vmem:[%s260 + $0x894] sm:$0xf]
        %v2152 = vld [vmem:[%s260 + $0x898] sm:$0xf]
        %v2153 = vld [vmem:[%s260 + $0x89c] sm:$0xf]
        %v2154 = vld [vmem:[%s260 + $0x8a0] sm:$0xf]
        %v2155 = vld [vmem:[%s260 + $0x8a4] sm:$0xf]
        %v2156 = vld [vmem:[%s260 + $0x8a8] sm:$0xf]
        %v2157 = vld [vmem:[%s260 + $0x8ac] sm:$0xf]
        %v2158 = vld [vmem:[%s260 + $0x8b0] sm:$0xf]
        %v2159 = vld [vmem:[%s260 + $0x8b4] sm:$0xf]
        %v2160 = vld [vmem:[%s260 + $0x8b8] sm:$0xf]
        %v2161 = vld [vmem:[%s260 + $0x8bc] sm:$0xf]
        %v2162 = vld [vmem:[%s260 + $0x8c0] sm:$0xf]
        %v2163 = vld [vmem:[%s260 + $0x8c4] sm:$0xf]
        %v2164 = vld [vmem:[%s260 + $0x8c8] sm:$0xf]
        %v2165 = vld [vmem:[%s260 + $0x8cc] sm:$0xf]
        %v2166 = vld [vmem:[%s260 + $0x8d0] sm:$0xf]
        %v2167 = vld [vmem:[%s260 + $0x8d4] sm:$0xf]
        %v2168 = vld [vmem:[%s260 + $0x8d8] sm:$0xf]
        %v2169 = vld [vmem:[%s260 + $0x8dc] sm:$0xf]
        %v2170 = vld [vmem:[%s260 + $0x8e0] sm:$0xf]
        %v2171 = vld [vmem:[%s260 + $0x8e4] sm:$0xf]
        %v2172 = vld [vmem:[%s260 + $0x8e8] sm:$0xf]
        %v2173 = vld [vmem:[%s260 + $0x8ec] sm:$0xf]
        %v2174 = vld [vmem:[%s260 + $0x8f0] sm:$0xf]
        %v2175 = vld [vmem:[%s260 + $0x8f4] sm:$0xf]
        %v2176 = vld [vmem:[%s260 + $0x8f8] sm:$0xf]
        %v2177 = vld [vmem:[%s260 + $0x8fc] sm:$0xf]
        %v2178 = vld [vmem:[%s260 + $0x900] sm:$0xf]
        %v2179 = vld [vmem:[%s260 + $0x904] sm:$0xf]
        %v2180 = vld [vmem:[%s260 + $0x908] sm:$0xf]
        %v2181 = vld [vmem:[%s260 + $0x90c] sm:$0xf]
        %v2182 = vld [vmem:[%s260 + $0x910] sm:$0xf]
        %v2183 = vld [vmem:[%s260 + $0x914] sm:$0xf]
        %v2184 = vld [vmem:[%s260 + $0x918] sm:$0xf]
        %v2185 = vld [vmem:[%s260 + $0x91c] sm:$0xf]
        %v2186 = vld [vmem:[%s260 + $0x920] sm:$0xf]
        %v2187 = vld [vmem:[%s260 + $0x924] sm:$0xf]
        %v2188 = vld [vmem:[%s260 + $0x928] sm:$0xf]
        %v2189 = vld [vmem:[%s260 + $0x92c] sm:$0xf]
        %v2190 = vld [vmem:[%s260 + $0x930] sm:$0xf]
        %v2191 = vld [vmem:[%s260 + $0x934] sm:$0xf]
        %v2192 = vld [vmem:[%s260 + $0x938] sm:$0xf]
        %v2193 = vld [vmem:[%s260 + $0x93c] sm:$0xf]
        %v2194 = vld [vmem:[%s260 + $0x940] sm:$0xf]
        %v2195 = vld [vmem:[%s260 + $0x944] sm:$0xf]
        %v2196 = vld [vmem:[%s260 + $0x948] sm:$0xf]
        %v2197 = vld [vmem:[%s260 + $0x94c] sm:$0xf]
        %v2198 = vld [vmem:[%s260 + $0x950] sm:$0xf]
        %v2199 = vld [vmem:[%s260 + $0x954] sm:$0xf]
        %v2200 = vld [vmem:[%s260 + $0x958] sm:$0xf]
        %v2201 = vld [vmem:[%s260 + $0x95c] sm:$0xf]
        %v2202 = vld [vmem:[%s260 + $0x960] sm:$0xf]
        %v2203 = vld [vmem:[%s260 + $0x964] sm:$0xf]
        %v2204 = vld [vmem:[%s260 + $0x968] sm:$0xf]
        %v2205 = vld [vmem:[%s260 + $0x96c] sm:$0xf]
        %v2206 = vld [vmem:[%s260 + $0x970] sm:$0xf]
        %v2207 = vld [vmem:[%s260 + $0x974] sm:$0xf]
        %v2208 = vld [vmem:[%s260 + $0x978] sm:$0xf]
        %v2209 = vld [vmem:[%s260 + $0x97c] sm:$0xf]
        %v2210 = vld [vmem:[%s260 + $0x980] sm:$0xf]
        %v2211 = vld [vmem:[%s260 + $0x984] sm:$0xf]
        %v2212 = vld [vmem:[%s260 + $0x988] sm:$0xf]
        %v2213 = vld [vmem:[%s260 + $0x98c] sm:$0xf]
        %v2214 = vld [vmem:[%s260 + $0x990] sm:$0xf]
        %v2215 = vld [vmem:[%s260 + $0x994] sm:$0xf]
        %v2216 = vld [vmem:[%s260 + $0x998] sm:$0xf]
        %v2217 = vld [vmem:[%s260 + $0x99c] sm:$0xf]
        %v2218 = vld [vmem:[%s260 + $0x9a0] sm:$0xf]
        %v2219 = vld [vmem:[%s260 + $0x9a4] sm:$0xf]
        %v2220 = vld [vmem:[%s260 + $0x9a8] sm:$0xf]
        %v2221 = vld [vmem:[%s260 + $0x9ac] sm:$0xf]
        %v2222 = vld [vmem:[%s260 + $0x9b0] sm:$0xf]
        %v2223 = vld [vmem:[%s260 + $0x9b4] sm:$0xf]
        %v2224 = vld [vmem:[%s260 + $0x9b8] sm:$0xf]
        %v2225 = vld [vmem:[%s260 + $0x9bc] sm:$0xf]
        %v2226 = vld [vmem:[%s260 + $0x9c0] sm:$0xf]
        %v2227 = vld [vmem:[%s260 + $0x9c4] sm:$0xf]
        %v2228 = vld [vmem:[%s260 + $0x9c8] sm:$0xf]
        %v2229 = vld [vmem:[%s260 + $0x9cc] sm:$0xf]
        %v2230 = vld [vmem:[%s260 + $0x9d0] sm:$0xf]
        %v2231 = vld [vmem:[%s260 + $0x9d4] sm:$0xf]
        %v2232 = vld [vmem:[%s260 + $0x9d8] sm:$0xf]
        %v2233 = vld [vmem:[%s260 + $0x9dc] sm:$0xf]
        %v2234 = vld [vmem:[%s260 + $0x9e0] sm:$0xf]
        %v2235 = vld [vmem:[%s260 + $0x9e4] sm:$0xf]
        %v2236 = vld [vmem:[%s260 + $0x9e8] sm:$0xf]
        %v2237 = vld [vmem:[%s260 + $0x9ec] sm:$0xf]
        %v2238 = vld [vmem:[%s260 + $0x9f0] sm:$0xf]
        %v2239 = vld [vmem:[%s260 + $0x9f4] sm:$0xf]
        %v2240 = vld [vmem:[%s260 + $0x9f8] sm:$0xf]
        %v2241 = vld [vmem:[%s260 + $0x9fc] sm:$0xf]
        %v2242 = vld [vmem:[%s260 + $0xa00] sm:$0xf]
        %v2243 = vld [vmem:[%s260 + $0xa04] sm:$0xf]
        %v2244 = vld [vmem:[%s260 + $0xa08] sm:$0xf]
        %v2245 = vld [vmem:[%s260 + $0xa0c] sm:$0xf]
        %v2246 = vld [vmem:[%s260 + $0xa10] sm:$0xf]
        %v2247 = vld [vmem:[%s260 + $0xa14] sm:$0xf]
        %v2248 = vld [vmem:[%s260 + $0xa18] sm:$0xf]
        %v2249 = vld [vmem:[%s260 + $0xa1c] sm:$0xf]
        %v2250 = vld [vmem:[%s260 + $0xa20] sm:$0xf]
        %v2251 = vld [vmem:[%s260 + $0xa24] sm:$0xf]
        %v2252 = vld [vmem:[%s260 + $0xa28] sm:$0xf]
        %v2253 = vld [vmem:[%s260 + $0xa2c] sm:$0xf]
        %v2254 = vld [vmem:[%s260 + $0xa30] sm:$0xf]
        %v2255 = vld [vmem:[%s260 + $0xa34] sm:$0xf]
        %v2256 = vld [vmem:[%s260 + $0xa38] sm:$0xf]
        %v2257 = vld [vmem:[%s260 + $0xa3c] sm:$0xf]
        %v2258 = vld [vmem:[%s260 + $0xa40] sm:$0xf]
        %v2259 = vld [vmem:[%s260 + $0xa44] sm:$0xf]
        %v2260 = vld [vmem:[%s260 + $0xa48] sm:$0xf]
        %v2261 = vld [vmem:[%s260 + $0xa4c] sm:$0xf]
        %v2262 = vld [vmem:[%s260 + $0xa50] sm:$0xf]
        %v2263 = vld [vmem:[%s260 + $0xa54] sm:$0xf]
        %v2264 = vld [vmem:[%s260 + $0xa58] sm:$0xf]
        %v2265 = vld [vmem:[%s260 + $0xa5c] sm:$0xf]
        %v2266 = vld [vmem:[%s260 + $0xa60] sm:$0xf]
        %v2267 = vld [vmem:[%s260 + $0xa64] sm:$0xf]
        %v2268 = vld [vmem:[%s260 + $0xa68] sm:$0xf]
        %v2269 = vld [vmem:[%s260 + $0xa6c] sm:$0xf]
        %v2270 = vld [vmem:[%s260 + $0xa70] sm:$0xf]
        %v2271 = vld [vmem:[%s260 + $0xa74] sm:$0xf]
        %v2272 = vld [vmem:[%s260 + $0xa78] sm:$0xf]
        %v2273 = vld [vmem:[%s260 + $0xa7c] sm:$0xf]
        %v2274 = vld [vmem:[%s260 + $0xa80] sm:$0xf]
        %v2275 = vld [vmem:[%s260 + $0xa84] sm:$0xf]
        %v2276 = vld [vmem:[%s260 + $0xa88] sm:$0xf]
        %v2277 = vld [vmem:[%s260 + $0xa8c] sm:$0xf]
        %v2278 = vld [vmem:[%s260 + $0xa90] sm:$0xf]
        %v2279 = vld [vmem:[%s260 + $0xa94] sm:$0xf]
        %v2280 = vld [vmem:[%s260 + $0xa98] sm:$0xf]
        %v2281 = vld [vmem:[%s260 + $0xa9c] sm:$0xf]
        %v2282 = vld [vmem:[%s260 + $0xaa0] sm:$0xf]
        %v2283 = vld [vmem:[%s260 + $0xaa4] sm:$0xf]
        %v2284 = vld [vmem:[%s260 + $0xaa8] sm:$0xf]
        %v2285 = vld [vmem:[%s260 + $0xaac] sm:$0xf]
        %v2286 = vld [vmem:[%s260 + $0xab0] sm:$0xf]
        %v2287 = vld [vmem:[%s260 + $0xab4] sm:$0xf]
        %v2288 = vld [vmem:[%s260 + $0xab8] sm:$0xf]
        %v2289 = vld [vmem:[%s260 + $0xabc] sm:$0xf]
        %v2290 = vld [vmem:[%s260 + $0xac0] sm:$0xf]
        %v2291 = vld [vmem:[%s260 + $0xac4] sm:$0xf]
        %v2292 = vld [vmem:[%s260 + $0xac8] sm:$0xf]
        %v2293 = vld [vmem:[%s260 + $0xacc] sm:$0xf]
        %v2294 = vld [vmem:[%s260 + $0xad0] sm:$0xf]
        %v2295 = vld [vmem:[%s260 + $0xad4] sm:$0xf]
        %v2296 = vld [vmem:[%s260 + $0xad8] sm:$0xf]
        %v2297 = vld [vmem:[%s260 + $0xadc] sm:$0xf]
        %v2298 = vld [vmem:[%s260 + $0xae0] sm:$0xf]
        %v2299 = vld [vmem:[%s260 + $0xae4] sm:$0xf]
        %v2300 = vld [vmem:[%s260 + $0xae8] sm:$0xf]
        %v2301 = vld [vmem:[%s260 + $0xaec] sm:$0xf]
        %v2302 = vld [vmem:[%s260 + $0xaf0] sm:$0xf]
        %v2303 = vld [vmem:[%s260 + $0xaf4] sm:$0xf]
        %v2304 = vld [vmem:[%s260 + $0xaf8] sm:$0xf]
        %v2305 = vld [vmem:[%s260 + $0xafc] sm:$0xf]
        %v2306 = vld [vmem:[%s260 + $0xb00] sm:$0xf]
        %v2307 = vld [vmem:[%s260 + $0xb04] sm:$0xf]
        %v2308 = vld [vmem:[%s260 + $0xb08] sm:$0xf]
        %v2309 = vld [vmem:[%s260 + $0xb0c] sm:$0xf]
        %v2310 = vld [vmem:[%s260 + $0xb10] sm:$0xf]
        %v2311 = vld [vmem:[%s260 + $0xb14] sm:$0xf]
        %v2312 = vld [vmem:[%s260 + $0xb18] sm:$0xf]
        %v2313 = vld [vmem:[%s260 + $0xb1c] sm:$0xf]
        %v2314 = vld [vmem:[%s260 + $0xb20] sm:$0xf]
        %v2315 = vld [vmem:[%s260 + $0xb24] sm:$0xf]
        %v2316 = vld [vmem:[%s260 + $0xb28] sm:$0xf]
        %v2317 = vld [vmem:[%s260 + $0xb2c] sm:$0xf]
        %v2318 = vld [vmem:[%s260 + $0xb30] sm:$0xf]
        %v2319 = vld [vmem:[%s260 + $0xb34] sm:$0xf]
        %v2320 = vld [vmem:[%s260 + $0xb38] sm:$0xf]
        %v2321 = vld [vmem:[%s260 + $0xb3c] sm:$0xf]
        %v2322 = vld [vmem:[%s260 + $0xb40] sm:$0xf]
        %v2323 = vld [vmem:[%s260 + $0xb44] sm:$0xf]
        %v2324 = vld [vmem:[%s260 + $0xb48] sm:$0xf]
        %v2325 = vld [vmem:[%s260 + $0xb4c] sm:$0xf]
        %v2326 = vld [vmem:[%s260 + $0xb50] sm:$0xf]
        %v2327 = vld [vmem:[%s260 + $0xb54] sm:$0xf]
        %v2328 = vld [vmem:[%s260 + $0xb58] sm:$0xf]
        %v2329 = vld [vmem:[%s260 + $0xb5c] sm:$0xf]
        %v2330 = vld [vmem:[%s260 + $0xb60] sm:$0xf]
        %v2331 = vld [vmem:[%s260 + $0xb64] sm:$0xf]
        %v2332 = vld [vmem:[%s260 + $0xb68] sm:$0xf]
        %v2333 = vld [vmem:[%s260 + $0xb6c] sm:$0xf]
        %v2334 = vld [vmem:[%s260 + $0xb70] sm:$0xf]
        %v2335 = vld [vmem:[%s260 + $0xb74] sm:$0xf]
        %v2336 = vld [vmem:[%s260 + $0xb78] sm:$0xf]
        %v2337 = vld [vmem:[%s260 + $0xb7c] sm:$0xf]
        %v2338 = vld [vmem:[%s260 + $0xb80] sm:$0xf]
        %v2339 = vld [vmem:[%s260 + $0xb84] sm:$0xf]
        %v2340 = vld [vmem:[%s260 + $0xb88] sm:$0xf]
        %v2341 = vld [vmem:[%s260 + $0xb8c] sm:$0xf]
        %v2342 = vld [vmem:[%s260 + $0xb90] sm:$0xf]
        %v2343 = vld [vmem:[%s260 + $0xb94] sm:$0xf]
        %v2344 = vld [vmem:[%s260 + $0xb98] sm:$0xf]
        %v2345 = vld [vmem:[%s260 + $0xb9c] sm:$0xf]
        %v2346 = vld [vmem:[%s260 + $0xba0] sm:$0xf]
        %v2347 = vld [vmem:[%s260 + $0xba4] sm:$0xf]
        %v2348 = vld [vmem:[%s260 + $0xba8] sm:$0xf]
        %v2349 = vld [vmem:[%s260 + $0xbac] sm:$0xf]
        %v2350 = vld [vmem:[%s260 + $0xbb0] sm:$0xf]
        %v2351 = vld [vmem:[%s260 + $0xbb4] sm:$0xf]
        %v2352 = vld [vmem:[%s260 + $0xbb8] sm:$0xf]
        %v2353 = vld [vmem:[%s260 + $0xbbc] sm:$0xf]
        %v2354 = vld [vmem:[%s260 + $0xbc0] sm:$0xf]
        %v2355 = vld [vmem:[%s260 + $0xbc4] sm:$0xf]
        %v2356 = vld [vmem:[%s260 + $0xbc8] sm:$0xf]
        %v2357 = vld [vmem:[%s260 + $0xbcc] sm:$0xf]
        %v2358 = vld [vmem:[%s260 + $0xbd0] sm:$0xf]
        %v2359 = vld [vmem:[%s260 + $0xbd4] sm:$0xf]
        %v2360 = vld [vmem:[%s260 + $0xbd8] sm:$0xf]
        %v2361 = vld [vmem:[%s260 + $0xbdc] sm:$0xf]
        %v2362 = vld [vmem:[%s260 + $0xbe0] sm:$0xf]
        %v2363 = vld [vmem:[%s260 + $0xbe4] sm:$0xf]
        %v2364 = vld [vmem:[%s260 + $0xbe8] sm:$0xf]
        %v2365 = vld [vmem:[%s260 + $0xbec] sm:$0xf]
        %v2366 = vld [vmem:[%s260 + $0xbf0] sm:$0xf]
        %v2367 = vld [vmem:[%s260 + $0xbf4] sm:$0xf]
        %v2368 = vld [vmem:[%s260 + $0xbf8] sm:$0xf]
        %v2369 = vld [vmem:[%s260 + $0xbfc] sm:$0xf]
        %v2370 = vld [vmem:[%s260 + $0xc00] sm:$0xf]
        %v2371 = vld [vmem:[%s260 + $0xc04] sm:$0xf]
        %v2372 = vld [vmem:[%s260 + $0xc08] sm:$0xf]
        %v2373 = vld [vmem:[%s260 + $0xc0c] sm:$0xf]
        %v2374 = vld [vmem:[%s260 + $0xc10] sm:$0xf]
        %v2375 = vld [vmem:[%s260 + $0xc14] sm:$0xf]
        %v2376 = vld [vmem:[%s260 + $0xc18] sm:$0xf]
        %v2377 = vld [vmem:[%s260 + $0xc1c] sm:$0xf]
        %v2378 = vld [vmem:[%s260 + $0xc20] sm:$0xf]
        %v2379 = vld [vmem:[%s260 + $0xc24] sm:$0xf]
        %v2380 = vld [vmem:[%s260 + $0xc28] sm:$0xf]
        %v2381 = vld [vmem:[%s260 + $0xc2c] sm:$0xf]
        %v2382 = vld [vmem:[%s260 + $0xc30] sm:$0xf]
        %v2383 = vld [vmem:[%s260 + $0xc34] sm:$0xf]
        %v2384 = vld [vmem:[%s260 + $0xc38] sm:$0xf]
        %v2385 = vld [vmem:[%s260 + $0xc3c] sm:$0xf]
        %v2386 = vld [vmem:[%s260 + $0xc40] sm:$0xf]
        %v2387 = vld [vmem:[%s260 + $0xc44] sm:$0xf]
        %v2388 = vld [vmem:[%s260 + $0xc48] sm:$0xf]
        %v2389 = vld [vmem:[%s260 + $0xc4c] sm:$0xf]
        %v2390 = vld [vmem:[%s260 + $0xc50] sm:$0xf]
        %v2391 = vld [vmem:[%s260 + $0xc54] sm:$0xf]
        %v2392 = vld [vmem:[%s260 + $0xc58] sm:$0xf]
        %v2393 = vld [vmem:[%s260 + $0xc5c] sm:$0xf]
        %v2394 = vld [vmem:[%s260 + $0xc60] sm:$0xf]
        %v2395 = vld [vmem:[%s260 + $0xc64] sm:$0xf]
        %v2396 = vld [vmem:[%s260 + $0xc68] sm:$0xf]
        %v2397 = vld [vmem:[%s260 + $0xc6c] sm:$0xf]
        %v2398 = vld [vmem:[%s260 + $0xc70] sm:$0xf]
        %v2399 = vld [vmem:[%s260 + $0xc74] sm:$0xf]
        %v2400 = vld [vmem:[%s260 + $0xc78] sm:$0xf]
        %v2401 = vld [vmem:[%s260 + $0xc7c] sm:$0xf]
        %v2402 = vld [vmem:[%s260 + $0xc80] sm:$0xf]
        %v2403 = vld [vmem:[%s260 + $0xc84] sm:$0xf]
        %v2404 = vld [vmem:[%s260 + $0xc88] sm:$0xf]
        %v2405 = vld [vmem:[%s260 + $0xc8c] sm:$0xf]
        %v2406 = vld [vmem:[%s260 + $0xc90] sm:$0xf]
        %v2407 = vld [vmem:[%s260 + $0xc94] sm:$0xf]
        %v2408 = vld [vmem:[%s260 + $0xc98] sm:$0xf]
        %v2409 = vld [vmem:[%s260 + $0xc9c] sm:$0xf]
        %v2410 = vld [vmem:[%s260 + $0xca0] sm:$0xf]
        %v2411 = vld [vmem:[%s260 + $0xca4] sm:$0xf]
        %v2412 = vld [vmem:[%s260 + $0xca8] sm:$0xf]
        %v2413 = vld [vmem:[%s260 + $0xcac] sm:$0xf]
        %v2414 = vld [vmem:[%s260 + $0xcb0] sm:$0xf]
        %v2415 = vld [vmem:[%s260 + $0xcb4] sm:$0xf]
        %v2416 = vld [vmem:[%s260 + $0xcb8] sm:$0xf]
        %v2417 = vld [vmem:[%s260 + $0xcbc] sm:$0xf]
        %v2418 = vld [vmem:[%s260 + $0xcc0] sm:$0xf]
        %v2419 = vld [vmem:[%s260 + $0xcc4] sm:$0xf]
        %v2420 = vld [vmem:[%s260 + $0xcc8] sm:$0xf]
        %v2421 = vld [vmem:[%s260 + $0xccc] sm:$0xf]
        %v2422 = vld [vmem:[%s260 + $0xcd0] sm:$0xf]
        %v2423 = vld [vmem:[%s260 + $0xcd4] sm:$0xf]
        %v2424 = vld [vmem:[%s260 + $0xcd8] sm:$0xf]
        %v2425 = vld [vmem:[%s260 + $0xcdc] sm:$0xf]
        %v2426 = vld [vmem:[%s260 + $0xce0] sm:$0xf]
        %v2427 = vld [vmem:[%s260 + $0xce4] sm:$0xf]
        %v2428 = vld [vmem:[%s260 + $0xce8] sm:$0xf]
        %v2429 = vld [vmem:[%s260 + $0xcec] sm:$0xf]
        %v2430 = vld [vmem:[%s260 + $0xcf0] sm:$0xf]
        %v2431 = vld [vmem:[%s260 + $0xcf4] sm:$0xf]
        %v2432 = vld [vmem:[%s260 + $0xcf8] sm:$0xf]
        %v2433 = vld [vmem:[%s260 + $0xcfc] sm:$0xf]
        %v2434 = vld [vmem:[%s260 + $0xd00] sm:$0xf]
        %v2435 = vld [vmem:[%s260 + $0xd04] sm:$0xf]
        %v2436 = vld [vmem:[%s260 + $0xd08] sm:$0xf]
        %v2437 = vld [vmem:[%s260 + $0xd0c] sm:$0xf]
        %v2438 = vld [vmem:[%s260 + $0xd10] sm:$0xf]
        %v2439 = vld [vmem:[%s260 + $0xd14] sm:$0xf]
        %v2440 = vld [vmem:[%s260 + $0xd18] sm:$0xf]
        %v2441 = vld [vmem:[%s260 + $0xd1c] sm:$0xf]
        %v2442 = vld [vmem:[%s260 + $0xd20] sm:$0xf]
        %v2443 = vld [vmem:[%s260 + $0xd24] sm:$0xf]
        %v2444 = vld [vmem:[%s260 + $0xd28] sm:$0xf]
        %v2445 = vld [vmem:[%s260 + $0xd2c] sm:$0xf]
        %v2446 = vld [vmem:[%s260 + $0xd30] sm:$0xf]
        %v2447 = vld [vmem:[%s260 + $0xd34] sm:$0xf]
        %v2448 = vld [vmem:[%s260 + $0xd38] sm:$0xf]
        %v2449 = vld [vmem:[%s260 + $0xd3c] sm:$0xf]
        %v2450 = vld [vmem:[%s260 + $0xd40] sm:$0xf]
        %v2451 = vld [vmem:[%s260 + $0xd44] sm:$0xf]
        %v2452 = vld [vmem:[%s260 + $0xd48] sm:$0xf]
        %v2453 = vld [vmem:[%s260 + $0xd4c] sm:$0xf]
        %v2454 = vld [vmem:[%s260 + $0xd50] sm:$0xf]
        %v2455 = vld [vmem:[%s260 + $0xd54] sm:$0xf]
        %v2456 = vld [vmem:[%s260 + $0xd58] sm:$0xf]
        %v2457 = vld [vmem:[%s260 + $0xd5c] sm:$0xf]
        %v2458 = vld [vmem:[%s260 + $0xd60] sm:$0xf]
        %v2459 = vld [vmem:[%s260 + $0xd64] sm:$0xf]
        %v2460 = vld [vmem:[%s260 + $0xd68] sm:$0xf]
        %v2461 = vld [vmem:[%s260 + $0xd6c] sm:$0xf]
        %v2462 = vld [vmem:[%s260 + $0xd70] sm:$0xf]
        %v2463 = vld [vmem:[%s260 + $0xd74] sm:$0xf]
        %v2464 = vld [vmem:[%s260 + $0xd78] sm:$0xf]
        %v2465 = vld [vmem:[%s260 + $0xd7c] sm:$0xf]
        %v2466 = vld [vmem:[%s260 + $0xd80] sm:$0xf]
        %v2467 = vld [vmem:[%s260 + $0xd84] sm:$0xf]
        %v2468 = vld [vmem:[%s260 + $0xd88] sm:$0xf]
        %v2469 = vld [vmem:[%s260 + $0xd8c] sm:$0xf]
        %v2470 = vld [vmem:[%s260 + $0xd90] sm:$0xf]
        %v2471 = vld [vmem:[%s260 + $0xd94] sm:$0xf]
        %v2472 = vld [vmem:[%s260 + $0xd98] sm:$0xf]
        %v2473 = vld [vmem:[%s260 + $0xd9c] sm:$0xf]
        %v2474 = vld [vmem:[%s260 + $0xda0] sm:$0xf]
        %v2475 = vld [vmem:[%s260 + $0xda4] sm:$0xf]
        %v2476 = vld [vmem:[%s260 + $0xda8] sm:$0xf]
        %v2477 = vld [vmem:[%s260 + $0xdac] sm:$0xf]
        %v2478 = vld [vmem:[%s260 + $0xdb0] sm:$0xf]
        %v2479 = vld [vmem:[%s260 + $0xdb4] sm:$0xf]
        %v2480 = vld [vmem:[%s260 + $0xdb8] sm:$0xf]
        %v2481 = vld [vmem:[%s260 + $0xdbc] sm:$0xf]
        %v2482 = vld [vmem:[%s260 + $0xdc0] sm:$0xf]
        %v2483 = vld [vmem:[%s260 + $0xdc4] sm:$0xf]
        %v2484 = vld [vmem:[%s260 + $0xdc8] sm:$0xf]
        %v2485 = vld [vmem:[%s260 + $0xdcc] sm:$0xf]
        %v2486 = vld [vmem:[%s260 + $0xdd0] sm:$0xf]
        %v2487 = vld [vmem:[%s260 + $0xdd4] sm:$0xf]
        %v2488 = vld [vmem:[%s260 + $0xdd8] sm:$0xf]
        %v2489 = vld [vmem:[%s260 + $0xddc] sm:$0xf]
        %v2490 = vld [vmem:[%s260 + $0xde0] sm:$0xf]
        %v2491 = vld [vmem:[%s260 + $0xde4] sm:$0xf]
        %v2492 = vld [vmem:[%s260 + $0xde8] sm:$0xf]
        %v2493 = vld [vmem:[%s260 + $0xdec] sm:$0xf]
        %v2494 = vld [vmem:[%s260 + $0xdf0] sm:$0xf]
        %v2495 = vld [vmem:[%s260 + $0xdf4] sm:$0xf]
        %v2496 = vld [vmem:[%s260 + $0xdf8] sm:$0xf]
        %v2497 = vld [vmem:[%s260 + $0xdfc] sm:$0xf]
        %v2498 = vld [vmem:[%s260 + $0xe00] sm:$0xf]
        %v2499 = vld [vmem:[%s260 + $0xe04] sm:$0xf]
        %v2500 = vld [vmem:[%s260 + $0xe08] sm:$0xf]
        %v2501 = vld [vmem:[%s260 + $0xe0c] sm:$0xf]
        %v2502 = vld [vmem:[%s260 + $0xe10] sm:$0xf]
        %v2503 = vld [vmem:[%s260 + $0xe14] sm:$0xf]
        %v2504 = vld [vmem:[%s260 + $0xe18] sm:$0xf]
        %v2505 = vld [vmem:[%s260 + $0xe1c] sm:$0xf]
        %v2506 = vld [vmem:[%s260 + $0xe20] sm:$0xf]
        %v2507 = vld [vmem:[%s260 + $0xe24] sm:$0xf]
        %v2508 = vld [vmem:[%s260 + $0xe28] sm:$0xf]
        %v2509 = vld [vmem:[%s260 + $0xe2c] sm:$0xf]
        %v2510 = vld [vmem:[%s260 + $0xe30] sm:$0xf]
        %v2511 = vld [vmem:[%s260 + $0xe34] sm:$0xf]
        %v2512 = vld [vmem:[%s260 + $0xe38] sm:$0xf]
        %v2513 = vld [vmem:[%s260 + $0xe3c] sm:$0xf]
        %v2514 = vld [vmem:[%s260 + $0xe40] sm:$0xf]
        %v2515 = vld [vmem:[%s260 + $0xe44] sm:$0xf]
        %v2516 = vld [vmem:[%s260 + $0xe48] sm:$0xf]
        %v2517 = vld [vmem:[%s260 + $0xe4c] sm:$0xf]
        %v2518 = vld [vmem:[%s260 + $0xe50] sm:$0xf]
        %v2519 = vld [vmem:[%s260 + $0xe54] sm:$0xf]
        %v2520 = vld [vmem:[%s260 + $0xe58] sm:$0xf]
        %v2521 = vld [vmem:[%s260 + $0xe5c] sm:$0xf]
        %v2522 = vld [vmem:[%s260 + $0xe60] sm:$0xf]
        %v2523 = vld [vmem:[%s260 + $0xe64] sm:$0xf]
        %v2524 = vld [vmem:[%s260 + $0xe68] sm:$0xf]
        %v2525 = vld [vmem:[%s260 + $0xe6c] sm:$0xf]
        %v2526 = vld [vmem:[%s260 + $0xe70] sm:$0xf]
        %v2527 = vld [vmem:[%s260 + $0xe74] sm:$0xf]
        %v2528 = vld [vmem:[%s260 + $0xe78] sm:$0xf]
        %v2529 = vld [vmem:[%s260 + $0xe7c] sm:$0xf]
        %v2530 = vld [vmem:[%s260 + $0xe80] sm:$0xf]
        %v2531 = vld [vmem:[%s260 + $0xe84] sm:$0xf]
        %v2532 = vld [vmem:[%s260 + $0xe88] sm:$0xf]
        %v2533 = vld [vmem:[%s260 + $0xe8c] sm:$0xf]
        %v2534 = vld [vmem:[%s260 + $0xe90] sm:$0xf]
        %v2535 = vld [vmem:[%s260 + $0xe94] sm:$0xf]
        %v2536 = vld [vmem:[%s260 + $0xe98] sm:$0xf]
        %v2537 = vld [vmem:[%s260 + $0xe9c] sm:$0xf]
        %v2538 = vld [vmem:[%s260 + $0xea0] sm:$0xf]
        %v2539 = vld [vmem:[%s260 + $0xea4] sm:$0xf]
        %v2540 = vld [vmem:[%s260 + $0xea8] sm:$0xf]
        %v2541 = vld [vmem:[%s260 + $0xeac] sm:$0xf]
        %v2542 = vld [vmem:[%s260 + $0xeb0] sm:$0xf]
        %v2543 = vld [vmem:[%s260 + $0xeb4] sm:$0xf]
        %v2544 = vld [vmem:[%s260 + $0xeb8] sm:$0xf]
        %v2545 = vld [vmem:[%s260 + $0xebc] sm:$0xf]
        %v2546 = vld [vmem:[%s260 + $0xec0] sm:$0xf]
        %v2547 = vld [vmem:[%s260 + $0xec4] sm:$0xf]
        %v2548 = vld [vmem:[%s260 + $0xec8] sm:$0xf]
        %v2549 = vld [vmem:[%s260 + $0xecc] sm:$0xf]
        %v2550 = vld [vmem:[%s260 + $0xed0] sm:$0xf]
        %v2551 = vld [vmem:[%s260 + $0xed4] sm:$0xf]
        %v2552 = vld [vmem:[%s260 + $0xed8] sm:$0xf]
        %v2553 = vld [vmem:[%s260 + $0xedc] sm:$0xf]
        %v2554 = vld [vmem:[%s260 + $0xee0] sm:$0xf]
        %v2555 = vld [vmem:[%s260 + $0xee4] sm:$0xf]
        %v2556 = vld [vmem:[%s260 + $0xee8] sm:$0xf]
        %v2557 = vld [vmem:[%s260 + $0xeec] sm:$0xf]
        %v2558 = vld [vmem:[%s260 + $0xef0] sm:$0xf]
        %v2559 = vld [vmem:[%s260 + $0xef4] sm:$0xf]
        %v2560 = vld [vmem:[%s260 + $0xef8] sm:$0xf]
        %v2561 = vld [vmem:[%s260 + $0xefc] sm:$0xf]
        %v2562 = vld [vmem:[%s260 + $0xf00] sm:$0xf]
        %v2563 = vld [vmem:[%s260 + $0xf04] sm:$0xf]
        %v2564 = vld [vmem:[%s260 + $0xf08] sm:$0xf]
        %v2565 = vld [vmem:[%s260 + $0xf0c] sm:$0xf]
        %v2566 = vld [vmem:[%s260 + $0xf10] sm:$0xf]
        %v2567 = vld [vmem:[%s260 + $0xf14] sm:$0xf]
        %v2568 = vld [vmem:[%s260 + $0xf18] sm:$0xf]
        %v2569 = vld [vmem:[%s260 + $0xf1c] sm:$0xf]
        %v2570 = vld [vmem:[%s260 + $0xf20] sm:$0xf]
        %v2571 = vld [vmem:[%s260 + $0xf24] sm:$0xf]
        %v2572 = vld [vmem:[%s260 + $0xf28] sm:$0xf]
        %v2573 = vld [vmem:[%s260 + $0xf2c] sm:$0xf]
        %v2574 = vld [vmem:[%s260 + $0xf30] sm:$0xf]
        %v2575 = vld [vmem:[%s260 + $0xf34] sm:$0xf]
        %v2576 = vld [vmem:[%s260 + $0xf38] sm:$0xf]
        %v2577 = vld [vmem:[%s260 + $0xf3c] sm:$0xf]
        %v2578 = vld [vmem:[%s260 + $0xf40] sm:$0xf]
        %v2579 = vld [vmem:[%s260 + $0xf44] sm:$0xf]
        %v2580 = vld [vmem:[%s260 + $0xf48] sm:$0xf]
        %v2581 = vld [vmem:[%s260 + $0xf4c] sm:$0xf]
        %v2582 = vld [vmem:[%s260 + $0xf50] sm:$0xf]
        %v2583 = vld [vmem:[%s260 + $0xf54] sm:$0xf]
        %v2584 = vld [vmem:[%s260 + $0xf58] sm:$0xf]
        %v2585 = vld [vmem:[%s260 + $0xf5c] sm:$0xf]
        %v2586 = vld [vmem:[%s260 + $0xf60] sm:$0xf]
        %v2587 = vld [vmem:[%s260 + $0xf64] sm:$0xf]
        %v2588 = vld [vmem:[%s260 + $0xf68] sm:$0xf]
        %v2589 = vld [vmem:[%s260 + $0xf6c] sm:$0xf]
        %v2590 = vld [vmem:[%s260 + $0xf70] sm:$0xf]
        %v2591 = vld [vmem:[%s260 + $0xf74] sm:$0xf]
        %v2592 = vld [vmem:[%s260 + $0xf78] sm:$0xf]
        %v2593 = vld [vmem:[%s260 + $0xf7c] sm:$0xf]
        %v2594 = vld [vmem:[%s260 + $0xf80] sm:$0xf]
        %v2595 = vld [vmem:[%s260 + $0xf84] sm:$0xf]
        %v2596 = vld [vmem:[%s260 + $0xf88] sm:$0xf]
        %v2597 = vld [vmem:[%s260 + $0xf8c] sm:$0xf]
        %v2598 = vld [vmem:[%s260 + $0xf90] sm:$0xf]
        %v2599 = vld [vmem:[%s260 + $0xf94] sm:$0xf]
        %v2600 = vld [vmem:[%s260 + $0xf98] sm:$0xf]
        %v2601 = vld [vmem:[%s260 + $0xf9c] sm:$0xf]
        %v2602 = vld [vmem:[%s260 + $0xfa0] sm:$0xf]
        %v2603 = vld [vmem:[%s260 + $0xfa4] sm:$0xf]
        %v2604 = vld [vmem:[%s260 + $0xfa8] sm:$0xf]
        %v2605 = vld [vmem:[%s260 + $0xfac] sm:$0xf]
        %v2606 = vld [vmem:[%s260 + $0xfb0] sm:$0xf]
        %v2607 = vld [vmem:[%s260 + $0xfb4] sm:$0xf]
        %v2608 = vld [vmem:[%s260 + $0xfb8] sm:$0xf]
        %v2609 = vld [vmem:[%s260 + $0xfbc] sm:$0xf]
        %v2610 = vld [vmem:[%s260 + $0xfc0] sm:$0xf]
        %v2611 = vld [vmem:[%s260 + $0xfc4] sm:$0xf]
        %v2612 = vld [vmem:[%s260 + $0xfc8] sm:$0xf]
        %v2613 = vld [vmem:[%s260 + $0xfcc] sm:$0xf]
        %v2614 = vld [vmem:[%s260 + $0xfd0] sm:$0xf]
        %v2615 = vld [vmem:[%s260 + $0xfd4] sm:$0xf]
        %v2616 = vld [vmem:[%s260 + $0xfd8] sm:$0xf]
        %v2617 = vld [vmem:[%s260 + $0xfdc] sm:$0xf]
        %v2618 = vld [vmem:[%s260 + $0xfe0] sm:$0xf]
        %v2619 = vld [vmem:[%s260 + $0xfe4] sm:$0xf]
        %v2620 = vld [vmem:[%s260 + $0xfe8] sm:$0xf]
        %v2621 = vld [vmem:[%s260 + $0xfec] sm:$0xf]
        %v2622 = vld [vmem:[%s260 + $0xff0] sm:$0xf]
        %v2623 = vld [vmem:[%s260 + $0xff4] sm:$0xf]
        %v2624 = vld [vmem:[%s260 + $0xff8] sm:$0xf]
        %v2625 = vld [vmem:[%s260 + $0xffc] sm:$0xf]
        %v2626 = vld [vmem:[%s260 + $0x1000] sm:$0xf]
        %v2627 = vld [vmem:[%s260 + $0x1004] sm:$0xf]
        %v2628 = vld [vmem:[%s260 + $0x1008] sm:$0xf]
        %v2629 = vld [vmem:[%s260 + $0x100c] sm:$0xf]
        %v2630 = vld [vmem:[%s260 + $0x1010] sm:$0xf]
        %v2631 = vld [vmem:[%s260 + $0x1014] sm:$0xf]
        %v2632 = vld [vmem:[%s260 + $0x1018] sm:$0xf]
        %v2633 = vld [vmem:[%s260 + $0x101c] sm:$0xf]
        %v2634 = vld [vmem:[%s260 + $0x1020] sm:$0xf]
        %v2635 = vld [vmem:[%s260 + $0x1024] sm:$0xf]
        %v2636 = vld [vmem:[%s260 + $0x1028] sm:$0xf]
        %v2637 = vld [vmem:[%s260 + $0x102c] sm:$0xf]
        %v2638 = vld [vmem:[%s260 + $0x1030] sm:$0xf]
        %v2639 = vld [vmem:[%s260 + $0x1034] sm:$0xf]
        %v2640 = vld [vmem:[%s260 + $0x1038] sm:$0xf]
        %v2641 = vld [vmem:[%s260 + $0x103c] sm:$0xf]
        %v2642 = vld [vmem:[%s260 + $0x1040] sm:$0xf]
        %v2643 = vld [vmem:[%s260 + $0x1044] sm:$0xf]
        %v2644 = vld [vmem:[%s260 + $0x1048] sm:$0xf]
        %v2645 = vld [vmem:[%s260 + $0x104c] sm:$0xf]
        %v2646 = vld [vmem:[%s260 + $0x1050] sm:$0xf]
        %v2647 = vld [vmem:[%s260 + $0x1054] sm:$0xf]
        %v2648 = vld [vmem:[%s260 + $0x1058] sm:$0xf]
        %v2649 = vld [vmem:[%s260 + $0x105c] sm:$0xf]
        %v2650 = vld [vmem:[%s260 + $0x1060] sm:$0xf]
        %v2651 = vld [vmem:[%s260 + $0x1064] sm:$0xf]
        %v2652 = vld [vmem:[%s260 + $0x1068] sm:$0xf]
        %v2653 = vld [vmem:[%s260 + $0x106c] sm:$0xf]
        %v2654 = vld [vmem:[%s260 + $0x1070] sm:$0xf]
        %v2655 = vld [vmem:[%s260 + $0x1074] sm:$0xf]
        %v2656 = vld [vmem:[%s260 + $0x1078] sm:$0xf]
        %v2657 = vld [vmem:[%s260 + $0x107c] sm:$0xf]
        %v2658 = vld [vmem:[%s260 + $0x1080] sm:$0xf]
        %v2659 = vld [vmem:[%s260 + $0x1084] sm:$0xf]
        %v2660 = vld [vmem:[%s260 + $0x1088] sm:$0xf]
        %v2661 = vld [vmem:[%s260 + $0x108c] sm:$0xf]
        %v2662 = vld [vmem:[%s260 + $0x1090] sm:$0xf]
        %v2663 = vld [vmem:[%s260 + $0x1094] sm:$0xf]
        %v2664 = vld [vmem:[%s260 + $0x1098] sm:$0xf]
        %v2665 = vld [vmem:[%s260 + $0x109c] sm:$0xf]
        %v2666 = vld [vmem:[%s260 + $0x10a0] sm:$0xf]
        %v2667 = vld [vmem:[%s260 + $0x10a4] sm:$0xf]
        %v2668 = vld [vmem:[%s260 + $0x10a8] sm:$0xf]
        %v2669 = vld [vmem:[%s260 + $0x10ac] sm:$0xf]
        %v2670 = vld [vmem:[%s260 + $0x10b0] sm:$0xf]
        %v2671 = vld [vmem:[%s260 + $0x10b4] sm:$0xf]
        %v2672 = vld [vmem:[%s260 + $0x10b8] sm:$0xf]
        %v2673 = vld [vmem:[%s260 + $0x10bc] sm:$0xf]
        %v2674 = vld [vmem:[%s260 + $0x10c0] sm:$0xf]
        %v2675 = vld [vmem:[%s260 + $0x10c4] sm:$0xf]
        %v2676 = vld [vmem:[%s260 + $0x10c8] sm:$0xf]
        %v2677 = vld [vmem:[%s260 + $0x10cc] sm:$0xf]
        %v2678 = vld [vmem:[%s260 + $0x10d0] sm:$0xf]
        %v2679 = vld [vmem:[%s260 + $0x10d4] sm:$0xf]
        %v2680 = vld [vmem:[%s260 + $0x10d8] sm:$0xf]
        %v2681 = vld [vmem:[%s260 + $0x10dc] sm:$0xf]
        %v2682 = vld [vmem:[%s260 + $0x10e0] sm:$0xf]
        %v2683 = vld [vmem:[%s260 + $0x10e4] sm:$0xf]
        %v2684 = vld [vmem:[%s260 + $0x10e8] sm:$0xf]
        %v2685 = vld [vmem:[%s260 + $0x10ec] sm:$0xf]
        %v2686 = vld [vmem:[%s260 + $0x10f0] sm:$0xf]
        %v2687 = vld [vmem:[%s260 + $0x10f4] sm:$0xf]
        %v2688 = vld [vmem:[%s260 + $0x10f8] sm:$0xf]
        %v2689 = vld [vmem:[%s260 + $0x10fc] sm:$0xf]
        %v2690 = vld [vmem:[%s260 + $0x1100] sm:$0xf]
        %v2691 = vld [vmem:[%s260 + $0x1104] sm:$0xf]
        %v2692 = vld [vmem:[%s260 + $0x1108] sm:$0xf]
        %v2693 = vld [vmem:[%s260 + $0x110c] sm:$0xf]
        %v2694 = vld [vmem:[%s260 + $0x1110] sm:$0xf]
        %v2695 = vld [vmem:[%s260 + $0x1114] sm:$0xf]
        %v2696 = vld [vmem:[%s260 + $0x1118] sm:$0xf]
        %v2697 = vld [vmem:[%s260 + $0x111c] sm:$0xf]
        %v2698 = vld [vmem:[%s260 + $0x1120] sm:$0xf]
        %v2699 = vld [vmem:[%s260 + $0x1124] sm:$0xf]
        %v2700 = vld [vmem:[%s260 + $0x1128] sm:$0xf]
        %v2701 = vld [vmem:[%s260 + $0x112c] sm:$0xf]
        %v2702 = vld [vmem:[%s260 + $0x1130] sm:$0xf]
        %v2703 = vld [vmem:[%s260 + $0x1134] sm:$0xf]
        %v2704 = vld [vmem:[%s260 + $0x1138] sm:$0xf]
        %v2705 = vld [vmem:[%s260 + $0x113c] sm:$0xf]
        %v2706 = vld [vmem:[%s260 + $0x1140] sm:$0xf]
        %v2707 = vld [vmem:[%s260 + $0x1144] sm:$0xf]
        %v2708 = vld [vmem:[%s260 + $0x1148] sm:$0xf]
        %v2709 = vld [vmem:[%s260 + $0x114c] sm:$0xf]
        %v2710 = vld [vmem:[%s260 + $0x1150] sm:$0xf]
        %v2711 = vld [vmem:[%s260 + $0x1154] sm:$0xf]
        %v2712 = vld [vmem:[%s260 + $0x1158] sm:$0xf]
        %v2713 = vld [vmem:[%s260 + $0x115c] sm:$0xf]
        %v2714 = vld [vmem:[%s260 + $0x1160] sm:$0xf]
        %v2715 = vld [vmem:[%s260 + $0x1164] sm:$0xf]
        %v2716 = vld [vmem:[%s260 + $0x1168] sm:$0xf]
        %v2717 = vld [vmem:[%s260 + $0x116c] sm:$0xf]
        %v2718 = vld [vmem:[%s260 + $0x1170] sm:$0xf]
        %v2719 = vld [vmem:[%s260 + $0x1174] sm:$0xf]
        %v2720 = vld [vmem:[%s260 + $0x1178] sm:$0xf]
        %v2721 = vld [vmem:[%s260 + $0x117c] sm:$0xf]
        %v2722 = vld [vmem:[%s260 + $0x1180] sm:$0xf]
        %v2723 = vld [vmem:[%s260 + $0x1184] sm:$0xf]
        %v2724 = vld [vmem:[%s260 + $0x1188] sm:$0xf]
        %v2725 = vld [vmem:[%s260 + $0x118c] sm:$0xf]
        %v2726 = vld [vmem:[%s260 + $0x1190] sm:$0xf]
        %v2727 = vld [vmem:[%s260 + $0x1194] sm:$0xf]
        %v2728 = vld [vmem:[%s260 + $0x1198] sm:$0xf]
        %v2729 = vld [vmem:[%s260 + $0x119c] sm:$0xf]
        %v2730 = vld [vmem:[%s260 + $0x11a0] sm:$0xf]
        %v2731 = vld [vmem:[%s260 + $0x11a4] sm:$0xf]
        %v2732 = vld [vmem:[%s260 + $0x11a8] sm:$0xf]
        %v2733 = vld [vmem:[%s260 + $0x11ac] sm:$0xf]
        %v2734 = vld [vmem:[%s260 + $0x11b0] sm:$0xf]
        %v2735 = vld [vmem:[%s260 + $0x11b4] sm:$0xf]
        %v2736 = vld [vmem:[%s260 + $0x11b8] sm:$0xf]
        %v2737 = vld [vmem:[%s260 + $0x11bc] sm:$0xf]
        %v2738 = vld [vmem:[%s260 + $0x11c0] sm:$0xf]
        %v2739 = vld [vmem:[%s260 + $0x11c4] sm:$0xf]
        %v2740 = vld [vmem:[%s260 + $0x11c8] sm:$0xf]
        %v2741 = vld [vmem:[%s260 + $0x11cc] sm:$0xf]
        %v2742 = vld [vmem:[%s260 + $0x11d0] sm:$0xf]
        %v2743 = vld [vmem:[%s260 + $0x11d4] sm:$0xf]
        %v2744 = vld [vmem:[%s260 + $0x11d8] sm:$0xf]
        %v2745 = vld [vmem:[%s260 + $0x11dc] sm:$0xf]
        %v2746 = vld [vmem:[%s260 + $0x11e0] sm:$0xf]
        %v2747 = vld [vmem:[%s260 + $0x11e4] sm:$0xf]
        %v2748 = vld [vmem:[%s260 + $0x11e8] sm:$0xf]
        %v2749 = vld [vmem:[%s260 + $0x11ec] sm:$0xf]
        %v2750 = vld [vmem:[%s260 + $0x11f0] sm:$0xf]
        %v2751 = vld [vmem:[%s260 + $0x11f4] sm:$0xf]
        %v2752 = vld [vmem:[%s260 + $0x11f8] sm:$0xf]
        %v2753 = vld [vmem:[%s260 + $0x11fc] sm:$0xf]
        %v2754 = vld [vmem:[%s260 + $0x1200] sm:$0xf]
        %v2755 = vld [vmem:[%s260 + $0x1204] sm:$0xf]
        %v2756 = vld [vmem:[%s260 + $0x1208] sm:$0xf]
        %v2757 = vld [vmem:[%s260 + $0x120c] sm:$0xf]
        %v2758 = vld [vmem:[%s260 + $0x1210] sm:$0xf]
        %v2759 = vld [vmem:[%s260 + $0x1214] sm:$0xf]
        %v2760 = vld [vmem:[%s260 + $0x1218] sm:$0xf]
        %v2761 = vld [vmem:[%s260 + $0x121c] sm:$0xf]
        %v2762 = vld [vmem:[%s260 + $0x1220] sm:$0xf]
        %v2763 = vld [vmem:[%s260 + $0x1224] sm:$0xf]
        %v2764 = vld [vmem:[%s260 + $0x1228] sm:$0xf]
        %v2765 = vld [vmem:[%s260 + $0x122c] sm:$0xf]
        %v2766 = vld [vmem:[%s260 + $0x1230] sm:$0xf]
        %v2767 = vld [vmem:[%s260 + $0x1234] sm:$0xf]
        %v2768 = vld [vmem:[%s260 + $0x1238] sm:$0xf]
        %v2769 = vld [vmem:[%s260 + $0x123c] sm:$0xf]
        %v2770 = vld [vmem:[%s260 + $0x1240] sm:$0xf]
        %v2771 = vld [vmem:[%s260 + $0x1244] sm:$0xf]
        %v2772 = vld [vmem:[%s260 + $0x1248] sm:$0xf]
        %v2773 = vld [vmem:[%s260 + $0x124c] sm:$0xf]
        %v2774 = vld [vmem:[%s260 + $0x1250] sm:$0xf]
        %v2775 = vld [vmem:[%s260 + $0x1254] sm:$0xf]
        %v2776 = vld [vmem:[%s260 + $0x1258] sm:$0xf]
        %v2777 = vld [vmem:[%s260 + $0x125c] sm:$0xf]
        %v2778 = vld [vmem:[%s260 + $0x1260] sm:$0xf]
        %v2779 = vld [vmem:[%s260 + $0x1264] sm:$0xf]
        %v2780 = vld [vmem:[%s260 + $0x1268] sm:$0xf]
        %v2781 = vld [vmem:[%s260 + $0x126c] sm:$0xf]
        %v2782 = vld [vmem:[%s260 + $0x1270] sm:$0xf]
        %v2783 = vld [vmem:[%s260 + $0x1274] sm:$0xf]
        %v2784 = vld [vmem:[%s260 + $0x1278] sm:$0xf]
        %v2785 = vld [vmem:[%s260 + $0x127c] sm:$0xf]
        %v2786 = vld [vmem:[%s260 + $0x1280] sm:$0xf]
        %v2787 = vld [vmem:[%s260 + $0x1284] sm:$0xf]
        %v2788 = vld [vmem:[%s260 + $0x1288] sm:$0xf]
        %v2789 = vld [vmem:[%s260 + $0x128c] sm:$0xf]
        %v2790 = vld [vmem:[%s260 + $0x1290] sm:$0xf]
        %v2791 = vld [vmem:[%s260 + $0x1294] sm:$0xf]
        %v2792 = vld [vmem:[%s260 + $0x1298] sm:$0xf]
        %v2793 = vld [vmem:[%s260 + $0x129c] sm:$0xf]
        %v2794 = vld [vmem:[%s260 + $0x12a0] sm:$0xf]
        %v2795 = vld [vmem:[%s260 + $0x12a4] sm:$0xf]
        %v2796 = vld [vmem:[%s260 + $0x12a8] sm:$0xf]
        %v2797 = vld [vmem:[%s260 + $0x12ac] sm:$0xf]
        %v2798 = vld [vmem:[%s260 + $0x12b0] sm:$0xf]
        %v2799 = vld [vmem:[%s260 + $0x12b4] sm:$0xf]
        %v2800 = vld [vmem:[%s260 + $0x12b8] sm:$0xf]
        %v2801 = vld [vmem:[%s260 + $0x12bc] sm:$0xf]
        %v2802 = vld [vmem:[%s260 + $0x12c0] sm:$0xf]
        %v2803 = vld [vmem:[%s260 + $0x12c4] sm:$0xf]
        %v2804 = vld [vmem:[%s260 + $0x12c8] sm:$0xf]
        %v2805 = vld [vmem:[%s260 + $0x12cc] sm:$0xf]
        %v2806 = vld [vmem:[%s260 + $0x12d0] sm:$0xf]
        %v2807 = vld [vmem:[%s260 + $0x12d4] sm:$0xf]
        %v2808 = vld [vmem:[%s260 + $0x12d8] sm:$0xf]
        %v2809 = vld [vmem:[%s260 + $0x12dc] sm:$0xf]
        %v2810 = vld [vmem:[%s260 + $0x12e0] sm:$0xf]
        %v2811 = vld [vmem:[%s260 + $0x12e4] sm:$0xf]
        %v2812 = vld [vmem:[%s260 + $0x12e8] sm:$0xf]
        %v2813 = vld [vmem:[%s260 + $0x12ec] sm:$0xf]
        %v2814 = vld [vmem:[%s260 + $0x12f0] sm:$0xf]
        %v2815 = vld [vmem:[%s260 + $0x12f4] sm:$0xf]
        %v2816 = vld [vmem:[%s260 + $0x12f8] sm:$0xf]
        %v2817 = vld [vmem:[%s260 + $0x12fc] sm:$0xf]
        %v2818 = vld [vmem:[%s260 + $0x1300] sm:$0xf]
        %v2819 = vld [vmem:[%s260 + $0x1304] sm:$0xf]
        %v2820 = vld [vmem:[%s260 + $0x1308] sm:$0xf]
        %v2821 = vld [vmem:[%s260 + $0x130c] sm:$0xf]
        %v2822 = vld [vmem:[%s260 + $0x1310] sm:$0xf]
        %v2823 = vld [vmem:[%s260 + $0x1314] sm:$0xf]
        %v2824 = vld [vmem:[%s260 + $0x1318] sm:$0xf]
        %v2825 = vld [vmem:[%s260 + $0x131c] sm:$0xf]
        %v2826 = vld [vmem:[%s260 + $0x1320] sm:$0xf]
        %v2827 = vld [vmem:[%s260 + $0x1324] sm:$0xf]
        %v2828 = vld [vmem:[%s260 + $0x1328] sm:$0xf]
        %v2829 = vld [vmem:[%s260 + $0x132c] sm:$0xf]
        %v2830 = vld [vmem:[%s260 + $0x1330] sm:$0xf]
        %v2831 = vld [vmem:[%s260 + $0x1334] sm:$0xf]
        %v2832 = vld [vmem:[%s260 + $0x1338] sm:$0xf]
        %v2833 = vld [vmem:[%s260 + $0x133c] sm:$0xf]
        %v2834 = vld [vmem:[%s260 + $0x1340] sm:$0xf]
        %v2835 = vld [vmem:[%s260 + $0x1344] sm:$0xf]
        %v2836 = vld [vmem:[%s260 + $0x1348] sm:$0xf]
        %v2837 = vld [vmem:[%s260 + $0x134c] sm:$0xf]
        %v2838 = vld [vmem:[%s260 + $0x1350] sm:$0xf]
        %v2839 = vld [vmem:[%s260 + $0x1354] sm:$0xf]
        %v2840 = vld [vmem:[%s260 + $0x1358] sm:$0xf]
        %v2841 = vld [vmem:[%s260 + $0x135c] sm:$0xf]
        %v2842 = vld [vmem:[%s260 + $0x1360] sm:$0xf]
        %v2843 = vld [vmem:[%s260 + $0x1364] sm:$0xf]
        %v2844 = vld [vmem:[%s260 + $0x1368] sm:$0xf]
        %v2845 = vld [vmem:[%s260 + $0x136c] sm:$0xf]
        %v2846 = vld [vmem:[%s260 + $0x1370] sm:$0xf]
        %v2847 = vld [vmem:[%s260 + $0x1374] sm:$0xf]
        %v2848 = vld [vmem:[%s260 + $0x1378] sm:$0xf]
        %v2849 = vld [vmem:[%s260 + $0x137c] sm:$0xf]
        %v2850 = vld [vmem:[%s260 + $0x1380] sm:$0xf]
        %v2851 = vld [vmem:[%s260 + $0x1384] sm:$0xf]
        %v2852 = vld [vmem:[%s260 + $0x1388] sm:$0xf]
        %v2853 = vld [vmem:[%s260 + $0x138c] sm:$0xf]
        %v2854 = vld [vmem:[%s260 + $0x1390] sm:$0xf]
        %v2855 = vld [vmem:[%s260 + $0x1394] sm:$0xf]
        %v2856 = vld [vmem:[%s260 + $0x1398] sm:$0xf]
        %v2857 = vld [vmem:[%s260 + $0x139c] sm:$0xf]
        %v2858 = vld [vmem:[%s260 + $0x13a0] sm:$0xf]
        %v2859 = vld [vmem:[%s260 + $0x13a4] sm:$0xf]
        %v2860 = vld [vmem:[%s260 + $0x13a8] sm:$0xf]
        %v2861 = vld [vmem:[%s260 + $0x13ac] sm:$0xf]
        %v2862 = vld [vmem:[%s260 + $0x13b0] sm:$0xf]
        %v2863 = vld [vmem:[%s260 + $0x13b4] sm:$0xf]
        %v2864 = vld [vmem:[%s260 + $0x13b8] sm:$0xf]
        %v2865 = vld [vmem:[%s260 + $0x13bc] sm:$0xf]
        %v2866 = vld [vmem:[%s260 + $0x13c0] sm:$0xf]
        %v2867 = vld [vmem:[%s260 + $0x13c4] sm:$0xf]
        %v2868 = vld [vmem:[%s260 + $0x13c8] sm:$0xf]
        %v2869 = vld [vmem:[%s260 + $0x13cc] sm:$0xf]
        %v2870 = vld [vmem:[%s260 + $0x13d0] sm:$0xf]
        %v2871 = vld [vmem:[%s260 + $0x13d4] sm:$0xf]
        %v2872 = vld [vmem:[%s260 + $0x13d8] sm:$0xf]
        %v2873 = vld [vmem:[%s260 + $0x13dc] sm:$0xf]
        %v2874 = vld [vmem:[%s260 + $0x13e0] sm:$0xf]
        %v2875 = vld [vmem:[%s260 + $0x13e4] sm:$0xf]
        %v2876 = vld [vmem:[%s260 + $0x13e8] sm:$0xf]
        %v2877 = vld [vmem:[%s260 + $0x13ec] sm:$0xf]
        %v2878 = vld [vmem:[%s260 + $0x13f0] sm:$0xf]
        %v2879 = vld [vmem:[%s260 + $0x13f4] sm:$0xf]
        %v2880 = vld [vmem:[%s260 + $0x13f8] sm:$0xf]
        %v2881 = vld [vmem:[%s260 + $0x13fc] sm:$0xf]
        %v4162 = vunpack.c.l.b16 %v1602
        %v4163 = vunpack.c.l.b16 %v1603
        %v4164 = vunpack.c.l.b16 %v1604
        %v4165 = vunpack.c.l.b16 %v1605
        %v4166 = vunpack.c.l.b16 %v1606
        %v4167 = vunpack.c.l.b16 %v1607
        %v4168 = vunpack.c.l.b16 %v1608
        %v4169 = vunpack.c.l.b16 %v1609
        %v4170 = vunpack.c.l.b16 %v1610
        %v4171 = vunpack.c.l.b16 %v1611
        %v4172 = vunpack.c.l.b16 %v1612
        %v4173 = vunpack.c.l.b16 %v1613
        %v4174 = vunpack.c.l.b16 %v1614
        %v4175 = vunpack.c.l.b16 %v1615
        %v4176 = vunpack.c.l.b16 %v1616
        %v4177 = vunpack.c.l.b16 %v1617
        %v4178 = vunpack.c.l.b16 %v1618
        %v4179 = vunpack.c.l.b16 %v1619
        %v4180 = vunpack.c.l.b16 %v1620
        %v4181 = vunpack.c.l.b16 %v1621
        %v4182 = vunpack.c.l.b16 %v1622
        %v4183 = vunpack.c.l.b16 %v1623
        %v4184 = vunpack.c.l.b16 %v1624
        %v4185 = vunpack.c.l.b16 %v1625
        %v4186 = vunpack.c.l.b16 %v1626
        %v4187 = vunpack.c.l.b16 %v1627
        %v4188 = vunpack.c.l.b16 %v1628
        %v4189 = vunpack.c.l.b16 %v1629
        %v4190 = vunpack.c.l.b16 %v1630
        %v4191 = vunpack.c.l.b16 %v1631
        %v4192 = vunpack.c.l.b16 %v1632
        %v4193 = vunpack.c.l.b16 %v1633
        %v4194 = vunpack.c.l.b16 %v1634
        %v4195 = vunpack.c.l.b16 %v1635
        %v4196 = vunpack.c.l.b16 %v1636
        %v4197 = vunpack.c.l.b16 %v1637
        %v4198 = vunpack.c.l.b16 %v1638
        %v4199 = vunpack.c.l.b16 %v1639
        %v4200 = vunpack.c.l.b16 %v1640
        %v4201 = vunpack.c.l.b16 %v1641
        %v4202 = vunpack.c.l.b16 %v1642
        %v4203 = vunpack.c.l.b16 %v1643
        %v4204 = vunpack.c.l.b16 %v1644
        %v4205 = vunpack.c.l.b16 %v1645
        %v4206 = vunpack.c.l.b16 %v1646
        %v4207 = vunpack.c.l.b16 %v1647
        %v4208 = vunpack.c.l.b16 %v1648
        %v4209 = vunpack.c.l.b16 %v1649
        %v4210 = vunpack.c.l.b16 %v1650
        %v4211 = vunpack.c.l.b16 %v1651
        %v4212 = vunpack.c.l.b16 %v1652
        %v4213 = vunpack.c.l.b16 %v1653
        %v4214 = vunpack.c.l.b16 %v1654
        %v4215 = vunpack.c.l.b16 %v1655
        %v4216 = vunpack.c.l.b16 %v1656
        %v4217 = vunpack.c.l.b16 %v1657
        %v4218 = vunpack.c.l.b16 %v1658
        %v4219 = vunpack.c.l.b16 %v1659
        %v4220 = vunpack.c.l.b16 %v1660
        %v4221 = vunpack.c.l.b16 %v1661
        %v4222 = vunpack.c.l.b16 %v1662
        %v4223 = vunpack.c.l.b16 %v1663
        %v4224 = vunpack.c.l.b16 %v1664
        %v4225 = vunpack.c.l.b16 %v1665
        %v4226 = vunpack.c.l.b16 %v1666
        %v4227 = vunpack.c.l.b16 %v1667
        %v4228 = vunpack.c.l.b16 %v1668
        %v4229 = vunpack.c.l.b16 %v1669
        %v4230 = vunpack.c.l.b16 %v1670
        %v4231 = vunpack.c.l.b16 %v1671
        %v4232 = vunpack.c.l.b16 %v1672
        %v4233 = vunpack.c.l.b16 %v1673
        %v4234 = vunpack.c.l.b16 %v1674
        %v4235 = vunpack.c.l.b16 %v1675
        %v4236 = vunpack.c.l.b16 %v1676
        %v4237 = vunpack.c.l.b16 %v1677
        %v4238 = vunpack.c.l.b16 %v1678
        %v4239 = vunpack.c.l.b16 %v1679
        %v4240 = vunpack.c.l.b16 %v1680
        %v4241 = vunpack.c.l.b16 %v1681
        %v4242 = vunpack.c.l.b16 %v1682
        %v4243 = vunpack.c.l.b16 %v1683
        %v4244 = vunpack.c.l.b16 %v1684
        %v4245 = vunpack.c.l.b16 %v1685
        %v4246 = vunpack.c.l.b16 %v1686
        %v4247 = vunpack.c.l.b16 %v1687
        %v4248 = vunpack.c.l.b16 %v1688
        %v4249 = vunpack.c.l.b16 %v1689
        %v4250 = vunpack.c.l.b16 %v1690
        %v4251 = vunpack.c.l.b16 %v1691
        %v4252 = vunpack.c.l.b16 %v1692
        %v4253 = vunpack.c.l.b16 %v1693
        %v4254 = vunpack.c.l.b16 %v1694
        %v4255 = vunpack.c.l.b16 %v1695
        %v4256 = vunpack.c.l.b16 %v1696
        %v4257 = vunpack.c.l.b16 %v1697
        %v4258 = vunpack.c.l.b16 %v1698
        %v4259 = vunpack.c.l.b16 %v1699
        %v4260 = vunpack.c.l.b16 %v1700
        %v4261 = vunpack.c.l.b16 %v1701
        %v4262 = vunpack.c.l.b16 %v1702
        %v4263 = vunpack.c.l.b16 %v1703
        %v4264 = vunpack.c.l.b16 %v1704
        %v4265 = vunpack.c.l.b16 %v1705
        %v4266 = vunpack.c.l.b16 %v1706
        %v4267 = vunpack.c.l.b16 %v1707
        %v4268 = vunpack.c.l.b16 %v1708
        %v4269 = vunpack.c.l.b16 %v1709
        %v4270 = vunpack.c.l.b16 %v1710
        %v4271 = vunpack.c.l.b16 %v1711
        %v4272 = vunpack.c.l.b16 %v1712
        %v4273 = vunpack.c.l.b16 %v1713
        %v4274 = vunpack.c.l.b16 %v1714
        %v4275 = vunpack.c.l.b16 %v1715
        %v4276 = vunpack.c.l.b16 %v1716
        %v4277 = vunpack.c.l.b16 %v1717
        %v4278 = vunpack.c.l.b16 %v1718
        %v4279 = vunpack.c.l.b16 %v1719
        %v4280 = vunpack.c.l.b16 %v1720
        %v4281 = vunpack.c.l.b16 %v1721
        %v4282 = vunpack.c.l.b16 %v1722
        %v4283 = vunpack.c.l.b16 %v1723
        %v4284 = vunpack.c.l.b16 %v1724
        %v4285 = vunpack.c.l.b16 %v1725
        %v4286 = vunpack.c.l.b16 %v1726
        %v4287 = vunpack.c.l.b16 %v1727
        %v4288 = vunpack.c.l.b16 %v1728
        %v4289 = vunpack.c.l.b16 %v1729
        %v4290 = vunpack.c.l.b16 %v1730
        %v4291 = vunpack.c.l.b16 %v1731
        %v4292 = vunpack.c.l.b16 %v1732
        %v4293 = vunpack.c.l.b16 %v1733
        %v4294 = vunpack.c.l.b16 %v1734
        %v4295 = vunpack.c.l.b16 %v1735
        %v4296 = vunpack.c.l.b16 %v1736
        %v4297 = vunpack.c.l.b16 %v1737
        %v4298 = vunpack.c.l.b16 %v1738
        %v4299 = vunpack.c.l.b16 %v1739
        %v4300 = vunpack.c.l.b16 %v1740
        %v4301 = vunpack.c.l.b16 %v1741
        %v4302 = vunpack.c.l.b16 %v1742
        %v4303 = vunpack.c.l.b16 %v1743
        %v4304 = vunpack.c.l.b16 %v1744
        %v4305 = vunpack.c.l.b16 %v1745
        %v4306 = vunpack.c.l.b16 %v1746
        %v4307 = vunpack.c.l.b16 %v1747
        %v4308 = vunpack.c.l.b16 %v1748
        %v4309 = vunpack.c.l.b16 %v1749
        %v4310 = vunpack.c.l.b16 %v1750
        %v4311 = vunpack.c.l.b16 %v1751
        %v4312 = vunpack.c.l.b16 %v1752
        %v4313 = vunpack.c.l.b16 %v1753
        %v4314 = vunpack.c.l.b16 %v1754
        %v4315 = vunpack.c.l.b16 %v1755
        %v4316 = vunpack.c.l.b16 %v1756
        %v4317 = vunpack.c.l.b16 %v1757
        %v4318 = vunpack.c.l.b16 %v1758
        %v4319 = vunpack.c.l.b16 %v1759
        %v4320 = vunpack.c.l.b16 %v1760
        %v4321 = vunpack.c.l.b16 %v1761
        %v4322 = vunpack.c.l.b16 %v1762
        %v4323 = vunpack.c.l.b16 %v1763
        %v4324 = vunpack.c.l.b16 %v1764
        %v4325 = vunpack.c.l.b16 %v1765
        %v4326 = vunpack.c.l.b16 %v1766
        %v4327 = vunpack.c.l.b16 %v1767
        %v4328 = vunpack.c.l.b16 %v1768
        %v4329 = vunpack.c.l.b16 %v1769
        %v4330 = vunpack.c.l.b16 %v1770
        %v4331 = vunpack.c.l.b16 %v1771
        %v4332 = vunpack.c.l.b16 %v1772
        %v4333 = vunpack.c.l.b16 %v1773
        %v4334 = vunpack.c.l.b16 %v1774
        %v4335 = vunpack.c.l.b16 %v1775
        %v4336 = vunpack.c.l.b16 %v1776
        %v4337 = vunpack.c.l.b16 %v1777
        %v4338 = vunpack.c.l.b16 %v1778
        %v4339 = vunpack.c.l.b16 %v1779
        %v4340 = vunpack.c.l.b16 %v1780
        %v4341 = vunpack.c.l.b16 %v1781
        %v4342 = vunpack.c.l.b16 %v1782
        %v4343 = vunpack.c.l.b16 %v1783
        %v4344 = vunpack.c.l.b16 %v1784
        %v4345 = vunpack.c.l.b16 %v1785
        %v4346 = vunpack.c.l.b16 %v1786
        %v4347 = vunpack.c.l.b16 %v1787
        %v4348 = vunpack.c.l.b16 %v1788
        %v4349 = vunpack.c.l.b16 %v1789
        %v4350 = vunpack.c.l.b16 %v1790
        %v4351 = vunpack.c.l.b16 %v1791
        %v4352 = vunpack.c.l.b16 %v1792
        %v4353 = vunpack.c.l.b16 %v1793
        %v4354 = vunpack.c.l.b16 %v1794
        %v4355 = vunpack.c.l.b16 %v1795
        %v4356 = vunpack.c.l.b16 %v1796
        %v4357 = vunpack.c.l.b16 %v1797
        %v4358 = vunpack.c.l.b16 %v1798
        %v4359 = vunpack.c.l.b16 %v1799
        %v4360 = vunpack.c.l.b16 %v1800
        %v4361 = vunpack.c.l.b16 %v1801
        %v4362 = vunpack.c.l.b16 %v1802
        %v4363 = vunpack.c.l.b16 %v1803
        %v4364 = vunpack.c.l.b16 %v1804
        %v4365 = vunpack.c.l.b16 %v1805
        %v4366 = vunpack.c.l.b16 %v1806
        %v4367 = vunpack.c.l.b16 %v1807
        %v4368 = vunpack.c.l.b16 %v1808
        %v4369 = vunpack.c.l.b16 %v1809
        %v4370 = vunpack.c.l.b16 %v1810
        %v4371 = vunpack.c.l.b16 %v1811
        %v4372 = vunpack.c.l.b16 %v1812
        %v4373 = vunpack.c.l.b16 %v1813
        %v4374 = vunpack.c.l.b16 %v1814
        %v4375 = vunpack.c.l.b16 %v1815
        %v4376 = vunpack.c.l.b16 %v1816
        %v4377 = vunpack.c.l.b16 %v1817
        %v4378 = vunpack.c.l.b16 %v1818
        %v4379 = vunpack.c.l.b16 %v1819
        %v4380 = vunpack.c.l.b16 %v1820
        %v4381 = vunpack.c.l.b16 %v1821
        %v4382 = vunpack.c.l.b16 %v1822
        %v4383 = vunpack.c.l.b16 %v1823
        %v4384 = vunpack.c.l.b16 %v1824
        %v4385 = vunpack.c.l.b16 %v1825
        %v4386 = vunpack.c.l.b16 %v1826
        %v4387 = vunpack.c.l.b16 %v1827
        %v4388 = vunpack.c.l.b16 %v1828
        %v4389 = vunpack.c.l.b16 %v1829
        %v4390 = vunpack.c.l.b16 %v1830
        %v4391 = vunpack.c.l.b16 %v1831
        %v4392 = vunpack.c.l.b16 %v1832
        %v4393 = vunpack.c.l.b16 %v1833
        %v4394 = vunpack.c.l.b16 %v1834
        %v4395 = vunpack.c.l.b16 %v1835
        %v4396 = vunpack.c.l.b16 %v1836
        %v4397 = vunpack.c.l.b16 %v1837
        %v4398 = vunpack.c.l.b16 %v1838
        %v4399 = vunpack.c.l.b16 %v1839
        %v4400 = vunpack.c.l.b16 %v1840
        %v4401 = vunpack.c.l.b16 %v1841
        %v4402 = vunpack.c.l.b16 %v1842
        %v4403 = vunpack.c.l.b16 %v1843
        %v4404 = vunpack.c.l.b16 %v1844
        %v4405 = vunpack.c.l.b16 %v1845
        %v4406 = vunpack.c.l.b16 %v1846
        %v4407 = vunpack.c.l.b16 %v1847
        %v4408 = vunpack.c.l.b16 %v1848
        %v4409 = vunpack.c.l.b16 %v1849
        %v4410 = vunpack.c.l.b16 %v1850
        %v4411 = vunpack.c.l.b16 %v1851
        %v4412 = vunpack.c.l.b16 %v1852
        %v4413 = vunpack.c.l.b16 %v1853
        %v4414 = vunpack.c.l.b16 %v1854
        %v4415 = vunpack.c.l.b16 %v1855
        %v4416 = vunpack.c.l.b16 %v1856
        %v4417 = vunpack.c.l.b16 %v1857
        %v4418 = vunpack.c.l.b16 %v1858
        %v4419 = vunpack.c.l.b16 %v1859
        %v4420 = vunpack.c.l.b16 %v1860
        %v4421 = vunpack.c.l.b16 %v1861
        %v4422 = vunpack.c.l.b16 %v1862
        %v4423 = vunpack.c.l.b16 %v1863
        %v4424 = vunpack.c.l.b16 %v1864
        %v4425 = vunpack.c.l.b16 %v1865
        %v4426 = vunpack.c.l.b16 %v1866
        %v4427 = vunpack.c.l.b16 %v1867
        %v4428 = vunpack.c.l.b16 %v1868
        %v4429 = vunpack.c.l.b16 %v1869
        %v4430 = vunpack.c.l.b16 %v1870
        %v4431 = vunpack.c.l.b16 %v1871
        %v4432 = vunpack.c.l.b16 %v1872
        %v4433 = vunpack.c.l.b16 %v1873
        %v4434 = vunpack.c.l.b16 %v1874
        %v4435 = vunpack.c.l.b16 %v1875
        %v4436 = vunpack.c.l.b16 %v1876
        %v4437 = vunpack.c.l.b16 %v1877
        %v4438 = vunpack.c.l.b16 %v1878
        %v4439 = vunpack.c.l.b16 %v1879
        %v4440 = vunpack.c.l.b16 %v1880
        %v4441 = vunpack.c.l.b16 %v1881
        %v4442 = vunpack.c.l.b16 %v1882
        %v4443 = vunpack.c.l.b16 %v1883
        %v4444 = vunpack.c.l.b16 %v1884
        %v4445 = vunpack.c.l.b16 %v1885
        %v4446 = vunpack.c.l.b16 %v1886
        %v4447 = vunpack.c.l.b16 %v1887
        %v4448 = vunpack.c.l.b16 %v1888
        %v4449 = vunpack.c.l.b16 %v1889
        %v4450 = vunpack.c.l.b16 %v1890
        %v4451 = vunpack.c.l.b16 %v1891
        %v4452 = vunpack.c.l.b16 %v1892
        %v4453 = vunpack.c.l.b16 %v1893
        %v4454 = vunpack.c.l.b16 %v1894
        %v4455 = vunpack.c.l.b16 %v1895
        %v4456 = vunpack.c.l.b16 %v1896
        %v4457 = vunpack.c.l.b16 %v1897
        %v4458 = vunpack.c.l.b16 %v1898
        %v4459 = vunpack.c.l.b16 %v1899
        %v4460 = vunpack.c.l.b16 %v1900
        %v4461 = vunpack.c.l.b16 %v1901
        %v4462 = vunpack.c.l.b16 %v1902
        %v4463 = vunpack.c.l.b16 %v1903
        %v4464 = vunpack.c.l.b16 %v1904
        %v4465 = vunpack.c.l.b16 %v1905
        %v4466 = vunpack.c.l.b16 %v1906
        %v4467 = vunpack.c.l.b16 %v1907
        %v4468 = vunpack.c.l.b16 %v1908
        %v4469 = vunpack.c.l.b16 %v1909
        %v4470 = vunpack.c.l.b16 %v1910
        %v4471 = vunpack.c.l.b16 %v1911
        %v4472 = vunpack.c.l.b16 %v1912
        %v4473 = vunpack.c.l.b16 %v1913
        %v4474 = vunpack.c.l.b16 %v1914
        %v4475 = vunpack.c.l.b16 %v1915
        %v4476 = vunpack.c.l.b16 %v1916
        %v4477 = vunpack.c.l.b16 %v1917
        %v4478 = vunpack.c.l.b16 %v1918
        %v4479 = vunpack.c.l.b16 %v1919
        %v4480 = vunpack.c.l.b16 %v1920
        %v4481 = vunpack.c.l.b16 %v1921
        %v4482 = vunpack.c.l.b16 %v1922
        %v4483 = vunpack.c.l.b16 %v1923
        %v4484 = vunpack.c.l.b16 %v1924
        %v4485 = vunpack.c.l.b16 %v1925
        %v4486 = vunpack.c.l.b16 %v1926
        %v4487 = vunpack.c.l.b16 %v1927
        %v4488 = vunpack.c.l.b16 %v1928
        %v4489 = vunpack.c.l.b16 %v1929
        %v4490 = vunpack.c.l.b16 %v1930
        %v4491 = vunpack.c.l.b16 %v1931
        %v4492 = vunpack.c.l.b16 %v1932
        %v4493 = vunpack.c.l.b16 %v1933
        %v4494 = vunpack.c.l.b16 %v1934
        %v4495 = vunpack.c.l.b16 %v1935
        %v4496 = vunpack.c.l.b16 %v1936
        %v4497 = vunpack.c.l.b16 %v1937
        %v4498 = vunpack.c.l.b16 %v1938
        %v4499 = vunpack.c.l.b16 %v1939
        %v4500 = vunpack.c.l.b16 %v1940
        %v4501 = vunpack.c.l.b16 %v1941
        %v4502 = vunpack.c.l.b16 %v1942
        %v4503 = vunpack.c.l.b16 %v1943
        %v4504 = vunpack.c.l.b16 %v1944
        %v4505 = vunpack.c.l.b16 %v1945
        %v4506 = vunpack.c.l.b16 %v1946
        %v4507 = vunpack.c.l.b16 %v1947
        %v4508 = vunpack.c.l.b16 %v1948
        %v4509 = vunpack.c.l.b16 %v1949
        %v4510 = vunpack.c.l.b16 %v1950
        %v4511 = vunpack.c.l.b16 %v1951
        %v4512 = vunpack.c.l.b16 %v1952
        %v4513 = vunpack.c.l.b16 %v1953
        %v4514 = vunpack.c.l.b16 %v1954
        %v4515 = vunpack.c.l.b16 %v1955
        %v4516 = vunpack.c.l.b16 %v1956
        %v4517 = vunpack.c.l.b16 %v1957
        %v4518 = vunpack.c.l.b16 %v1958
        %v4519 = vunpack.c.l.b16 %v1959
        %v4520 = vunpack.c.l.b16 %v1960
        %v4521 = vunpack.c.l.b16 %v1961
        %v4522 = vunpack.c.l.b16 %v1962
        %v4523 = vunpack.c.l.b16 %v1963
        %v4524 = vunpack.c.l.b16 %v1964
        %v4525 = vunpack.c.l.b16 %v1965
        %v4526 = vunpack.c.l.b16 %v1966
        %v4527 = vunpack.c.l.b16 %v1967
        %v4528 = vunpack.c.l.b16 %v1968
        %v4529 = vunpack.c.l.b16 %v1969
        %v4530 = vunpack.c.l.b16 %v1970
        %v4531 = vunpack.c.l.b16 %v1971
        %v4532 = vunpack.c.l.b16 %v1972
        %v4533 = vunpack.c.l.b16 %v1973
        %v4534 = vunpack.c.l.b16 %v1974
        %v4535 = vunpack.c.l.b16 %v1975
        %v4536 = vunpack.c.l.b16 %v1976
        %v4537 = vunpack.c.l.b16 %v1977
        %v4538 = vunpack.c.l.b16 %v1978
        %v4539 = vunpack.c.l.b16 %v1979
        %v4540 = vunpack.c.l.b16 %v1980
        %v4541 = vunpack.c.l.b16 %v1981
        %v4542 = vunpack.c.l.b16 %v1982
        %v4543 = vunpack.c.l.b16 %v1983
        %v4544 = vunpack.c.l.b16 %v1984
        %v4545 = vunpack.c.l.b16 %v1985
        %v4546 = vunpack.c.l.b16 %v1986
        %v4547 = vunpack.c.l.b16 %v1987
        %v4548 = vunpack.c.l.b16 %v1988
        %v4549 = vunpack.c.l.b16 %v1989
        %v4550 = vunpack.c.l.b16 %v1990
        %v4551 = vunpack.c.l.b16 %v1991
        %v4552 = vunpack.c.l.b16 %v1992
        %v4553 = vunpack.c.l.b16 %v1993
        %v4554 = vunpack.c.l.b16 %v1994
        %v4555 = vunpack.c.l.b16 %v1995
        %v4556 = vunpack.c.l.b16 %v1996
        %v4557 = vunpack.c.l.b16 %v1997
        %v4558 = vunpack.c.l.b16 %v1998
        %v4559 = vunpack.c.l.b16 %v1999
        %v4560 = vunpack.c.l.b16 %v2000
        %v4561 = vunpack.c.l.b16 %v2001
        %v4562 = vunpack.c.l.b16 %v2002
        %v4563 = vunpack.c.l.b16 %v2003
        %v4564 = vunpack.c.l.b16 %v2004
        %v4565 = vunpack.c.l.b16 %v2005
        %v4566 = vunpack.c.l.b16 %v2006
        %v4567 = vunpack.c.l.b16 %v2007
        %v4568 = vunpack.c.l.b16 %v2008
        %v4569 = vunpack.c.l.b16 %v2009
        %v4570 = vunpack.c.l.b16 %v2010
        %v4571 = vunpack.c.l.b16 %v2011
        %v4572 = vunpack.c.l.b16 %v2012
        %v4573 = vunpack.c.l.b16 %v2013
        %v4574 = vunpack.c.l.b16 %v2014
        %v4575 = vunpack.c.l.b16 %v2015
        %v4576 = vunpack.c.l.b16 %v2016
        %v4577 = vunpack.c.l.b16 %v2017
        %v4578 = vunpack.c.l.b16 %v2018
        %v4579 = vunpack.c.l.b16 %v2019
        %v4580 = vunpack.c.l.b16 %v2020
        %v4581 = vunpack.c.l.b16 %v2021
        %v4582 = vunpack.c.l.b16 %v2022
        %v4583 = vunpack.c.l.b16 %v2023
        %v4584 = vunpack.c.l.b16 %v2024
        %v4585 = vunpack.c.l.b16 %v2025
        %v4586 = vunpack.c.l.b16 %v2026
        %v4587 = vunpack.c.l.b16 %v2027
        %v4588 = vunpack.c.l.b16 %v2028
        %v4589 = vunpack.c.l.b16 %v2029
        %v4590 = vunpack.c.l.b16 %v2030
        %v4591 = vunpack.c.l.b16 %v2031
        %v4592 = vunpack.c.l.b16 %v2032
        %v4593 = vunpack.c.l.b16 %v2033
        %v4594 = vunpack.c.l.b16 %v2034
        %v4595 = vunpack.c.l.b16 %v2035
        %v4596 = vunpack.c.l.b16 %v2036
        %v4597 = vunpack.c.l.b16 %v2037
        %v4598 = vunpack.c.l.b16 %v2038
        %v4599 = vunpack.c.l.b16 %v2039
        %v4600 = vunpack.c.l.b16 %v2040
        %v4601 = vunpack.c.l.b16 %v2041
        %v4602 = vunpack.c.l.b16 %v2042
        %v4603 = vunpack.c.l.b16 %v2043
        %v4604 = vunpack.c.l.b16 %v2044
        %v4605 = vunpack.c.l.b16 %v2045
        %v4606 = vunpack.c.l.b16 %v2046
        %v4607 = vunpack.c.l.b16 %v2047
        %v4608 = vunpack.c.l.b16 %v2048
        %v4609 = vunpack.c.l.b16 %v2049
        %v4610 = vunpack.c.l.b16 %v2050
        %v4611 = vunpack.c.l.b16 %v2051
        %v4612 = vunpack.c.l.b16 %v2052
        %v4613 = vunpack.c.l.b16 %v2053
        %v4614 = vunpack.c.l.b16 %v2054
        %v4615 = vunpack.c.l.b16 %v2055
        %v4616 = vunpack.c.l.b16 %v2056
        %v4617 = vunpack.c.l.b16 %v2057
        %v4618 = vunpack.c.l.b16 %v2058
        %v4619 = vunpack.c.l.b16 %v2059
        %v4620 = vunpack.c.l.b16 %v2060
        %v4621 = vunpack.c.l.b16 %v2061
        %v4622 = vunpack.c.l.b16 %v2062
        %v4623 = vunpack.c.l.b16 %v2063
        %v4624 = vunpack.c.l.b16 %v2064
        %v4625 = vunpack.c.l.b16 %v2065
        %v4626 = vunpack.c.l.b16 %v2066
        %v4627 = vunpack.c.l.b16 %v2067
        %v4628 = vunpack.c.l.b16 %v2068
        %v4629 = vunpack.c.l.b16 %v2069
        %v4630 = vunpack.c.l.b16 %v2070
        %v4631 = vunpack.c.l.b16 %v2071
        %v4632 = vunpack.c.l.b16 %v2072
        %v4633 = vunpack.c.l.b16 %v2073
        %v4634 = vunpack.c.l.b16 %v2074
        %v4635 = vunpack.c.l.b16 %v2075
        %v4636 = vunpack.c.l.b16 %v2076
        %v4637 = vunpack.c.l.b16 %v2077
        %v4638 = vunpack.c.l.b16 %v2078
        %v4639 = vunpack.c.l.b16 %v2079
        %v4640 = vunpack.c.l.b16 %v2080
        %v4641 = vunpack.c.l.b16 %v2081
        %v4642 = vunpack.c.l.b16 %v2082
        %v4643 = vunpack.c.l.b16 %v2083
        %v4644 = vunpack.c.l.b16 %v2084
        %v4645 = vunpack.c.l.b16 %v2085
        %v4646 = vunpack.c.l.b16 %v2086
        %v4647 = vunpack.c.l.b16 %v2087
        %v4648 = vunpack.c.l.b16 %v2088
        %v4649 = vunpack.c.l.b16 %v2089
        %v4650 = vunpack.c.l.b16 %v2090
        %v4651 = vunpack.c.l.b16 %v2091
        %v4652 = vunpack.c.l.b16 %v2092
        %v4653 = vunpack.c.l.b16 %v2093
        %v4654 = vunpack.c.l.b16 %v2094
        %v4655 = vunpack.c.l.b16 %v2095
        %v4656 = vunpack.c.l.b16 %v2096
        %v4657 = vunpack.c.l.b16 %v2097
        %v4658 = vunpack.c.l.b16 %v2098
        %v4659 = vunpack.c.l.b16 %v2099
        %v4660 = vunpack.c.l.b16 %v2100
        %v4661 = vunpack.c.l.b16 %v2101
        %v4662 = vunpack.c.l.b16 %v2102
        %v4663 = vunpack.c.l.b16 %v2103
        %v4664 = vunpack.c.l.b16 %v2104
        %v4665 = vunpack.c.l.b16 %v2105
        %v4666 = vunpack.c.l.b16 %v2106
        %v4667 = vunpack.c.l.b16 %v2107
        %v4668 = vunpack.c.l.b16 %v2108
        %v4669 = vunpack.c.l.b16 %v2109
        %v4670 = vunpack.c.l.b16 %v2110
        %v4671 = vunpack.c.l.b16 %v2111
        %v4672 = vunpack.c.l.b16 %v2112
        %v4673 = vunpack.c.l.b16 %v2113
        %v4674 = vunpack.c.l.b16 %v2114
        %v4675 = vunpack.c.l.b16 %v2115
        %v4676 = vunpack.c.l.b16 %v2116
        %v4677 = vunpack.c.l.b16 %v2117
        %v4678 = vunpack.c.l.b16 %v2118
        %v4679 = vunpack.c.l.b16 %v2119
        %v4680 = vunpack.c.l.b16 %v2120
        %v4681 = vunpack.c.l.b16 %v2121
        %v4682 = vunpack.c.l.b16 %v2122
        %v4683 = vunpack.c.l.b16 %v2123
        %v4684 = vunpack.c.l.b16 %v2124
        %v4685 = vunpack.c.l.b16 %v2125
        %v4686 = vunpack.c.l.b16 %v2126
        %v4687 = vunpack.c.l.b16 %v2127
        %v4688 = vunpack.c.l.b16 %v2128
        %v4689 = vunpack.c.l.b16 %v2129
        %v4690 = vunpack.c.l.b16 %v2130
        %v4691 = vunpack.c.l.b16 %v2131
        %v4692 = vunpack.c.l.b16 %v2132
        %v4693 = vunpack.c.l.b16 %v2133
        %v4694 = vunpack.c.l.b16 %v2134
        %v4695 = vunpack.c.l.b16 %v2135
        %v4696 = vunpack.c.l.b16 %v2136
        %v4697 = vunpack.c.l.b16 %v2137
        %v4698 = vunpack.c.l.b16 %v2138
        %v4699 = vunpack.c.l.b16 %v2139
        %v4700 = vunpack.c.l.b16 %v2140
        %v4701 = vunpack.c.l.b16 %v2141
        %v4702 = vunpack.c.l.b16 %v2142
        %v4703 = vunpack.c.l.b16 %v2143
        %v4704 = vunpack.c.l.b16 %v2144
        %v4705 = vunpack.c.l.b16 %v2145
        %v4706 = vunpack.c.l.b16 %v2146
        %v4707 = vunpack.c.l.b16 %v2147
        %v4708 = vunpack.c.l.b16 %v2148
        %v4709 = vunpack.c.l.b16 %v2149
        %v4710 = vunpack.c.l.b16 %v2150
        %v4711 = vunpack.c.l.b16 %v2151
        %v4712 = vunpack.c.l.b16 %v2152
        %v4713 = vunpack.c.l.b16 %v2153
        %v4714 = vunpack.c.l.b16 %v2154
        %v4715 = vunpack.c.l.b16 %v2155
        %v4716 = vunpack.c.l.b16 %v2156
        %v4717 = vunpack.c.l.b16 %v2157
        %v4718 = vunpack.c.l.b16 %v2158
        %v4719 = vunpack.c.l.b16 %v2159
        %v4720 = vunpack.c.l.b16 %v2160
        %v4721 = vunpack.c.l.b16 %v2161
        %v4722 = vunpack.c.l.b16 %v2162
        %v4723 = vunpack.c.l.b16 %v2163
        %v4724 = vunpack.c.l.b16 %v2164
        %v4725 = vunpack.c.l.b16 %v2165
        %v4726 = vunpack.c.l.b16 %v2166
        %v4727 = vunpack.c.l.b16 %v2167
        %v4728 = vunpack.c.l.b16 %v2168
        %v4729 = vunpack.c.l.b16 %v2169
        %v4730 = vunpack.c.l.b16 %v2170
        %v4731 = vunpack.c.l.b16 %v2171
        %v4732 = vunpack.c.l.b16 %v2172
        %v4733 = vunpack.c.l.b16 %v2173
        %v4734 = vunpack.c.l.b16 %v2174
        %v4735 = vunpack.c.l.b16 %v2175
        %v4736 = vunpack.c.l.b16 %v2176
        %v4737 = vunpack.c.l.b16 %v2177
        %v4738 = vunpack.c.l.b16 %v2178
        %v4739 = vunpack.c.l.b16 %v2179
        %v4740 = vunpack.c.l.b16 %v2180
        %v4741 = vunpack.c.l.b16 %v2181
        %v4742 = vunpack.c.l.b16 %v2182
        %v4743 = vunpack.c.l.b16 %v2183
        %v4744 = vunpack.c.l.b16 %v2184
        %v4745 = vunpack.c.l.b16 %v2185
        %v4746 = vunpack.c.l.b16 %v2186
        %v4747 = vunpack.c.l.b16 %v2187
        %v4748 = vunpack.c.l.b16 %v2188
        %v4749 = vunpack.c.l.b16 %v2189
        %v4750 = vunpack.c.l.b16 %v2190
        %v4751 = vunpack.c.l.b16 %v2191
        %v4752 = vunpack.c.l.b16 %v2192
        %v4753 = vunpack.c.l.b16 %v2193
        %v4754 = vunpack.c.l.b16 %v2194
        %v4755 = vunpack.c.l.b16 %v2195
        %v4756 = vunpack.c.l.b16 %v2196
        %v4757 = vunpack.c.l.b16 %v2197
        %v4758 = vunpack.c.l.b16 %v2198
        %v4759 = vunpack.c.l.b16 %v2199
        %v4760 = vunpack.c.l.b16 %v2200
        %v4761 = vunpack.c.l.b16 %v2201
        %v4762 = vunpack.c.l.b16 %v2202
        %v4763 = vunpack.c.l.b16 %v2203
        %v4764 = vunpack.c.l.b16 %v2204
        %v4765 = vunpack.c.l.b16 %v2205
        %v4766 = vunpack.c.l.b16 %v2206
        %v4767 = vunpack.c.l.b16 %v2207
        %v4768 = vunpack.c.l.b16 %v2208
        %v4769 = vunpack.c.l.b16 %v2209
        %v4770 = vunpack.c.l.b16 %v2210
        %v4771 = vunpack.c.l.b16 %v2211
        %v4772 = vunpack.c.l.b16 %v2212
        %v4773 = vunpack.c.l.b16 %v2213
        %v4774 = vunpack.c.l.b16 %v2214
        %v4775 = vunpack.c.l.b16 %v2215
        %v4776 = vunpack.c.l.b16 %v2216
        %v4777 = vunpack.c.l.b16 %v2217
        %v4778 = vunpack.c.l.b16 %v2218
        %v4779 = vunpack.c.l.b16 %v2219
        %v4780 = vunpack.c.l.b16 %v2220
        %v4781 = vunpack.c.l.b16 %v2221
        %v4782 = vunpack.c.l.b16 %v2222
        %v4783 = vunpack.c.l.b16 %v2223
        %v4784 = vunpack.c.l.b16 %v2224
        %v4785 = vunpack.c.l.b16 %v2225
        %v4786 = vunpack.c.l.b16 %v2226
        %v4787 = vunpack.c.l.b16 %v2227
        %v4788 = vunpack.c.l.b16 %v2228
        %v4789 = vunpack.c.l.b16 %v2229
        %v4790 = vunpack.c.l.b16 %v2230
        %v4791 = vunpack.c.l.b16 %v2231
        %v4792 = vunpack.c.l.b16 %v2232
        %v4793 = vunpack.c.l.b16 %v2233
        %v4794 = vunpack.c.l.b16 %v2234
        %v4795 = vunpack.c.l.b16 %v2235
        %v4796 = vunpack.c.l.b16 %v2236
        %v4797 = vunpack.c.l.b16 %v2237
        %v4798 = vunpack.c.l.b16 %v2238
        %v4799 = vunpack.c.l.b16 %v2239
        %v4800 = vunpack.c.l.b16 %v2240
        %v4801 = vunpack.c.l.b16 %v2241
        %v4802 = vunpack.c.l.b16 %v2242
        %v4803 = vunpack.c.l.b16 %v2243
        %v4804 = vunpack.c.l.b16 %v2244
        %v4805 = vunpack.c.l.b16 %v2245
        %v4806 = vunpack.c.l.b16 %v2246
        %v4807 = vunpack.c.l.b16 %v2247
        %v4808 = vunpack.c.l.b16 %v2248
        %v4809 = vunpack.c.l.b16 %v2249
        %v4810 = vunpack.c.l.b16 %v2250
        %v4811 = vunpack.c.l.b16 %v2251
        %v4812 = vunpack.c.l.b16 %v2252
        %v4813 = vunpack.c.l.b16 %v2253
        %v4814 = vunpack.c.l.b16 %v2254
        %v4815 = vunpack.c.l.b16 %v2255
        %v4816 = vunpack.c.l.b16 %v2256
        %v4817 = vunpack.c.l.b16 %v2257
        %v4818 = vunpack.c.l.b16 %v2258
        %v4819 = vunpack.c.l.b16 %v2259
        %v4820 = vunpack.c.l.b16 %v2260
        %v4821 = vunpack.c.l.b16 %v2261
        %v4822 = vunpack.c.l.b16 %v2262
        %v4823 = vunpack.c.l.b16 %v2263
        %v4824 = vunpack.c.l.b16 %v2264
        %v4825 = vunpack.c.l.b16 %v2265
        %v4826 = vunpack.c.l.b16 %v2266
        %v4827 = vunpack.c.l.b16 %v2267
        %v4828 = vunpack.c.l.b16 %v2268
        %v4829 = vunpack.c.l.b16 %v2269
        %v4830 = vunpack.c.l.b16 %v2270
        %v4831 = vunpack.c.l.b16 %v2271
        %v4832 = vunpack.c.l.b16 %v2272
        %v4833 = vunpack.c.l.b16 %v2273
        %v4834 = vunpack.c.l.b16 %v2274
        %v4835 = vunpack.c.l.b16 %v2275
        %v4836 = vunpack.c.l.b16 %v2276
        %v4837 = vunpack.c.l.b16 %v2277
        %v4838 = vunpack.c.l.b16 %v2278
        %v4839 = vunpack.c.l.b16 %v2279
        %v4840 = vunpack.c.l.b16 %v2280
        %v4841 = vunpack.c.l.b16 %v2281
        %v4842 = vunpack.c.l.b16 %v2282
        %v4843 = vunpack.c.l.b16 %v2283
        %v4844 = vunpack.c.l.b16 %v2284
        %v4845 = vunpack.c.l.b16 %v2285
        %v4846 = vunpack.c.l.b16 %v2286
        %v4847 = vunpack.c.l.b16 %v2287
        %v4848 = vunpack.c.l.b16 %v2288
        %v4849 = vunpack.c.l.b16 %v2289
        %v4850 = vunpack.c.l.b16 %v2290
        %v4851 = vunpack.c.l.b16 %v2291
        %v4852 = vunpack.c.l.b16 %v2292
        %v4853 = vunpack.c.l.b16 %v2293
        %v4854 = vunpack.c.l.b16 %v2294
        %v4855 = vunpack.c.l.b16 %v2295
        %v4856 = vunpack.c.l.b16 %v2296
        %v4857 = vunpack.c.l.b16 %v2297
        %v4858 = vunpack.c.l.b16 %v2298
        %v4859 = vunpack.c.l.b16 %v2299
        %v4860 = vunpack.c.l.b16 %v2300
        %v4861 = vunpack.c.l.b16 %v2301
        %v4862 = vunpack.c.l.b16 %v2302
        %v4863 = vunpack.c.l.b16 %v2303
        %v4864 = vunpack.c.l.b16 %v2304
        %v4865 = vunpack.c.l.b16 %v2305
        %v4866 = vunpack.c.l.b16 %v2306
        %v4867 = vunpack.c.l.b16 %v2307
        %v4868 = vunpack.c.l.b16 %v2308
        %v4869 = vunpack.c.l.b16 %v2309
        %v4870 = vunpack.c.l.b16 %v2310
        %v4871 = vunpack.c.l.b16 %v2311
        %v4872 = vunpack.c.l.b16 %v2312
        %v4873 = vunpack.c.l.b16 %v2313
        %v4874 = vunpack.c.l.b16 %v2314
        %v4875 = vunpack.c.l.b16 %v2315
        %v4876 = vunpack.c.l.b16 %v2316
        %v4877 = vunpack.c.l.b16 %v2317
        %v4878 = vunpack.c.l.b16 %v2318
        %v4879 = vunpack.c.l.b16 %v2319
        %v4880 = vunpack.c.l.b16 %v2320
        %v4881 = vunpack.c.l.b16 %v2321
        %v4882 = vunpack.c.l.b16 %v2322
        %v4883 = vunpack.c.l.b16 %v2323
        %v4884 = vunpack.c.l.b16 %v2324
        %v4885 = vunpack.c.l.b16 %v2325
        %v4886 = vunpack.c.l.b16 %v2326
        %v4887 = vunpack.c.l.b16 %v2327
        %v4888 = vunpack.c.l.b16 %v2328
        %v4889 = vunpack.c.l.b16 %v2329
        %v4890 = vunpack.c.l.b16 %v2330
        %v4891 = vunpack.c.l.b16 %v2331
        %v4892 = vunpack.c.l.b16 %v2332
        %v4893 = vunpack.c.l.b16 %v2333
        %v4894 = vunpack.c.l.b16 %v2334
        %v4895 = vunpack.c.l.b16 %v2335
        %v4896 = vunpack.c.l.b16 %v2336
        %v4897 = vunpack.c.l.b16 %v2337
        %v4898 = vunpack.c.l.b16 %v2338
        %v4899 = vunpack.c.l.b16 %v2339
        %v4900 = vunpack.c.l.b16 %v2340
        %v4901 = vunpack.c.l.b16 %v2341
        %v4902 = vunpack.c.l.b16 %v2342
        %v4903 = vunpack.c.l.b16 %v2343
        %v4904 = vunpack.c.l.b16 %v2344
        %v4905 = vunpack.c.l.b16 %v2345
        %v4906 = vunpack.c.l.b16 %v2346
        %v4907 = vunpack.c.l.b16 %v2347
        %v4908 = vunpack.c.l.b16 %v2348
        %v4909 = vunpack.c.l.b16 %v2349
        %v4910 = vunpack.c.l.b16 %v2350
        %v4911 = vunpack.c.l.b16 %v2351
        %v4912 = vunpack.c.l.b16 %v2352
        %v4913 = vunpack.c.l.b16 %v2353
        %v4914 = vunpack.c.l.b16 %v2354
        %v4915 = vunpack.c.l.b16 %v2355
        %v4916 = vunpack.c.l.b16 %v2356
        %v4917 = vunpack.c.l.b16 %v2357
        %v4918 = vunpack.c.l.b16 %v2358
        %v4919 = vunpack.c.l.b16 %v2359
        %v4920 = vunpack.c.l.b16 %v2360
        %v4921 = vunpack.c.l.b16 %v2361
        %v4922 = vunpack.c.l.b16 %v2362
        %v4923 = vunpack.c.l.b16 %v2363
        %v4924 = vunpack.c.l.b16 %v2364
        %v4925 = vunpack.c.l.b16 %v2365
        %v4926 = vunpack.c.l.b16 %v2366
        %v4927 = vunpack.c.l.b16 %v2367
        %v4928 = vunpack.c.l.b16 %v2368
        %v4929 = vunpack.c.l.b16 %v2369
        %v4930 = vunpack.c.l.b16 %v2370
        %v4931 = vunpack.c.l.b16 %v2371
        %v4932 = vunpack.c.l.b16 %v2372
        %v4933 = vunpack.c.l.b16 %v2373
        %v4934 = vunpack.c.l.b16 %v2374
        %v4935 = vunpack.c.l.b16 %v2375
        %v4936 = vunpack.c.l.b16 %v2376
        %v4937 = vunpack.c.l.b16 %v2377
        %v4938 = vunpack.c.l.b16 %v2378
        %v4939 = vunpack.c.l.b16 %v2379
        %v4940 = vunpack.c.l.b16 %v2380
        %v4941 = vunpack.c.l.b16 %v2381
        %v4942 = vunpack.c.l.b16 %v2382
        %v4943 = vunpack.c.l.b16 %v2383
        %v4944 = vunpack.c.l.b16 %v2384
        %v4945 = vunpack.c.l.b16 %v2385
        %v4946 = vunpack.c.l.b16 %v2386
        %v4947 = vunpack.c.l.b16 %v2387
        %v4948 = vunpack.c.l.b16 %v2388
        %v4949 = vunpack.c.l.b16 %v2389
        %v4950 = vunpack.c.l.b16 %v2390
        %v4951 = vunpack.c.l.b16 %v2391
        %v4952 = vunpack.c.l.b16 %v2392
        %v4953 = vunpack.c.l.b16 %v2393
        %v4954 = vunpack.c.l.b16 %v2394
        %v4955 = vunpack.c.l.b16 %v2395
        %v4956 = vunpack.c.l.b16 %v2396
        %v4957 = vunpack.c.l.b16 %v2397
        %v4958 = vunpack.c.l.b16 %v2398
        %v4959 = vunpack.c.l.b16 %v2399
        %v4960 = vunpack.c.l.b16 %v2400
        %v4961 = vunpack.c.l.b16 %v2401
        %v4962 = vunpack.c.l.b16 %v2402
        %v4963 = vunpack.c.l.b16 %v2403
        %v4964 = vunpack.c.l.b16 %v2404
        %v4965 = vunpack.c.l.b16 %v2405
        %v4966 = vunpack.c.l.b16 %v2406
        %v4967 = vunpack.c.l.b16 %v2407
        %v4968 = vunpack.c.l.b16 %v2408
        %v4969 = vunpack.c.l.b16 %v2409
        %v4970 = vunpack.c.l.b16 %v2410
        %v4971 = vunpack.c.l.b16 %v2411
        %v4972 = vunpack.c.l.b16 %v2412
        %v4973 = vunpack.c.l.b16 %v2413
        %v4974 = vunpack.c.l.b16 %v2414
        %v4975 = vunpack.c.l.b16 %v2415
        %v4976 = vunpack.c.l.b16 %v2416
        %v4977 = vunpack.c.l.b16 %v2417
        %v4978 = vunpack.c.l.b16 %v2418
        %v4979 = vunpack.c.l.b16 %v2419
        %v4980 = vunpack.c.l.b16 %v2420
        %v4981 = vunpack.c.l.b16 %v2421
        %v4982 = vunpack.c.l.b16 %v2422
        %v4983 = vunpack.c.l.b16 %v2423
        %v4984 = vunpack.c.l.b16 %v2424
        %v4985 = vunpack.c.l.b16 %v2425
        %v4986 = vunpack.c.l.b16 %v2426
        %v4987 = vunpack.c.l.b16 %v2427
        %v4988 = vunpack.c.l.b16 %v2428
        %v4989 = vunpack.c.l.b16 %v2429
        %v4990 = vunpack.c.l.b16 %v2430
        %v4991 = vunpack.c.l.b16 %v2431
        %v4992 = vunpack.c.l.b16 %v2432
        %v4993 = vunpack.c.l.b16 %v2433
        %v4994 = vunpack.c.l.b16 %v2434
        %v4995 = vunpack.c.l.b16 %v2435
        %v4996 = vunpack.c.l.b16 %v2436
        %v4997 = vunpack.c.l.b16 %v2437
        %v4998 = vunpack.c.l.b16 %v2438
        %v4999 = vunpack.c.l.b16 %v2439
        %v5000 = vunpack.c.l.b16 %v2440
        %v5001 = vunpack.c.l.b16 %v2441
        %v5002 = vunpack.c.l.b16 %v2442
        %v5003 = vunpack.c.l.b16 %v2443
        %v5004 = vunpack.c.l.b16 %v2444
        %v5005 = vunpack.c.l.b16 %v2445
        %v5006 = vunpack.c.l.b16 %v2446
        %v5007 = vunpack.c.l.b16 %v2447
        %v5008 = vunpack.c.l.b16 %v2448
        %v5009 = vunpack.c.l.b16 %v2449
        %v5010 = vunpack.c.l.b16 %v2450
        %v5011 = vunpack.c.l.b16 %v2451
        %v5012 = vunpack.c.l.b16 %v2452
        %v5013 = vunpack.c.l.b16 %v2453
        %v5014 = vunpack.c.l.b16 %v2454
        %v5015 = vunpack.c.l.b16 %v2455
        %v5016 = vunpack.c.l.b16 %v2456
        %v5017 = vunpack.c.l.b16 %v2457
        %v5018 = vunpack.c.l.b16 %v2458
        %v5019 = vunpack.c.l.b16 %v2459
        %v5020 = vunpack.c.l.b16 %v2460
        %v5021 = vunpack.c.l.b16 %v2461
        %v5022 = vunpack.c.l.b16 %v2462
        %v5023 = vunpack.c.l.b16 %v2463
        %v5024 = vunpack.c.l.b16 %v2464
        %v5025 = vunpack.c.l.b16 %v2465
        %v5026 = vunpack.c.l.b16 %v2466
        %v5027 = vunpack.c.l.b16 %v2467
        %v5028 = vunpack.c.l.b16 %v2468
        %v5029 = vunpack.c.l.b16 %v2469
        %v5030 = vunpack.c.l.b16 %v2470
        %v5031 = vunpack.c.l.b16 %v2471
        %v5032 = vunpack.c.l.b16 %v2472
        %v5033 = vunpack.c.l.b16 %v2473
        %v5034 = vunpack.c.l.b16 %v2474
        %v5035 = vunpack.c.l.b16 %v2475
        %v5036 = vunpack.c.l.b16 %v2476
        %v5037 = vunpack.c.l.b16 %v2477
        %v5038 = vunpack.c.l.b16 %v2478
        %v5039 = vunpack.c.l.b16 %v2479
        %v5040 = vunpack.c.l.b16 %v2480
        %v5041 = vunpack.c.l.b16 %v2481
        %v5042 = vunpack.c.l.b16 %v2482
        %v5043 = vunpack.c.l.b16 %v2483
        %v5044 = vunpack.c.l.b16 %v2484
        %v5045 = vunpack.c.l.b16 %v2485
        %v5046 = vunpack.c.l.b16 %v2486
        %v5047 = vunpack.c.l.b16 %v2487
        %v5048 = vunpack.c.l.b16 %v2488
        %v5049 = vunpack.c.l.b16 %v2489
        %v5050 = vunpack.c.l.b16 %v2490
        %v5051 = vunpack.c.l.b16 %v2491
        %v5052 = vunpack.c.l.b16 %v2492
        %v5053 = vunpack.c.l.b16 %v2493
        %v5054 = vunpack.c.l.b16 %v2494
        %v5055 = vunpack.c.l.b16 %v2495
        %v5056 = vunpack.c.l.b16 %v2496
        %v5057 = vunpack.c.l.b16 %v2497
        %v5058 = vunpack.c.l.b16 %v2498
        %v5059 = vunpack.c.l.b16 %v2499
        %v5060 = vunpack.c.l.b16 %v2500
        %v5061 = vunpack.c.l.b16 %v2501
        %v5062 = vunpack.c.l.b16 %v2502
        %v5063 = vunpack.c.l.b16 %v2503
        %v5064 = vunpack.c.l.b16 %v2504
        %v5065 = vunpack.c.l.b16 %v2505
        %v5066 = vunpack.c.l.b16 %v2506
        %v5067 = vunpack.c.l.b16 %v2507
        %v5068 = vunpack.c.l.b16 %v2508
        %v5069 = vunpack.c.l.b16 %v2509
        %v5070 = vunpack.c.l.b16 %v2510
        %v5071 = vunpack.c.l.b16 %v2511
        %v5072 = vunpack.c.l.b16 %v2512
        %v5073 = vunpack.c.l.b16 %v2513
        %v5074 = vunpack.c.l.b16 %v2514
        %v5075 = vunpack.c.l.b16 %v2515
        %v5076 = vunpack.c.l.b16 %v2516
        %v5077 = vunpack.c.l.b16 %v2517
        %v5078 = vunpack.c.l.b16 %v2518
        %v5079 = vunpack.c.l.b16 %v2519
        %v5080 = vunpack.c.l.b16 %v2520
        %v5081 = vunpack.c.l.b16 %v2521
        %v5082 = vunpack.c.l.b16 %v2522
        %v5083 = vunpack.c.l.b16 %v2523
        %v5084 = vunpack.c.l.b16 %v2524
        %v5085 = vunpack.c.l.b16 %v2525
        %v5086 = vunpack.c.l.b16 %v2526
        %v5087 = vunpack.c.l.b16 %v2527
        %v5088 = vunpack.c.l.b16 %v2528
        %v5089 = vunpack.c.l.b16 %v2529
        %v5090 = vunpack.c.l.b16 %v2530
        %v5091 = vunpack.c.l.b16 %v2531
        %v5092 = vunpack.c.l.b16 %v2532
        %v5093 = vunpack.c.l.b16 %v2533
        %v5094 = vunpack.c.l.b16 %v2534
        %v5095 = vunpack.c.l.b16 %v2535
        %v5096 = vunpack.c.l.b16 %v2536
        %v5097 = vunpack.c.l.b16 %v2537
        %v5098 = vunpack.c.l.b16 %v2538
        %v5099 = vunpack.c.l.b16 %v2539
        %v5100 = vunpack.c.l.b16 %v2540
        %v5101 = vunpack.c.l.b16 %v2541
        %v5102 = vunpack.c.l.b16 %v2542
        %v5103 = vunpack.c.l.b16 %v2543
        %v5104 = vunpack.c.l.b16 %v2544
        %v5105 = vunpack.c.l.b16 %v2545
        %v5106 = vunpack.c.l.b16 %v2546
        %v5107 = vunpack.c.l.b16 %v2547
        %v5108 = vunpack.c.l.b16 %v2548
        %v5109 = vunpack.c.l.b16 %v2549
        %v5110 = vunpack.c.l.b16 %v2550
        %v5111 = vunpack.c.l.b16 %v2551
        %v5112 = vunpack.c.l.b16 %v2552
        %v5113 = vunpack.c.l.b16 %v2553
        %v5114 = vunpack.c.l.b16 %v2554
        %v5115 = vunpack.c.l.b16 %v2555
        %v5116 = vunpack.c.l.b16 %v2556
        %v5117 = vunpack.c.l.b16 %v2557
        %v5118 = vunpack.c.l.b16 %v2558
        %v5119 = vunpack.c.l.b16 %v2559
        %v5120 = vunpack.c.l.b16 %v2560
        %v5121 = vunpack.c.l.b16 %v2561
        %v5122 = vunpack.c.l.b16 %v2562
        %v5123 = vunpack.c.l.b16 %v2563
        %v5124 = vunpack.c.l.b16 %v2564
        %v5125 = vunpack.c.l.b16 %v2565
        %v5126 = vunpack.c.l.b16 %v2566
        %v5127 = vunpack.c.l.b16 %v2567
        %v5128 = vunpack.c.l.b16 %v2568
        %v5129 = vunpack.c.l.b16 %v2569
        %v5130 = vunpack.c.l.b16 %v2570
        %v5131 = vunpack.c.l.b16 %v2571
        %v5132 = vunpack.c.l.b16 %v2572
        %v5133 = vunpack.c.l.b16 %v2573
        %v5134 = vunpack.c.l.b16 %v2574
        %v5135 = vunpack.c.l.b16 %v2575
        %v5136 = vunpack.c.l.b16 %v2576
        %v5137 = vunpack.c.l.b16 %v2577
        %v5138 = vunpack.c.l.b16 %v2578
        %v5139 = vunpack.c.l.b16 %v2579
        %v5140 = vunpack.c.l.b16 %v2580
        %v5141 = vunpack.c.l.b16 %v2581
        %v5142 = vunpack.c.l.b16 %v2582
        %v5143 = vunpack.c.l.b16 %v2583
        %v5144 = vunpack.c.l.b16 %v2584
        %v5145 = vunpack.c.l.b16 %v2585
        %v5146 = vunpack.c.l.b16 %v2586
        %v5147 = vunpack.c.l.b16 %v2587
        %v5148 = vunpack.c.l.b16 %v2588
        %v5149 = vunpack.c.l.b16 %v2589
        %v5150 = vunpack.c.l.b16 %v2590
        %v5151 = vunpack.c.l.b16 %v2591
        %v5152 = vunpack.c.l.b16 %v2592
        %v5153 = vunpack.c.l.b16 %v2593
        %v5154 = vunpack.c.l.b16 %v2594
        %v5155 = vunpack.c.l.b16 %v2595
        %v5156 = vunpack.c.l.b16 %v2596
        %v5157 = vunpack.c.l.b16 %v2597
        %v5158 = vunpack.c.l.b16 %v2598
        %v5159 = vunpack.c.l.b16 %v2599
        %v5160 = vunpack.c.l.b16 %v2600
        %v5161 = vunpack.c.l.b16 %v2601
        %v5162 = vunpack.c.l.b16 %v2602
        %v5163 = vunpack.c.l.b16 %v2603
        %v5164 = vunpack.c.l.b16 %v2604
        %v5165 = vunpack.c.l.b16 %v2605
        %v5166 = vunpack.c.l.b16 %v2606
        %v5167 = vunpack.c.l.b16 %v2607
        %v5168 = vunpack.c.l.b16 %v2608
        %v5169 = vunpack.c.l.b16 %v2609
        %v5170 = vunpack.c.l.b16 %v2610
        %v5171 = vunpack.c.l.b16 %v2611
        %v5172 = vunpack.c.l.b16 %v2612
        %v5173 = vunpack.c.l.b16 %v2613
        %v5174 = vunpack.c.l.b16 %v2614
        %v5175 = vunpack.c.l.b16 %v2615
        %v5176 = vunpack.c.l.b16 %v2616
        %v5177 = vunpack.c.l.b16 %v2617
        %v5178 = vunpack.c.l.b16 %v2618
        %v5179 = vunpack.c.l.b16 %v2619
        %v5180 = vunpack.c.l.b16 %v2620
        %v5181 = vunpack.c.l.b16 %v2621
        %v5182 = vunpack.c.l.b16 %v2622
        %v5183 = vunpack.c.l.b16 %v2623
        %v5184 = vunpack.c.l.b16 %v2624
        %v5185 = vunpack.c.l.b16 %v2625
        %v5186 = vunpack.c.l.b16 %v2626
        %v5187 = vunpack.c.l.b16 %v2627
        %v5188 = vunpack.c.l.b16 %v2628
        %v5189 = vunpack.c.l.b16 %v2629
        %v5190 = vunpack.c.l.b16 %v2630
        %v5191 = vunpack.c.l.b16 %v2631
        %v5192 = vunpack.c.l.b16 %v2632
        %v5193 = vunpack.c.l.b16 %v2633
        %v5194 = vunpack.c.l.b16 %v2634
        %v5195 = vunpack.c.l.b16 %v2635
        %v5196 = vunpack.c.l.b16 %v2636
        %v5197 = vunpack.c.l.b16 %v2637
        %v5198 = vunpack.c.l.b16 %v2638
        %v5199 = vunpack.c.l.b16 %v2639
        %v5200 = vunpack.c.l.b16 %v2640
        %v5201 = vunpack.c.l.b16 %v2641
        %v5202 = vunpack.c.l.b16 %v2642
        %v5203 = vunpack.c.l.b16 %v2643
        %v5204 = vunpack.c.l.b16 %v2644
        %v5205 = vunpack.c.l.b16 %v2645
        %v5206 = vunpack.c.l.b16 %v2646
        %v5207 = vunpack.c.l.b16 %v2647
        %v5208 = vunpack.c.l.b16 %v2648
        %v5209 = vunpack.c.l.b16 %v2649
        %v5210 = vunpack.c.l.b16 %v2650
        %v5211 = vunpack.c.l.b16 %v2651
        %v5212 = vunpack.c.l.b16 %v2652
        %v5213 = vunpack.c.l.b16 %v2653
        %v5214 = vunpack.c.l.b16 %v2654
        %v5215 = vunpack.c.l.b16 %v2655
        %v5216 = vunpack.c.l.b16 %v2656
        %v5217 = vunpack.c.l.b16 %v2657
        %v5218 = vunpack.c.l.b16 %v2658
        %v5219 = vunpack.c.l.b16 %v2659
        %v5220 = vunpack.c.l.b16 %v2660
        %v5221 = vunpack.c.l.b16 %v2661
        %v5222 = vunpack.c.l.b16 %v2662
        %v5223 = vunpack.c.l.b16 %v2663
        %v5224 = vunpack.c.l.b16 %v2664
        %v5225 = vunpack.c.l.b16 %v2665
        %v5226 = vunpack.c.l.b16 %v2666
        %v5227 = vunpack.c.l.b16 %v2667
        %v5228 = vunpack.c.l.b16 %v2668
        %v5229 = vunpack.c.l.b16 %v2669
        %v5230 = vunpack.c.l.b16 %v2670
        %v5231 = vunpack.c.l.b16 %v2671
        %v5232 = vunpack.c.l.b16 %v2672
        %v5233 = vunpack.c.l.b16 %v2673
        %v5234 = vunpack.c.l.b16 %v2674
        %v5235 = vunpack.c.l.b16 %v2675
        %v5236 = vunpack.c.l.b16 %v2676
        %v5237 = vunpack.c.l.b16 %v2677
        %v5238 = vunpack.c.l.b16 %v2678
        %v5239 = vunpack.c.l.b16 %v2679
        %v5240 = vunpack.c.l.b16 %v2680
        %v5241 = vunpack.c.l.b16 %v2681
        %v5242 = vunpack.c.l.b16 %v2682
        %v5243 = vunpack.c.l.b16 %v2683
        %v5244 = vunpack.c.l.b16 %v2684
        %v5245 = vunpack.c.l.b16 %v2685
        %v5246 = vunpack.c.l.b16 %v2686
        %v5247 = vunpack.c.l.b16 %v2687
        %v5248 = vunpack.c.l.b16 %v2688
        %v5249 = vunpack.c.l.b16 %v2689
        %v5250 = vunpack.c.l.b16 %v2690
        %v5251 = vunpack.c.l.b16 %v2691
        %v5252 = vunpack.c.l.b16 %v2692
        %v5253 = vunpack.c.l.b16 %v2693
        %v5254 = vunpack.c.l.b16 %v2694
        %v5255 = vunpack.c.l.b16 %v2695
        %v5256 = vunpack.c.l.b16 %v2696
        %v5257 = vunpack.c.l.b16 %v2697
        %v5258 = vunpack.c.l.b16 %v2698
        %v5259 = vunpack.c.l.b16 %v2699
        %v5260 = vunpack.c.l.b16 %v2700
        %v5261 = vunpack.c.l.b16 %v2701
        %v5262 = vunpack.c.l.b16 %v2702
        %v5263 = vunpack.c.l.b16 %v2703
        %v5264 = vunpack.c.l.b16 %v2704
        %v5265 = vunpack.c.l.b16 %v2705
        %v5266 = vunpack.c.l.b16 %v2706
        %v5267 = vunpack.c.l.b16 %v2707
        %v5268 = vunpack.c.l.b16 %v2708
        %v5269 = vunpack.c.l.b16 %v2709
        %v5270 = vunpack.c.l.b16 %v2710
        %v5271 = vunpack.c.l.b16 %v2711
        %v5272 = vunpack.c.l.b16 %v2712
        %v5273 = vunpack.c.l.b16 %v2713
        %v5274 = vunpack.c.l.b16 %v2714
        %v5275 = vunpack.c.l.b16 %v2715
        %v5276 = vunpack.c.l.b16 %v2716
        %v5277 = vunpack.c.l.b16 %v2717
        %v5278 = vunpack.c.l.b16 %v2718
        %v5279 = vunpack.c.l.b16 %v2719
        %v5280 = vunpack.c.l.b16 %v2720
        %v5281 = vunpack.c.l.b16 %v2721
        %v5282 = vunpack.c.l.b16 %v2722
        %v5283 = vunpack.c.l.b16 %v2723
        %v5284 = vunpack.c.l.b16 %v2724
        %v5285 = vunpack.c.l.b16 %v2725
        %v5286 = vunpack.c.l.b16 %v2726
        %v5287 = vunpack.c.l.b16 %v2727
        %v5288 = vunpack.c.l.b16 %v2728
        %v5289 = vunpack.c.l.b16 %v2729
        %v5290 = vunpack.c.l.b16 %v2730
        %v5291 = vunpack.c.l.b16 %v2731
        %v5292 = vunpack.c.l.b16 %v2732
        %v5293 = vunpack.c.l.b16 %v2733
        %v5294 = vunpack.c.l.b16 %v2734
        %v5295 = vunpack.c.l.b16 %v2735
        %v5296 = vunpack.c.l.b16 %v2736
        %v5297 = vunpack.c.l.b16 %v2737
        %v5298 = vunpack.c.l.b16 %v2738
        %v5299 = vunpack.c.l.b16 %v2739
        %v5300 = vunpack.c.l.b16 %v2740
        %v5301 = vunpack.c.l.b16 %v2741
        %v5302 = vunpack.c.l.b16 %v2742
        %v5303 = vunpack.c.l.b16 %v2743
        %v5304 = vunpack.c.l.b16 %v2744
        %v5305 = vunpack.c.l.b16 %v2745
        %v5306 = vunpack.c.l.b16 %v2746
        %v5307 = vunpack.c.l.b16 %v2747
        %v5308 = vunpack.c.l.b16 %v2748
        %v5309 = vunpack.c.l.b16 %v2749
        %v5310 = vunpack.c.l.b16 %v2750
        %v5311 = vunpack.c.l.b16 %v2751
        %v5312 = vunpack.c.l.b16 %v2752
        %v5313 = vunpack.c.l.b16 %v2753
        %v5314 = vunpack.c.l.b16 %v2754
        %v5315 = vunpack.c.l.b16 %v2755
        %v5316 = vunpack.c.l.b16 %v2756
        %v5317 = vunpack.c.l.b16 %v2757
        %v5318 = vunpack.c.l.b16 %v2758
        %v5319 = vunpack.c.l.b16 %v2759
        %v5320 = vunpack.c.l.b16 %v2760
        %v5321 = vunpack.c.l.b16 %v2761
        %v5322 = vunpack.c.l.b16 %v2762
        %v5323 = vunpack.c.l.b16 %v2763
        %v5324 = vunpack.c.l.b16 %v2764
        %v5325 = vunpack.c.l.b16 %v2765
        %v5326 = vunpack.c.l.b16 %v2766
        %v5327 = vunpack.c.l.b16 %v2767
        %v5328 = vunpack.c.l.b16 %v2768
        %v5329 = vunpack.c.l.b16 %v2769
        %v5330 = vunpack.c.l.b16 %v2770
        %v5331 = vunpack.c.l.b16 %v2771
        %v5332 = vunpack.c.l.b16 %v2772
        %v5333 = vunpack.c.l.b16 %v2773
        %v5334 = vunpack.c.l.b16 %v2774
        %v5335 = vunpack.c.l.b16 %v2775
        %v5336 = vunpack.c.l.b16 %v2776
        %v5337 = vunpack.c.l.b16 %v2777
        %v5338 = vunpack.c.l.b16 %v2778
        %v5339 = vunpack.c.l.b16 %v2779
        %v5340 = vunpack.c.l.b16 %v2780
        %v5341 = vunpack.c.l.b16 %v2781
        %v5342 = vunpack.c.l.b16 %v2782
        %v5343 = vunpack.c.l.b16 %v2783
        %v5344 = vunpack.c.l.b16 %v2784
        %v5345 = vunpack.c.l.b16 %v2785
        %v5346 = vunpack.c.l.b16 %v2786
        %v5347 = vunpack.c.l.b16 %v2787
        %v5348 = vunpack.c.l.b16 %v2788
        %v5349 = vunpack.c.l.b16 %v2789
        %v5350 = vunpack.c.l.b16 %v2790
        %v5351 = vunpack.c.l.b16 %v2791
        %v5352 = vunpack.c.l.b16 %v2792
        %v5353 = vunpack.c.l.b16 %v2793
        %v5354 = vunpack.c.l.b16 %v2794
        %v5355 = vunpack.c.l.b16 %v2795
        %v5356 = vunpack.c.l.b16 %v2796
        %v5357 = vunpack.c.l.b16 %v2797
        %v5358 = vunpack.c.l.b16 %v2798
        %v5359 = vunpack.c.l.b16 %v2799
        %v5360 = vunpack.c.l.b16 %v2800
        %v5361 = vunpack.c.l.b16 %v2801
        %v5362 = vunpack.c.l.b16 %v2802
        %v5363 = vunpack.c.l.b16 %v2803
        %v5364 = vunpack.c.l.b16 %v2804
        %v5365 = vunpack.c.l.b16 %v2805
        %v5366 = vunpack.c.l.b16 %v2806
        %v5367 = vunpack.c.l.b16 %v2807
        %v5368 = vunpack.c.l.b16 %v2808
        %v5369 = vunpack.c.l.b16 %v2809
        %v5370 = vunpack.c.l.b16 %v2810
        %v5371 = vunpack.c.l.b16 %v2811
        %v5372 = vunpack.c.l.b16 %v2812
        %v5373 = vunpack.c.l.b16 %v2813
        %v5374 = vunpack.c.l.b16 %v2814
        %v5375 = vunpack.c.l.b16 %v2815
        %v5376 = vunpack.c.l.b16 %v2816
        %v5377 = vunpack.c.l.b16 %v2817
        %v5378 = vunpack.c.l.b16 %v2818
        %v5379 = vunpack.c.l.b16 %v2819
        %v5380 = vunpack.c.l.b16 %v2820
        %v5381 = vunpack.c.l.b16 %v2821
        %v5382 = vunpack.c.l.b16 %v2822
        %v5383 = vunpack.c.l.b16 %v2823
        %v5384 = vunpack.c.l.b16 %v2824
        %v5385 = vunpack.c.l.b16 %v2825
        %v5386 = vunpack.c.l.b16 %v2826
        %v5387 = vunpack.c.l.b16 %v2827
        %v5388 = vunpack.c.l.b16 %v2828
        %v5389 = vunpack.c.l.b16 %v2829
        %v5390 = vunpack.c.l.b16 %v2830
        %v5391 = vunpack.c.l.b16 %v2831
        %v5392 = vunpack.c.l.b16 %v2832
        %v5393 = vunpack.c.l.b16 %v2833
        %v5394 = vunpack.c.l.b16 %v2834
        %v5395 = vunpack.c.l.b16 %v2835
        %v5396 = vunpack.c.l.b16 %v2836
        %v5397 = vunpack.c.l.b16 %v2837
        %v5398 = vunpack.c.l.b16 %v2838
        %v5399 = vunpack.c.l.b16 %v2839
        %v5400 = vunpack.c.l.b16 %v2840
        %v5401 = vunpack.c.l.b16 %v2841
        %v5402 = vunpack.c.l.b16 %v2842
        %v5403 = vunpack.c.l.b16 %v2843
        %v5404 = vunpack.c.l.b16 %v2844
        %v5405 = vunpack.c.l.b16 %v2845
        %v5406 = vunpack.c.l.b16 %v2846
        %v5407 = vunpack.c.l.b16 %v2847
        %v5408 = vunpack.c.l.b16 %v2848
        %v5409 = vunpack.c.l.b16 %v2849
        %v5410 = vunpack.c.l.b16 %v2850
        %v5411 = vunpack.c.l.b16 %v2851
        %v5412 = vunpack.c.l.b16 %v2852
        %v5413 = vunpack.c.l.b16 %v2853
        %v5414 = vunpack.c.l.b16 %v2854
        %v5415 = vunpack.c.l.b16 %v2855
        %v5416 = vunpack.c.l.b16 %v2856
        %v5417 = vunpack.c.l.b16 %v2857
        %v5418 = vunpack.c.l.b16 %v2858
        %v5419 = vunpack.c.l.b16 %v2859
        %v5420 = vunpack.c.l.b16 %v2860
        %v5421 = vunpack.c.l.b16 %v2861
        %v5422 = vunpack.c.l.b16 %v2862
        %v5423 = vunpack.c.l.b16 %v2863
        %v5424 = vunpack.c.l.b16 %v2864
        %v5425 = vunpack.c.l.b16 %v2865
        %v5426 = vunpack.c.l.b16 %v2866
        %v5427 = vunpack.c.l.b16 %v2867
        %v5428 = vunpack.c.l.b16 %v2868
        %v5429 = vunpack.c.l.b16 %v2869
        %v5430 = vunpack.c.l.b16 %v2870
        %v5431 = vunpack.c.l.b16 %v2871
        %v5432 = vunpack.c.l.b16 %v2872
        %v5433 = vunpack.c.l.b16 %v2873
        %v5434 = vunpack.c.l.b16 %v2874
        %v5435 = vunpack.c.l.b16 %v2875
        %v5436 = vunpack.c.l.b16 %v2876
        %v5437 = vunpack.c.l.b16 %v2877
        %v5438 = vunpack.c.l.b16 %v2878
        %v5439 = vunpack.c.l.b16 %v2879
        %v5440 = vunpack.c.l.b16 %v2880
        %v5441 = vunpack.c.l.b16 %v2881
        %v5442 = vpack.c.b16 %v4163, %v4162
        %v5443 = vpack.c.b16 %v4165, %v4164
        %v5444 = vpack.c.b16 %v4167, %v4166
        %v5445 = vpack.c.b16 %v4169, %v4168
        %v5446 = vpack.c.b16 %v4171, %v4170
        %v5447 = vpack.c.b16 %v4173, %v4172
        %v5448 = vpack.c.b16 %v4175, %v4174
        %v5449 = vpack.c.b16 %v4177, %v4176
        %v5450 = vpack.c.b16 %v4179, %v4178
        %v5451 = vpack.c.b16 %v4181, %v4180
        %v5452 = vpack.c.b16 %v4183, %v4182
        %v5453 = vpack.c.b16 %v4185, %v4184
        %v5454 = vpack.c.b16 %v4187, %v4186
        %v5455 = vpack.c.b16 %v4189, %v4188
        %v5456 = vpack.c.b16 %v4191, %v4190
        %v5457 = vpack.c.b16 %v4193, %v4192
        %v5458 = vpack.c.b16 %v4195, %v4194
        %v5459 = vpack.c.b16 %v4197, %v4196
        %v5460 = vpack.c.b16 %v4199, %v4198
        %v5461 = vpack.c.b16 %v4201, %v4200
        %v5462 = vpack.c.b16 %v4203, %v4202
        %v5463 = vpack.c.b16 %v4205, %v4204
        %v5464 = vpack.c.b16 %v4207, %v4206
        %v5465 = vpack.c.b16 %v4209, %v4208
        %v5466 = vpack.c.b16 %v4211, %v4210
        %v5467 = vpack.c.b16 %v4213, %v4212
        %v5468 = vpack.c.b16 %v4215, %v4214
        %v5469 = vpack.c.b16 %v4217, %v4216
        %v5470 = vpack.c.b16 %v4219, %v4218
        %v5471 = vpack.c.b16 %v4221, %v4220
        %v5472 = vpack.c.b16 %v4223, %v4222
        %v5473 = vpack.c.b16 %v4225, %v4224
        %v5474 = vpack.c.b16 %v4227, %v4226
        %v5475 = vpack.c.b16 %v4229, %v4228
        %v5476 = vpack.c.b16 %v4231, %v4230
        %v5477 = vpack.c.b16 %v4233, %v4232
        %v5478 = vpack.c.b16 %v4235, %v4234
        %v5479 = vpack.c.b16 %v4237, %v4236
        %v5480 = vpack.c.b16 %v4239, %v4238
        %v5481 = vpack.c.b16 %v4241, %v4240
        %v5482 = vpack.c.b16 %v4243, %v4242
        %v5483 = vpack.c.b16 %v4245, %v4244
        %v5484 = vpack.c.b16 %v4247, %v4246
        %v5485 = vpack.c.b16 %v4249, %v4248
        %v5486 = vpack.c.b16 %v4251, %v4250
        %v5487 = vpack.c.b16 %v4253, %v4252
        %v5488 = vpack.c.b16 %v4255, %v4254
        %v5489 = vpack.c.b16 %v4257, %v4256
        %v5490 = vpack.c.b16 %v4259, %v4258
        %v5491 = vpack.c.b16 %v4261, %v4260
        %v5492 = vpack.c.b16 %v4263, %v4262
        %v5493 = vpack.c.b16 %v4265, %v4264
        %v5494 = vpack.c.b16 %v4267, %v4266
        %v5495 = vpack.c.b16 %v4269, %v4268
        %v5496 = vpack.c.b16 %v4271, %v4270
        %v5497 = vpack.c.b16 %v4273, %v4272
        %v5498 = vpack.c.b16 %v4275, %v4274
        %v5499 = vpack.c.b16 %v4277, %v4276
        %v5500 = vpack.c.b16 %v4279, %v4278
        %v5501 = vpack.c.b16 %v4281, %v4280
        %v5502 = vpack.c.b16 %v4283, %v4282
        %v5503 = vpack.c.b16 %v4285, %v4284
        %v5504 = vpack.c.b16 %v4287, %v4286
        %v5505 = vpack.c.b16 %v4289, %v4288
        %v5506 = vpack.c.b16 %v4291, %v4290
        %v5507 = vpack.c.b16 %v4293, %v4292
        %v5508 = vpack.c.b16 %v4295, %v4294
        %v5509 = vpack.c.b16 %v4297, %v4296
        %v5510 = vpack.c.b16 %v4299, %v4298
        %v5511 = vpack.c.b16 %v4301, %v4300
        %v5512 = vpack.c.b16 %v4303, %v4302
        %v5513 = vpack.c.b16 %v4305, %v4304
        %v5514 = vpack.c.b16 %v4307, %v4306
        %v5515 = vpack.c.b16 %v4309, %v4308
        %v5516 = vpack.c.b16 %v4311, %v4310
        %v5517 = vpack.c.b16 %v4313, %v4312
        %v5518 = vpack.c.b16 %v4315, %v4314
        %v5519 = vpack.c.b16 %v4317, %v4316
        %v5520 = vpack.c.b16 %v4319, %v4318
        %v5521 = vpack.c.b16 %v4321, %v4320
        %v5522 = vpack.c.b16 %v4323, %v4322
        %v5523 = vpack.c.b16 %v4325, %v4324
        %v5524 = vpack.c.b16 %v4327, %v4326
        %v5525 = vpack.c.b16 %v4329, %v4328
        %v5526 = vpack.c.b16 %v4331, %v4330
        %v5527 = vpack.c.b16 %v4333, %v4332
        %v5528 = vpack.c.b16 %v4335, %v4334
        %v5529 = vpack.c.b16 %v4337, %v4336
        %v5530 = vpack.c.b16 %v4339, %v4338
        %v5531 = vpack.c.b16 %v4341, %v4340
        %v5532 = vpack.c.b16 %v4343, %v4342
        %v5533 = vpack.c.b16 %v4345, %v4344
        %v5534 = vpack.c.b16 %v4347, %v4346
        %v5535 = vpack.c.b16 %v4349, %v4348
        %v5536 = vpack.c.b16 %v4351, %v4350
        %v5537 = vpack.c.b16 %v4353, %v4352
        %v5538 = vpack.c.b16 %v4355, %v4354
        %v5539 = vpack.c.b16 %v4357, %v4356
        %v5540 = vpack.c.b16 %v4359, %v4358
        %v5541 = vpack.c.b16 %v4361, %v4360
        %v5542 = vpack.c.b16 %v4363, %v4362
        %v5543 = vpack.c.b16 %v4365, %v4364
        %v5544 = vpack.c.b16 %v4367, %v4366
        %v5545 = vpack.c.b16 %v4369, %v4368
        %v5546 = vpack.c.b16 %v4371, %v4370
        %v5547 = vpack.c.b16 %v4373, %v4372
        %v5548 = vpack.c.b16 %v4375, %v4374
        %v5549 = vpack.c.b16 %v4377, %v4376
        %v5550 = vpack.c.b16 %v4379, %v4378
        %v5551 = vpack.c.b16 %v4381, %v4380
        %v5552 = vpack.c.b16 %v4383, %v4382
        %v5553 = vpack.c.b16 %v4385, %v4384
        %v5554 = vpack.c.b16 %v4387, %v4386
        %v5555 = vpack.c.b16 %v4389, %v4388
        %v5556 = vpack.c.b16 %v4391, %v4390
        %v5557 = vpack.c.b16 %v4393, %v4392
        %v5558 = vpack.c.b16 %v4395, %v4394
        %v5559 = vpack.c.b16 %v4397, %v4396
        %v5560 = vpack.c.b16 %v4399, %v4398
        %v5561 = vpack.c.b16 %v4401, %v4400
        %v5562 = vpack.c.b16 %v4403, %v4402
        %v5563 = vpack.c.b16 %v4405, %v4404
        %v5564 = vpack.c.b16 %v4407, %v4406
        %v5565 = vpack.c.b16 %v4409, %v4408
        %v5566 = vpack.c.b16 %v4411, %v4410
        %v5567 = vpack.c.b16 %v4413, %v4412
        %v5568 = vpack.c.b16 %v4415, %v4414
        %v5569 = vpack.c.b16 %v4417, %v4416
        %v5570 = vpack.c.b16 %v4419, %v4418
        %v5571 = vpack.c.b16 %v4421, %v4420
        %v5572 = vpack.c.b16 %v4423, %v4422
        %v5573 = vpack.c.b16 %v4425, %v4424
        %v5574 = vpack.c.b16 %v4427, %v4426
        %v5575 = vpack.c.b16 %v4429, %v4428
        %v5576 = vpack.c.b16 %v4431, %v4430
        %v5577 = vpack.c.b16 %v4433, %v4432
        %v5578 = vpack.c.b16 %v4435, %v4434
        %v5579 = vpack.c.b16 %v4437, %v4436
        %v5580 = vpack.c.b16 %v4439, %v4438
        %v5581 = vpack.c.b16 %v4441, %v4440
        %v5582 = vpack.c.b16 %v4443, %v4442
        %v5583 = vpack.c.b16 %v4445, %v4444
        %v5584 = vpack.c.b16 %v4447, %v4446
        %v5585 = vpack.c.b16 %v4449, %v4448
        %v5586 = vpack.c.b16 %v4451, %v4450
        %v5587 = vpack.c.b16 %v4453, %v4452
        %v5588 = vpack.c.b16 %v4455, %v4454
        %v5589 = vpack.c.b16 %v4457, %v4456
        %v5590 = vpack.c.b16 %v4459, %v4458
        %v5591 = vpack.c.b16 %v4461, %v4460
        %v5592 = vpack.c.b16 %v4463, %v4462
        %v5593 = vpack.c.b16 %v4465, %v4464
        %v5594 = vpack.c.b16 %v4467, %v4466
        %v5595 = vpack.c.b16 %v4469, %v4468
        %v5596 = vpack.c.b16 %v4471, %v4470
        %v5597 = vpack.c.b16 %v4473, %v4472
        %v5598 = vpack.c.b16 %v4475, %v4474
        %v5599 = vpack.c.b16 %v4477, %v4476
        %v5600 = vpack.c.b16 %v4479, %v4478
        %v5601 = vpack.c.b16 %v4481, %v4480
        %v5602 = vpack.c.b16 %v4483, %v4482
        %v5603 = vpack.c.b16 %v4485, %v4484
        %v5604 = vpack.c.b16 %v4487, %v4486
        %v5605 = vpack.c.b16 %v4489, %v4488
        %v5606 = vpack.c.b16 %v4491, %v4490
        %v5607 = vpack.c.b16 %v4493, %v4492
        %v5608 = vpack.c.b16 %v4495, %v4494
        %v5609 = vpack.c.b16 %v4497, %v4496
        %v5610 = vpack.c.b16 %v4499, %v4498
        %v5611 = vpack.c.b16 %v4501, %v4500
        %v5612 = vpack.c.b16 %v4503, %v4502
        %v5613 = vpack.c.b16 %v4505, %v4504
        %v5614 = vpack.c.b16 %v4507, %v4506
        %v5615 = vpack.c.b16 %v4509, %v4508
        %v5616 = vpack.c.b16 %v4511, %v4510
        %v5617 = vpack.c.b16 %v4513, %v4512
        %v5618 = vpack.c.b16 %v4515, %v4514
        %v5619 = vpack.c.b16 %v4517, %v4516
        %v5620 = vpack.c.b16 %v4519, %v4518
        %v5621 = vpack.c.b16 %v4521, %v4520
        %v5622 = vpack.c.b16 %v4523, %v4522
        %v5623 = vpack.c.b16 %v4525, %v4524
        %v5624 = vpack.c.b16 %v4527, %v4526
        %v5625 = vpack.c.b16 %v4529, %v4528
        %v5626 = vpack.c.b16 %v4531, %v4530
        %v5627 = vpack.c.b16 %v4533, %v4532
        %v5628 = vpack.c.b16 %v4535, %v4534
        %v5629 = vpack.c.b16 %v4537, %v4536
        %v5630 = vpack.c.b16 %v4539, %v4538
        %v5631 = vpack.c.b16 %v4541, %v4540
        %v5632 = vpack.c.b16 %v4543, %v4542
        %v5633 = vpack.c.b16 %v4545, %v4544
        %v5634 = vpack.c.b16 %v4547, %v4546
        %v5635 = vpack.c.b16 %v4549, %v4548
        %v5636 = vpack.c.b16 %v4551, %v4550
        %v5637 = vpack.c.b16 %v4553, %v4552
        %v5638 = vpack.c.b16 %v4555, %v4554
        %v5639 = vpack.c.b16 %v4557, %v4556
        %v5640 = vpack.c.b16 %v4559, %v4558
        %v5641 = vpack.c.b16 %v4561, %v4560
        %v5642 = vpack.c.b16 %v4563, %v4562
        %v5643 = vpack.c.b16 %v4565, %v4564
        %v5644 = vpack.c.b16 %v4567, %v4566
        %v5645 = vpack.c.b16 %v4569, %v4568
        %v5646 = vpack.c.b16 %v4571, %v4570
        %v5647 = vpack.c.b16 %v4573, %v4572
        %v5648 = vpack.c.b16 %v4575, %v4574
        %v5649 = vpack.c.b16 %v4577, %v4576
        %v5650 = vpack.c.b16 %v4579, %v4578
        %v5651 = vpack.c.b16 %v4581, %v4580
        %v5652 = vpack.c.b16 %v4583, %v4582
        %v5653 = vpack.c.b16 %v4585, %v4584
        %v5654 = vpack.c.b16 %v4587, %v4586
        %v5655 = vpack.c.b16 %v4589, %v4588
        %v5656 = vpack.c.b16 %v4591, %v4590
        %v5657 = vpack.c.b16 %v4593, %v4592
        %v5658 = vpack.c.b16 %v4595, %v4594
        %v5659 = vpack.c.b16 %v4597, %v4596
        %v5660 = vpack.c.b16 %v4599, %v4598
        %v5661 = vpack.c.b16 %v4601, %v4600
        %v5662 = vpack.c.b16 %v4603, %v4602
        %v5663 = vpack.c.b16 %v4605, %v4604
        %v5664 = vpack.c.b16 %v4607, %v4606
        %v5665 = vpack.c.b16 %v4609, %v4608
        %v5666 = vpack.c.b16 %v4611, %v4610
        %v5667 = vpack.c.b16 %v4613, %v4612
        %v5668 = vpack.c.b16 %v4615, %v4614
        %v5669 = vpack.c.b16 %v4617, %v4616
        %v5670 = vpack.c.b16 %v4619, %v4618
        %v5671 = vpack.c.b16 %v4621, %v4620
        %v5672 = vpack.c.b16 %v4623, %v4622
        %v5673 = vpack.c.b16 %v4625, %v4624
        %v5674 = vpack.c.b16 %v4627, %v4626
        %v5675 = vpack.c.b16 %v4629, %v4628
        %v5676 = vpack.c.b16 %v4631, %v4630
        %v5677 = vpack.c.b16 %v4633, %v4632
        %v5678 = vpack.c.b16 %v4635, %v4634
        %v5679 = vpack.c.b16 %v4637, %v4636
        %v5680 = vpack.c.b16 %v4639, %v4638
        %v5681 = vpack.c.b16 %v4641, %v4640
        %v5682 = vpack.c.b16 %v4643, %v4642
        %v5683 = vpack.c.b16 %v4645, %v4644
        %v5684 = vpack.c.b16 %v4647, %v4646
        %v5685 = vpack.c.b16 %v4649, %v4648
        %v5686 = vpack.c.b16 %v4651, %v4650
        %v5687 = vpack.c.b16 %v4653, %v4652
        %v5688 = vpack.c.b16 %v4655, %v4654
        %v5689 = vpack.c.b16 %v4657, %v4656
        %v5690 = vpack.c.b16 %v4659, %v4658
        %v5691 = vpack.c.b16 %v4661, %v4660
        %v5692 = vpack.c.b16 %v4663, %v4662
        %v5693 = vpack.c.b16 %v4665, %v4664
        %v5694 = vpack.c.b16 %v4667, %v4666
        %v5695 = vpack.c.b16 %v4669, %v4668
        %v5696 = vpack.c.b16 %v4671, %v4670
        %v5697 = vpack.c.b16 %v4673, %v4672
        %v5698 = vpack.c.b16 %v4675, %v4674
        %v5699 = vpack.c.b16 %v4677, %v4676
        %v5700 = vpack.c.b16 %v4679, %v4678
        %v5701 = vpack.c.b16 %v4681, %v4680
        %v5702 = vpack.c.b16 %v4683, %v4682
        %v5703 = vpack.c.b16 %v4685, %v4684
        %v5704 = vpack.c.b16 %v4687, %v4686
        %v5705 = vpack.c.b16 %v4689, %v4688
        %v5706 = vpack.c.b16 %v4691, %v4690
        %v5707 = vpack.c.b16 %v4693, %v4692
        %v5708 = vpack.c.b16 %v4695, %v4694
        %v5709 = vpack.c.b16 %v4697, %v4696
        %v5710 = vpack.c.b16 %v4699, %v4698
        %v5711 = vpack.c.b16 %v4701, %v4700
        %v5712 = vpack.c.b16 %v4703, %v4702
        %v5713 = vpack.c.b16 %v4705, %v4704
        %v5714 = vpack.c.b16 %v4707, %v4706
        %v5715 = vpack.c.b16 %v4709, %v4708
        %v5716 = vpack.c.b16 %v4711, %v4710
        %v5717 = vpack.c.b16 %v4713, %v4712
        %v5718 = vpack.c.b16 %v4715, %v4714
        %v5719 = vpack.c.b16 %v4717, %v4716
        %v5720 = vpack.c.b16 %v4719, %v4718
        %v5721 = vpack.c.b16 %v4721, %v4720
        %v5722 = vpack.c.b16 %v4723, %v4722
        %v5723 = vpack.c.b16 %v4725, %v4724
        %v5724 = vpack.c.b16 %v4727, %v4726
        %v5725 = vpack.c.b16 %v4729, %v4728
        %v5726 = vpack.c.b16 %v4731, %v4730
        %v5727 = vpack.c.b16 %v4733, %v4732
        %v5728 = vpack.c.b16 %v4735, %v4734
        %v5729 = vpack.c.b16 %v4737, %v4736
        %v5730 = vpack.c.b16 %v4739, %v4738
        %v5731 = vpack.c.b16 %v4741, %v4740
        %v5732 = vpack.c.b16 %v4743, %v4742
        %v5733 = vpack.c.b16 %v4745, %v4744
        %v5734 = vpack.c.b16 %v4747, %v4746
        %v5735 = vpack.c.b16 %v4749, %v4748
        %v5736 = vpack.c.b16 %v4751, %v4750
        %v5737 = vpack.c.b16 %v4753, %v4752
        %v5738 = vpack.c.b16 %v4755, %v4754
        %v5739 = vpack.c.b16 %v4757, %v4756
        %v5740 = vpack.c.b16 %v4759, %v4758
        %v5741 = vpack.c.b16 %v4761, %v4760
        %v5742 = vpack.c.b16 %v4763, %v4762
        %v5743 = vpack.c.b16 %v4765, %v4764
        %v5744 = vpack.c.b16 %v4767, %v4766
        %v5745 = vpack.c.b16 %v4769, %v4768
        %v5746 = vpack.c.b16 %v4771, %v4770
        %v5747 = vpack.c.b16 %v4773, %v4772
        %v5748 = vpack.c.b16 %v4775, %v4774
        %v5749 = vpack.c.b16 %v4777, %v4776
        %v5750 = vpack.c.b16 %v4779, %v4778
        %v5751 = vpack.c.b16 %v4781, %v4780
        %v5752 = vpack.c.b16 %v4783, %v4782
        %v5753 = vpack.c.b16 %v4785, %v4784
        %v5754 = vpack.c.b16 %v4787, %v4786
        %v5755 = vpack.c.b16 %v4789, %v4788
        %v5756 = vpack.c.b16 %v4791, %v4790
        %v5757 = vpack.c.b16 %v4793, %v4792
        %v5758 = vpack.c.b16 %v4795, %v4794
        %v5759 = vpack.c.b16 %v4797, %v4796
        %v5760 = vpack.c.b16 %v4799, %v4798
        %v5761 = vpack.c.b16 %v4801, %v4800
        %v5762 = vpack.c.b16 %v4803, %v4802
        %v5763 = vpack.c.b16 %v4805, %v4804
        %v5764 = vpack.c.b16 %v4807, %v4806
        %v5765 = vpack.c.b16 %v4809, %v4808
        %v5766 = vpack.c.b16 %v4811, %v4810
        %v5767 = vpack.c.b16 %v4813, %v4812
        %v5768 = vpack.c.b16 %v4815, %v4814
        %v5769 = vpack.c.b16 %v4817, %v4816
        %v5770 = vpack.c.b16 %v4819, %v4818
        %v5771 = vpack.c.b16 %v4821, %v4820
        %v5772 = vpack.c.b16 %v4823, %v4822
        %v5773 = vpack.c.b16 %v4825, %v4824
        %v5774 = vpack.c.b16 %v4827, %v4826
        %v5775 = vpack.c.b16 %v4829, %v4828
        %v5776 = vpack.c.b16 %v4831, %v4830
        %v5777 = vpack.c.b16 %v4833, %v4832
        %v5778 = vpack.c.b16 %v4835, %v4834
        %v5779 = vpack.c.b16 %v4837, %v4836
        %v5780 = vpack.c.b16 %v4839, %v4838
        %v5781 = vpack.c.b16 %v4841, %v4840
        %v5782 = vpack.c.b16 %v4843, %v4842
        %v5783 = vpack.c.b16 %v4845, %v4844
        %v5784 = vpack.c.b16 %v4847, %v4846
        %v5785 = vpack.c.b16 %v4849, %v4848
        %v5786 = vpack.c.b16 %v4851, %v4850
        %v5787 = vpack.c.b16 %v4853, %v4852
        %v5788 = vpack.c.b16 %v4855, %v4854
        %v5789 = vpack.c.b16 %v4857, %v4856
        %v5790 = vpack.c.b16 %v4859, %v4858
        %v5791 = vpack.c.b16 %v4861, %v4860
        %v5792 = vpack.c.b16 %v4863, %v4862
        %v5793 = vpack.c.b16 %v4865, %v4864
        %v5794 = vpack.c.b16 %v4867, %v4866
        %v5795 = vpack.c.b16 %v4869, %v4868
        %v5796 = vpack.c.b16 %v4871, %v4870
        %v5797 = vpack.c.b16 %v4873, %v4872
        %v5798 = vpack.c.b16 %v4875, %v4874
        %v5799 = vpack.c.b16 %v4877, %v4876
        %v5800 = vpack.c.b16 %v4879, %v4878
        %v5801 = vpack.c.b16 %v4881, %v4880
        %v5802 = vpack.c.b16 %v4883, %v4882
        %v5803 = vpack.c.b16 %v4885, %v4884
        %v5804 = vpack.c.b16 %v4887, %v4886
        %v5805 = vpack.c.b16 %v4889, %v4888
        %v5806 = vpack.c.b16 %v4891, %v4890
        %v5807 = vpack.c.b16 %v4893, %v4892
        %v5808 = vpack.c.b16 %v4895, %v4894
        %v5809 = vpack.c.b16 %v4897, %v4896
        %v5810 = vpack.c.b16 %v4899, %v4898
        %v5811 = vpack.c.b16 %v4901, %v4900
        %v5812 = vpack.c.b16 %v4903, %v4902
        %v5813 = vpack.c.b16 %v4905, %v4904
        %v5814 = vpack.c.b16 %v4907, %v4906
        %v5815 = vpack.c.b16 %v4909, %v4908
        %v5816 = vpack.c.b16 %v4911, %v4910
        %v5817 = vpack.c.b16 %v4913, %v4912
        %v5818 = vpack.c.b16 %v4915, %v4914
        %v5819 = vpack.c.b16 %v4917, %v4916
        %v5820 = vpack.c.b16 %v4919, %v4918
        %v5821 = vpack.c.b16 %v4921, %v4920
        %v5822 = vpack.c.b16 %v4923, %v4922
        %v5823 = vpack.c.b16 %v4925, %v4924
        %v5824 = vpack.c.b16 %v4927, %v4926
        %v5825 = vpack.c.b16 %v4929, %v4928
        %v5826 = vpack.c.b16 %v4931, %v4930
        %v5827 = vpack.c.b16 %v4933, %v4932
        %v5828 = vpack.c.b16 %v4935, %v4934
        %v5829 = vpack.c.b16 %v4937, %v4936
        %v5830 = vpack.c.b16 %v4939, %v4938
        %v5831 = vpack.c.b16 %v4941, %v4940
        %v5832 = vpack.c.b16 %v4943, %v4942
        %v5833 = vpack.c.b16 %v4945, %v4944
        %v5834 = vpack.c.b16 %v4947, %v4946
        %v5835 = vpack.c.b16 %v4949, %v4948
        %v5836 = vpack.c.b16 %v4951, %v4950
        %v5837 = vpack.c.b16 %v4953, %v4952
        %v5838 = vpack.c.b16 %v4955, %v4954
        %v5839 = vpack.c.b16 %v4957, %v4956
        %v5840 = vpack.c.b16 %v4959, %v4958
        %v5841 = vpack.c.b16 %v4961, %v4960
        %v5842 = vpack.c.b16 %v4963, %v4962
        %v5843 = vpack.c.b16 %v4965, %v4964
        %v5844 = vpack.c.b16 %v4967, %v4966
        %v5845 = vpack.c.b16 %v4969, %v4968
        %v5846 = vpack.c.b16 %v4971, %v4970
        %v5847 = vpack.c.b16 %v4973, %v4972
        %v5848 = vpack.c.b16 %v4975, %v4974
        %v5849 = vpack.c.b16 %v4977, %v4976
        %v5850 = vpack.c.b16 %v4979, %v4978
        %v5851 = vpack.c.b16 %v4981, %v4980
        %v5852 = vpack.c.b16 %v4983, %v4982
        %v5853 = vpack.c.b16 %v4985, %v4984
        %v5854 = vpack.c.b16 %v4987, %v4986
        %v5855 = vpack.c.b16 %v4989, %v4988
        %v5856 = vpack.c.b16 %v4991, %v4990
        %v5857 = vpack.c.b16 %v4993, %v4992
        %v5858 = vpack.c.b16 %v4995, %v4994
        %v5859 = vpack.c.b16 %v4997, %v4996
        %v5860 = vpack.c.b16 %v4999, %v4998
        %v5861 = vpack.c.b16 %v5001, %v5000
        %v5862 = vpack.c.b16 %v5003, %v5002
        %v5863 = vpack.c.b16 %v5005, %v5004
        %v5864 = vpack.c.b16 %v5007, %v5006
        %v5865 = vpack.c.b16 %v5009, %v5008
        %v5866 = vpack.c.b16 %v5011, %v5010
        %v5867 = vpack.c.b16 %v5013, %v5012
        %v5868 = vpack.c.b16 %v5015, %v5014
        %v5869 = vpack.c.b16 %v5017, %v5016
        %v5870 = vpack.c.b16 %v5019, %v5018
        %v5871 = vpack.c.b16 %v5021, %v5020
        %v5872 = vpack.c.b16 %v5023, %v5022
        %v5873 = vpack.c.b16 %v5025, %v5024
        %v5874 = vpack.c.b16 %v5027, %v5026
        %v5875 = vpack.c.b16 %v5029, %v5028
        %v5876 = vpack.c.b16 %v5031, %v5030
        %v5877 = vpack.c.b16 %v5033, %v5032
        %v5878 = vpack.c.b16 %v5035, %v5034
        %v5879 = vpack.c.b16 %v5037, %v5036
        %v5880 = vpack.c.b16 %v5039, %v5038
        %v5881 = vpack.c.b16 %v5041, %v5040
        %v5882 = vpack.c.b16 %v5043, %v5042
        %v5883 = vpack.c.b16 %v5045, %v5044
        %v5884 = vpack.c.b16 %v5047, %v5046
        %v5885 = vpack.c.b16 %v5049, %v5048
        %v5886 = vpack.c.b16 %v5051, %v5050
        %v5887 = vpack.c.b16 %v5053, %v5052
        %v5888 = vpack.c.b16 %v5055, %v5054
        %v5889 = vpack.c.b16 %v5057, %v5056
        %v5890 = vpack.c.b16 %v5059, %v5058
        %v5891 = vpack.c.b16 %v5061, %v5060
        %v5892 = vpack.c.b16 %v5063, %v5062
        %v5893 = vpack.c.b16 %v5065, %v5064
        %v5894 = vpack.c.b16 %v5067, %v5066
        %v5895 = vpack.c.b16 %v5069, %v5068
        %v5896 = vpack.c.b16 %v5071, %v5070
        %v5897 = vpack.c.b16 %v5073, %v5072
        %v5898 = vpack.c.b16 %v5075, %v5074
        %v5899 = vpack.c.b16 %v5077, %v5076
        %v5900 = vpack.c.b16 %v5079, %v5078
        %v5901 = vpack.c.b16 %v5081, %v5080
        %v5902 = vpack.c.b16 %v5083, %v5082
        %v5903 = vpack.c.b16 %v5085, %v5084
        %v5904 = vpack.c.b16 %v5087, %v5086
        %v5905 = vpack.c.b16 %v5089, %v5088
        %v5906 = vpack.c.b16 %v5091, %v5090
        %v5907 = vpack.c.b16 %v5093, %v5092
        %v5908 = vpack.c.b16 %v5095, %v5094
        %v5909 = vpack.c.b16 %v5097, %v5096
        %v5910 = vpack.c.b16 %v5099, %v5098
        %v5911 = vpack.c.b16 %v5101, %v5100
        %v5912 = vpack.c.b16 %v5103, %v5102
        %v5913 = vpack.c.b16 %v5105, %v5104
        %v5914 = vpack.c.b16 %v5107, %v5106
        %v5915 = vpack.c.b16 %v5109, %v5108
        %v5916 = vpack.c.b16 %v5111, %v5110
        %v5917 = vpack.c.b16 %v5113, %v5112
        %v5918 = vpack.c.b16 %v5115, %v5114
        %v5919 = vpack.c.b16 %v5117, %v5116
        %v5920 = vpack.c.b16 %v5119, %v5118
        %v5921 = vpack.c.b16 %v5121, %v5120
        %v5922 = vpack.c.b16 %v5123, %v5122
        %v5923 = vpack.c.b16 %v5125, %v5124
        %v5924 = vpack.c.b16 %v5127, %v5126
        %v5925 = vpack.c.b16 %v5129, %v5128
        %v5926 = vpack.c.b16 %v5131, %v5130
        %v5927 = vpack.c.b16 %v5133, %v5132
        %v5928 = vpack.c.b16 %v5135, %v5134
        %v5929 = vpack.c.b16 %v5137, %v5136
        %v5930 = vpack.c.b16 %v5139, %v5138
        %v5931 = vpack.c.b16 %v5141, %v5140
        %v5932 = vpack.c.b16 %v5143, %v5142
        %v5933 = vpack.c.b16 %v5145, %v5144
        %v5934 = vpack.c.b16 %v5147, %v5146
        %v5935 = vpack.c.b16 %v5149, %v5148
        %v5936 = vpack.c.b16 %v5151, %v5150
        %v5937 = vpack.c.b16 %v5153, %v5152
        %v5938 = vpack.c.b16 %v5155, %v5154
        %v5939 = vpack.c.b16 %v5157, %v5156
        %v5940 = vpack.c.b16 %v5159, %v5158
        %v5941 = vpack.c.b16 %v5161, %v5160
        %v5942 = vpack.c.b16 %v5163, %v5162
        %v5943 = vpack.c.b16 %v5165, %v5164
        %v5944 = vpack.c.b16 %v5167, %v5166
        %v5945 = vpack.c.b16 %v5169, %v5168
        %v5946 = vpack.c.b16 %v5171, %v5170
        %v5947 = vpack.c.b16 %v5173, %v5172
        %v5948 = vpack.c.b16 %v5175, %v5174
        %v5949 = vpack.c.b16 %v5177, %v5176
        %v5950 = vpack.c.b16 %v5179, %v5178
        %v5951 = vpack.c.b16 %v5181, %v5180
        %v5952 = vpack.c.b16 %v5183, %v5182
        %v5953 = vpack.c.b16 %v5185, %v5184
        %v5954 = vpack.c.b16 %v5187, %v5186
        %v5955 = vpack.c.b16 %v5189, %v5188
        %v5956 = vpack.c.b16 %v5191, %v5190
        %v5957 = vpack.c.b16 %v5193, %v5192
        %v5958 = vpack.c.b16 %v5195, %v5194
        %v5959 = vpack.c.b16 %v5197, %v5196
        %v5960 = vpack.c.b16 %v5199, %v5198
        %v5961 = vpack.c.b16 %v5201, %v5200
        %v5962 = vpack.c.b16 %v5203, %v5202
        %v5963 = vpack.c.b16 %v5205, %v5204
        %v5964 = vpack.c.b16 %v5207, %v5206
        %v5965 = vpack.c.b16 %v5209, %v5208
        %v5966 = vpack.c.b16 %v5211, %v5210
        %v5967 = vpack.c.b16 %v5213, %v5212
        %v5968 = vpack.c.b16 %v5215, %v5214
        %v5969 = vpack.c.b16 %v5217, %v5216
        %v5970 = vpack.c.b16 %v5219, %v5218
        %v5971 = vpack.c.b16 %v5221, %v5220
        %v5972 = vpack.c.b16 %v5223, %v5222
        %v5973 = vpack.c.b16 %v5225, %v5224
        %v5974 = vpack.c.b16 %v5227, %v5226
        %v5975 = vpack.c.b16 %v5229, %v5228
        %v5976 = vpack.c.b16 %v5231, %v5230
        %v5977 = vpack.c.b16 %v5233, %v5232
        %v5978 = vpack.c.b16 %v5235, %v5234
        %v5979 = vpack.c.b16 %v5237, %v5236
        %v5980 = vpack.c.b16 %v5239, %v5238
        %v5981 = vpack.c.b16 %v5241, %v5240
        %v5982 = vpack.c.b16 %v5243, %v5242
        %v5983 = vpack.c.b16 %v5245, %v5244
        %v5984 = vpack.c.b16 %v5247, %v5246
        %v5985 = vpack.c.b16 %v5249, %v5248
        %v5986 = vpack.c.b16 %v5251, %v5250
        %v5987 = vpack.c.b16 %v5253, %v5252
        %v5988 = vpack.c.b16 %v5255, %v5254
        %v5989 = vpack.c.b16 %v5257, %v5256
        %v5990 = vpack.c.b16 %v5259, %v5258
        %v5991 = vpack.c.b16 %v5261, %v5260
        %v5992 = vpack.c.b16 %v5263, %v5262
        %v5993 = vpack.c.b16 %v5265, %v5264
        %v5994 = vpack.c.b16 %v5267, %v5266
        %v5995 = vpack.c.b16 %v5269, %v5268
        %v5996 = vpack.c.b16 %v5271, %v5270
        %v5997 = vpack.c.b16 %v5273, %v5272
        %v5998 = vpack.c.b16 %v5275, %v5274
        %v5999 = vpack.c.b16 %v5277, %v5276
        %v6000 = vpack.c.b16 %v5279, %v5278
        %v6001 = vpack.c.b16 %v5281, %v5280
        %v6002 = vpack.c.b16 %v5283, %v5282
        %v6003 = vpack.c.b16 %v5285, %v5284
        %v6004 = vpack.c.b16 %v5287, %v5286
        %v6005 = vpack.c.b16 %v5289, %v5288
        %v6006 = vpack.c.b16 %v5291, %v5290
        %v6007 = vpack.c.b16 %v5293, %v5292
        %v6008 = vpack.c.b16 %v5295, %v5294
        %v6009 = vpack.c.b16 %v5297, %v5296
        %v6010 = vpack.c.b16 %v5299, %v5298
        %v6011 = vpack.c.b16 %v5301, %v5300
        %v6012 = vpack.c.b16 %v5303, %v5302
        %v6013 = vpack.c.b16 %v5305, %v5304
        %v6014 = vpack.c.b16 %v5307, %v5306
        %v6015 = vpack.c.b16 %v5309, %v5308
        %v6016 = vpack.c.b16 %v5311, %v5310
        %v6017 = vpack.c.b16 %v5313, %v5312
        %v6018 = vpack.c.b16 %v5315, %v5314
        %v6019 = vpack.c.b16 %v5317, %v5316
        %v6020 = vpack.c.b16 %v5319, %v5318
        %v6021 = vpack.c.b16 %v5321, %v5320
        %v6022 = vpack.c.b16 %v5323, %v5322
        %v6023 = vpack.c.b16 %v5325, %v5324
        %v6024 = vpack.c.b16 %v5327, %v5326
        %v6025 = vpack.c.b16 %v5329, %v5328
        %v6026 = vpack.c.b16 %v5331, %v5330
        %v6027 = vpack.c.b16 %v5333, %v5332
        %v6028 = vpack.c.b16 %v5335, %v5334
        %v6029 = vpack.c.b16 %v5337, %v5336
        %v6030 = vpack.c.b16 %v5339, %v5338
        %v6031 = vpack.c.b16 %v5341, %v5340
        %v6032 = vpack.c.b16 %v5343, %v5342
        %v6033 = vpack.c.b16 %v5345, %v5344
        %v6034 = vpack.c.b16 %v5347, %v5346
        %v6035 = vpack.c.b16 %v5349, %v5348
        %v6036 = vpack.c.b16 %v5351, %v5350
        %v6037 = vpack.c.b16 %v5353, %v5352
        %v6038 = vpack.c.b16 %v5355, %v5354
        %v6039 = vpack.c.b16 %v5357, %v5356
        %v6040 = vpack.c.b16 %v5359, %v5358
        %v6041 = vpack.c.b16 %v5361, %v5360
        %v6042 = vpack.c.b16 %v5363, %v5362
        %v6043 = vpack.c.b16 %v5365, %v5364
        %v6044 = vpack.c.b16 %v5367, %v5366
        %v6045 = vpack.c.b16 %v5369, %v5368
        %v6046 = vpack.c.b16 %v5371, %v5370
        %v6047 = vpack.c.b16 %v5373, %v5372
        %v6048 = vpack.c.b16 %v5375, %v5374
        %v6049 = vpack.c.b16 %v5377, %v5376
        %v6050 = vpack.c.b16 %v5379, %v5378
        %v6051 = vpack.c.b16 %v5381, %v5380
        %v6052 = vpack.c.b16 %v5383, %v5382
        %v6053 = vpack.c.b16 %v5385, %v5384
        %v6054 = vpack.c.b16 %v5387, %v5386
        %v6055 = vpack.c.b16 %v5389, %v5388
        %v6056 = vpack.c.b16 %v5391, %v5390
        %v6057 = vpack.c.b16 %v5393, %v5392
        %v6058 = vpack.c.b16 %v5395, %v5394
        %v6059 = vpack.c.b16 %v5397, %v5396
        %v6060 = vpack.c.b16 %v5399, %v5398
        %v6061 = vpack.c.b16 %v5401, %v5400
        %v6062 = vpack.c.b16 %v5403, %v5402
        %v6063 = vpack.c.b16 %v5405, %v5404
        %v6064 = vpack.c.b16 %v5407, %v5406
        %v6065 = vpack.c.b16 %v5409, %v5408
        %v6066 = vpack.c.b16 %v5411, %v5410
        %v6067 = vpack.c.b16 %v5413, %v5412
        %v6068 = vpack.c.b16 %v5415, %v5414
        %v6069 = vpack.c.b16 %v5417, %v5416
        %v6070 = vpack.c.b16 %v5419, %v5418
        %v6071 = vpack.c.b16 %v5421, %v5420
        %v6072 = vpack.c.b16 %v5423, %v5422
        %v6073 = vpack.c.b16 %v5425, %v5424
        %v6074 = vpack.c.b16 %v5427, %v5426
        %v6075 = vpack.c.b16 %v5429, %v5428
        %v6076 = vpack.c.b16 %v5431, %v5430
        %v6077 = vpack.c.b16 %v5433, %v5432
        %v6078 = vpack.c.b16 %v5435, %v5434
        %v6079 = vpack.c.b16 %v5437, %v5436
        %v6080 = vpack.c.b16 %v5439, %v5438
        %v6081 = vpack.c.b16 %v5441, %v5440
        %6722 = vmatprep.subr.bf16.mxu0 0
        %6723 = vmatpush1.bf16.msra.mxu0 %v5442
        %6724 = vmatprep.subr.bf16.mxu0 0
        %6725 = vmatpush1.bf16.msra.mxu0 %v5443
        %6726 = vmatprep.subr.bf16.mxu0 0
        %6727 = vmatpush1.bf16.msra.mxu0 %v5444
        %6728 = vmatprep.subr.bf16.mxu0 0
        %6729 = vmatpush1.bf16.msra.mxu0 %v5445
        %6730 = vmatprep.subr.bf16.mxu0 0
        %6731 = vmatpush1.bf16.msra.mxu0 %v5446
        %6732 = vmatprep.subr.bf16.mxu0 0
        %6733 = vmatpush1.bf16.msra.mxu0 %v5447
        %6734 = vmatprep.subr.bf16.mxu0 0
        %6735 = vmatpush1.bf16.msra.mxu0 %v5448
        %6736 = vmatprep.subr.bf16.mxu0 0
        %6737 = vmatpush1.bf16.msra.mxu0 %v5449
        %6738 = vmatprep.subr.bf16.mxu0 0
        %6739 = vmatpush1.bf16.msra.mxu0 %v5450
        %6740 = vmatprep.subr.bf16.mxu0 0
        %6741 = vmatpush1.bf16.msra.mxu0 %v5451
        %6742 = vmatprep.subr.bf16.mxu0 0
        %6743 = vmatpush1.bf16.msra.mxu0 %v5452
        %6744 = vmatprep.subr.bf16.mxu0 0
        %6745 = vmatpush1.bf16.msra.mxu0 %v5453
        %6746 = vmatprep.subr.bf16.mxu0 0
        %6747 = vmatpush1.bf16.msra.mxu0 %v5454
        %6748 = vmatprep.subr.bf16.mxu0 0
        %6749 = vmatpush1.bf16.msra.mxu0 %v5455
        %6750 = vmatprep.subr.bf16.mxu0 0
        %6751 = vmatpush1.bf16.msra.mxu0 %v5456
        %6752 = vmatprep.subr.bf16.mxu0 0
        %6753 = vmatpush1.bf16.msra.mxu0 %v5457
        %6754 = vmatprep.mubr.bf16.mxu0 %v1523
        %6755 = vmatmul.mubr.bf16.gmra.mrb[0].mxu0 %v1522
        %v6756 = vpop.f32.mrb[0].mxu0
        %v6757 = vadd.f32 0.0, %v6756
        %v6758 = vpop.f32.mrb[0].mxu0
        %v6759 = vpop.f32.mrb[0].mxu0
        %v6760 = vpop.f32.mrb[0].mxu0
        %6761 = vdwg.mxu0
        %6762 = vmatprep.subr.bf16.mxu0 0
        %6763 = vmatpush1.bf16.msra.mxu0 %v5458
        %6764 = vmatprep.subr.bf16.mxu0 0
        %6765 = vmatpush1.bf16.msra.mxu0 %v5459
        %6766 = vmatprep.subr.bf16.mxu0 0
        %6767 = vmatpush1.bf16.msra.mxu0 %v5460
        %6768 = vmatprep.subr.bf16.mxu0 0
        %6769 = vmatpush1.bf16.msra.mxu0 %v5461
        %6770 = vmatprep.subr.bf16.mxu0 0
        %6771 = vmatpush1.bf16.msra.mxu0 %v5462
        %6772 = vmatprep.subr.bf16.mxu0 0
        %6773 = vmatpush1.bf16.msra.mxu0 %v5463
        %6774 = vmatprep.subr.bf16.mxu0 0
        %6775 = vmatpush1.bf16.msra.mxu0 %v5464
        %6776 = vmatprep.subr.bf16.mxu0 0
        %6777 = vmatpush1.bf16.msra.mxu0 %v5465
        %6778 = vmatprep.subr.bf16.mxu0 0
        %6779 = vmatpush1.bf16.msra.mxu0 %v5466
        %6780 = vmatprep.subr.bf16.mxu0 0
        %6781 = vmatpush1.bf16.msra.mxu0 %v5467
        %6782 = vmatprep.subr.bf16.mxu0 0
        %6783 = vmatpush1.bf16.msra.mxu0 %v5468
        %6784 = vmatprep.subr.bf16.mxu0 0
        %6785 = vmatpush1.bf16.msra.mxu0 %v5469
        %6786 = vmatprep.subr.bf16.mxu0 0
        %6787 = vmatpush1.bf16.msra.mxu0 %v5470
        %6788 = vmatprep.subr.bf16.mxu0 0
        %6789 = vmatpush1.bf16.msra.mxu0 %v5471
        %6790 = vmatprep.subr.bf16.mxu0 0
        %6791 = vmatpush1.bf16.msra.mxu0 %v5472
        %6792 = vmatprep.subr.bf16.mxu0 0
        %6793 = vmatpush1.bf16.msra.mxu0 %v5473
        %6794 = vmatprep.mubr.bf16.mxu0 %v1525
        %6795 = vmatmul.mubr.bf16.gmra.mrb[0].mxu0 %v1524
        %v6796 = vpop.f32.mrb[0].mxu0
        %v6797 = vadd.f32 %v6757, %v6796
        %v6798 = vpop.f32.mrb[0].mxu0
        %v6799 = vpop.f32.mrb[0].mxu0
        %v6800 = vpop.f32.mrb[0].mxu0
        %6801 = vdwg.mxu0
        %6802 = vmatprep.subr.bf16.mxu0 0
        %6803 = vmatpush1.bf16.msra.mxu0 %v5474
        %6804 = vmatprep.subr.bf16.mxu0 0
        %6805 = vmatpush1.bf16.msra.mxu0 %v5475
        %6806 = vmatprep.subr.bf16.mxu0 0
        %6807 = vmatpush1.bf16.msra.mxu0 %v5476
        %6808 = vmatprep.subr.bf16.mxu0 0
        %6809 = vmatpush1.bf16.msra.mxu0 %v5477
        %6810 = vmatprep.subr.bf16.mxu0 0
        %6811 = vmatpush1.bf16.msra.mxu0 %v5478
        %6812 = vmatprep.subr.bf16.mxu0 0
        %6813 = vmatpush1.bf16.msra.mxu0 %v5479
        %6814 = vmatprep.subr.bf16.mxu0 0
        %6815 = vmatpush1.bf16.msra.mxu0 %v5480
        %6816 = vmatprep.subr.bf16.mxu0 0
        %6817 = vmatpush1.bf16.msra.mxu0 %v5481
        %6818 = vmatprep.subr.bf16.mxu0 0
        %6819 = vmatpush1.bf16.msra.mxu0 %v5482
        %6820 = vmatprep.subr.bf16.mxu0 0
        %6821 = vmatpush1.bf16.msra.mxu0 %v5483
        %6822 = vmatprep.subr.bf16.mxu0 0
        %6823 = vmatpush1.bf16.msra.mxu0 %v5484
        %6824 = vmatprep.subr.bf16.mxu0 0
        %6825 = vmatpush1.bf16.msra.mxu0 %v5485
        %6826 = vmatprep.subr.bf16.mxu0 0
        %6827 = vmatpush1.bf16.msra.mxu0 %v5486
        %6828 = vmatprep.subr.bf16.mxu0 0
        %6829 = vmatpush1.bf16.msra.mxu0 %v5487
        %6830 = vmatprep.subr.bf16.mxu0 0
        %6831 = vmatpush1.bf16.msra.mxu0 %v5488
        %6832 = vmatprep.subr.bf16.mxu0 0
        %6833 = vmatpush1.bf16.msra.mxu0 %v5489
        %6834 = vmatprep.mubr.bf16.mxu0 %v1527
        %6835 = vmatmul.mubr.bf16.gmra.mrb[0].mxu0 %v1526
        %v6836 = vpop.f32.mrb[0].mxu0
        %v6837 = vadd.f32 %v6797, %v6836
        %v6838 = vpop.f32.mrb[0].mxu0
        %v6839 = vpop.f32.mrb[0].mxu0
        %v6840 = vpop.f32.mrb[0].mxu0
        %6841 = vdwg.mxu0
        %6842 = vmatprep.subr.bf16.mxu0 0
        %6843 = vmatpush1.bf16.msra.mxu0 %v5490
        %6844 = vmatprep.subr.bf16.mxu0 0
        %6845 = vmatpush1.bf16.msra.mxu0 %v5491
        %6846 = vmatprep.subr.bf16.mxu0 0
        %6847 = vmatpush1.bf16.msra.mxu0 %v5492
        %6848 = vmatprep.subr.bf16.mxu0 0
        %6849 = vmatpush1.bf16.msra.mxu0 %v5493
        %6850 = vmatprep.subr.bf16.mxu0 0
        %6851 = vmatpush1.bf16.msra.mxu0 %v5494
        %6852 = vmatprep.subr.bf16.mxu0 0
        %6853 = vmatpush1.bf16.msra.mxu0 %v5495
        %6854 = vmatprep.subr.bf16.mxu0 0
        %6855 = vmatpush1.bf16.msra.mxu0 %v5496
        %6856 = vmatprep.subr.bf16.mxu0 0
        %6857 = vmatpush1.bf16.msra.mxu0 %v5497
        %6858 = vmatprep.subr.bf16.mxu0 0
        %6859 = vmatpush1.bf16.msra.mxu0 %v5498
        %6860 = vmatprep.subr.bf16.mxu0 0
        %6861 = vmatpush1.bf16.msra.mxu0 %v5499
        %6862 = vmatprep.subr.bf16.mxu0 0
        %6863 = vmatpush1.bf16.msra.mxu0 %v5500
        %6864 = vmatprep.subr.bf16.mxu0 0
        %6865 = vmatpush1.bf16.msra.mxu0 %v5501
        %6866 = vmatprep.subr.bf16.mxu0 0
        %6867 = vmatpush1.bf16.msra.mxu0 %v5502
        %6868 = vmatprep.subr.bf16.mxu0 0
        %6869 = vmatpush1.bf16.msra.mxu0 %v5503
        %6870 = vmatprep.subr.bf16.mxu0 0
        %6871 = vmatpush1.bf16.msra.mxu0 %v5504
        %6872 = vmatprep.subr.bf16.mxu0 0
        %6873 = vmatpush1.bf16.msra.mxu0 %v5505
        %6874 = vmatprep.mubr.bf16.mxu0 %v1529
        %6875 = vmatmul.mubr.bf16.gmra.mrb[0].mxu0 %v1528
        %v6876 = vpop.f32.mrb[0].mxu0
        %v6877 = vadd.f32 %v6837, %v6876
        %v6878 = vpop.f32.mrb[0].mxu0
        %v6879 = vpop.f32.mrb[0].mxu0
        %v6880 = vpop.f32.mrb[0].mxu0
        %6881 = vdwg.mxu0
        %6882 = vmatprep.subr.bf16.mxu0 0
        %6883 = vmatpush1.bf16.msra.mxu0 %v5506
        %6884 = vmatprep.subr.bf16.mxu0 0
        %6885 = vmatpush1.bf16.msra.mxu0 %v5507
        %6886 = vmatprep.subr.bf16.mxu0 0
        %6887 = vmatpush1.bf16.msra.mxu0 %v5508
        %6888 = vmatprep.subr.bf16.mxu0 0
        %6889 = vmatpush1.bf16.msra.mxu0 %v5509
        %6890 = vmatprep.subr.bf16.mxu0 0
        %6891 = vmatpush1.bf16.msra.mxu0 %v5510
        %6892 = vmatprep.subr.bf16.mxu0 0
        %6893 = vmatpush1.bf16.msra.mxu0 %v5511
        %6894 = vmatprep.subr.bf16.mxu0 0
        %6895 = vmatpush1.bf16.msra.mxu0 %v5512
        %6896 = vmatprep.subr.bf16.mxu0 0
        %6897 = vmatpush1.bf16.msra.mxu0 %v5513
        %6898 = vmatprep.subr.bf16.mxu0 0
        %6899 = vmatpush1.bf16.msra.mxu0 %v5514
        %6900 = vmatprep.subr.bf16.mxu0 0
        %6901 = vmatpush1.bf16.msra.mxu0 %v5515
        %6902 = vmatprep.subr.bf16.mxu0 0
        %6903 = vmatpush1.bf16.msra.mxu0 %v5516
        %6904 = vmatprep.subr.bf16.mxu0 0
        %6905 = vmatpush1.bf16.msra.mxu0 %v5517
        %6906 = vmatprep.subr.bf16.mxu0 0
        %6907 = vmatpush1.bf16.msra.mxu0 %v5518
        %6908 = vmatprep.subr.bf16.mxu0 0
        %6909 = vmatpush1.bf16.msra.mxu0 %v5519
        %6910 = vmatprep.subr.bf16.mxu0 0
        %6911 = vmatpush1.bf16.msra.mxu0 %v5520
        %6912 = vmatprep.subr.bf16.mxu0 0
        %6913 = vmatpush1.bf16.msra.mxu0 %v5521
        %6914 = vmatprep.mubr.bf16.mxu0 %v1531
        %6915 = vmatmul.mubr.bf16.gmra.mrb[0].mxu0 %v1530
        %v6916 = vpop.f32.mrb[0].mxu0
        %v6917 = vadd.f32 %v6877, %v6916
        %v6918 = vpop.f32.mrb[0].mxu0
        %v6919 = vpop.f32.mrb[0].mxu0
        %v6920 = vpop.f32.mrb[0].mxu0
        %6921 = vdwg.mxu0
        %6922 = vmatprep.subr.bf16.mxu0 0
        %6923 = vmatpush1.bf16.msra.mxu0 %v5522
        %6924 = vmatprep.subr.bf16.mxu0 0
        %6925 = vmatpush1.bf16.msra.mxu0 %v5523
        %6926 = vmatprep.subr.bf16.mxu0 0
        %6927 = vmatpush1.bf16.msra.mxu0 %v5524
        %6928 = vmatprep.subr.bf16.mxu0 0
        %6929 = vmatpush1.bf16.msra.mxu0 %v5525
        %6930 = vmatprep.subr.bf16.mxu0 0
        %6931 = vmatpush1.bf16.msra.mxu0 %v5526
        %6932 = vmatprep.subr.bf16.mxu0 0
        %6933 = vmatpush1.bf16.msra.mxu0 %v5527
        %6934 = vmatprep.subr.bf16.mxu0 0
        %6935 = vmatpush1.bf16.msra.mxu0 %v5528
        %6936 = vmatprep.subr.bf16.mxu0 0
        %6937 = vmatpush1.bf16.msra.mxu0 %v5529
        %6938 = vmatprep.subr.bf16.mxu0 0
        %6939 = vmatpush1.bf16.msra.mxu0 %v5530
        %6940 = vmatprep.subr.bf16.mxu0 0
        %6941 = vmatpush1.bf16.msra.mxu0 %v5531
        %6942 = vmatprep.subr.bf16.mxu0 0
        %6943 = vmatpush1.bf16.msra.mxu0 %v5532
        %6944 = vmatprep.subr.bf16.mxu0 0
        %6945 = vmatpush1.bf16.msra.mxu0 %v5533
        %6946 = vmatprep.subr.bf16.mxu0 0
        %6947 = vmatpush1.bf16.msra.mxu0 %v5534
        %6948 = vmatprep.subr.bf16.mxu0 0
        %6949 = vmatpush1.bf16.msra.mxu0 %v5535
        %6950 = vmatprep.subr.bf16.mxu0 0
        %6951 = vmatpush1.bf16.msra.mxu0 %v5536
        %6952 = vmatprep.subr.bf16.mxu0 0
        %6953 = vmatpush1.bf16.msra.mxu0 %v5537
        %6954 = vmatprep.mubr.bf16.mxu0 %v1533
        %6955 = vmatmul.mubr.bf16.gmra.mrb[0].mxu0 %v1532
        %v6956 = vpop.f32.mrb[0].mxu0
        %v6957 = vadd.f32 %v6917, %v6956
        %v6958 = vpop.f32.mrb[0].mxu0
        %v6959 = vpop.f32.mrb[0].mxu0
        %v6960 = vpop.f32.mrb[0].mxu0
        %6961 = vdwg.mxu0
        %6962 = vmatprep.subr.bf16.mxu0 0
        %6963 = vmatpush1.bf16.msra.mxu0 %v5538
        %6964 = vmatprep.subr.bf16.mxu0 0
        %6965 = vmatpush1.bf16.msra.mxu0 %v5539
        %6966 = vmatprep.subr.bf16.mxu0 0
        %6967 = vmatpush1.bf16.msra.mxu0 %v5540
        %6968 = vmatprep.subr.bf16.mxu0 0
        %6969 = vmatpush1.bf16.msra.mxu0 %v5541
        %6970 = vmatprep.subr.bf16.mxu0 0
        %6971 = vmatpush1.bf16.msra.mxu0 %v5542
        %6972 = vmatprep.subr.bf16.mxu0 0
        %6973 = vmatpush1.bf16.msra.mxu0 %v5543
        %6974 = vmatprep.subr.bf16.mxu0 0
        %6975 = vmatpush1.bf16.msra.mxu0 %v5544
        %6976 = vmatprep.subr.bf16.mxu0 0
        %6977 = vmatpush1.bf16.msra.mxu0 %v5545
        %6978 = vmatprep.subr.bf16.mxu0 0
        %6979 = vmatpush1.bf16.msra.mxu0 %v5546
        %6980 = vmatprep.subr.bf16.mxu0 0
        %6981 = vmatpush1.bf16.msra.mxu0 %v5547
        %6982 = vmatprep.subr.bf16.mxu0 0
        %6983 = vmatpush1.bf16.msra.mxu0 %v5548
        %6984 = vmatprep.subr.bf16.mxu0 0
        %6985 = vmatpush1.bf16.msra.mxu0 %v5549
        %6986 = vmatprep.subr.bf16.mxu0 0
        %6987 = vmatpush1.bf16.msra.mxu0 %v5550
        %6988 = vmatprep.subr.bf16.mxu0 0
        %6989 = vmatpush1.bf16.msra.mxu0 %v5551
        %6990 = vmatprep.subr.bf16.mxu0 0
        %6991 = vmatpush1.bf16.msra.mxu0 %v5552
        %6992 = vmatprep.subr.bf16.mxu0 0
        %6993 = vmatpush1.bf16.msra.mxu0 %v5553
        %6994 = vmatprep.mubr.bf16.mxu0 %v1535
        %6995 = vmatmul.mubr.bf16.gmra.mrb[0].mxu0 %v1534
        %v6996 = vpop.f32.mrb[0].mxu0
        %v6997 = vadd.f32 %v6957, %v6996
        %v6998 = vpop.f32.mrb[0].mxu0
        %v6999 = vpop.f32.mrb[0].mxu0
        %v7000 = vpop.f32.mrb[0].mxu0
        %7001 = vdwg.mxu0
        %7002 = vmatprep.subr.bf16.mxu0 0
        %7003 = vmatpush1.bf16.msra.mxu0 %v5554
        %7004 = vmatprep.subr.bf16.mxu0 0
        %7005 = vmatpush1.bf16.msra.mxu0 %v5555
        %7006 = vmatprep.subr.bf16.mxu0 0
        %7007 = vmatpush1.bf16.msra.mxu0 %v5556
        %7008 = vmatprep.subr.bf16.mxu0 0
        %7009 = vmatpush1.bf16.msra.mxu0 %v5557
        %7010 = vmatprep.subr.bf16.mxu0 0
        %7011 = vmatpush1.bf16.msra.mxu0 %v5558
        %7012 = vmatprep.subr.bf16.mxu0 0
        %7013 = vmatpush1.bf16.msra.mxu0 %v5559
        %7014 = vmatprep.subr.bf16.mxu0 0
        %7015 = vmatpush1.bf16.msra.mxu0 %v5560
        %7016 = vmatprep.subr.bf16.mxu0 0
        %7017 = vmatpush1.bf16.msra.mxu0 %v5561
        %7018 = vmatprep.subr.bf16.mxu0 0
        %7019 = vmatpush1.bf16.msra.mxu0 %v5562
        %7020 = vmatprep.subr.bf16.mxu0 0
        %7021 = vmatpush1.bf16.msra.mxu0 %v5563
        %7022 = vmatprep.subr.bf16.mxu0 0
        %7023 = vmatpush1.bf16.msra.mxu0 %v5564
        %7024 = vmatprep.subr.bf16.mxu0 0
        %7025 = vmatpush1.bf16.msra.mxu0 %v5565
        %7026 = vmatprep.subr.bf16.mxu0 0
        %7027 = vmatpush1.bf16.msra.mxu0 %v5566
        %7028 = vmatprep.subr.bf16.mxu0 0
        %7029 = vmatpush1.bf16.msra.mxu0 %v5567
        %7030 = vmatprep.subr.bf16.mxu0 0
        %7031 = vmatpush1.bf16.msra.mxu0 %v5568
        %7032 = vmatprep.subr.bf16.mxu0 0
        %7033 = vmatpush1.bf16.msra.mxu0 %v5569
        %7034 = vmatprep.mubr.bf16.mxu0 %v1537
        %7035 = vmatmul.mubr.bf16.gmra.mrb[0].mxu0 %v1536
        %v7036 = vpop.f32.mrb[0].mxu0
        %v7037 = vadd.f32 %v6997, %v7036
        %v7038 = vpop.f32.mrb[0].mxu0
        %v7039 = vpop.f32.mrb[0].mxu0
        %v7040 = vpop.f32.mrb[0].mxu0
        %7041 = vdwg.mxu0
        %7042 = vmatprep.subr.bf16.mxu0 0
        %7043 = vmatpush1.bf16.msra.mxu0 %v5570
        %7044 = vmatprep.subr.bf16.mxu0 0
        %7045 = vmatpush1.bf16.msra.mxu0 %v5571
        %7046 = vmatprep.subr.bf16.mxu0 0
        %7047 = vmatpush1.bf16.msra.mxu0 %v5572
        %7048 = vmatprep.subr.bf16.mxu0 0
        %7049 = vmatpush1.bf16.msra.mxu0 %v5573
        %7050 = vmatprep.subr.bf16.mxu0 0
        %7051 = vmatpush1.bf16.msra.mxu0 %v5574
        %7052 = vmatprep.subr.bf16.mxu0 0
        %7053 = vmatpush1.bf16.msra.mxu0 %v5575
        %7054 = vmatprep.subr.bf16.mxu0 0
        %7055 = vmatpush1.bf16.msra.mxu0 %v5576
        %7056 = vmatprep.subr.bf16.mxu0 0
        %7057 = vmatpush1.bf16.msra.mxu0 %v5577
        %7058 = vmatprep.subr.bf16.mxu0 0
        %7059 = vmatpush1.bf16.msra.mxu0 %v5578
        %7060 = vmatprep.subr.bf16.mxu0 0
        %7061 = vmatpush1.bf16.msra.mxu0 %v5579
        %7062 = vmatprep.subr.bf16.mxu0 0
        %7063 = vmatpush1.bf16.msra.mxu0 %v5580
        %7064 = vmatprep.subr.bf16.mxu0 0
        %7065 = vmatpush1.bf16.msra.mxu0 %v5581
        %7066 = vmatprep.subr.bf16.mxu0 0
        %7067 = vmatpush1.bf16.msra.mxu0 %v5582
        %7068 = vmatprep.subr.bf16.mxu0 0
        %7069 = vmatpush1.bf16.msra.mxu0 %v5583
        %7070 = vmatprep.subr.bf16.mxu0 0
        %7071 = vmatpush1.bf16.msra.mxu0 %v5584
        %7072 = vmatprep.subr.bf16.mxu0 0
        %7073 = vmatpush1.bf16.msra.mxu0 %v5585
        %7074 = vmatprep.mubr.bf16.mxu0 %v1539
        %7075 = vmatmul.mubr.bf16.gmra.mrb[0].mxu0 %v1538
        %v7076 = vpop.f32.mrb[0].mxu0
        %v7077 = vadd.f32 %v7037, %v7076
        %v7078 = vpop.f32.mrb[0].mxu0
        %v7079 = vpop.f32.mrb[0].mxu0
        %v7080 = vpop.f32.mrb[0].mxu0
        %7081 = vdwg.mxu0
        %7082 = vmatprep.subr.bf16.mxu0 0
        %7083 = vmatpush1.bf16.msra.mxu0 %v5586
        %7084 = vmatprep.subr.bf16.mxu0 0
        %7085 = vmatpush1.bf16.msra.mxu0 %v5587
        %7086 = vmatprep.subr.bf16.mxu0 0
        %7087 = vmatpush1.bf16.msra.mxu0 %v5588
        %7088 = vmatprep.subr.bf16.mxu0 0
        %7089 = vmatpush1.bf16.msra.mxu0 %v5589
        %7090 = vmatprep.subr.bf16.mxu0 0
        %7091 = vmatpush1.bf16.msra.mxu0 %v5590
        %7092 = vmatprep.subr.bf16.mxu0 0
        %7093 = vmatpush1.bf16.msra.mxu0 %v5591
        %7094 = vmatprep.subr.bf16.mxu0 0
        %7095 = vmatpush1.bf16.msra.mxu0 %v5592
        %7096 = vmatprep.subr.bf16.mxu0 0
        %7097 = vmatpush1.bf16.msra.mxu0 %v5593
        %7098 = vmatprep.subr.bf16.mxu0 0
        %7099 = vmatpush1.bf16.msra.mxu0 %v5594
        %7100 = vmatprep.subr.bf16.mxu0 0
        %7101 = vmatpush1.bf16.msra.mxu0 %v5595
        %7102 = vmatprep.subr.bf16.mxu0 0
        %7103 = vmatpush1.bf16.msra.mxu0 %v5596
        %7104 = vmatprep.subr.bf16.mxu0 0
        %7105 = vmatpush1.bf16.msra.mxu0 %v5597
        %7106 = vmatprep.subr.bf16.mxu0 0
        %7107 = vmatpush1.bf16.msra.mxu0 %v5598
        %7108 = vmatprep.subr.bf16.mxu0 0
        %7109 = vmatpush1.bf16.msra.mxu0 %v5599
        %7110 = vmatprep.subr.bf16.mxu0 0
        %7111 = vmatpush1.bf16.msra.mxu0 %v5600
        %7112 = vmatprep.subr.bf16.mxu0 0
        %7113 = vmatpush1.bf16.msra.mxu0 %v5601
        %7114 = vmatprep.mubr.bf16.mxu0 %v1541
        %7115 = vmatmul.mubr.bf16.gmra.mrb[0].mxu0 %v1540
        %v7116 = vpop.f32.mrb[0].mxu0
        %v7117 = vadd.f32 %v7077, %v7116
        %v7118 = vpop.f32.mrb[0].mxu0
        %v7119 = vpop.f32.mrb[0].mxu0
        %v7120 = vpop.f32.mrb[0].mxu0
        %7121 = vdwg.mxu0
        %7122 = vmatprep.subr.bf16.mxu0 0
        %7123 = vmatpush1.bf16.msra.mxu0 %v5602
        %7124 = vmatprep.subr.bf16.mxu0 0
        %7125 = vmatpush1.bf16.msra.mxu0 %v5603
        %7126 = vmatprep.subr.bf16.mxu0 0
        %7127 = vmatpush1.bf16.msra.mxu0 %v5604
        %7128 = vmatprep.subr.bf16.mxu0 0
        %7129 = vmatpush1.bf16.msra.mxu0 %v5605
        %7130 = vmatprep.subr.bf16.mxu0 0
        %7131 = vmatpush1.bf16.msra.mxu0 %v5606
        %7132 = vmatprep.subr.bf16.mxu0 0
        %7133 = vmatpush1.bf16.msra.mxu0 %v5607
        %7134 = vmatprep.subr.bf16.mxu0 0
        %7135 = vmatpush1.bf16.msra.mxu0 %v5608
        %7136 = vmatprep.subr.bf16.mxu0 0
        %7137 = vmatpush1.bf16.msra.mxu0 %v5609
        %7138 = vmatprep.subr.bf16.mxu0 0
        %7139 = vmatpush1.bf16.msra.mxu0 %v5610
        %7140 = vmatprep.subr.bf16.mxu0 0
        %7141 = vmatpush1.bf16.msra.mxu0 %v5611
        %7142 = vmatprep.subr.bf16.mxu0 0
        %7143 = vmatpush1.bf16.msra.mxu0 %v5612
        %7144 = vmatprep.subr.bf16.mxu0 0
        %7145 = vmatpush1.bf16.msra.mxu0 %v5613
        %7146 = vmatprep.subr.bf16.mxu0 0
        %7147 = vmatpush1.bf16.msra.mxu0 %v5614
        %7148 = vmatprep.subr.bf16.mxu0 0
        %7149 = vmatpush1.bf16.msra.mxu0 %v5615
        %7150 = vmatprep.subr.bf16.mxu0 0
        %7151 = vmatpush1.bf16.msra.mxu0 %v5616
        %7152 = vmatprep.subr.bf16.mxu0 0
        %7153 = vmatpush1.bf16.msra.mxu0 %v5617
        %7154 = vmatprep.mubr.bf16.mxu0 %v1543
        %7155 = vmatmul.mubr.bf16.gmra.mrb[0].mxu0 %v1542
        %v7156 = vpop.f32.mrb[0].mxu0
        %v7157 = vadd.f32 %v7117, %v7156
        %v7158 = vpop.f32.mrb[0].mxu0
        %v7159 = vpop.f32.mrb[0].mxu0
        %v7160 = vpop.f32.mrb[0].mxu0
        %7161 = vdwg.mxu0
        %7162 = vmatprep.subr.bf16.mxu0 0
        %7163 = vmatpush1.bf16.msra.mxu0 %v5618
        %7164 = vmatprep.subr.bf16.mxu0 0
        %7165 = vmatpush1.bf16.msra.mxu0 %v5619
        %7166 = vmatprep.subr.bf16.mxu0 0
        %7167 = vmatpush1.bf16.msra.mxu0 %v5620
        %7168 = vmatprep.subr.bf16.mxu0 0
        %7169 = vmatpush1.bf16.msra.mxu0 %v5621
        %7170 = vmatprep.subr.bf16.mxu0 0
        %7171 = vmatpush1.bf16.msra.mxu0 %v5622
        %7172 = vmatprep.subr.bf16.mxu0 0
        %7173 = vmatpush1.bf16.msra.mxu0 %v5623
        %7174 = vmatprep.subr.bf16.mxu0 0
        %7175 = vmatpush1.bf16.msra.mxu0 %v5624
        %7176 = vmatprep.subr.bf16.mxu0 0
        %7177 = vmatpush1.bf16.msra.mxu0 %v5625
        %7178 = vmatprep.subr.bf16.mxu0 0
        %7179 = vmatpush1.bf16.msra.mxu0 %v5626
        %7180 = vmatprep.subr.bf16.mxu0 0
        %7181 = vmatpush1.bf16.msra.mxu0 %v5627
        %7182 = vmatprep.subr.bf16.mxu0 0
        %7183 = vmatpush1.bf16.msra.mxu0 %v5628
        %7184 = vmatprep.subr.bf16.mxu0 0
        %7185 = vmatpush1.bf16.msra.mxu0 %v5629
        %7186 = vmatprep.subr.bf16.mxu0 0
        %7187 = vmatpush1.bf16.msra.mxu0 %v5630
        %7188 = vmatprep.subr.bf16.mxu0 0
        %7189 = vmatpush1.bf16.msra.mxu0 %v5631
        %7190 = vmatprep.subr.bf16.mxu0 0
        %7191 = vmatpush1.bf16.msra.mxu0 %v5632
        %7192 = vmatprep.subr.bf16.mxu0 0
        %7193 = vmatpush1.bf16.msra.mxu0 %v5633
        %7194 = vmatprep.mubr.bf16.mxu0 %v1545
        %7195 = vmatmul.mubr.bf16.gmra.mrb[0].mxu0 %v1544
        %v7196 = vpop.f32.mrb[0].mxu0
        %v7197 = vadd.f32 %v7157, %v7196
        %v7198 = vpop.f32.mrb[0].mxu0
        %v7199 = vpop.f32.mrb[0].mxu0
        %v7200 = vpop.f32.mrb[0].mxu0
        %7201 = vdwg.mxu0
        %7202 = vmatprep.subr.bf16.mxu0 0
        %7203 = vmatpush1.bf16.msra.mxu0 %v5634
        %7204 = vmatprep.subr.bf16.mxu0 0
        %7205 = vmatpush1.bf16.msra.mxu0 %v5635
        %7206 = vmatprep.subr.bf16.mxu0 0
        %7207 = vmatpush1.bf16.msra.mxu0 %v5636
        %7208 = vmatprep.subr.bf16.mxu0 0
        %7209 = vmatpush1.bf16.msra.mxu0 %v5637
        %7210 = vmatprep.subr.bf16.mxu0 0
        %7211 = vmatpush1.bf16.msra.mxu0 %v5638
        %7212 = vmatprep.subr.bf16.mxu0 0
        %7213 = vmatpush1.bf16.msra.mxu0 %v5639
        %7214 = vmatprep.subr.bf16.mxu0 0
        %7215 = vmatpush1.bf16.msra.mxu0 %v5640
        %7216 = vmatprep.subr.bf16.mxu0 0
        %7217 = vmatpush1.bf16.msra.mxu0 %v5641
        %7218 = vmatprep.subr.bf16.mxu0 0
        %7219 = vmatpush1.bf16.msra.mxu0 %v5642
        %7220 = vmatprep.subr.bf16.mxu0 0
        %7221 = vmatpush1.bf16.msra.mxu0 %v5643
        %7222 = vmatprep.subr.bf16.mxu0 0
        %7223 = vmatpush1.bf16.msra.mxu0 %v5644
        %7224 = vmatprep.subr.bf16.mxu0 0
        %7225 = vmatpush1.bf16.msra.mxu0 %v5645
        %7226 = vmatprep.subr.bf16.mxu0 0
        %7227 = vmatpush1.bf16.msra.mxu0 %v5646
        %7228 = vmatprep.subr.bf16.mxu0 0
        %7229 = vmatpush1.bf16.msra.mxu0 %v5647
        %7230 = vmatprep.subr.bf16.mxu0 0
        %7231 = vmatpush1.bf16.msra.mxu0 %v5648
        %7232 = vmatprep.subr.bf16.mxu0 0
        %7233 = vmatpush1.bf16.msra.mxu0 %v5649
        %7234 = vmatprep.mubr.bf16.mxu0 %v1547
        %7235 = vmatmul.mubr.bf16.gmra.mrb[0].mxu0 %v1546
        %v7236 = vpop.f32.mrb[0].mxu0
        %v7237 = vadd.f32 %v7197, %v7236
        %v7238 = vpop.f32.mrb[0].mxu0
        %v7239 = vpop.f32.mrb[0].mxu0
        %v7240 = vpop.f32.mrb[0].mxu0
        %7241 = vdwg.mxu0
        %7242 = vmatprep.subr.bf16.mxu0 0
        %7243 = vmatpush1.bf16.msra.mxu0 %v5650
        %7244 = vmatprep.subr.bf16.mxu0 0
        %7245 = vmatpush1.bf16.msra.mxu0 %v5651
        %7246 = vmatprep.subr.bf16.mxu0 0
        %7247 = vmatpush1.bf16.msra.mxu0 %v5652
        %7248 = vmatprep.subr.bf16.mxu0 0
        %7249 = vmatpush1.bf16.msra.mxu0 %v5653
        %7250 = vmatprep.subr.bf16.mxu0 0
        %7251 = vmatpush1.bf16.msra.mxu0 %v5654
        %7252 = vmatprep.subr.bf16.mxu0 0
        %7253 = vmatpush1.bf16.msra.mxu0 %v5655
        %7254 = vmatprep.subr.bf16.mxu0 0
        %7255 = vmatpush1.bf16.msra.mxu0 %v5656
        %7256 = vmatprep.subr.bf16.mxu0 0
        %7257 = vmatpush1.bf16.msra.mxu0 %v5657
        %7258 = vmatprep.subr.bf16.mxu0 0
        %7259 = vmatpush1.bf16.msra.mxu0 %v5658
        %7260 = vmatprep.subr.bf16.mxu0 0
        %7261 = vmatpush1.bf16.msra.mxu0 %v5659
        %7262 = vmatprep.subr.bf16.mxu0 0
        %7263 = vmatpush1.bf16.msra.mxu0 %v5660
        %7264 = vmatprep.subr.bf16.mxu0 0
        %7265 = vmatpush1.bf16.msra.mxu0 %v5661
        %7266 = vmatprep.subr.bf16.mxu0 0
        %7267 = vmatpush1.bf16.msra.mxu0 %v5662
        %7268 = vmatprep.subr.bf16.mxu0 0
        %7269 = vmatpush1.bf16.msra.mxu0 %v5663
        %7270 = vmatprep.subr.bf16.mxu0 0
        %7271 = vmatpush1.bf16.msra.mxu0 %v5664
        %7272 = vmatprep.subr.bf16.mxu0 0
        %7273 = vmatpush1.bf16.msra.mxu0 %v5665
        %7274 = vmatprep.mubr.bf16.mxu0 %v1549
        %7275 = vmatmul.mubr.bf16.gmra.mrb[0].mxu0 %v1548
        %v7276 = vpop.f32.mrb[0].mxu0
        %v7277 = vadd.f32 %v7237, %v7276
        %v7278 = vpop.f32.mrb[0].mxu0
        %v7279 = vpop.f32.mrb[0].mxu0
        %v7280 = vpop.f32.mrb[0].mxu0
        %7281 = vdwg.mxu0
        %7282 = vmatprep.subr.bf16.mxu0 0
        %7283 = vmatpush1.bf16.msra.mxu0 %v5666
        %7284 = vmatprep.subr.bf16.mxu0 0
        %7285 = vmatpush1.bf16.msra.mxu0 %v5667
        %7286 = vmatprep.subr.bf16.mxu0 0
        %7287 = vmatpush1.bf16.msra.mxu0 %v5668
        %7288 = vmatprep.subr.bf16.mxu0 0
        %7289 = vmatpush1.bf16.msra.mxu0 %v5669
        %7290 = vmatprep.subr.bf16.mxu0 0
        %7291 = vmatpush1.bf16.msra.mxu0 %v5670
        %7292 = vmatprep.subr.bf16.mxu0 0
        %7293 = vmatpush1.bf16.msra.mxu0 %v5671
        %7294 = vmatprep.subr.bf16.mxu0 0
        %7295 = vmatpush1.bf16.msra.mxu0 %v5672
        %7296 = vmatprep.subr.bf16.mxu0 0
        %7297 = vmatpush1.bf16.msra.mxu0 %v5673
        %7298 = vmatprep.subr.bf16.mxu0 0
        %7299 = vmatpush1.bf16.msra.mxu0 %v5674
        %7300 = vmatprep.subr.bf16.mxu0 0
        %7301 = vmatpush1.bf16.msra.mxu0 %v5675
        %7302 = vmatprep.subr.bf16.mxu0 0
        %7303 = vmatpush1.bf16.msra.mxu0 %v5676
        %7304 = vmatprep.subr.bf16.mxu0 0
        %7305 = vmatpush1.bf16.msra.mxu0 %v5677
        %7306 = vmatprep.subr.bf16.mxu0 0
        %7307 = vmatpush1.bf16.msra.mxu0 %v5678
        %7308 = vmatprep.subr.bf16.mxu0 0
        %7309 = vmatpush1.bf16.msra.mxu0 %v5679
        %7310 = vmatprep.subr.bf16.mxu0 0
        %7311 = vmatpush1.bf16.msra.mxu0 %v5680
        %7312 = vmatprep.subr.bf16.mxu0 0
        %7313 = vmatpush1.bf16.msra.mxu0 %v5681
        %7314 = vmatprep.mubr.bf16.mxu0 %v1551
        %7315 = vmatmul.mubr.bf16.gmra.mrb[0].mxu0 %v1550
        %v7316 = vpop.f32.mrb[0].mxu0
        %v7317 = vadd.f32 %v7277, %v7316
        %v7318 = vpop.f32.mrb[0].mxu0
        %v7319 = vpop.f32.mrb[0].mxu0
        %v7320 = vpop.f32.mrb[0].mxu0
        %7321 = vdwg.mxu0
        %7322 = vmatprep.subr.bf16.mxu0 0
        %7323 = vmatpush1.bf16.msra.mxu0 %v5682
        %7324 = vmatprep.subr.bf16.mxu0 0
        %7325 = vmatpush1.bf16.msra.mxu0 %v5683
        %7326 = vmatprep.subr.bf16.mxu0 0
        %7327 = vmatpush1.bf16.msra.mxu0 %v5684
        %7328 = vmatprep.subr.bf16.mxu0 0
        %7329 = vmatpush1.bf16.msra.mxu0 %v5685
        %7330 = vmatprep.subr.bf16.mxu0 0
        %7331 = vmatpush1.bf16.msra.mxu0 %v5686
        %7332 = vmatprep.subr.bf16.mxu0 0
        %7333 = vmatpush1.bf16.msra.mxu0 %v5687
        %7334 = vmatprep.subr.bf16.mxu0 0
        %7335 = vmatpush1.bf16.msra.mxu0 %v5688
        %7336 = vmatprep.subr.bf16.mxu0 0
        %7337 = vmatpush1.bf16.msra.mxu0 %v5689
        %7338 = vmatprep.subr.bf16.mxu0 0
        %7339 = vmatpush1.bf16.msra.mxu0 %v5690
        %7340 = vmatprep.subr.bf16.mxu0 0
        %7341 = vmatpush1.bf16.msra.mxu0 %v5691
        %7342 = vmatprep.subr.bf16.mxu0 0
        %7343 = vmatpush1.bf16.msra.mxu0 %v5692
        %7344 = vmatprep.subr.bf16.mxu0 0
        %7345 = vmatpush1.bf16.msra.mxu0 %v5693
        %7346 = vmatprep.subr.bf16.mxu0 0
        %7347 = vmatpush1.bf16.msra.mxu0 %v5694
        %7348 = vmatprep.subr.bf16.mxu0 0
        %7349 = vmatpush1.bf16.msra.mxu0 %v5695
        %7350 = vmatprep.subr.bf16.mxu0 0
        %7351 = vmatpush1.bf16.msra.mxu0 %v5696
        %7352 = vmatprep.subr.bf16.mxu0 0
        %7353 = vmatpush1.bf16.msra.mxu0 %v5697
        %7354 = vmatprep.mubr.bf16.mxu0 %v1553
        %7355 = vmatmul.mubr.bf16.gmra.mrb[0].mxu0 %v1552
        %v7356 = vpop.f32.mrb[0].mxu0
        %v7357 = vadd.f32 %v7317, %v7356
        %v7358 = vpop.f32.mrb[0].mxu0
        %v7359 = vpop.f32.mrb[0].mxu0
        %v7360 = vpop.f32.mrb[0].mxu0
        %7361 = vdwg.mxu0
        %7362 = vmatprep.subr.bf16.mxu0 0
        %7363 = vmatpush1.bf16.msra.mxu0 %v5698
        %7364 = vmatprep.subr.bf16.mxu0 0
        %7365 = vmatpush1.bf16.msra.mxu0 %v5699
        %7366 = vmatprep.subr.bf16.mxu0 0
        %7367 = vmatpush1.bf16.msra.mxu0 %v5700
        %7368 = vmatprep.subr.bf16.mxu0 0
        %7369 = vmatpush1.bf16.msra.mxu0 %v5701
        %7370 = vmatprep.subr.bf16.mxu0 0
        %7371 = vmatpush1.bf16.msra.mxu0 %v5702
        %7372 = vmatprep.subr.bf16.mxu0 0
        %7373 = vmatpush1.bf16.msra.mxu0 %v5703
        %7374 = vmatprep.subr.bf16.mxu0 0
        %7375 = vmatpush1.bf16.msra.mxu0 %v5704
        %7376 = vmatprep.subr.bf16.mxu0 0
        %7377 = vmatpush1.bf16.msra.mxu0 %v5705
        %7378 = vmatprep.subr.bf16.mxu0 0
        %7379 = vmatpush1.bf16.msra.mxu0 %v5706
        %7380 = vmatprep.subr.bf16.mxu0 0
        %7381 = vmatpush1.bf16.msra.mxu0 %v5707
        %7382 = vmatprep.subr.bf16.mxu0 0
        %7383 = vmatpush1.bf16.msra.mxu0 %v5708
        %7384 = vmatprep.subr.bf16.mxu0 0
        %7385 = vmatpush1.bf16.msra.mxu0 %v5709
        %7386 = vmatprep.subr.bf16.mxu0 0
        %7387 = vmatpush1.bf16.msra.mxu0 %v5710
        %7388 = vmatprep.subr.bf16.mxu0 0
        %7389 = vmatpush1.bf16.msra.mxu0 %v5711
        %7390 = vmatprep.subr.bf16.mxu0 0
        %7391 = vmatpush1.bf16.msra.mxu0 %v5712
        %7392 = vmatprep.subr.bf16.mxu0 0
        %7393 = vmatpush1.bf16.msra.mxu0 %v5713
        %7394 = vmatprep.mubr.bf16.mxu0 %v1555
        %7395 = vmatmul.mubr.bf16.gmra.mrb[0].mxu0 %v1554
        %v7396 = vpop.f32.mrb[0].mxu0
        %v7397 = vadd.f32 %v7357, %v7396
        %v7398 = vpop.f32.mrb[0].mxu0
        %v7399 = vpop.f32.mrb[0].mxu0
        %v7400 = vpop.f32.mrb[0].mxu0
        %7401 = vdwg.mxu0
        %7402 = vmatprep.subr.bf16.mxu0 0
        %7403 = vmatpush1.bf16.msra.mxu0 %v5714
        %7404 = vmatprep.subr.bf16.mxu0 0
        %7405 = vmatpush1.bf16.msra.mxu0 %v5715
        %7406 = vmatprep.subr.bf16.mxu0 0
        %7407 = vmatpush1.bf16.msra.mxu0 %v5716
        %7408 = vmatprep.subr.bf16.mxu0 0
        %7409 = vmatpush1.bf16.msra.mxu0 %v5717
        %7410 = vmatprep.subr.bf16.mxu0 0
        %7411 = vmatpush1.bf16.msra.mxu0 %v5718
        %7412 = vmatprep.subr.bf16.mxu0 0
        %7413 = vmatpush1.bf16.msra.mxu0 %v5719
        %7414 = vmatprep.subr.bf16.mxu0 0
        %7415 = vmatpush1.bf16.msra.mxu0 %v5720
        %7416 = vmatprep.subr.bf16.mxu0 0
        %7417 = vmatpush1.bf16.msra.mxu0 %v5721
        %7418 = vmatprep.subr.bf16.mxu0 0
        %7419 = vmatpush1.bf16.msra.mxu0 %v5722
        %7420 = vmatprep.subr.bf16.mxu0 0
        %7421 = vmatpush1.bf16.msra.mxu0 %v5723
        %7422 = vmatprep.subr.bf16.mxu0 0
        %7423 = vmatpush1.bf16.msra.mxu0 %v5724
        %7424 = vmatprep.subr.bf16.mxu0 0
        %7425 = vmatpush1.bf16.msra.mxu0 %v5725
        %7426 = vmatprep.subr.bf16.mxu0 0
        %7427 = vmatpush1.bf16.msra.mxu0 %v5726
        %7428 = vmatprep.subr.bf16.mxu0 0
        %7429 = vmatpush1.bf16.msra.mxu0 %v5727
        %7430 = vmatprep.subr.bf16.mxu0 0
        %7431 = vmatpush1.bf16.msra.mxu0 %v5728
        %7432 = vmatprep.subr.bf16.mxu0 0
        %7433 = vmatpush1.bf16.msra.mxu0 %v5729
        %7434 = vmatprep.mubr.bf16.mxu0 %v1557
        %7435 = vmatmul.mubr.bf16.gmra.mrb[0].mxu0 %v1556
        %v7436 = vpop.f32.mrb[0].mxu0
        %v7437 = vadd.f32 %v7397, %v7436
        %v7438 = vpop.f32.mrb[0].mxu0
        %v7439 = vpop.f32.mrb[0].mxu0
        %v7440 = vpop.f32.mrb[0].mxu0
        %7441 = vdwg.mxu0
        %7442 = vmatprep.subr.bf16.mxu0 0
        %7443 = vmatpush1.bf16.msra.mxu0 %v5730
        %7444 = vmatprep.subr.bf16.mxu0 0
        %7445 = vmatpush1.bf16.msra.mxu0 %v5731
        %7446 = vmatprep.subr.bf16.mxu0 0
        %7447 = vmatpush1.bf16.msra.mxu0 %v5732
        %7448 = vmatprep.subr.bf16.mxu0 0
        %7449 = vmatpush1.bf16.msra.mxu0 %v5733
        %7450 = vmatprep.subr.bf16.mxu0 0
        %7451 = vmatpush1.bf16.msra.mxu0 %v5734
        %7452 = vmatprep.subr.bf16.mxu0 0
        %7453 = vmatpush1.bf16.msra.mxu0 %v5735
        %7454 = vmatprep.subr.bf16.mxu0 0
        %7455 = vmatpush1.bf16.msra.mxu0 %v5736
        %7456 = vmatprep.subr.bf16.mxu0 0
        %7457 = vmatpush1.bf16.msra.mxu0 %v5737
        %7458 = vmatprep.subr.bf16.mxu0 0
        %7459 = vmatpush1.bf16.msra.mxu0 %v5738
        %7460 = vmatprep.subr.bf16.mxu0 0
        %7461 = vmatpush1.bf16.msra.mxu0 %v5739
        %7462 = vmatprep.subr.bf16.mxu0 0
        %7463 = vmatpush1.bf16.msra.mxu0 %v5740
        %7464 = vmatprep.subr.bf16.mxu0 0
        %7465 = vmatpush1.bf16.msra.mxu0 %v5741
        %7466 = vmatprep.subr.bf16.mxu0 0
        %7467 = vmatpush1.bf16.msra.mxu0 %v5742
        %7468 = vmatprep.subr.bf16.mxu0 0
        %7469 = vmatpush1.bf16.msra.mxu0 %v5743
        %7470 = vmatprep.subr.bf16.mxu0 0
        %7471 = vmatpush1.bf16.msra.mxu0 %v5744
        %7472 = vmatprep.subr.bf16.mxu0 0
        %7473 = vmatpush1.bf16.msra.mxu0 %v5745
        %7474 = vmatprep.mubr.bf16.mxu0 %v1559
        %7475 = vmatmul.mubr.bf16.gmra.mrb[0].mxu0 %v1558
        %v7476 = vpop.f32.mrb[0].mxu0
        %v7477 = vadd.f32 %v7437, %v7476
        %v7478 = vpop.f32.mrb[0].mxu0
        %v7479 = vpop.f32.mrb[0].mxu0
        %v7480 = vpop.f32.mrb[0].mxu0
        %7481 = vdwg.mxu0
        %7482 = vmatprep.subr.bf16.mxu0 0
        %7483 = vmatpush1.bf16.msra.mxu0 %v5746
        %7484 = vmatprep.subr.bf16.mxu0 0
        %7485 = vmatpush1.bf16.msra.mxu0 %v5747
        %7486 = vmatprep.subr.bf16.mxu0 0
        %7487 = vmatpush1.bf16.msra.mxu0 %v5748
        %7488 = vmatprep.subr.bf16.mxu0 0
        %7489 = vmatpush1.bf16.msra.mxu0 %v5749
        %7490 = vmatprep.subr.bf16.mxu0 0
        %7491 = vmatpush1.bf16.msra.mxu0 %v5750
        %7492 = vmatprep.subr.bf16.mxu0 0
        %7493 = vmatpush1.bf16.msra.mxu0 %v5751
        %7494 = vmatprep.subr.bf16.mxu0 0
        %7495 = vmatpush1.bf16.msra.mxu0 %v5752
        %7496 = vmatprep.subr.bf16.mxu0 0
        %7497 = vmatpush1.bf16.msra.mxu0 %v5753
        %7498 = vmatprep.subr.bf16.mxu0 0
        %7499 = vmatpush1.bf16.msra.mxu0 %v5754
        %7500 = vmatprep.subr.bf16.mxu0 0
        %7501 = vmatpush1.bf16.msra.mxu0 %v5755
        %7502 = vmatprep.subr.bf16.mxu0 0
        %7503 = vmatpush1.bf16.msra.mxu0 %v5756
        %7504 = vmatprep.subr.bf16.mxu0 0
        %7505 = vmatpush1.bf16.msra.mxu0 %v5757
        %7506 = vmatprep.subr.bf16.mxu0 0
        %7507 = vmatpush1.bf16.msra.mxu0 %v5758
        %7508 = vmatprep.subr.bf16.mxu0 0
        %7509 = vmatpush1.bf16.msra.mxu0 %v5759
        %7510 = vmatprep.subr.bf16.mxu0 0
        %7511 = vmatpush1.bf16.msra.mxu0 %v5760
        %7512 = vmatprep.subr.bf16.mxu0 0
        %7513 = vmatpush1.bf16.msra.mxu0 %v5761
        %7514 = vmatprep.mubr.bf16.mxu0 %v1561
        %7515 = vmatmul.mubr.bf16.gmra.mrb[0].mxu0 %v1560
        %v7516 = vpop.f32.mrb[0].mxu0
        %v7517 = vadd.f32 %v7477, %v7516
        %v7518 = vpop.f32.mrb[0].mxu0
        %v7519 = vpop.f32.mrb[0].mxu0
        %v7520 = vpop.f32.mrb[0].mxu0
        %7521 = vdwg.mxu0
        %7522 = vmatprep.subr.bf16.mxu0 0
        %7523 = vmatpush1.bf16.msra.mxu0 %v5762
        %7524 = vmatprep.subr.bf16.mxu0 0
        %7525 = vmatpush1.bf16.msra.mxu0 %v5763
        %7526 = vmatprep.subr.bf16.mxu0 0
        %7527 = vmatpush1.bf16.msra.mxu0 %v5764
        %7528 = vmatprep.subr.bf16.mxu0 0
        %7529 = vmatpush1.bf16.msra.mxu0 %v5765
        %7530 = vmatprep.subr.bf16.mxu0 0
        %7531 = vmatpush1.bf16.msra.mxu0 %v5766
        %7532 = vmatprep.subr.bf16.mxu0 0
        %7533 = vmatpush1.bf16.msra.mxu0 %v5767
        %7534 = vmatprep.subr.bf16.mxu0 0
        %7535 = vmatpush1.bf16.msra.mxu0 %v5768
        %7536 = vmatprep.subr.bf16.mxu0 0
        %7537 = vmatpush1.bf16.msra.mxu0 %v5769
        %7538 = vmatprep.subr.bf16.mxu0 0
        %7539 = vmatpush1.bf16.msra.mxu0 %v5770
        %7540 = vmatprep.subr.bf16.mxu0 0
        %7541 = vmatpush1.bf16.msra.mxu0 %v5771
        %7542 = vmatprep.subr.bf16.mxu0 0
        %7543 = vmatpush1.bf16.msra.mxu0 %v5772
        %7544 = vmatprep.subr.bf16.mxu0 0
        %7545 = vmatpush1.bf16.msra.mxu0 %v5773
        %7546 = vmatprep.subr.bf16.mxu0 0
        %7547 = vmatpush1.bf16.msra.mxu0 %v5774
        %7548 = vmatprep.subr.bf16.mxu0 0
        %7549 = vmatpush1.bf16.msra.mxu0 %v5775
        %7550 = vmatprep.subr.bf16.mxu0 0
        %7551 = vmatpush1.bf16.msra.mxu0 %v5776
        %7552 = vmatprep.subr.bf16.mxu0 0
        %7553 = vmatpush1.bf16.msra.mxu0 %v5777
        %7554 = vmatprep.mubr.bf16.mxu0 %v1563
        %7555 = vmatmul.mubr.bf16.gmra.mrb[0].mxu0 %v1562
        %v7556 = vpop.f32.mrb[0].mxu0
        %v7557 = vadd.f32 %v7517, %v7556
        %v7558 = vpop.f32.mrb[0].mxu0
        %v7559 = vpop.f32.mrb[0].mxu0
        %v7560 = vpop.f32.mrb[0].mxu0
        %7561 = vdwg.mxu0
        %7562 = vmatprep.subr.bf16.mxu0 0
        %7563 = vmatpush1.bf16.msra.mxu0 %v5778
        %7564 = vmatprep.subr.bf16.mxu0 0
        %7565 = vmatpush1.bf16.msra.mxu0 %v5779
        %7566 = vmatprep.subr.bf16.mxu0 0
        %7567 = vmatpush1.bf16.msra.mxu0 %v5780
        %7568 = vmatprep.subr.bf16.mxu0 0
        %7569 = vmatpush1.bf16.msra.mxu0 %v5781
        %7570 = vmatprep.subr.bf16.mxu0 0
        %7571 = vmatpush1.bf16.msra.mxu0 %v5782
        %7572 = vmatprep.subr.bf16.mxu0 0
        %7573 = vmatpush1.bf16.msra.mxu0 %v5783
        %7574 = vmatprep.subr.bf16.mxu0 0
        %7575 = vmatpush1.bf16.msra.mxu0 %v5784
        %7576 = vmatprep.subr.bf16.mxu0 0
        %7577 = vmatpush1.bf16.msra.mxu0 %v5785
        %7578 = vmatprep.subr.bf16.mxu0 0
        %7579 = vmatpush1.bf16.msra.mxu0 %v5786
        %7580 = vmatprep.subr.bf16.mxu0 0
        %7581 = vmatpush1.bf16.msra.mxu0 %v5787
        %7582 = vmatprep.subr.bf16.mxu0 0
        %7583 = vmatpush1.bf16.msra.mxu0 %v5788
        %7584 = vmatprep.subr.bf16.mxu0 0
        %7585 = vmatpush1.bf16.msra.mxu0 %v5789
        %7586 = vmatprep.subr.bf16.mxu0 0
        %7587 = vmatpush1.bf16.msra.mxu0 %v5790
        %7588 = vmatprep.subr.bf16.mxu0 0
        %7589 = vmatpush1.bf16.msra.mxu0 %v5791
        %7590 = vmatprep.subr.bf16.mxu0 0
        %7591 = vmatpush1.bf16.msra.mxu0 %v5792
        %7592 = vmatprep.subr.bf16.mxu0 0
        %7593 = vmatpush1.bf16.msra.mxu0 %v5793
        %7594 = vmatprep.mubr.bf16.mxu0 %v1565
        %7595 = vmatmul.mubr.bf16.gmra.mrb[0].mxu0 %v1564
        %v7596 = vpop.f32.mrb[0].mxu0
        %v7597 = vadd.f32 %v7557, %v7596
        %v7598 = vpop.f32.mrb[0].mxu0
        %v7599 = vpop.f32.mrb[0].mxu0
        %v7600 = vpop.f32.mrb[0].mxu0
        %7601 = vdwg.mxu0
        %7602 = vmatprep.subr.bf16.mxu0 0
        %7603 = vmatpush1.bf16.msra.mxu0 %v5794
        %7604 = vmatprep.subr.bf16.mxu0 0
        %7605 = vmatpush1.bf16.msra.mxu0 %v5795
        %7606 = vmatprep.subr.bf16.mxu0 0
        %7607 = vmatpush1.bf16.msra.mxu0 %v5796
        %7608 = vmatprep.subr.bf16.mxu0 0
        %7609 = vmatpush1.bf16.msra.mxu0 %v5797
        %7610 = vmatprep.subr.bf16.mxu0 0
        %7611 = vmatpush1.bf16.msra.mxu0 %v5798
        %7612 = vmatprep.subr.bf16.mxu0 0
        %7613 = vmatpush1.bf16.msra.mxu0 %v5799
        %7614 = vmatprep.subr.bf16.mxu0 0
        %7615 = vmatpush1.bf16.msra.mxu0 %v5800
        %7616 = vmatprep.subr.bf16.mxu0 0
        %7617 = vmatpush1.bf16.msra.mxu0 %v5801
        %7618 = vmatprep.subr.bf16.mxu0 0
        %7619 = vmatpush1.bf16.msra.mxu0 %v5802
        %7620 = vmatprep.subr.bf16.mxu0 0
        %7621 = vmatpush1.bf16.msra.mxu0 %v5803
        %7622 = vmatprep.subr.bf16.mxu0 0
        %7623 = vmatpush1.bf16.msra.mxu0 %v5804
        %7624 = vmatprep.subr.bf16.mxu0 0
        %7625 = vmatpush1.bf16.msra.mxu0 %v5805
        %7626 = vmatprep.subr.bf16.mxu0 0
        %7627 = vmatpush1.bf16.msra.mxu0 %v5806
        %7628 = vmatprep.subr.bf16.mxu0 0
        %7629 = vmatpush1.bf16.msra.mxu0 %v5807
        %7630 = vmatprep.subr.bf16.mxu0 0
        %7631 = vmatpush1.bf16.msra.mxu0 %v5808
        %7632 = vmatprep.subr.bf16.mxu0 0
        %7633 = vmatpush1.bf16.msra.mxu0 %v5809
        %7634 = vmatprep.mubr.bf16.mxu0 %v1567
        %7635 = vmatmul.mubr.bf16.gmra.mrb[0].mxu0 %v1566
        %v7636 = vpop.f32.mrb[0].mxu0
        %v7637 = vadd.f32 %v7597, %v7636
        %v7638 = vpop.f32.mrb[0].mxu0
        %v7639 = vpop.f32.mrb[0].mxu0
        %v7640 = vpop.f32.mrb[0].mxu0
        %7641 = vdwg.mxu0
        %7642 = vmatprep.subr.bf16.mxu0 0
        %7643 = vmatpush1.bf16.msra.mxu0 %v5810
        %7644 = vmatprep.subr.bf16.mxu0 0
        %7645 = vmatpush1.bf16.msra.mxu0 %v5811
        %7646 = vmatprep.subr.bf16.mxu0 0
        %7647 = vmatpush1.bf16.msra.mxu0 %v5812
        %7648 = vmatprep.subr.bf16.mxu0 0
        %7649 = vmatpush1.bf16.msra.mxu0 %v5813
        %7650 = vmatprep.subr.bf16.mxu0 0
        %7651 = vmatpush1.bf16.msra.mxu0 %v5814
        %7652 = vmatprep.subr.bf16.mxu0 0
        %7653 = vmatpush1.bf16.msra.mxu0 %v5815
        %7654 = vmatprep.subr.bf16.mxu0 0
        %7655 = vmatpush1.bf16.msra.mxu0 %v5816
        %7656 = vmatprep.subr.bf16.mxu0 0
        %7657 = vmatpush1.bf16.msra.mxu0 %v5817
        %7658 = vmatprep.subr.bf16.mxu0 0
        %7659 = vmatpush1.bf16.msra.mxu0 %v5818
        %7660 = vmatprep.subr.bf16.mxu0 0
        %7661 = vmatpush1.bf16.msra.mxu0 %v5819
        %7662 = vmatprep.subr.bf16.mxu0 0
        %7663 = vmatpush1.bf16.msra.mxu0 %v5820
        %7664 = vmatprep.subr.bf16.mxu0 0
        %7665 = vmatpush1.bf16.msra.mxu0 %v5821
        %7666 = vmatprep.subr.bf16.mxu0 0
        %7667 = vmatpush1.bf16.msra.mxu0 %v5822
        %7668 = vmatprep.subr.bf16.mxu0 0
        %7669 = vmatpush1.bf16.msra.mxu0 %v5823
        %7670 = vmatprep.subr.bf16.mxu0 0
        %7671 = vmatpush1.bf16.msra.mxu0 %v5824
        %7672 = vmatprep.subr.bf16.mxu0 0
        %7673 = vmatpush1.bf16.msra.mxu0 %v5825
        %7674 = vmatprep.mubr.bf16.mxu0 %v1569
        %7675 = vmatmul.mubr.bf16.gmra.mrb[0].mxu0 %v1568
        %v7676 = vpop.f32.mrb[0].mxu0
        %v7677 = vadd.f32 %v7637, %v7676
        %v7678 = vpop.f32.mrb[0].mxu0
        %v7679 = vpop.f32.mrb[0].mxu0
        %v7680 = vpop.f32.mrb[0].mxu0
        %7681 = vdwg.mxu0
        %7682 = vmatprep.subr.bf16.mxu0 0
        %7683 = vmatpush1.bf16.msra.mxu0 %v5826
        %7684 = vmatprep.subr.bf16.mxu0 0
        %7685 = vmatpush1.bf16.msra.mxu0 %v5827
        %7686 = vmatprep.subr.bf16.mxu0 0
        %7687 = vmatpush1.bf16.msra.mxu0 %v5828
        %7688 = vmatprep.subr.bf16.mxu0 0
        %7689 = vmatpush1.bf16.msra.mxu0 %v5829
        %7690 = vmatprep.subr.bf16.mxu0 0
        %7691 = vmatpush1.bf16.msra.mxu0 %v5830
        %7692 = vmatprep.subr.bf16.mxu0 0
        %7693 = vmatpush1.bf16.msra.mxu0 %v5831
        %7694 = vmatprep.subr.bf16.mxu0 0
        %7695 = vmatpush1.bf16.msra.mxu0 %v5832
        %7696 = vmatprep.subr.bf16.mxu0 0
        %7697 = vmatpush1.bf16.msra.mxu0 %v5833
        %7698 = vmatprep.subr.bf16.mxu0 0
        %7699 = vmatpush1.bf16.msra.mxu0 %v5834
        %7700 = vmatprep.subr.bf16.mxu0 0
        %7701 = vmatpush1.bf16.msra.mxu0 %v5835
        %7702 = vmatprep.subr.bf16.mxu0 0
        %7703 = vmatpush1.bf16.msra.mxu0 %v5836
        %7704 = vmatprep.subr.bf16.mxu0 0
        %7705 = vmatpush1.bf16.msra.mxu0 %v5837
        %7706 = vmatprep.subr.bf16.mxu0 0
        %7707 = vmatpush1.bf16.msra.mxu0 %v5838
        %7708 = vmatprep.subr.bf16.mxu0 0
        %7709 = vmatpush1.bf16.msra.mxu0 %v5839
        %7710 = vmatprep.subr.bf16.mxu0 0
        %7711 = vmatpush1.bf16.msra.mxu0 %v5840
        %7712 = vmatprep.subr.bf16.mxu0 0
        %7713 = vmatpush1.bf16.msra.mxu0 %v5841
        %7714 = vmatprep.mubr.bf16.mxu0 %v1571
        %7715 = vmatmul.mubr.bf16.gmra.mrb[0].mxu0 %v1570
        %v7716 = vpop.f32.mrb[0].mxu0
        %v7717 = vadd.f32 %v7677, %v7716
        %v7718 = vpop.f32.mrb[0].mxu0
        %v7719 = vpop.f32.mrb[0].mxu0
        %v7720 = vpop.f32.mrb[0].mxu0
        %7721 = vdwg.mxu0
        %7722 = vmatprep.subr.bf16.mxu0 0
        %7723 = vmatpush1.bf16.msra.mxu0 %v5842
        %7724 = vmatprep.subr.bf16.mxu0 0
        %7725 = vmatpush1.bf16.msra.mxu0 %v5843
        %7726 = vmatprep.subr.bf16.mxu0 0
        %7727 = vmatpush1.bf16.msra.mxu0 %v5844
        %7728 = vmatprep.subr.bf16.mxu0 0
        %7729 = vmatpush1.bf16.msra.mxu0 %v5845
        %7730 = vmatprep.subr.bf16.mxu0 0
        %7731 = vmatpush1.bf16.msra.mxu0 %v5846
        %7732 = vmatprep.subr.bf16.mxu0 0
        %7733 = vmatpush1.bf16.msra.mxu0 %v5847
        %7734 = vmatprep.subr.bf16.mxu0 0
        %7735 = vmatpush1.bf16.msra.mxu0 %v5848
        %7736 = vmatprep.subr.bf16.mxu0 0
        %7737 = vmatpush1.bf16.msra.mxu0 %v5849
        %7738 = vmatprep.subr.bf16.mxu0 0
        %7739 = vmatpush1.bf16.msra.mxu0 %v5850
        %7740 = vmatprep.subr.bf16.mxu0 0
        %7741 = vmatpush1.bf16.msra.mxu0 %v5851
        %7742 = vmatprep.subr.bf16.mxu0 0
        %7743 = vmatpush1.bf16.msra.mxu0 %v5852
        %7744 = vmatprep.subr.bf16.mxu0 0
        %7745 = vmatpush1.bf16.msra.mxu0 %v5853
        %7746 = vmatprep.subr.bf16.mxu0 0
        %7747 = vmatpush1.bf16.msra.mxu0 %v5854
        %7748 = vmatprep.subr.bf16.mxu0 0
        %7749 = vmatpush1.bf16.msra.mxu0 %v5855
        %7750 = vmatprep.subr.bf16.mxu0 0
        %7751 = vmatpush1.bf16.msra.mxu0 %v5856
        %7752 = vmatprep.subr.bf16.mxu0 0
        %7753 = vmatpush1.bf16.msra.mxu0 %v5857
        %7754 = vmatprep.mubr.bf16.mxu0 %v1573
        %7755 = vmatmul.mubr.bf16.gmra.mrb[0].mxu0 %v1572
        %v7756 = vpop.f32.mrb[0].mxu0
        %v7757 = vadd.f32 %v7717, %v7756
        %v7758 = vpop.f32.mrb[0].mxu0
        %v7759 = vpop.f32.mrb[0].mxu0
        %v7760 = vpop.f32.mrb[0].mxu0
        %7761 = vdwg.mxu0
        %7762 = vmatprep.subr.bf16.mxu0 0
        %7763 = vmatpush1.bf16.msra.mxu0 %v5858
        %7764 = vmatprep.subr.bf16.mxu0 0
        %7765 = vmatpush1.bf16.msra.mxu0 %v5859
        %7766 = vmatprep.subr.bf16.mxu0 0
        %7767 = vmatpush1.bf16.msra.mxu0 %v5860
        %7768 = vmatprep.subr.bf16.mxu0 0
        %7769 = vmatpush1.bf16.msra.mxu0 %v5861
        %7770 = vmatprep.subr.bf16.mxu0 0
        %7771 = vmatpush1.bf16.msra.mxu0 %v5862
        %7772 = vmatprep.subr.bf16.mxu0 0
        %7773 = vmatpush1.bf16.msra.mxu0 %v5863
        %7774 = vmatprep.subr.bf16.mxu0 0
        %7775 = vmatpush1.bf16.msra.mxu0 %v5864
        %7776 = vmatprep.subr.bf16.mxu0 0
        %7777 = vmatpush1.bf16.msra.mxu0 %v5865
        %7778 = vmatprep.subr.bf16.mxu0 0
        %7779 = vmatpush1.bf16.msra.mxu0 %v5866
        %7780 = vmatprep.subr.bf16.mxu0 0
        %7781 = vmatpush1.bf16.msra.mxu0 %v5867
        %7782 = vmatprep.subr.bf16.mxu0 0
        %7783 = vmatpush1.bf16.msra.mxu0 %v5868
        %7784 = vmatprep.subr.bf16.mxu0 0
        %7785 = vmatpush1.bf16.msra.mxu0 %v5869
        %7786 = vmatprep.subr.bf16.mxu0 0
        %7787 = vmatpush1.bf16.msra.mxu0 %v5870
        %7788 = vmatprep.subr.bf16.mxu0 0
        %7789 = vmatpush1.bf16.msra.mxu0 %v5871
        %7790 = vmatprep.subr.bf16.mxu0 0
        %7791 = vmatpush1.bf16.msra.mxu0 %v5872
        %7792 = vmatprep.subr.bf16.mxu0 0
        %7793 = vmatpush1.bf16.msra.mxu0 %v5873
        %7794 = vmatprep.mubr.bf16.mxu0 %v1575
        %7795 = vmatmul.mubr.bf16.gmra.mrb[0].mxu0 %v1574
        %v7796 = vpop.f32.mrb[0].mxu0
        %v7797 = vadd.f32 %v7757, %v7796
        %v7798 = vpop.f32.mrb[0].mxu0
        %v7799 = vpop.f32.mrb[0].mxu0
        %v7800 = vpop.f32.mrb[0].mxu0
        %7801 = vdwg.mxu0
        %7802 = vmatprep.subr.bf16.mxu0 0
        %7803 = vmatpush1.bf16.msra.mxu0 %v5874
        %7804 = vmatprep.subr.bf16.mxu0 0
        %7805 = vmatpush1.bf16.msra.mxu0 %v5875
        %7806 = vmatprep.subr.bf16.mxu0 0
        %7807 = vmatpush1.bf16.msra.mxu0 %v5876
        %7808 = vmatprep.subr.bf16.mxu0 0
        %7809 = vmatpush1.bf16.msra.mxu0 %v5877
        %7810 = vmatprep.subr.bf16.mxu0 0
        %7811 = vmatpush1.bf16.msra.mxu0 %v5878
        %7812 = vmatprep.subr.bf16.mxu0 0
        %7813 = vmatpush1.bf16.msra.mxu0 %v5879
        %7814 = vmatprep.subr.bf16.mxu0 0
        %7815 = vmatpush1.bf16.msra.mxu0 %v5880
        %7816 = vmatprep.subr.bf16.mxu0 0
        %7817 = vmatpush1.bf16.msra.mxu0 %v5881
        %7818 = vmatprep.subr.bf16.mxu0 0
        %7819 = vmatpush1.bf16.msra.mxu0 %v5882
        %7820 = vmatprep.subr.bf16.mxu0 0
        %7821 = vmatpush1.bf16.msra.mxu0 %v5883
        %7822 = vmatprep.subr.bf16.mxu0 0
        %7823 = vmatpush1.bf16.msra.mxu0 %v5884
        %7824 = vmatprep.subr.bf16.mxu0 0
        %7825 = vmatpush1.bf16.msra.mxu0 %v5885
        %7826 = vmatprep.subr.bf16.mxu0 0
        %7827 = vmatpush1.bf16.msra.mxu0 %v5886
        %7828 = vmatprep.subr.bf16.mxu0 0
        %7829 = vmatpush1.bf16.msra.mxu0 %v5887
        %7830 = vmatprep.subr.bf16.mxu0 0
        %7831 = vmatpush1.bf16.msra.mxu0 %v5888
        %7832 = vmatprep.subr.bf16.mxu0 0
        %7833 = vmatpush1.bf16.msra.mxu0 %v5889
        %7834 = vmatprep.mubr.bf16.mxu0 %v1577
        %7835 = vmatmul.mubr.bf16.gmra.mrb[0].mxu0 %v1576
        %v7836 = vpop.f32.mrb[0].mxu0
        %v7837 = vadd.f32 %v7797, %v7836
        %v7838 = vpop.f32.mrb[0].mxu0
        %v7839 = vpop.f32.mrb[0].mxu0
        %v7840 = vpop.f32.mrb[0].mxu0
        %7841 = vdwg.mxu0
        %7842 = vmatprep.subr.bf16.mxu0 0
        %7843 = vmatpush1.bf16.msra.mxu0 %v5890
        %7844 = vmatprep.subr.bf16.mxu0 0
        %7845 = vmatpush1.bf16.msra.mxu0 %v5891
        %7846 = vmatprep.subr.bf16.mxu0 0
        %7847 = vmatpush1.bf16.msra.mxu0 %v5892
        %7848 = vmatprep.subr.bf16.mxu0 0
        %7849 = vmatpush1.bf16.msra.mxu0 %v5893
        %7850 = vmatprep.subr.bf16.mxu0 0
        %7851 = vmatpush1.bf16.msra.mxu0 %v5894
        %7852 = vmatprep.subr.bf16.mxu0 0
        %7853 = vmatpush1.bf16.msra.mxu0 %v5895
        %7854 = vmatprep.subr.bf16.mxu0 0
        %7855 = vmatpush1.bf16.msra.mxu0 %v5896
        %7856 = vmatprep.subr.bf16.mxu0 0
        %7857 = vmatpush1.bf16.msra.mxu0 %v5897
        %7858 = vmatprep.subr.bf16.mxu0 0
        %7859 = vmatpush1.bf16.msra.mxu0 %v5898
        %7860 = vmatprep.subr.bf16.mxu0 0
        %7861 = vmatpush1.bf16.msra.mxu0 %v5899
        %7862 = vmatprep.subr.bf16.mxu0 0
        %7863 = vmatpush1.bf16.msra.mxu0 %v5900
        %7864 = vmatprep.subr.bf16.mxu0 0
        %7865 = vmatpush1.bf16.msra.mxu0 %v5901
        %7866 = vmatprep.subr.bf16.mxu0 0
        %7867 = vmatpush1.bf16.msra.mxu0 %v5902
        %7868 = vmatprep.subr.bf16.mxu0 0
        %7869 = vmatpush1.bf16.msra.mxu0 %v5903
        %7870 = vmatprep.subr.bf16.mxu0 0
        %7871 = vmatpush1.bf16.msra.mxu0 %v5904
        %7872 = vmatprep.subr.bf16.mxu0 0
        %7873 = vmatpush1.bf16.msra.mxu0 %v5905
        %7874 = vmatprep.mubr.bf16.mxu0 %v1579
        %7875 = vmatmul.mubr.bf16.gmra.mrb[0].mxu0 %v1578
        %v7876 = vpop.f32.mrb[0].mxu0
        %v7877 = vadd.f32 %v7837, %v7876
        %v7878 = vpop.f32.mrb[0].mxu0
        %v7879 = vpop.f32.mrb[0].mxu0
        %v7880 = vpop.f32.mrb[0].mxu0
        %7881 = vdwg.mxu0
        %7882 = vmatprep.subr.bf16.mxu0 0
        %7883 = vmatpush1.bf16.msra.mxu0 %v5906
        %7884 = vmatprep.subr.bf16.mxu0 0
        %7885 = vmatpush1.bf16.msra.mxu0 %v5907
        %7886 = vmatprep.subr.bf16.mxu0 0
        %7887 = vmatpush1.bf16.msra.mxu0 %v5908
        %7888 = vmatprep.subr.bf16.mxu0 0
        %7889 = vmatpush1.bf16.msra.mxu0 %v5909
        %7890 = vmatprep.subr.bf16.mxu0 0
        %7891 = vmatpush1.bf16.msra.mxu0 %v5910
        %7892 = vmatprep.subr.bf16.mxu0 0
        %7893 = vmatpush1.bf16.msra.mxu0 %v5911
        %7894 = vmatprep.subr.bf16.mxu0 0
        %7895 = vmatpush1.bf16.msra.mxu0 %v5912
        %7896 = vmatprep.subr.bf16.mxu0 0
        %7897 = vmatpush1.bf16.msra.mxu0 %v5913
        %7898 = vmatprep.subr.bf16.mxu0 0
        %7899 = vmatpush1.bf16.msra.mxu0 %v5914
        %7900 = vmatprep.subr.bf16.mxu0 0
        %7901 = vmatpush1.bf16.msra.mxu0 %v5915
        %7902 = vmatprep.subr.bf16.mxu0 0
        %7903 = vmatpush1.bf16.msra.mxu0 %v5916
        %7904 = vmatprep.subr.bf16.mxu0 0
        %7905 = vmatpush1.bf16.msra.mxu0 %v5917
        %7906 = vmatprep.subr.bf16.mxu0 0
        %7907 = vmatpush1.bf16.msra.mxu0 %v5918
        %7908 = vmatprep.subr.bf16.mxu0 0
        %7909 = vmatpush1.bf16.msra.mxu0 %v5919
        %7910 = vmatprep.subr.bf16.mxu0 0
        %7911 = vmatpush1.bf16.msra.mxu0 %v5920
        %7912 = vmatprep.subr.bf16.mxu0 0
        %7913 = vmatpush1.bf16.msra.mxu0 %v5921
        %7914 = vmatprep.mubr.bf16.mxu0 %v1581
        %7915 = vmatmul.mubr.bf16.gmra.mrb[0].mxu0 %v1580
        %v7916 = vpop.f32.mrb[0].mxu0
        %v7917 = vadd.f32 %v7877, %v7916
        %v7918 = vpop.f32.mrb[0].mxu0
        %v7919 = vpop.f32.mrb[0].mxu0
        %v7920 = vpop.f32.mrb[0].mxu0
        %7921 = vdwg.mxu0
        %7922 = vmatprep.subr.bf16.mxu0 0
        %7923 = vmatpush1.bf16.msra.mxu0 %v5922
        %7924 = vmatprep.subr.bf16.mxu0 0
        %7925 = vmatpush1.bf16.msra.mxu0 %v5923
        %7926 = vmatprep.subr.bf16.mxu0 0
        %7927 = vmatpush1.bf16.msra.mxu0 %v5924
        %7928 = vmatprep.subr.bf16.mxu0 0
        %7929 = vmatpush1.bf16.msra.mxu0 %v5925
        %7930 = vmatprep.subr.bf16.mxu0 0
        %7931 = vmatpush1.bf16.msra.mxu0 %v5926
        %7932 = vmatprep.subr.bf16.mxu0 0
        %7933 = vmatpush1.bf16.msra.mxu0 %v5927
        %7934 = vmatprep.subr.bf16.mxu0 0
        %7935 = vmatpush1.bf16.msra.mxu0 %v5928
        %7936 = vmatprep.subr.bf16.mxu0 0
        %7937 = vmatpush1.bf16.msra.mxu0 %v5929
        %7938 = vmatprep.subr.bf16.mxu0 0
        %7939 = vmatpush1.bf16.msra.mxu0 %v5930
        %7940 = vmatprep.subr.bf16.mxu0 0
        %7941 = vmatpush1.bf16.msra.mxu0 %v5931
        %7942 = vmatprep.subr.bf16.mxu0 0
        %7943 = vmatpush1.bf16.msra.mxu0 %v5932
        %7944 = vmatprep.subr.bf16.mxu0 0
        %7945 = vmatpush1.bf16.msra.mxu0 %v5933
        %7946 = vmatprep.subr.bf16.mxu0 0
        %7947 = vmatpush1.bf16.msra.mxu0 %v5934
        %7948 = vmatprep.subr.bf16.mxu0 0
        %7949 = vmatpush1.bf16.msra.mxu0 %v5935
        %7950 = vmatprep.subr.bf16.mxu0 0
        %7951 = vmatpush1.bf16.msra.mxu0 %v5936
        %7952 = vmatprep.subr.bf16.mxu0 0
        %7953 = vmatpush1.bf16.msra.mxu0 %v5937
        %7954 = vmatprep.mubr.bf16.mxu0 %v1583
        %7955 = vmatmul.mubr.bf16.gmra.mrb[0].mxu0 %v1582
        %v7956 = vpop.f32.mrb[0].mxu0
        %v7957 = vadd.f32 %v7917, %v7956
        %v7958 = vpop.f32.mrb[0].mxu0
        %v7959 = vpop.f32.mrb[0].mxu0
        %v7960 = vpop.f32.mrb[0].mxu0
        %7961 = vdwg.mxu0
        %7962 = vmatprep.subr.bf16.mxu0 0
        %7963 = vmatpush1.bf16.msra.mxu0 %v5938
        %7964 = vmatprep.subr.bf16.mxu0 0
        %7965 = vmatpush1.bf16.msra.mxu0 %v5939
        %7966 = vmatprep.subr.bf16.mxu0 0
        %7967 = vmatpush1.bf16.msra.mxu0 %v5940
        %7968 = vmatprep.subr.bf16.mxu0 0
        %7969 = vmatpush1.bf16.msra.mxu0 %v5941
        %7970 = vmatprep.subr.bf16.mxu0 0
        %7971 = vmatpush1.bf16.msra.mxu0 %v5942
        %7972 = vmatprep.subr.bf16.mxu0 0
        %7973 = vmatpush1.bf16.msra.mxu0 %v5943
        %7974 = vmatprep.subr.bf16.mxu0 0
        %7975 = vmatpush1.bf16.msra.mxu0 %v5944
        %7976 = vmatprep.subr.bf16.mxu0 0
        %7977 = vmatpush1.bf16.msra.mxu0 %v5945
        %7978 = vmatprep.subr.bf16.mxu0 0
        %7979 = vmatpush1.bf16.msra.mxu0 %v5946
        %7980 = vmatprep.subr.bf16.mxu0 0
        %7981 = vmatpush1.bf16.msra.mxu0 %v5947
        %7982 = vmatprep.subr.bf16.mxu0 0
        %7983 = vmatpush1.bf16.msra.mxu0 %v5948
        %7984 = vmatprep.subr.bf16.mxu0 0
        %7985 = vmatpush1.bf16.msra.mxu0 %v5949
        %7986 = vmatprep.subr.bf16.mxu0 0
        %7987 = vmatpush1.bf16.msra.mxu0 %v5950
        %7988 = vmatprep.subr.bf16.mxu0 0
        %7989 = vmatpush1.bf16.msra.mxu0 %v5951
        %7990 = vmatprep.subr.bf16.mxu0 0
        %7991 = vmatpush1.bf16.msra.mxu0 %v5952
        %7992 = vmatprep.subr.bf16.mxu0 0
        %7993 = vmatpush1.bf16.msra.mxu0 %v5953
        %7994 = vmatprep.mubr.bf16.mxu0 %v1585
        %7995 = vmatmul.mubr.bf16.gmra.mrb[0].mxu0 %v1584
        %v7996 = vpop.f32.mrb[0].mxu0
        %v7997 = vadd.f32 %v7957, %v7996
        %v7998 = vpop.f32.mrb[0].mxu0
        %v7999 = vpop.f32.mrb[0].mxu0
        %v8000 = vpop.f32.mrb[0].mxu0
        %8001 = vdwg.mxu0
        %8002 = vmatprep.subr.bf16.mxu0 0
        %8003 = vmatpush1.bf16.msra.mxu0 %v5954
        %8004 = vmatprep.subr.bf16.mxu0 0
        %8005 = vmatpush1.bf16.msra.mxu0 %v5955
        %8006 = vmatprep.subr.bf16.mxu0 0
        %8007 = vmatpush1.bf16.msra.mxu0 %v5956
        %8008 = vmatprep.subr.bf16.mxu0 0
        %8009 = vmatpush1.bf16.msra.mxu0 %v5957
        %8010 = vmatprep.subr.bf16.mxu0 0
        %8011 = vmatpush1.bf16.msra.mxu0 %v5958
        %8012 = vmatprep.subr.bf16.mxu0 0
        %8013 = vmatpush1.bf16.msra.mxu0 %v5959
        %8014 = vmatprep.subr.bf16.mxu0 0
        %8015 = vmatpush1.bf16.msra.mxu0 %v5960
        %8016 = vmatprep.subr.bf16.mxu0 0
        %8017 = vmatpush1.bf16.msra.mxu0 %v5961
        %8018 = vmatprep.subr.bf16.mxu0 0
        %8019 = vmatpush1.bf16.msra.mxu0 %v5962
        %8020 = vmatprep.subr.bf16.mxu0 0
        %8021 = vmatpush1.bf16.msra.mxu0 %v5963
        %8022 = vmatprep.subr.bf16.mxu0 0
        %8023 = vmatpush1.bf16.msra.mxu0 %v5964
        %8024 = vmatprep.subr.bf16.mxu0 0
        %8025 = vmatpush1.bf16.msra.mxu0 %v5965
        %8026 = vmatprep.subr.bf16.mxu0 0
        %8027 = vmatpush1.bf16.msra.mxu0 %v5966
        %8028 = vmatprep.subr.bf16.mxu0 0
        %8029 = vmatpush1.bf16.msra.mxu0 %v5967
        %8030 = vmatprep.subr.bf16.mxu0 0
        %8031 = vmatpush1.bf16.msra.mxu0 %v5968
        %8032 = vmatprep.subr.bf16.mxu0 0
        %8033 = vmatpush1.bf16.msra.mxu0 %v5969
        %8034 = vmatprep.mubr.bf16.mxu0 %v1587
        %8035 = vmatmul.mubr.bf16.gmra.mrb[0].mxu0 %v1586
        %v8036 = vpop.f32.mrb[0].mxu0
        %v8037 = vadd.f32 %v7997, %v8036
        %v8038 = vpop.f32.mrb[0].mxu0
        %v8039 = vpop.f32.mrb[0].mxu0
        %v8040 = vpop.f32.mrb[0].mxu0
        %8041 = vdwg.mxu0
        %8042 = vmatprep.subr.bf16.mxu0 0
        %8043 = vmatpush1.bf16.msra.mxu0 %v5970
        %8044 = vmatprep.subr.bf16.mxu0 0
        %8045 = vmatpush1.bf16.msra.mxu0 %v5971
        %8046 = vmatprep.subr.bf16.mxu0 0
        %8047 = vmatpush1.bf16.msra.mxu0 %v5972
        %8048 = vmatprep.subr.bf16.mxu0 0
        %8049 = vmatpush1.bf16.msra.mxu0 %v5973
        %8050 = vmatprep.subr.bf16.mxu0 0
        %8051 = vmatpush1.bf16.msra.mxu0 %v5974
        %8052 = vmatprep.subr.bf16.mxu0 0
        %8053 = vmatpush1.bf16.msra.mxu0 %v5975
        %8054 = vmatprep.subr.bf16.mxu0 0
        %8055 = vmatpush1.bf16.msra.mxu0 %v5976
        %8056 = vmatprep.subr.bf16.mxu0 0
        %8057 = vmatpush1.bf16.msra.mxu0 %v5977
        %8058 = vmatprep.subr.bf16.mxu0 0
        %8059 = vmatpush1.bf16.msra.mxu0 %v5978
        %8060 = vmatprep.subr.bf16.mxu0 0
        %8061 = vmatpush1.bf16.msra.mxu0 %v5979
        %8062 = vmatprep.subr.bf16.mxu0 0
        %8063 = vmatpush1.bf16.msra.mxu0 %v5980
        %8064 = vmatprep.subr.bf16.mxu0 0
        %8065 = vmatpush1.bf16.msra.mxu0 %v5981
        %8066 = vmatprep.subr.bf16.mxu0 0
        %8067 = vmatpush1.bf16.msra.mxu0 %v5982
        %8068 = vmatprep.subr.bf16.mxu0 0
        %8069 = vmatpush1.bf16.msra.mxu0 %v5983
        %8070 = vmatprep.subr.bf16.mxu0 0
        %8071 = vmatpush1.bf16.msra.mxu0 %v5984
        %8072 = vmatprep.subr.bf16.mxu0 0
        %8073 = vmatpush1.bf16.msra.mxu0 %v5985
        %8074 = vmatprep.mubr.bf16.mxu0 %v1589
        %8075 = vmatmul.mubr.bf16.gmra.mrb[0].mxu0 %v1588
        %v8076 = vpop.f32.mrb[0].mxu0
        %v8077 = vadd.f32 %v8037, %v8076
        %v8078 = vpop.f32.mrb[0].mxu0
        %v8079 = vpop.f32.mrb[0].mxu0
        %v8080 = vpop.f32.mrb[0].mxu0
        %8081 = vdwg.mxu0
        %8082 = vmatprep.subr.bf16.mxu0 0
        %8083 = vmatpush1.bf16.msra.mxu0 %v5986
        %8084 = vmatprep.subr.bf16.mxu0 0
        %8085 = vmatpush1.bf16.msra.mxu0 %v5987
        %8086 = vmatprep.subr.bf16.mxu0 0
        %8087 = vmatpush1.bf16.msra.mxu0 %v5988
        %8088 = vmatprep.subr.bf16.mxu0 0
        %8089 = vmatpush1.bf16.msra.mxu0 %v5989
        %8090 = vmatprep.subr.bf16.mxu0 0
        %8091 = vmatpush1.bf16.msra.mxu0 %v5990
        %8092 = vmatprep.subr.bf16.mxu0 0
        %8093 = vmatpush1.bf16.msra.mxu0 %v5991
        %8094 = vmatprep.subr.bf16.mxu0 0
        %8095 = vmatpush1.bf16.msra.mxu0 %v5992
        %8096 = vmatprep.subr.bf16.mxu0 0
        %8097 = vmatpush1.bf16.msra.mxu0 %v5993
        %8098 = vmatprep.subr.bf16.mxu0 0
        %8099 = vmatpush1.bf16.msra.mxu0 %v5994
        %8100 = vmatprep.subr.bf16.mxu0 0
        %8101 = vmatpush1.bf16.msra.mxu0 %v5995
        %8102 = vmatprep.subr.bf16.mxu0 0
        %8103 = vmatpush1.bf16.msra.mxu0 %v5996
        %8104 = vmatprep.subr.bf16.mxu0 0
        %8105 = vmatpush1.bf16.msra.mxu0 %v5997
        %8106 = vmatprep.subr.bf16.mxu0 0
        %8107 = vmatpush1.bf16.msra.mxu0 %v5998
        %8108 = vmatprep.subr.bf16.mxu0 0
        %8109 = vmatpush1.bf16.msra.mxu0 %v5999
        %8110 = vmatprep.subr.bf16.mxu0 0
        %8111 = vmatpush1.bf16.msra.mxu0 %v6000
        %8112 = vmatprep.subr.bf16.mxu0 0
        %8113 = vmatpush1.bf16.msra.mxu0 %v6001
        %8114 = vmatprep.mubr.bf16.mxu0 %v1591
        %8115 = vmatmul.mubr.bf16.gmra.mrb[0].mxu0 %v1590
        %v8116 = vpop.f32.mrb[0].mxu0
        %v8117 = vadd.f32 %v8077, %v8116
        %v8118 = vpop.f32.mrb[0].mxu0
        %v8119 = vpop.f32.mrb[0].mxu0
        %v8120 = vpop.f32.mrb[0].mxu0
        %8121 = vdwg.mxu0
        %8122 = vmatprep.subr.bf16.mxu0 0
        %8123 = vmatpush1.bf16.msra.mxu0 %v6002
        %8124 = vmatprep.subr.bf16.mxu0 0
        %8125 = vmatpush1.bf16.msra.mxu0 %v6003
        %8126 = vmatprep.subr.bf16.mxu0 0
        %8127 = vmatpush1.bf16.msra.mxu0 %v6004
        %8128 = vmatprep.subr.bf16.mxu0 0
        %8129 = vmatpush1.bf16.msra.mxu0 %v6005
        %8130 = vmatprep.subr.bf16.mxu0 0
        %8131 = vmatpush1.bf16.msra.mxu0 %v6006
        %8132 = vmatprep.subr.bf16.mxu0 0
        %8133 = vmatpush1.bf16.msra.mxu0 %v6007
        %8134 = vmatprep.subr.bf16.mxu0 0
        %8135 = vmatpush1.bf16.msra.mxu0 %v6008
        %8136 = vmatprep.subr.bf16.mxu0 0
        %8137 = vmatpush1.bf16.msra.mxu0 %v6009
        %8138 = vmatprep.subr.bf16.mxu0 0
        %8139 = vmatpush1.bf16.msra.mxu0 %v6010
        %8140 = vmatprep.subr.bf16.mxu0 0
        %8141 = vmatpush1.bf16.msra.mxu0 %v6011
        %8142 = vmatprep.subr.bf16.mxu0 0
        %8143 = vmatpush1.bf16.msra.mxu0 %v6012
        %8144 = vmatprep.subr.bf16.mxu0 0
        %8145 = vmatpush1.bf16.msra.mxu0 %v6013
        %8146 = vmatprep.subr.bf16.mxu0 0
        %8147 = vmatpush1.bf16.msra.mxu0 %v6014
        %8148 = vmatprep.subr.bf16.mxu0 0
        %8149 = vmatpush1.bf16.msra.mxu0 %v6015
        %8150 = vmatprep.subr.bf16.mxu0 0
        %8151 = vmatpush1.bf16.msra.mxu0 %v6016
        %8152 = vmatprep.subr.bf16.mxu0 0
        %8153 = vmatpush1.bf16.msra.mxu0 %v6017
        %8154 = vmatprep.mubr.bf16.mxu0 %v1593
        %8155 = vmatmul.mubr.bf16.gmra.mrb[0].mxu0 %v1592
        %v8156 = vpop.f32.mrb[0].mxu0
        %v8157 = vadd.f32 %v8117, %v8156
        %v8158 = vpop.f32.mrb[0].mxu0
        %v8159 = vpop.f32.mrb[0].mxu0
        %v8160 = vpop.f32.mrb[0].mxu0
        %8161 = vdwg.mxu0
        %8162 = vmatprep.subr.bf16.mxu0 0
        %8163 = vmatpush1.bf16.msra.mxu0 %v6018
        %8164 = vmatprep.subr.bf16.mxu0 0
        %8165 = vmatpush1.bf16.msra.mxu0 %v6019
        %8166 = vmatprep.subr.bf16.mxu0 0
        %8167 = vmatpush1.bf16.msra.mxu0 %v6020
        %8168 = vmatprep.subr.bf16.mxu0 0
        %8169 = vmatpush1.bf16.msra.mxu0 %v6021
        %8170 = vmatprep.subr.bf16.mxu0 0
        %8171 = vmatpush1.bf16.msra.mxu0 %v6022
        %8172 = vmatprep.subr.bf16.mxu0 0
        %8173 = vmatpush1.bf16.msra.mxu0 %v6023
        %8174 = vmatprep.subr.bf16.mxu0 0
        %8175 = vmatpush1.bf16.msra.mxu0 %v6024
        %8176 = vmatprep.subr.bf16.mxu0 0
        %8177 = vmatpush1.bf16.msra.mxu0 %v6025
        %8178 = vmatprep.subr.bf16.mxu0 0
        %8179 = vmatpush1.bf16.msra.mxu0 %v6026
        %8180 = vmatprep.subr.bf16.mxu0 0
        %8181 = vmatpush1.bf16.msra.mxu0 %v6027
        %8182 = vmatprep.subr.bf16.mxu0 0
        %8183 = vmatpush1.bf16.msra.mxu0 %v6028
        %8184 = vmatprep.subr.bf16.mxu0 0
        %8185 = vmatpush1.bf16.msra.mxu0 %v6029
        %8186 = vmatprep.subr.bf16.mxu0 0
        %8187 = vmatpush1.bf16.msra.mxu0 %v6030
        %8188 = vmatprep.subr.bf16.mxu0 0
        %8189 = vmatpush1.bf16.msra.mxu0 %v6031
        %8190 = vmatprep.subr.bf16.mxu0 0
        %8191 = vmatpush1.bf16.msra.mxu0 %v6032
        %8192 = vmatprep.subr.bf16.mxu0 0
        %8193 = vmatpush1.bf16.msra.mxu0 %v6033
        %8194 = vmatprep.mubr.bf16.mxu0 %v1595
        %8195 = vmatmul.mubr.bf16.gmra.mrb[0].mxu0 %v1594
        %v8196 = vpop.f32.mrb[0].mxu0
        %v8197 = vadd.f32 %v8157, %v8196
        %v8198 = vpop.f32.mrb[0].mxu0
        %v8199 = vpop.f32.mrb[0].mxu0
        %v8200 = vpop.f32.mrb[0].mxu0
        %8201 = vdwg.mxu0
        %8202 = vmatprep.subr.bf16.mxu0 0
        %8203 = vmatpush1.bf16.msra.mxu0 %v6034
        %8204 = vmatprep.subr.bf16.mxu0 0
        %8205 = vmatpush1.bf16.msra.mxu0 %v6035
        %8206 = vmatprep.subr.bf16.mxu0 0
        %8207 = vmatpush1.bf16.msra.mxu0 %v6036
        %8208 = vmatprep.subr.bf16.mxu0 0
        %8209 = vmatpush1.bf16.msra.mxu0 %v6037
        %8210 = vmatprep.subr.bf16.mxu0 0
        %8211 = vmatpush1.bf16.msra.mxu0 %v6038
        %8212 = vmatprep.subr.bf16.mxu0 0
        %8213 = vmatpush1.bf16.msra.mxu0 %v6039
        %8214 = vmatprep.subr.bf16.mxu0 0
        %8215 = vmatpush1.bf16.msra.mxu0 %v6040
        %8216 = vmatprep.subr.bf16.mxu0 0
        %8217 = vmatpush1.bf16.msra.mxu0 %v6041
        %8218 = vmatprep.subr.bf16.mxu0 0
        %8219 = vmatpush1.bf16.msra.mxu0 %v6042
        %8220 = vmatprep.subr.bf16.mxu0 0
        %8221 = vmatpush1.bf16.msra.mxu0 %v6043
        %8222 = vmatprep.subr.bf16.mxu0 0
        %8223 = vmatpush1.bf16.msra.mxu0 %v6044
        %8224 = vmatprep.subr.bf16.mxu0 0
        %8225 = vmatpush1.bf16.msra.mxu0 %v6045
        %8226 = vmatprep.subr.bf16.mxu0 0
        %8227 = vmatpush1.bf16.msra.mxu0 %v6046
        %8228 = vmatprep.subr.bf16.mxu0 0
        %8229 = vmatpush1.bf16.msra.mxu0 %v6047
        %8230 = vmatprep.subr.bf16.mxu0 0
        %8231 = vmatpush1.bf16.msra.mxu0 %v6048
        %8232 = vmatprep.subr.bf16.mxu0 0
        %8233 = vmatpush1.bf16.msra.mxu0 %v6049
        %8234 = vmatprep.mubr.bf16.mxu0 %v1597
        %8235 = vmatmul.mubr.bf16.gmra.mrb[0].mxu0 %v1596
        %v8236 = vpop.f32.mrb[0].mxu0
        %v8237 = vadd.f32 %v8197, %v8236
        %v8238 = vpop.f32.mrb[0].mxu0
        %v8239 = vpop.f32.mrb[0].mxu0
        %v8240 = vpop.f32.mrb[0].mxu0
        %8241 = vdwg.mxu0
        %8242 = vmatprep.subr.bf16.mxu0 0
        %8243 = vmatpush1.bf16.msra.mxu0 %v6050
        %8244 = vmatprep.subr.bf16.mxu0 0
        %8245 = vmatpush1.bf16.msra.mxu0 %v6051
        %8246 = vmatprep.subr.bf16.mxu0 0
        %8247 = vmatpush1.bf16.msra.mxu0 %v6052
        %8248 = vmatprep.subr.bf16.mxu0 0
        %8249 = vmatpush1.bf16.msra.mxu0 %v6053
        %8250 = vmatprep.subr.bf16.mxu0 0
        %8251 = vmatpush1.bf16.msra.mxu0 %v6054
        %8252 = vmatprep.subr.bf16.mxu0 0
        %8253 = vmatpush1.bf16.msra.mxu0 %v6055
        %8254 = vmatprep.subr.bf16.mxu0 0
        %8255 = vmatpush1.bf16.msra.mxu0 %v6056
        %8256 = vmatprep.subr.bf16.mxu0 0
        %8257 = vmatpush1.bf16.msra.mxu0 %v6057
        %8258 = vmatprep.subr.bf16.mxu0 0
        %8259 = vmatpush1.bf16.msra.mxu0 %v6058
        %8260 = vmatprep.subr.bf16.mxu0 0
        %8261 = vmatpush1.bf16.msra.mxu0 %v6059
        %8262 = vmatprep.subr.bf16.mxu0 0
        %8263 = vmatpush1.bf16.msra.mxu0 %v6060
        %8264 = vmatprep.subr.bf16.mxu0 0
        %8265 = vmatpush1.bf16.msra.mxu0 %v6061
        %8266 = vmatprep.subr.bf16.mxu0 0
        %8267 = vmatpush1.bf16.msra.mxu0 %v6062
        %8268 = vmatprep.subr.bf16.mxu0 0
        %8269 = vmatpush1.bf16.msra.mxu0 %v6063
        %8270 = vmatprep.subr.bf16.mxu0 0
        %8271 = vmatpush1.bf16.msra.mxu0 %v6064
        %8272 = vmatprep.subr.bf16.mxu0 0
        %8273 = vmatpush1.bf16.msra.mxu0 %v6065
        %8274 = vmatprep.mubr.bf16.mxu0 %v1599
        %8275 = vmatmul.mubr.bf16.gmra.mrb[0].mxu0 %v1598
        %v8276 = vpop.f32.mrb[0].mxu0
        %v8277 = vadd.f32 %v8237, %v8276
        %v8278 = vpop.f32.mrb[0].mxu0
        %v8279 = vpop.f32.mrb[0].mxu0
        %v8280 = vpop.f32.mrb[0].mxu0
        %8281 = vdwg.mxu0
        %8282 = vmatprep.subr.bf16.mxu0 0
        %8283 = vmatpush1.bf16.msra.mxu0 %v6066
        %8284 = vmatprep.subr.bf16.mxu0 0
        %8285 = vmatpush1.bf16.msra.mxu0 %v6067
        %8286 = vmatprep.subr.bf16.mxu0 0
        %8287 = vmatpush1.bf16.msra.mxu0 %v6068
        %8288 = vmatprep.subr.bf16.mxu0 0
        %8289 = vmatpush1.bf16.msra.mxu0 %v6069
        %8290 = vmatprep.subr.bf16.mxu0 0
        %8291 = vmatpush1.bf16.msra.mxu0 %v6070
        %8292 = vmatprep.subr.bf16.mxu0 0
        %8293 = vmatpush1.bf16.msra.mxu0 %v6071
        %8294 = vmatprep.subr.bf16.mxu0 0
        %8295 = vmatpush1.bf16.msra.mxu0 %v6072
        %8296 = vmatprep.subr.bf16.mxu0 0
        %8297 = vmatpush1.bf16.msra.mxu0 %v6073
        %8298 = vmatprep.subr.bf16.mxu0 0
        %8299 = vmatpush1.bf16.msra.mxu0 %v6074
        %8300 = vmatprep.subr.bf16.mxu0 0
        %8301 = vmatpush1.bf16.msra.mxu0 %v6075
        %8302 = vmatprep.subr.bf16.mxu0 0
        %8303 = vmatpush1.bf16.msra.mxu0 %v6076
        %8304 = vmatprep.subr.bf16.mxu0 0
        %8305 = vmatpush1.bf16.msra.mxu0 %v6077
        %8306 = vmatprep.subr.bf16.mxu0 0
        %8307 = vmatpush1.bf16.msra.mxu0 %v6078
        %8308 = vmatprep.subr.bf16.mxu0 0
        %8309 = vmatpush1.bf16.msra.mxu0 %v6079
        %8310 = vmatprep.subr.bf16.mxu0 0
        %8311 = vmatpush1.bf16.msra.mxu0 %v6080
        %8312 = vmatprep.subr.bf16.mxu0 0
        %8313 = vmatpush1.bf16.msra.mxu0 %v6081
        %8314 = vmatprep.mubr.bf16.mxu0 %v1601
        %8315 = vmatmul.mubr.bf16.gmra.mrb[0].mxu0 %v1600
        %v8316 = vpop.f32.mrb[0].mxu0
        %v8317 = vadd.f32 %v8277, %v8316
        %v8318 = vpop.f32.mrb[0].mxu0
        %v8319 = vpop.f32.mrb[0].mxu0
        %v8320 = vpop.f32.mrb[0].mxu0
        %8321 = vdwg.mxu0
        %v8322 = vadd.f32 %v1521, %v8317
        %8323 = vst [vmem:[#allocation2] sm:$0x3] %v8322
        %p8324 = scmp.eq.s32.totalorder %s18, 1
        // Predicated region
        $region49: #{encode_ln_classify.3} parent=43 // pred_check
          %p8325 = pneg %p8324
        $region50: #{encode_ln_classify.3} parent=43 // pred_check_branch
          %8327 = sbr.rel (%p8325) target = $region52
        $region51: #{encode_ln_classify.3} parent=43 // pred_region
          %v8328 = vld [vmem:[#allocation3] sm:$0x3]
          %v8329 = vmul.f32 %v8328, 4.8828126e-05
          %v8330 = vld [vmem:[#allocation4] sm:$0x3]
          %v8331 = vmul.f32 %v8330, 4.8828126e-05
          %v8332 = vmul.f32 %v8329, %v8329
          %v8333 = vsub.f32 %v8331, %v8332
          %v8334 = vadd.f32 %v8333, 1e-05
          %v8335 = vrsqrt.pop %v8334
          %v8336 = vld [vmem:[#allocation2] sm:$0x3]
          %8338 = vset.pattern.permute.xlu0 0
          %8339 = vperm.xlu0 %8338, %v8335
          %v8340 = vpop.permute.xlu0 %8339
          %v8342 = vmul.f32 %v8340, %v8336
          %v8343 = vmul.f32 %v8335, %v8329
          %v8344 = vld [vmem:[%s2] sm:$0x1]
          %8346 = vset.pattern.permute.xlu0 0
          %8347 = vperm.xlu0 %8346, %v8343
          %v8348 = vpop.permute.xlu0 %8347
          %v8351 = vlaneseq
          %v8352 = vshrl.u32 %v8351, 7
          %v8353 = vsub.s32 0, %v8352
          %v8354 = vrot.slane %v8344, %v8353
          %v8356 = vmul.f32 %v8348, %v8354
          %v8357 = vsub.f32 %v8342, %v8356
          %v8358 = vld [vmem:[%s3] sm:$0x1]
          %v8360 = vlaneseq
          %v8361 = vshrl.u32 %v8360, 7
          %v8362 = vsub.s32 0, %v8361
          %v8363 = vrot.slane %v8358, %v8362
          %v8365 = vadd.f32 %v8357, %v8363
          %v8366 = vmax.f32 %v8365, 0.0
          %v8367 = vld [vmem:[%s4] sm:$0xff]
          %v8368 = vld [vmem:[%s4 + $0x8] sm:$0xff]
          %v8369 = vld [vmem:[%s4 + $0x10] sm:$0xff]
          %v8370 = vld [vmem:[%s4 + $0x18] sm:$0xff]
          %v8371 = vld [vmem:[%s4 + $0x20] sm:$0xff]
          %v8372 = vld [vmem:[%s4 + $0x28] sm:$0xff]
          %v8373 = vld [vmem:[%s4 + $0x30] sm:$0xff]
          %v8374 = vld [vmem:[%s4 + $0x38] sm:$0xff]
          %v8375 = vld [vmem:[%s4 + $0x40] sm:$0xff]
          %v8376 = vld [vmem:[%s4 + $0x48] sm:$0xff]
          %v8377 = vld [vmem:[%s4 + $0x50] sm:$0xff]
          %v8378 = vld [vmem:[%s4 + $0x58] sm:$0xff]
          %v8379 = vld [vmem:[%s4 + $0x60] sm:$0xff]
          %v8380 = vld [vmem:[%s4 + $0x68] sm:$0xff]
          %v8381 = vld [vmem:[%s4 + $0x70] sm:$0xff]
          %v8382 = vld [vmem:[%s4 + $0x78] sm:$0xff]
          %v8383 = vld [vmem:[%s5] sm:$0x1]
          %v8385 = vlaneseq
          %v8386 = vshrl.u32 %v8385, 7
          %v8387 = vsub.s32 0, %v8386
          %v8388 = vrot.slane %v8383, %v8387
          %8390 = vmatprep.subr.mxu0 0.0
          %8391 = vmatpush1.msra.mxu0 %v8367
          %8392 = vmatprep.subr.mxu0 0.0
          %8393 = vmatpush1.msra.mxu0 %v8368
          %8394 = vmatprep.subr.mxu0 0.0
          %8395 = vmatpush1.msra.mxu0 %v8369
          %8396 = vmatprep.subr.mxu0 0.0
          %8397 = vmatpush1.msra.mxu0 %v8370
          %8398 = vmatprep.subr.mxu0 0.0
          %8399 = vmatpush1.msra.mxu0 %v8371
          %8400 = vmatprep.subr.mxu0 0.0
          %8401 = vmatpush1.msra.mxu0 %v8372
          %8402 = vmatprep.subr.mxu0 0.0
          %8403 = vmatpush1.msra.mxu0 %v8373
          %8404 = vmatprep.subr.mxu0 0.0
          %8405 = vmatpush1.msra.mxu0 %v8374
          %8406 = vmatprep.subr.mxu0 0.0
          %8407 = vmatpush1.msra.mxu0 %v8375
          %8408 = vmatprep.subr.mxu0 0.0
          %8409 = vmatpush1.msra.mxu0 %v8376
          %8410 = vmatprep.subr.mxu0 0.0
          %8411 = vmatpush1.msra.mxu0 %v8377
          %8412 = vmatprep.subr.mxu0 0.0
          %8413 = vmatpush1.msra.mxu0 %v8378
          %8414 = vmatprep.subr.mxu0 0.0
          %8415 = vmatpush1.msra.mxu0 %v8379
          %8416 = vmatprep.subr.mxu0 0.0
          %8417 = vmatpush1.msra.mxu0 %v8380
          %8418 = vmatprep.subr.mxu0 0.0
          %8419 = vmatpush1.msra.mxu0 %v8381
          %8420 = vmatprep.subr.mxu0 0.0
          %8421 = vmatpush1.msra.mxu0 %v8382
          %8422 = vmatprep.subr.mxu0 0.0
          %8423 = vmatpush1.msra.mxu0 0.0
          %8424 = vmatprep.subr.mxu0 0.0
          %8425 = vmatpush1.msra.mxu0 0.0
          %8426 = vmatprep.subr.mxu0 0.0
          %8427 = vmatpush1.msra.mxu0 0.0
          %8428 = vmatprep.subr.mxu0 0.0
          %8429 = vmatpush1.msra.mxu0 0.0
          %8430 = vmatprep.subr.mxu0 0.0
          %8431 = vmatpush1.msra.mxu0 0.0
          %8432 = vmatprep.subr.mxu0 0.0
          %8433 = vmatpush1.msra.mxu0 0.0
          %8434 = vmatprep.subr.mxu0 0.0
          %8435 = vmatpush1.msra.mxu0 0.0
          %8436 = vmatprep.subr.mxu0 0.0
          %8437 = vmatpush1.msra.mxu0 0.0
          %8438 = vmatprep.subr.mxu0 0.0
          %8439 = vmatpush1.msra.mxu0 0.0
          %8440 = vmatprep.subr.mxu0 0.0
          %8441 = vmatpush1.msra.mxu0 0.0
          %8442 = vmatprep.subr.mxu0 0.0
          %8443 = vmatpush1.msra.mxu0 0.0
          %8444 = vmatprep.subr.mxu0 0.0
          %8445 = vmatpush1.msra.mxu0 0.0
          %8446 = vmatprep.subr.mxu0 0.0
          %8447 = vmatpush1.msra.mxu0 0.0
          %8448 = vmatprep.subr.mxu0 0.0
          %8449 = vmatpush1.msra.mxu0 0.0
          %8450 = vmatprep.subr.mxu0 0.0
          %8451 = vmatpush1.msra.mxu0 0.0
          %8452 = vmatprep.subr.mxu0 0.0
          %8453 = vmatpush1.msra.mxu0 0.0
          %8454 = vmatprep.mubr.f32.mxu0 0.0
          %8455 = vmatmul.mubr.f32.gmra.mrb[0].mxu0 %v8366
          %v8456 = vpop.f32.mrb[0].mxu0
          %v8457 = vadd.f32 %v8388, %v8456
          %v8458 = vpop.f32.mrb[0].mxu0
          %8459 = vdwg.mxu0
          %vm8460 = vcmask 74752
          %8461 = vst.msk [vmem:[#allocation5] sm:$0x3] %vm8460, %v8457
        $region52: #{encode_ln_classify.3} parent=43 // pred_fallthru
          _
        // Predicated region
        $region53: #{encode_ln_classify.3} parent=43 // pred_check
          %p8462 = pneg %p167
        $region54: #{encode_ln_classify.3} parent=43 // pred_check_branch
          %8464 = sbr.rel (%p8462) target = $region56
        $region55: #{encode_ln_classify.3} parent=43 // pred_region
          %s8466 = ssub.s32 32, 32
          %8467 = vsyncadd [#allocation6], %s8466
          %s8469 = sshll.u32 [#allocation5], 4
          %s8470 = int_to_ptr.vmem [resolvable:$true] %s8469
          %8472 = dma.vmem_to_hbm [thread:$0]  %s8470, 32, %s6, [#allocation6]
        $region56: #{encode_ln_classify.3} parent=43 // pred_fallthru
          _
        // Predicated region
        $region57: #{encode_ln_classify.3} parent=43 // pred_check
          %p8473 = pneg %p167
        $region58: #{encode_ln_classify.3} parent=43 // pred_check_branch
          %8475 = sbr.rel (%p8473) target = $region60
        $region59: #{encode_ln_classify.3} parent=43 // pred_region
          %8476 = dma.done [#allocation6], 32
        $region60: #{encode_ln_classify.3} parent=43 // pred_fallthru
          _
      $region44: #{encode_ln_classify.3} parent=5 // pred_fallthru
        _
      %p8477 = scmp.le.s32.totalorder 2, %s13
      // Predicated region
      $region61: #{encode_ln_classify.3} parent=5 // pred_check
        %p8478 = pneg %p8477
      $region62: #{encode_ln_classify.3} parent=5 // pred_check_branch
        %8480 = sbr.rel (%p8478) target = $region64
      $region63: #{encode_ln_classify.3} parent=5 // pred_region
        %s8481 = ssub.s32 %s13, 2
      $region64: #{encode_ln_classify.3} parent=5 // pred_fallthru
        _
    $region6: #{encode_ln_classify.3} parent=1 // loop_footer
      %s17 = sadd.s32 1, %s13
    $region7: #{encode_ln_classify.3} parent=1 // loop_footer_branch
      %12 = sbr.rel target = $region3
    $region8: #{encode_ln_classify.3} parent=1 // loop_exit
      _
    %8482 = vsyncpa [#allocation6], 1
    %s8483 = scalar_lea.sflag [#allocation6], 1
    %8484 = vsyncpa %s8483, 1

</llo_original>
